<compile_context>
chip_gen: v6e
topology: v6e:2x2x1
jax: 0.10.0
libtpu: 0.0.40
codegen_flags: <defaults>
</compile_context>

<pallas_src>
from functools import partial

import jax
import jax.numpy as jnp
from jax.experimental import pallas as pl
from jax.experimental.pallas import tpu as pltpu


# ----------------------------------------------------------------------------
# Kernel A: fused MaskEncoder convolutions (conv3x3+ReLU -> conv3x3+ReLU)
# ----------------------------------------------------------------------------
def _mask_conv_kernel(x_ref, w1_ref, b1_ref, w2_ref, b2_ref, o_ref, xpad_ref,
                      *, H, W):
    # x_ref:    (1, H+2, W+2, C1)  zero-halo, channel-padded NHWC input
    # w1_ref:   (9*C1, Cm)         conv1 weights, im2col layout
    # b1_ref:   (1, Cm)
    # w2_ref:   (9*Cm, Cm)         conv2 weights, im2col layout
    # b2_ref:   (1, Cm)
    # o_ref:    (1, H, W, Cm)      conv2 output (NHWC)
    # xpad_ref: (H+2, W+2, Cm)     VMEM scratch: zero-padded conv1 output
    c1 = x_ref.shape[-1]
    cm = w1_ref.shape[-1]

    # --- conv1: im2col + ONE MXU matmul (instead of 9 per-tap matmuls) -------
    x = x_ref[0]                                                   # (H+2, W+2, C1)
    patch1 = jnp.concatenate(
        [x[dh:dh + H, dw:dw + W, :].reshape(H * W, c1)
         for dh in range(3) for dw in range(3)], axis=-1)          # (H*W, 9*C1)
    y1 = jnp.dot(patch1, w1_ref[...], preferred_element_type=jnp.float32)
    y1 = jnp.maximum(y1 + b1_ref[...], 0.0)                        # (H*W, Cm)

    # --- conv2 input: zero halo built entirely in VMEM (no HBM round trip) ---
    xpad_ref[...] = jnp.zeros_like(xpad_ref)
    xpad_ref[1:H + 1, 1:W + 1, :] = y1.reshape(H, W, cm)

    # --- conv2: im2col + ONE MXU matmul --------------------------------------
    patch2 = jnp.concatenate(
        [xpad_ref[dh:dh + H, dw:dw + W, :].reshape(H * W, cm)
         for dh in range(3) for dw in range(3)], axis=-1)          # (H*W, 9*Cm)
    y2 = jnp.dot(patch2, w2_ref[...], preferred_element_type=jnp.float32)
    o_ref[...] = jnp.maximum(y2 + b2_ref[...], 0.0).reshape(1, H, W, cm)


def mask_conv(x_pad, w1col, b1, w2col, b2):
    """x_pad: (B, H+2, W+2, C1) f32 (halo + channel pad already applied)."""
    B, Hp, Wp, C1 = x_pad.shape
    H, W = Hp - 2, Wp - 2
    Cm = w1col.shape[-1]
    return pl.pallas_call(
        partial(_mask_conv_kernel, H=H, W=W),
        out_shape=jax.ShapeDtypeStruct((B, H, W, Cm), jnp.float32),
        grid=(B,),
        in_specs=[
            pl.BlockSpec((1, Hp, Wp, C1), lambda b: (b, 0, 0, 0)),
            pl.BlockSpec((9 * C1, Cm), lambda b: (0, 0)),
            pl.BlockSpec((1, Cm), lambda b: (0, 0)),
            pl.BlockSpec((9 * Cm, Cm), lambda b: (0, 0)),
            pl.BlockSpec((1, Cm), lambda b: (0, 0)),
        ],
        out_specs=pl.BlockSpec((1, H, W, Cm), lambda b: (b, 0, 0, 0)),
        scratch_shapes=[pltpu.VMEM((Hp, Wp, Cm), jnp.float32)],
        compiler_params=pltpu.CompilerParams(
            dimension_semantics=("parallel",)),   # v7x: 2 TCs, one batch elt each
    )(x_pad, w1col, b1, w2col, b2)


# ----------------------------------------------------------------------------
# Kernel B: fused MLP head — mask FC + action encoder + decoder.
# The torch.cat is fused as a split first-layer matmul:
#   concat([mf, af]) @ Wd1 == mf @ Wd1[:Hm] + af @ Wd1[Hm:]
# ----------------------------------------------------------------------------
def _head_kernel(mflat_ref, act_ref,
                 wm_ref, bm_ref,
                 wa1_ref, ba1_ref, wa2_ref, ba2_ref, wa3_ref, ba3_ref,
                 wd1_ref, bd1_ref, wd2_ref, bd2_ref, wd3_ref, bd3_ref,
                 out_ref, *, mask_hidden):
    relu = lambda v: jnp.maximum(v, 0.0)
    dot = lambda a, b: jnp.dot(a, b, preferred_element_type=jnp.float32)

    # mask encoder fc + relu   (wm rows are stored in NHWC-flatten order)
    mf = relu(dot(mflat_ref[...], wm_ref[...]) + bm_ref[...])        # (B, Hm)

    # action encoder: 3x (linear + relu)
    a = relu(dot(act_ref[...], wa1_ref[...]) + ba1_ref[...])
    a = relu(dot(a, wa2_ref[...]) + ba2_ref[...])
    a = relu(dot(a, wa3_ref[...]) + ba3_ref[...])                    # (B, Ha)

    # decoder on concat([mf, a], axis=1)
    w1_m = wd1_ref[:mask_hidden, :]
    w1_a = wd1_ref[mask_hidden:, :]
    d = relu(dot(mf, w1_m) + dot(a, w1_a) + bd1_ref[...])
    d = relu(dot(d, wd2_ref[...]) + bd2_ref[...])
    out_ref[...] = dot(d, wd3_ref[...]) + bd3_ref[...]


def head(mask_flat, actions_padded, params):
    B = mask_flat.shape[0]
    out_dim = params["wd3"].shape[-1]
    args = (mask_flat, actions_padded,
            params["wm"], params["bm"],
            params["wa1"], params["ba1"],
            params["wa2"], params["ba2"],
            params["wa3"], params["ba3"],
            params["wd1"], params["bd1"],
            params["wd2"], params["bd2"],
            params["wd3"], params["bd3"])
    vmem = pl.BlockSpec(memory_space=pltpu.MemorySpace.VMEM)
    return pl.pallas_call(
        partial(_head_kernel, mask_hidden=params["wm"].shape[-1]),
        out_shape=jax.ShapeDtypeStruct((B, out_dim), jnp.float32),
        in_specs=[vmem] * len(args),
        out_specs=vmem,
    )(*args)


# ----------------------------------------------------------------------------
# Parameter init (deterministic, synthetic) in kernel-friendly layouts
# ----------------------------------------------------------------------------
def _round8(n):
    return ((n + 7) // 8) * 8


def init_params(key, num_views, mask_hidden, action_hidden, output_dim,
                action_dim, H, W):
    ks = jax.random.split(key, 18)
    s = 0.05

    cin_pad = _round8(num_views)          # conv1 input channels padded to 8
    act_pad = _round8(action_dim)         # action input dim padded to 8-mult

    def lin(k, i, o):
        return jax.random.normal(k, (i, o), dtype=jnp.float32) * s

    def bias(k, o):
        return jax.random.normal(k, (1, o), dtype=jnp.float32) * 0.01

    # conv weights pre-reshaped to im2col layout (rows ordered (dh, dw, ci));
    # padded input channels get zero weight rows.
    w1 = jnp.zeros((3, 3, cin_pad, mask_hidden), jnp.float32)
    w1 = w1.at[:, :, :num_views, :].set(
        jax.random.normal(ks[0], (3, 3, num_views, mask_hidden),
                          jnp.float32) * s)
    w1col = w1.reshape(9 * cin_pad, mask_hidden)
    w2col = (jax.random.normal(ks[1], (3, 3, mask_hidden, mask_hidden),
                               jnp.float32) * s
             ).reshape(9 * mask_hidden, mask_hidden)

    wa1 = jnp.zeros((act_pad, action_hidden), jnp.float32)
    wa1 = wa1.at[:action_dim, :].set(lin(ks[2], action_dim, action_hidden))

    return dict(
        w1col=w1col, b1=bias(ks[3], mask_hidden),
        w2col=w2col, b2=bias(ks[4], mask_hidden),
        # mask_encoder.fc — rows in NHWC-flatten order (h, w, c).  To import
        # PyTorch weights (NCHW flatten), permute rows once at load time:
        #   wm_nhwc = wm_pt.T.reshape(C, H, W, Hm).transpose(1, 2, 0, 3).reshape(-1, Hm)
        wm=lin(ks[5], mask_hidden * H * W, mask_hidden),
        bm=bias(ks[6], mask_hidden),
        # action encoder
        wa1=wa1, ba1=bias(ks[7], action_hidden),
        wa2=lin(ks[8], action_hidden, action_hidden),
        ba2=bias(ks[9], action_hidden),
        wa3=lin(ks[10], action_hidden, action_hidden),
        ba3=bias(ks[11], action_hidden),
        # decoder
        wd1=lin(ks[12], mask_hidden + action_hidden, action_hidden),
        bd1=bias(ks[13], action_hidden),
        wd2=lin(ks[14], action_hidden, action_hidden),
        bd2=bias(ks[15], action_hidden),
        wd3=lin(ks[16], action_hidden, output_dim),
        bd3=jnp.zeros((1, output_dim), jnp.float32),
    )


# ----------------------------------------------------------------------------
# Full forward
# ----------------------------------------------------------------------------
@jax.jit
def action_prediction_forward(params, mask_images, current_actions):
    # mask_images: (B, num_views, H, W) — PyTorch NCHW; current_actions: (B, 19)
    B, C, H, W = mask_images.shape
    c1 = params["w1col"].shape[0] // 9
    # One tiny XLA fusion on the 6 KiB raw input: NCHW->NHWC, zero channel pad,
    # zero spatial halo.  All conv intermediates stay in VMEM inside kernel A.
    x = jnp.transpose(mask_images, (0, 2, 3, 1)).astype(jnp.float32)
    x = jnp.pad(x, ((0, 0), (1, 1), (1, 1), (0, c1 - C)))
    y = mask_conv(x, params["w1col"], params["b1"],
                  params["w2col"], params["b2"])
    # NHWC flatten of a contiguous array — free reshape; wm rows match this order.
    mask_flat = y.reshape(B, -1)

    a = current_actions.astype(jnp.float32)
    act_pad = params["wa1"].shape[0]
    if act_pad > a.shape[1]:
        a = jnp.pad(a, ((0, 0), (0, act_pad - a.shape[1])))   # zero-weighted rows

    return head(mask_flat, a, params)


# ----------------------------------------------------------------------------
# Pure-JAX reference (same parameters) for a correctness check
# ----------------------------------------------------------------------------
def reference_forward(params, mask_images, current_actions):
    hp = jax.lax.Precision.HIGHEST
    rdot = lambda a, b: jnp.dot(a, b, precision=hp)
    relu = lambda v: jnp.maximum(v, 0.0)

    B, C, H, W = mask_images.shape
    c1 = params["w1col"].shape[0] // 9
    cm = params["w1col"].shape[-1]
    x = jnp.transpose(mask_images, (0, 2, 3, 1)).astype(jnp.float32)
    x = jnp.pad(x, ((0, 0), (0, 0), (0, 0), (0, c1 - C)))
    w1 = params["w1col"].reshape(3, 3, c1, cm)
    w2 = params["w2col"].reshape(3, 3, cm, cm)
    dn = ("NHWC", "HWIO", "NHWC")
    y = jax.lax.conv_general_dilated(x, w1, (1, 1), "SAME",
                                     dimension_numbers=dn, precision=hp)
    y = relu(y + params["b1"].reshape(1, 1, 1, -1))
    y = jax.lax.conv_general_dilated(y, w2, (1, 1), "SAME",
                                     dimension_numbers=dn, precision=hp)
    y = relu(y + params["b2"].reshape(1, 1, 1, -1))
    mf = relu(rdot(y.reshape(B, -1), params["wm"]) + params["bm"])

    a = current_actions.astype(jnp.float32)
    a = relu(rdot(a, params["wa1"][:a.shape[1]]) + params["ba1"])
    a = relu(rdot(a, params["wa2"]) + params["ba2"])
    a = relu(rdot(a, params["wa3"]) + params["ba3"])

    comb = jnp.concatenate([mf, a], axis=1)
    d = relu(rdot(comb, params["wd1"]) + params["bd1"])
    d = relu(rdot(d, params["wd2"]) + params["bd2"])
    return rdot(d, params["wd3"]) + params["bd3"]


if __name__ == "__main__":
    # Small shapes consistent with the module's forward (the PyTorch __init__
    # hardcodes 64*64 in mask_encoder.fc; here the fc input dim is
    # mask_hidden * H * W, consistent with the forward at H=W=16).
    B, num_views, H, W = 2, 3, 16, 16
    mask_hidden, action_hidden, output_dim = 32, 32, 19
    action_dim = 19

    key = jax.random.PRNGKey(0)
    k_params, k_mask, k_act = jax.random.split(key, 3)

    params = init_params(k_params, num_views, mask_hidden, action_hidden,
                         output_dim, action_dim, H, W)
    mask_images = jax.random.normal(k_mask, (B, num_views, H, W),
                                    dtype=jnp.float32)
    current_actions = jax.random.normal(k_act, (B, action_dim),
                                        dtype=jnp.float32)

    out = action_prediction_forward(params, mask_images, current_actions)
    out = jax.block_until_ready(out)
    assert out.shape == (B, output_dim), out.shape
    assert bool(jnp.all(jnp.isfinite(out)))

    ref = reference_forward(params, mask_images, current_actions)
    assert jnp.allclose(out, ref, rtol=2e-2, atol=2e-2), \
        float(jnp.max(jnp.abs(out - ref)))
    print("KERNEL_OK")
</pallas_src>

<mosaic_0001>
module attributes {stable_mosaic.version = 11 : i64} {
  func.func @_mask_conv_kernel(%arg0: i32, %arg1: memref<1x18x18x8xf32, #tpu.memory_space<vmem>>, %arg2: memref<72x32xf32, #tpu.memory_space<vmem>>, %arg3: memref<1x32xf32, #tpu.memory_space<vmem>>, %arg4: memref<288x32xf32, #tpu.memory_space<vmem>>, %arg5: memref<1x32xf32, #tpu.memory_space<vmem>>, %arg6: memref<1x16x16x32xf32, #tpu.memory_space<vmem>>, %arg7: memref<18x18x32xf32, #tpu.memory_space<vmem>>) attributes {dimension_semantics = [#tpu.dimension_semantics<parallel>], iteration_bounds = array<i64: 2>, scalar_prefetch = 0 : i64, scratch_operands = 1 : i64, tpu.core_type = #tpu.core_type<tc>, window_params = [{transform_indices = @transform_0, window_bounds = array<i64: 1, 18, 18, 8>}, {pipeline_mode = #tpu.pipeline_mode<synchronous>, transform_indices = @transform_1, window_bounds = array<i64: 72, 32>}, {pipeline_mode = #tpu.pipeline_mode<synchronous>, transform_indices = @transform_2, window_bounds = array<i64: 1, 32>}, {pipeline_mode = #tpu.pipeline_mode<synchronous>, transform_indices = @transform_3, window_bounds = array<i64: 288, 32>}, {pipeline_mode = #tpu.pipeline_mode<synchronous>, transform_indices = @transform_4, window_bounds = array<i64: 1, 32>}, {transform_indices = @transform_5, window_bounds = array<i64: 1, 16, 16, 32>}]} {
    %c0 = arith.constant 0 : index
    %c0_0 = arith.constant 0 : index
    %c0_1 = arith.constant 0 : index
    %c0_2 = arith.constant 0 : index
    %0 = vector.load %arg1[%c0, %c0_0, %c0_1, %c0_2] : memref<1x18x18x8xf32, #tpu.memory_space<vmem>>, vector<1x18x18x8xf32>
    %1 = vector.shape_cast %0 : vector<1x18x18x8xf32> to vector<18x18x8xf32>
    %2 = vector.extract_strided_slice %1 {offsets = [0, 0, 0], sizes = [16, 16, 8], strides = [1, 1, 1]} : vector<18x18x8xf32> to vector<16x16x8xf32>
    %3 = vector.shape_cast %2 : vector<16x16x8xf32> to vector<256x8xf32>
    %4 = vector.extract_strided_slice %1 {offsets = [0, 1, 0], sizes = [16, 16, 8], strides = [1, 1, 1]} : vector<18x18x8xf32> to vector<16x16x8xf32>
    %5 = vector.shape_cast %4 : vector<16x16x8xf32> to vector<256x8xf32>
    %6 = vector.extract_strided_slice %1 {offsets = [0, 2, 0], sizes = [16, 16, 8], strides = [1, 1, 1]} : vector<18x18x8xf32> to vector<16x16x8xf32>
    %7 = vector.shape_cast %6 : vector<16x16x8xf32> to vector<256x8xf32>
    %8 = vector.extract_strided_slice %1 {offsets = [1, 0, 0], sizes = [16, 16, 8], strides = [1, 1, 1]} : vector<18x18x8xf32> to vector<16x16x8xf32>
    %9 = vector.shape_cast %8 : vector<16x16x8xf32> to vector<256x8xf32>
    %10 = vector.extract_strided_slice %1 {offsets = [1, 1, 0], sizes = [16, 16, 8], strides = [1, 1, 1]} : vector<18x18x8xf32> to vector<16x16x8xf32>
    %11 = vector.shape_cast %10 : vector<16x16x8xf32> to vector<256x8xf32>
    %12 = vector.extract_strided_slice %1 {offsets = [1, 2, 0], sizes = [16, 16, 8], strides = [1, 1, 1]} : vector<18x18x8xf32> to vector<16x16x8xf32>
    %13 = vector.shape_cast %12 : vector<16x16x8xf32> to vector<256x8xf32>
    %14 = vector.extract_strided_slice %1 {offsets = [2, 0, 0], sizes = [16, 16, 8], strides = [1, 1, 1]} : vector<18x18x8xf32> to vector<16x16x8xf32>
    %15 = vector.shape_cast %14 : vector<16x16x8xf32> to vector<256x8xf32>
    %16 = vector.extract_strided_slice %1 {offsets = [2, 1, 0], sizes = [16, 16, 8], strides = [1, 1, 1]} : vector<18x18x8xf32> to vector<16x16x8xf32>
    %17 = vector.shape_cast %16 : vector<16x16x8xf32> to vector<256x8xf32>
    %18 = vector.extract_strided_slice %1 {offsets = [2, 2, 0], sizes = [16, 16, 8], strides = [1, 1, 1]} : vector<18x18x8xf32> to vector<16x16x8xf32>
    %19 = vector.shape_cast %18 : vector<16x16x8xf32> to vector<256x8xf32>
    %20 = tpu.concatenate %3, %5, %7, %9, %11, %13, %15, %17, %19 in 1 : vector<256x8xf32>, vector<256x8xf32>, vector<256x8xf32>, vector<256x8xf32>, vector<256x8xf32>, vector<256x8xf32>, vector<256x8xf32>, vector<256x8xf32>, vector<256x8xf32> -> vector<256x72xf32>
    %c0_3 = arith.constant 0 : index
    %c0_4 = arith.constant 0 : index
    %21 = vector.load %arg2[%c0_3, %c0_4] : memref<72x32xf32, #tpu.memory_space<vmem>>, vector<72x32xf32>
    %cst = arith.constant dense<0.000000e+00> : vector<256x32xf32>
    %22 = tpu.matmul %20, %21, %cst {dimension_numbers = #tpu.dot_dimension_numbers<[1], [0], [0], [1], [0, 0, 1, 1], [], []>} : vector<256x72xf32>, vector<72x32xf32>, vector<256x32xf32> -> vector<256x32xf32>
    %c0_5 = arith.constant 0 : index
    %c0_6 = arith.constant 0 : index
    %23 = vector.load %arg3[%c0_5, %c0_6] : memref<1x32xf32, #tpu.memory_space<vmem>>, vector<1x32xf32>
    %24 = vector.broadcast %23 : vector<1x32xf32> to vector<256x32xf32>
    %25 = arith.addf %22, %24 : vector<256x32xf32>
    %cst_7 = arith.constant 0.000000e+00 : f32
    %26 = vector.broadcast %cst_7 : f32 to vector<256x32xf32>
    %27 = arith.maximumf %25, %26 : vector<256x32xf32>
    %cst_8 = arith.constant 0.000000e+00 : f32
    %28 = vector.broadcast %cst_8 : f32 to vector<18x18x32xf32>
    %c0_9 = arith.constant 0 : index
    %c0_10 = arith.constant 0 : index
    %c0_11 = arith.constant 0 : index
    %29 = vector.load %arg7[%c0_9, %c0_10, %c0_11] : memref<18x18x32xf32, #tpu.memory_space<vmem>>, vector<18x18x32xf32>
    tpu.vector_store %arg7[%c0_9, %c0_10, %c0_11], %28 {strides = array<i32>} : memref<18x18x32xf32, #tpu.memory_space<vmem>>, vector<18x18x32xf32>,
    %30 = vector.shape_cast %27 : vector<256x32xf32> to vector<16x16x32xf32>
    %c1 = arith.constant 1 : index
    %c1_12 = arith.constant 1 : index
    %c0_13 = arith.constant 0 : index
    %31 = vector.load %arg7[%c1, %c1_12, %c0_13] : memref<18x18x32xf32, #tpu.memory_space<vmem>>, vector<16x16x32xf32>
    tpu.vector_store %arg7[%c1, %c1_12, %c0_13], %30 {strides = array<i32>} : memref<18x18x32xf32, #tpu.memory_space<vmem>>, vector<16x16x32xf32>,
    %c0_14 = arith.constant 0 : index
    %c0_15 = arith.constant 0 : index
    %c0_16 = arith.constant 0 : index
    %32 = vector.load %arg7[%c0_14, %c0_15, %c0_16] : memref<18x18x32xf32, #tpu.memory_space<vmem>>, vector<16x16x32xf32>
    %33 = vector.shape_cast %32 : vector<16x16x32xf32> to vector<256x32xf32>
    %c0_17 = arith.constant 0 : index
    %c1_18 = arith.constant 1 : index
    %c0_19 = arith.constant 0 : index
    %34 = vector.load %arg7[%c0_17, %c1_18, %c0_19] : memref<18x18x32xf32, #tpu.memory_space<vmem>>, vector<16x16x32xf32>
    %35 = vector.shape_cast %34 : vector<16x16x32xf32> to vector<256x32xf32>
    %c0_20 = arith.constant 0 : index
    %c2 = arith.constant 2 : index
    %c0_21 = arith.constant 0 : index
    %36 = vector.load %arg7[%c0_20, %c2, %c0_21] : memref<18x18x32xf32, #tpu.memory_space<vmem>>, vector<16x16x32xf32>
    %37 = vector.shape_cast %36 : vector<16x16x32xf32> to vector<256x32xf32>
    %c1_22 = arith.constant 1 : index
    %c0_23 = arith.constant 0 : index
    %c0_24 = arith.constant 0 : index
    %38 = vector.load %arg7[%c1_22, %c0_23, %c0_24] : memref<18x18x32xf32, #tpu.memory_space<vmem>>, vector<16x16x32xf32>
    %39 = vector.shape_cast %38 : vector<16x16x32xf32> to vector<256x32xf32>
    %c1_25 = arith.constant 1 : index
    %c1_26 = arith.constant 1 : index
    %c0_27 = arith.constant 0 : index
    %40 = vector.load %arg7[%c1_25, %c1_26, %c0_27] : memref<18x18x32xf32, #tpu.memory_space<vmem>>, vector<16x16x32xf32>
    %41 = vector.shape_cast %40 : vector<16x16x32xf32> to vector<256x32xf32>
    %c1_28 = arith.constant 1 : index
    %c2_29 = arith.constant 2 : index
    %c0_30 = arith.constant 0 : index
    %42 = vector.load %arg7[%c1_28, %c2_29, %c0_30] : memref<18x18x32xf32, #tpu.memory_space<vmem>>, vector<16x16x32xf32>
    %43 = vector.shape_cast %42 : vector<16x16x32xf32> to vector<256x32xf32>
    %c2_31 = arith.constant 2 : index
    %c0_32 = arith.constant 0 : index
    %c0_33 = arith.constant 0 : index
    %44 = vector.load %arg7[%c2_31, %c0_32, %c0_33] : memref<18x18x32xf32, #tpu.memory_space<vmem>>, vector<16x16x32xf32>
    %45 = vector.shape_cast %44 : vector<16x16x32xf32> to vector<256x32xf32>
    %c2_34 = arith.constant 2 : index
    %c1_35 = arith.constant 1 : index
    %c0_36 = arith.constant 0 : index
    %46 = vector.load %arg7[%c2_34, %c1_35, %c0_36] : memref<18x18x32xf32, #tpu.memory_space<vmem>>, vector<16x16x32xf32>
    %47 = vector.shape_cast %46 : vector<16x16x32xf32> to vector<256x32xf32>
    %c2_37 = arith.constant 2 : index
    %c2_38 = arith.constant 2 : index
    %c0_39 = arith.constant 0 : index
    %48 = vector.load %arg7[%c2_37, %c2_38, %c0_39] : memref<18x18x32xf32, #tpu.memory_space<vmem>>, vector<16x16x32xf32>
    %49 = vector.shape_cast %48 : vector<16x16x32xf32> to vector<256x32xf32>
    %50 = tpu.concatenate %33, %35, %37, %39, %41, %43, %45, %47, %49 in 1 : vector<256x32xf32>, vector<256x32xf32>, vector<256x32xf32>, vector<256x32xf32>, vector<256x32xf32>, vector<256x32xf32>, vector<256x32xf32>, vector<256x32xf32>, vector<256x32xf32> -> vector<256x288xf32>
    %c0_40 = arith.constant 0 : index
    %c0_41 = arith.constant 0 : index
    %51 = vector.load %arg4[%c0_40, %c0_41] : memref<288x32xf32, #tpu.memory_space<vmem>>, vector<288x32xf32>
    %cst_42 = arith.constant dense<0.000000e+00> : vector<256x32xf32>
    %52 = tpu.matmul %50, %51, %cst_42 {dimension_numbers = #tpu.dot_dimension_numbers<[1], [0], [0], [1], [0, 0, 1, 1], [], []>} : vector<256x288xf32>, vector<288x32xf32>, vector<256x32xf32> -> vector<256x32xf32>
    %c0_43 = arith.constant 0 : index
    %c0_44 = arith.constant 0 : index
    %53 = vector.load %arg5[%c0_43, %c0_44] : memref<1x32xf32, #tpu.memory_space<vmem>>, vector<1x32xf32>
    %54 = vector.broadcast %53 : vector<1x32xf32> to vector<256x32xf32>
    %55 = arith.addf %52, %54 : vector<256x32xf32>
    %cst_45 = arith.constant 0.000000e+00 : f32
    %56 = vector.broadcast %cst_45 : f32 to vector<256x32xf32>
    %57 = arith.maximumf %55, %56 : vector<256x32xf32>
    %58 = vector.shape_cast %57 : vector<256x32xf32> to vector<1x16x16x32xf32>
    %c0_46 = arith.constant 0 : index
    %c0_47 = arith.constant 0 : index
    %c0_48 = arith.constant 0 : index
    %c0_49 = arith.constant 0 : index
    %59 = vector.load %arg6[%c0_46, %c0_47, %c0_48, %c0_49] : memref<1x16x16x32xf32, #tpu.memory_space<vmem>>, vector<1x16x16x32xf32>
    tpu.vector_store %arg6[%c0_46, %c0_47, %c0_48, %c0_49], %58 {strides = array<i32>} : memref<1x16x16x32xf32, #tpu.memory_space<vmem>>, vector<1x16x16x32xf32>,
    return
  }
  func.func @transform_0(%arg0: i32) -> (i32, i32, i32, i32) {
    %c0_i32 = arith.constant 0 : i32
    %c0_i32_0 = arith.constant 0 : i32
    %c0_i32_1 = arith.constant 0 : i32
    %c0_i32_2 = arith.constant 0 : i32
    return %arg0, %c0_i32, %c0_i32_0, %c0_i32_1 : i32, i32, i32, i32
  }
  func.func @transform_1(%arg0: i32) -> (i32, i32) {
    %c0_i32 = arith.constant 0 : i32
    %c0_i32_0 = arith.constant 0 : i32
    %c0_i32_1 = arith.constant 0 : i32
    return %c0_i32, %c0_i32_0 : i32, i32
  }
  func.func @transform_2(%arg0: i32) -> (i32, i32) {
    %c0_i32 = arith.constant 0 : i32
    %c0_i32_0 = arith.constant 0 : i32
    %c0_i32_1 = arith.constant 0 : i32
    return %c0_i32, %c0_i32_0 : i32, i32
  }
  func.func @transform_3(%arg0: i32) -> (i32, i32) {
    %c0_i32 = arith.constant 0 : i32
    %c0_i32_0 = arith.constant 0 : i32
    %c0_i32_1 = arith.constant 0 : i32
    return %c0_i32, %c0_i32_0 : i32, i32
  }
  func.func @transform_4(%arg0: i32) -> (i32, i32) {
    %c0_i32 = arith.constant 0 : i32
    %c0_i32_0 = arith.constant 0 : i32
    %c0_i32_1 = arith.constant 0 : i32
    return %c0_i32, %c0_i32_0 : i32, i32
  }
  func.func @transform_5(%arg0: i32) -> (i32, i32, i32, i32) {
    %c0_i32 = arith.constant 0 : i32
    %c0_i32_0 = arith.constant 0 : i32
    %c0_i32_1 = arith.constant 0 : i32
    %c0_i32_2 = arith.constant 0 : i32
    return %arg0, %c0_i32, %c0_i32_0, %c0_i32_1 : i32, i32, i32, i32
  }
}

module attributes {stable_mosaic.version = 11 : i64} {
  func.func @_head_kernel(%arg0: memref<2x8192xf32, #tpu.memory_space<vmem>>, %arg1: memref<2x24xf32, #tpu.memory_space<vmem>>, %arg2: memref<8192x32xf32, #tpu.memory_space<vmem>>, %arg3: memref<1x32xf32, #tpu.memory_space<vmem>>, %arg4: memref<24x32xf32, #tpu.memory_space<vmem>>, %arg5: memref<1x32xf32, #tpu.memory_space<vmem>>, %arg6: memref<32x32xf32, #tpu.memory_space<vmem>>, %arg7: memref<1x32xf32, #tpu.memory_space<vmem>>, %arg8: memref<32x32xf32, #tpu.memory_space<vmem>>, %arg9: memref<1x32xf32, #tpu.memory_space<vmem>>, %arg10: memref<64x32xf32, #tpu.memory_space<vmem>>, %arg11: memref<1x32xf32, #tpu.memory_space<vmem>>, %arg12: memref<32x32xf32, #tpu.memory_space<vmem>>, %arg13: memref<1x32xf32, #tpu.memory_space<vmem>>, %arg14: memref<32x19xf32, #tpu.memory_space<vmem>>, %arg15: memref<1x19xf32, #tpu.memory_space<vmem>>, %arg16: memref<2x19xf32, #tpu.memory_space<vmem>>) attributes {dimension_semantics = [], scalar_prefetch = 0 : i64, scratch_operands = 0 : i64, tpu.core_type = #tpu.core_type<tc>} {
    %c0 = arith.constant 0 : index
    %c0_0 = arith.constant 0 : index
    %0 = vector.load %arg0[%c0, %c0_0] : memref<2x8192xf32, #tpu.memory_space<vmem>>, vector<2x8192xf32>
    %c0_1 = arith.constant 0 : index
    %c0_2 = arith.constant 0 : index
    %1 = vector.load %arg2[%c0_1, %c0_2] : memref<8192x32xf32, #tpu.memory_space<vmem>>, vector<8192x32xf32>
    %cst = arith.constant dense<0.000000e+00> : vector<2x32xf32>
    %2 = tpu.matmul %0, %1, %cst {dimension_numbers = #tpu.dot_dimension_numbers<[1], [0], [0], [1], [0, 0, 1, 1], [], []>} : vector<2x8192xf32>, vector<8192x32xf32>, vector<2x32xf32> -> vector<2x32xf32>
    %c0_3 = arith.constant 0 : index
    %c0_4 = arith.constant 0 : index
    %3 = vector.load %arg3[%c0_3, %c0_4] : memref<1x32xf32, #tpu.memory_space<vmem>>, vector<1x32xf32>
    %4 = vector.broadcast %3 : vector<1x32xf32> to vector<2x32xf32>
    %5 = arith.addf %2, %4 : vector<2x32xf32>
    %cst_5 = arith.constant 0.000000e+00 : f32
    %6 = vector.broadcast %cst_5 : f32 to vector<2x32xf32>
    %7 = arith.maximumf %5, %6 : vector<2x32xf32>
    %c0_6 = arith.constant 0 : index
    %c0_7 = arith.constant 0 : index
    %8 = vector.load %arg1[%c0_6, %c0_7] : memref<2x24xf32, #tpu.memory_space<vmem>>, vector<2x24xf32>
    %c0_8 = arith.constant 0 : index
    %c0_9 = arith.constant 0 : index
    %9 = vector.load %arg4[%c0_8, %c0_9] : memref<24x32xf32, #tpu.memory_space<vmem>>, vector<24x32xf32>
    %cst_10 = arith.constant dense<0.000000e+00> : vector<2x32xf32>
    %10 = tpu.matmul %8, %9, %cst_10 {dimension_numbers = #tpu.dot_dimension_numbers<[1], [0], [0], [1], [0, 0, 1, 1], [], []>} : vector<2x24xf32>, vector<24x32xf32>, vector<2x32xf32> -> vector<2x32xf32>
    %c0_11 = arith.constant 0 : index
    %c0_12 = arith.constant 0 : index
    %11 = vector.load %arg5[%c0_11, %c0_12] : memref<1x32xf32, #tpu.memory_space<vmem>>, vector<1x32xf32>
    %12 = vector.broadcast %11 : vector<1x32xf32> to vector<2x32xf32>
    %13 = arith.addf %10, %12 : vector<2x32xf32>
    %cst_13 = arith.constant 0.000000e+00 : f32
    %14 = vector.broadcast %cst_13 : f32 to vector<2x32xf32>
    %15 = arith.maximumf %13, %14 : vector<2x32xf32>
    %c0_14 = arith.constant 0 : index
    %c0_15 = arith.constant 0 : index
    %16 = vector.load %arg6[%c0_14, %c0_15] : memref<32x32xf32, #tpu.memory_space<vmem>>, vector<32x32xf32>
    %cst_16 = arith.constant dense<0.000000e+00> : vector<2x32xf32>
    %17 = tpu.matmul %15, %16, %cst_16 {dimension_numbers = #tpu.dot_dimension_numbers<[1], [0], [0], [1], [0, 0, 1, 1], [], []>} : vector<2x32xf32>, vector<32x32xf32>, vector<2x32xf32> -> vector<2x32xf32>
    %c0_17 = arith.constant 0 : index
    %c0_18 = arith.constant 0 : index
    %18 = vector.load %arg7[%c0_17, %c0_18] : memref<1x32xf32, #tpu.memory_space<vmem>>, vector<1x32xf32>
    %19 = vector.broadcast %18 : vector<1x32xf32> to vector<2x32xf32>
    %20 = arith.addf %17, %19 : vector<2x32xf32>
    %cst_19 = arith.constant 0.000000e+00 : f32
    %21 = vector.broadcast %cst_19 : f32 to vector<2x32xf32>
    %22 = arith.maximumf %20, %21 : vector<2x32xf32>
    %c0_20 = arith.constant 0 : index
    %c0_21 = arith.constant 0 : index
    %23 = vector.load %arg8[%c0_20, %c0_21] : memref<32x32xf32, #tpu.memory_space<vmem>>, vector<32x32xf32>
    %cst_22 = arith.constant dense<0.000000e+00> : vector<2x32xf32>
    %24 = tpu.matmul %22, %23, %cst_22 {dimension_numbers = #tpu.dot_dimension_numbers<[1], [0], [0], [1], [0, 0, 1, 1], [], []>} : vector<2x32xf32>, vector<32x32xf32>, vector<2x32xf32> -> vector<2x32xf32>
    %c0_23 = arith.constant 0 : index
    %c0_24 = arith.constant 0 : index
    %25 = vector.load %arg9[%c0_23, %c0_24] : memref<1x32xf32, #tpu.memory_space<vmem>>, vector<1x32xf32>
    %26 = vector.broadcast %25 : vector<1x32xf32> to vector<2x32xf32>
    %27 = arith.addf %24, %26 : vector<2x32xf32>
    %cst_25 = arith.constant 0.000000e+00 : f32
    %28 = vector.broadcast %cst_25 : f32 to vector<2x32xf32>
    %29 = arith.maximumf %27, %28 : vector<2x32xf32>
    %c0_26 = arith.constant 0 : index
    %c0_27 = arith.constant 0 : index
    %30 = vector.load %arg10[%c0_26, %c0_27] : memref<64x32xf32, #tpu.memory_space<vmem>>, vector<32x32xf32>
    %c32 = arith.constant 32 : index
    %c0_28 = arith.constant 0 : index
    %31 = vector.load %arg10[%c32, %c0_28] : memref<64x32xf32, #tpu.memory_space<vmem>>, vector<32x32xf32>
    %cst_29 = arith.constant dense<0.000000e+00> : vector<2x32xf32>
    %32 = tpu.matmul %7, %30, %cst_29 {dimension_numbers = #tpu.dot_dimension_numbers<[1], [0], [0], [1], [0, 0, 1, 1], [], []>} : vector<2x32xf32>, vector<32x32xf32>, vector<2x32xf32> -> vector<2x32xf32>
    %cst_30 = arith.constant dense<0.000000e+00> : vector<2x32xf32>
    %33 = tpu.matmul %29, %31, %cst_30 {dimension_numbers = #tpu.dot_dimension_numbers<[1], [0], [0], [1], [0, 0, 1, 1], [], []>} : vector<2x32xf32>, vector<32x32xf32>, vector<2x32xf32> -> vector<2x32xf32>
    %34 = arith.addf %32, %33 : vector<2x32xf32>
    %c0_31 = arith.constant 0 : index
    %c0_32 = arith.constant 0 : index
    %35 = vector.load %arg11[%c0_31, %c0_32] : memref<1x32xf32, #tpu.memory_space<vmem>>, vector<1x32xf32>
    %36 = vector.broadcast %35 : vector<1x32xf32> to vector<2x32xf32>
    %37 = arith.addf %34, %36 : vector<2x32xf32>
    %cst_33 = arith.constant 0.000000e+00 : f32
    %38 = vector.broadcast %cst_33 : f32 to vector<2x32xf32>
    %39 = arith.maximumf %37, %38 : vector<2x32xf32>
    %c0_34 = arith.constant 0 : index
    %c0_35 = arith.constant 0 : index
    %40 = vector.load %arg12[%c0_34, %c0_35] : memref<32x32xf32, #tpu.memory_space<vmem>>, vector<32x32xf32>
    %cst_36 = arith.constant dense<0.000000e+00> : vector<2x32xf32>
    %41 = tpu.matmul %39, %40, %cst_36 {dimension_numbers = #tpu.dot_dimension_numbers<[1], [0], [0], [1], [0, 0, 1, 1], [], []>} : vector<2x32xf32>, vector<32x32xf32>, vector<2x32xf32> -> vector<2x32xf32>
    %c0_37 = arith.constant 0 : index
    %c0_38 = arith.constant 0 : index
    %42 = vector.load %arg13[%c0_37, %c0_38] : memref<1x32xf32, #tpu.memory_space<vmem>>, vector<1x32xf32>
    %43 = vector.broadcast %42 : vector<1x32xf32> to vector<2x32xf32>
    %44 = arith.addf %41, %43 : vector<2x32xf32>
    %cst_39 = arith.constant 0.000000e+00 : f32
    %45 = vector.broadcast %cst_39 : f32 to vector<2x32xf32>
    %46 = arith.maximumf %44, %45 : vector<2x32xf32>
    %c0_40 = arith.constant 0 : index
    %c0_41 = arith.constant 0 : index
    %47 = vector.load %arg14[%c0_40, %c0_41] : memref<32x19xf32, #tpu.memory_space<vmem>>, vector<32x19xf32>
    %cst_42 = arith.constant dense<0.000000e+00> : vector<2x19xf32>
    %48 = tpu.matmul %46, %47, %cst_42 {dimension_numbers = #tpu.dot_dimension_numbers<[1], [0], [0], [1], [0, 0, 1, 1], [], []>} : vector<2x32xf32>, vector<32x19xf32>, vector<2x19xf32> -> vector<2x19xf32>
    %c0_43 = arith.constant 0 : index
    %c0_44 = arith.constant 0 : index
    %49 = vector.load %arg15[%c0_43, %c0_44] : memref<1x19xf32, #tpu.memory_space<vmem>>, vector<1x19xf32>
    %50 = vector.broadcast %49 : vector<1x19xf32> to vector<2x19xf32>
    %51 = arith.addf %48, %50 : vector<2x19xf32>
    %c0_45 = arith.constant 0 : index
    %c0_46 = arith.constant 0 : index
    %52 = vector.load %arg16[%c0_45, %c0_46] : memref<2x19xf32, #tpu.memory_space<vmem>>, vector<2x19xf32>
    tpu.vector_store %arg16[%c0_45, %c0_46], %51 {strides = array<i32>} : memref<2x19xf32, #tpu.memory_space<vmem>>, vector<2x19xf32>,
    return
  }
}

</mosaic_0001>

<llo_original>
// kernel: action_prediction_forward.2
$region0: #{action_prediction_forward.2}
  #allocation0 [shape = 'u32[]', space=smem, size = 0x4, offset = 0x4, fixed_abs, tag = 'smem constant byte address 0x4 - core index']
  #allocation1 [shape = 'u32[144,128]{1,0:T(1,128)}', space=vmem, size = 0x12000, scoped, tag = 'internal scratch']
  #allocation2 [shape = 'f32[18,18,32]{2,1,0:T(8,128)}', space=vmem, size = 0x36000, scoped, tag = 'scratch operand']
  %s0 = inlined_call_operand.vmem [shape: f32[2,18,18,8], index: 0, kind: input, shape index: {}]
  %s1 = inlined_call_operand.vmem [shape: f32[72,32], index: 1, kind: input, shape index: {}]
  %s2 = inlined_call_operand.hbm [shape: f32[1,32], index: 2, kind: input, shape index: {}]
  %s3 = inlined_call_operand.vmem [shape: f32[288,32], index: 3, kind: input, shape index: {}]
  %s4 = inlined_call_operand.hbm [shape: f32[1,32], index: 4, kind: input, shape index: {}]
  %s5 = inlined_call_operand.vmem [shape: f32[2,16,16,32], index: 5, kind: output, shape index: {}]
  %s6 = sld [smem:[#allocation0]]
  $region61: #{action_prediction_forward.2} parent=0
    _
  %s8 = ssub.s32 1, %s6
  %s9 = scalar_select 0, %s8, %s6
  $region1: #{action_prediction_forward.2} parent=0
    #allocation3 [shape = 'u8[512]{0}', space=vmem, size = 0x400, scoped, tag = 'input window, operand 2, single buffered']
    #allocation4 [shape = 's32[2]{0}', space=sflag, size = 0x8, scoped, tag = 'scoped memory for action_prediction_forward.2']
    #allocation5 [shape = 'u8[512]{0}', space=vmem, size = 0x400, scoped, tag = 'input window, operand 4, single buffered']
    #allocation6 [shape = 's32[1]{0}', space=sflag, size = 0x4, scoped, tag = 'scoped memory for action_prediction_forward.2']
    %10 = vsyncpa [#allocation4], 0
    %11 = vsyncpa [#allocation6], 0
    loop: start=0, step=1, limit=4
    $region2: #{action_prediction_forward.2} parent=1 // loop_pre_header
      _
    $region3: #{action_prediction_forward.2} parent=1 // loop_header
      %s13 = sphi 0, %s17
      %p14 = scmp.ge.s32.totalorder %s13, 4
      %s23 = sphi 0, %s25
      %s26 = sphi 0, %s23
      %s27 = sphi 0, %s26
      %s43 = sphi 0, %s27
      %s47 = sphi 0, %s47
      %s49 = sphi 0, %s47
      %s50 = sphi 0, %s49
      %s64 = sphi 0, %s50
      %s68 = sphi 0, %s68
      %s70 = sphi 0, %s68
      %s71 = sphi 0, %s70
      %s85 = sphi 0, %s71
      %s89 = sphi 0, %s89
      %s91 = sphi 0, %s89
      %s92 = sphi 0, %s91
      %s106 = sphi 0, %s92
      %s110 = sphi 0, %s110
      %s112 = sphi 0, %s110
      %s113 = sphi 0, %s112
      %s127 = sphi 0, %s113
      %s133 = sphi 0, %s135
      %s136 = sphi 0, %s133
      %s137 = sphi 0, %s136
      %s153 = sphi 0, %s137
    $region4: #{action_prediction_forward.2} parent=1 // loop_header_branch
      %16 = sbr.rel (%p14) target = $region8
    $region5: #{action_prediction_forward.2} parent=1 // loop_body
      %s18 = ssub.s32 %s13, 1
      %s19 = ssub.s32 %s13, 2
      %s20 = sadd.s32 %s13, 1
      %s21 = ssub.s32 %s13, %s20
      %p22 = scmp.eq.s32.totalorder %s21, 0
      %s24 = sadd.s32 %s23, 1
      %s25 = scalar_select %p22, %s23, %s24
      %p28 = pneg %p22
      %p29 = scmp.eq.s32.totalorder %s13, 1
      %p30 = por %p28, %p29
      %p31 = scmp.ne.s32.totalorder %s23, %s26
      %p32 = scmp.eq.s32.totalorder %s13, 0
      %p33 = por %p31, %p32
      %p34 = scmp.ne.s32.totalorder %s23, %s26
      %p35 = scmp.eq.s32.totalorder %s18, 1
      %p36 = por %p34, %p35
      %p37 = scmp.ne.s32.totalorder %s26, %s27
      %p38 = scmp.eq.s32.totalorder %s18, 0
      %p39 = por %p37, %p38
      %p40 = scmp.ne.s32.totalorder %s26, %s27
      %p41 = scmp.eq.s32.totalorder %s19, 1
      %p42 = por %p40, %p41
      %p44 = scmp.ne.s32.totalorder %s27, %s43
      %p45 = scmp.eq.s32.totalorder %s19, 0
      %p46 = por %p44, %p45
      %s48 = sadd.s32 %s47, 1
      %p51 = scmp.eq.s32.totalorder %s13, 1
      %p52 = scmp.ne.s32.totalorder %s47, %s49
      %p53 = scmp.eq.s32.totalorder %s13, 0
      %p54 = por %p52, %p53
      %p55 = scmp.ne.s32.totalorder %s47, %s49
      %p56 = scmp.eq.s32.totalorder %s18, 1
      %p57 = por %p55, %p56
      %p58 = scmp.ne.s32.totalorder %s49, %s50
      %p59 = scmp.eq.s32.totalorder %s18, 0
      %p60 = por %p58, %p59
      %p61 = scmp.ne.s32.totalorder %s49, %s50
      %p62 = scmp.eq.s32.totalorder %s19, 1
      %p63 = por %p61, %p62
      %p65 = scmp.ne.s32.totalorder %s50, %s64
      %p66 = scmp.eq.s32.totalorder %s19, 0
      %p67 = por %p65, %p66
      %s69 = sadd.s32 %s68, 1
      %p72 = scmp.eq.s32.totalorder %s13, 1
      %p73 = scmp.ne.s32.totalorder %s68, %s70
      %p74 = scmp.eq.s32.totalorder %s13, 0
      %p75 = por %p73, %p74
      %p76 = scmp.ne.s32.totalorder %s68, %s70
      %p77 = scmp.eq.s32.totalorder %s18, 1
      %p78 = por %p76, %p77
      %p79 = scmp.ne.s32.totalorder %s70, %s71
      %p80 = scmp.eq.s32.totalorder %s18, 0
      %p81 = por %p79, %p80
      %p82 = scmp.ne.s32.totalorder %s70, %s71
      %p83 = scmp.eq.s32.totalorder %s19, 1
      %p84 = por %p82, %p83
      %p86 = scmp.ne.s32.totalorder %s71, %s85
      %p87 = scmp.eq.s32.totalorder %s19, 0
      %p88 = por %p86, %p87
      %s90 = sadd.s32 %s89, 1
      %p93 = scmp.eq.s32.totalorder %s13, 1
      %p94 = scmp.ne.s32.totalorder %s89, %s91
      %p95 = scmp.eq.s32.totalorder %s13, 0
      %p96 = por %p94, %p95
      %p97 = scmp.ne.s32.totalorder %s89, %s91
      %p98 = scmp.eq.s32.totalorder %s18, 1
      %p99 = por %p97, %p98
      %p100 = scmp.ne.s32.totalorder %s91, %s92
      %p101 = scmp.eq.s32.totalorder %s18, 0
      %p102 = por %p100, %p101
      %p103 = scmp.ne.s32.totalorder %s91, %s92
      %p104 = scmp.eq.s32.totalorder %s19, 1
      %p105 = por %p103, %p104
      %p107 = scmp.ne.s32.totalorder %s92, %s106
      %p108 = scmp.eq.s32.totalorder %s19, 0
      %p109 = por %p107, %p108
      %s111 = sadd.s32 %s110, 1
      %p114 = scmp.eq.s32.totalorder %s13, 1
      %p115 = scmp.ne.s32.totalorder %s110, %s112
      %p116 = scmp.eq.s32.totalorder %s13, 0
      %p117 = por %p115, %p116
      %p118 = scmp.ne.s32.totalorder %s110, %s112
      %p119 = scmp.eq.s32.totalorder %s18, 1
      %p120 = por %p118, %p119
      %p121 = scmp.ne.s32.totalorder %s112, %s113
      %p122 = scmp.eq.s32.totalorder %s18, 0
      %p123 = por %p121, %p122
      %p124 = scmp.ne.s32.totalorder %s112, %s113
      %p125 = scmp.eq.s32.totalorder %s19, 1
      %p126 = por %p124, %p125
      %p128 = scmp.ne.s32.totalorder %s113, %s127
      %p129 = scmp.eq.s32.totalorder %s19, 0
      %p130 = por %p128, %p129
      %s131 = ssub.s32 %s13, %s20
      %p132 = scmp.eq.s32.totalorder %s131, 0
      %s134 = sadd.s32 %s133, 1
      %s135 = scalar_select %p132, %s133, %s134
      %p138 = pneg %p132
      %p139 = scmp.eq.s32.totalorder %s13, 1
      %p140 = por %p138, %p139
      %p141 = scmp.ne.s32.totalorder %s133, %s136
      %p142 = scmp.eq.s32.totalorder %s13, 0
      %p143 = por %p141, %p142
      %p144 = scmp.ne.s32.totalorder %s133, %s136
      %p145 = scmp.eq.s32.totalorder %s18, 1
      %p146 = por %p144, %p145
      %p147 = scmp.ne.s32.totalorder %s136, %s137
      %p148 = scmp.eq.s32.totalorder %s18, 0
      %p149 = por %p147, %p148
      %p150 = scmp.ne.s32.totalorder %s136, %s137
      %p151 = scmp.eq.s32.totalorder %s19, 1
      %p152 = por %p150, %p151
      %p154 = scmp.ne.s32.totalorder %s137, %s153
      %p155 = scmp.eq.s32.totalorder %s19, 0
      %p156 = por %p154, %p155
      %p157 = scmp.le.s32.totalorder 1, %s13
      %p158 = scmp.lt.s32.totalorder %s13, 3
      %p159 = pnand %p157, %p158
      %p160 = pneg %p159
      // Predicated region
      $region9: #{action_prediction_forward.2} parent=5 // pred_check
        _
      $region10: #{action_prediction_forward.2} parent=5 // pred_check_branch
        %162 = sbr.rel (%p159) target = $region12
      $region11: #{action_prediction_forward.2} parent=5 // pred_region
        %s163 = ssub.s32 %s13, 1
        // Predicated region
        $region13: #{action_prediction_forward.2} parent=11 // pred_check
          %p164 = pneg %p60
        $region14: #{action_prediction_forward.2} parent=11 // pred_check_branch
          %166 = sbr.rel (%p164) target = $region16
        $region15: #{action_prediction_forward.2} parent=11 // pred_region
          _
        $region16: #{action_prediction_forward.2} parent=11 // pred_fallthru
          _
        // Predicated region
        $region17: #{action_prediction_forward.2} parent=11 // pred_check
          %p167 = pneg %p81
        $region18: #{action_prediction_forward.2} parent=11 // pred_check_branch
          %169 = sbr.rel (%p167) target = $region20
        $region19: #{action_prediction_forward.2} parent=11 // pred_region
          %s171 = ssub.s32 16, 16
          %172 = vsyncadd [#allocation4], %s171
          %s174 = sshll.u32 [#allocation3], 4
          %s175 = int_to_ptr.vmem [resolvable:$true] %s174
          %177 = dma.hbm_to_vmem [thread:$0]  %s2, 16, %s175, [#allocation4]
        $region20: #{action_prediction_forward.2} parent=11 // pred_fallthru
          _
        // Predicated region
        $region21: #{action_prediction_forward.2} parent=11 // pred_check
          %p178 = pneg %p102
        $region22: #{action_prediction_forward.2} parent=11 // pred_check_branch
          %180 = sbr.rel (%p178) target = $region24
        $region23: #{action_prediction_forward.2} parent=11 // pred_region
          _
        $region24: #{action_prediction_forward.2} parent=11 // pred_fallthru
          _
        // Predicated region
        $region25: #{action_prediction_forward.2} parent=11 // pred_check
          %p181 = pneg %p123
        $region26: #{action_prediction_forward.2} parent=11 // pred_check_branch
          %183 = sbr.rel (%p181) target = $region28
        $region27: #{action_prediction_forward.2} parent=11 // pred_region
          %s185 = ssub.s32 16, 16
          %186 = vsyncadd [#allocation6], %s185
          %s188 = sshll.u32 [#allocation5], 4
          %s189 = int_to_ptr.vmem [resolvable:$true] %s188
          %191 = dma.hbm_to_vmem [thread:$0]  %s4, 16, %s189, [#allocation6]
        $region28: #{action_prediction_forward.2} parent=11 // pred_fallthru
          _
      $region12: #{action_prediction_forward.2} parent=5 // pred_fallthru
        _
      %p192 = scmp.lt.s32.totalorder %s13, 2
      // Predicated region
      $region29: #{action_prediction_forward.2} parent=5 // pred_check
        %p193 = pneg %p192
      $region30: #{action_prediction_forward.2} parent=5 // pred_check_branch
        %195 = sbr.rel (%p193) target = $region32
      $region31: #{action_prediction_forward.2} parent=5 // pred_region
        // Predicated region
        $region33: #{action_prediction_forward.2} parent=31 // pred_check
          %p196 = pneg %p33
        $region34: #{action_prediction_forward.2} parent=31 // pred_check_branch
          %198 = sbr.rel (%p196) target = $region36
        $region35: #{action_prediction_forward.2} parent=31 // pred_region
          %p199 = scmp.lt.s32.totalorder %s13, 1
          %s200 = scalar_select %p199, %s13, 1
          %s201 = smul.addr %s200, 54
          %s202 = smul.addr %s201, 8
          %s203 = scalar_lea.vmem %s0, %s202
        $region36: #{action_prediction_forward.2} parent=31 // pred_fallthru
          _
      $region32: #{action_prediction_forward.2} parent=5 // pred_fallthru
        _
      %p204 = scmp.le.s32.totalorder 1, %s13
      %p205 = scmp.lt.s32.totalorder %s13, 3
      %p206 = pnand %p204, %p205
      %p207 = pneg %p206
      // Predicated region
      $region37: #{action_prediction_forward.2} parent=5 // pred_check
        _
      $region38: #{action_prediction_forward.2} parent=5 // pred_check_branch
        %209 = sbr.rel (%p206) target = $region40
      $region39: #{action_prediction_forward.2} parent=5 // pred_region
        %s210 = ssub.s32 %s13, 1
        // Predicated region
        $region41: #{action_prediction_forward.2} parent=39 // pred_check
          %p211 = pneg %p81
        $region42: #{action_prediction_forward.2} parent=39 // pred_check_branch
          %213 = sbr.rel (%p211) target = $region44
        $region43: #{action_prediction_forward.2} parent=39 // pred_region
          %214 = dma.done [#allocation4], 16
        $region44: #{action_prediction_forward.2} parent=39 // pred_fallthru
          _
        // Predicated region
        $region45: #{action_prediction_forward.2} parent=39 // pred_check
          %p215 = pneg %p123
        $region46: #{action_prediction_forward.2} parent=39 // pred_check_branch
          %217 = sbr.rel (%p215) target = $region48
        $region47: #{action_prediction_forward.2} parent=39 // pred_region
          %218 = dma.done [#allocation6], 16
        $region48: #{action_prediction_forward.2} parent=39 // pred_fallthru
          _
        %p219 = scmp.lt.s32.totalorder %s18, 1
        %s220 = scalar_select %p219, %s18, 1
        %s221 = smul.addr %s220, 54
        %s222 = smul.addr %s221, 8
        %s223 = scalar_lea.vmem %s0, %s222
        %p224 = pneg %p39
        %p225 = pneg %p36
        %p226 = pneg %p60
        %p227 = pneg %p57
        %p228 = pneg %p81
        %p229 = pneg %p78
        %p230 = pneg %p102
        %p231 = pneg %p99
        %p232 = pneg %p123
        %p233 = pneg %p120
        %p234 = pneg %p149
        %p235 = pneg %p146
        %p236 = scmp.lt.s32.totalorder %s18, 1
        %s237 = scalar_select %p236, %s18, 1
        %s238 = smul.addr %s237, 32
        %s239 = smul.addr %s238, 8
        %s240 = scalar_lea.vmem %s5, %s239
        %p241 = scmp.lt.s32.totalorder %s18, 1
        %s242 = scalar_select %p241, %s18, 1
        %s243 = smul.addr %s242, 54
        %s244 = smul.addr %s243, 8
        %s245 = scalar_lea.vmem %s0, %s244
        %p246 = scmp.lt.s32.totalorder %s18, 1
        %s247 = scalar_select %p246, %s18, 1
        %s248 = smul.addr %s247, 32
        %s249 = smul.addr %s248, 8
        %s250 = scalar_lea.vmem %s5, %s249
        %v251 = vld [vmem:[%s245] sm:$0xff]
        %v252 = vld [vmem:[%s245 + $0x8] sm:$0xff]
        %v253 = vld [vmem:[%s245 + $0x10] sm:$0x3]
        %v254 = vld [vmem:[%s245 + $0x18] sm:$0xff]
        %v255 = vld [vmem:[%s245 + $0x20] sm:$0xff]
        %v256 = vld [vmem:[%s245 + $0x28] sm:$0x3]
        %v257 = vld [vmem:[%s245 + $0x30] sm:$0xff]
        %v258 = vld [vmem:[%s245 + $0x38] sm:$0xff]
        %v259 = vld [vmem:[%s245 + $0x40] sm:$0x3]
        %v260 = vld [vmem:[%s245 + $0x48] sm:$0xff]
        %v261 = vld [vmem:[%s245 + $0x50] sm:$0xff]
        %v262 = vld [vmem:[%s245 + $0x58] sm:$0x3]
        %v263 = vld [vmem:[%s245 + $0x60] sm:$0xff]
        %v264 = vld [vmem:[%s245 + $0x68] sm:$0xff]
        %v265 = vld [vmem:[%s245 + $0x70] sm:$0x3]
        %v266 = vld [vmem:[%s245 + $0x78] sm:$0xff]
        %v267 = vld [vmem:[%s245 + $0x80] sm:$0xff]
        %v268 = vld [vmem:[%s245 + $0x88] sm:$0x3]
        %v269 = vld [vmem:[%s245 + $0x90] sm:$0xff]
        %v270 = vld [vmem:[%s245 + $0x98] sm:$0xff]
        %v271 = vld [vmem:[%s245 + $0xa0] sm:$0x3]
        %v272 = vld [vmem:[%s245 + $0xa8] sm:$0xff]
        %v273 = vld [vmem:[%s245 + $0xb0] sm:$0xff]
        %v274 = vld [vmem:[%s245 + $0xb8] sm:$0x3]
        %v275 = vld [vmem:[%s245 + $0xc0] sm:$0xff]
        %v276 = vld [vmem:[%s245 + $0xc8] sm:$0xff]
        %v277 = vld [vmem:[%s245 + $0xd0] sm:$0x3]
        %v278 = vld [vmem:[%s245 + $0xd8] sm:$0xff]
        %v279 = vld [vmem:[%s245 + $0xe0] sm:$0xff]
        %v280 = vld [vmem:[%s245 + $0xe8] sm:$0x3]
        %v281 = vld [vmem:[%s245 + $0xf0] sm:$0xff]
        %v282 = vld [vmem:[%s245 + $0xf8] sm:$0xff]
        %v283 = vld [vmem:[%s245 + $0x100] sm:$0x3]
        %v284 = vld [vmem:[%s245 + $0x108] sm:$0xff]
        %v285 = vld [vmem:[%s245 + $0x110] sm:$0xff]
        %v286 = vld [vmem:[%s245 + $0x118] sm:$0x3]
        %v287 = vld [vmem:[%s245 + $0x120] sm:$0xff]
        %v288 = vld [vmem:[%s245 + $0x128] sm:$0xff]
        %v289 = vld [vmem:[%s245 + $0x130] sm:$0x3]
        %v290 = vld [vmem:[%s245 + $0x138] sm:$0xff]
        %v291 = vld [vmem:[%s245 + $0x140] sm:$0xff]
        %v292 = vld [vmem:[%s245 + $0x148] sm:$0x3]
        %v293 = vld [vmem:[%s245 + $0x150] sm:$0xff]
        %v294 = vld [vmem:[%s245 + $0x158] sm:$0xff]
        %v295 = vld [vmem:[%s245 + $0x160] sm:$0x3]
        %v296 = vld [vmem:[%s245 + $0x168] sm:$0xff]
        %v297 = vld [vmem:[%s245 + $0x170] sm:$0xff]
        %v298 = vld [vmem:[%s245 + $0x178] sm:$0x3]
        %v299 = vld [vmem:[%s245 + $0x180] sm:$0xff]
        %v300 = vld [vmem:[%s245 + $0x188] sm:$0xff]
        %v301 = vld [vmem:[%s245 + $0x190] sm:$0x3]
        %v302 = vld [vmem:[%s245 + $0x198] sm:$0xff]
        %v303 = vld [vmem:[%s245 + $0x1a0] sm:$0xff]
        %v304 = vld [vmem:[%s245 + $0x1a8] sm:$0x3]
        %vm353 = vcmask 1046528
        %v354 = vrot.slane %v251, 1
        %v355 = vrot.slane %v252, 1
        %v356 = vsel %vm353, %v354, %v355
        %v357 = vrot.slane %v253, 1
        %v358 = vsel %vm353, %v355, %v357
        %v359 = vrot.slane %v254, 1
        %v360 = vrot.slane %v255, 1
        %v361 = vsel %vm353, %v359, %v360
        %v362 = vrot.slane %v256, 1
        %v363 = vsel %vm353, %v360, %v362
        %v364 = vrot.slane %v257, 1
        %v365 = vrot.slane %v258, 1
        %v366 = vsel %vm353, %v364, %v365
        %v367 = vrot.slane %v259, 1
        %v368 = vsel %vm353, %v365, %v367
        %v369 = vrot.slane %v260, 1
        %v370 = vrot.slane %v261, 1
        %v371 = vsel %vm353, %v369, %v370
        %v372 = vrot.slane %v262, 1
        %v373 = vsel %vm353, %v370, %v372
        %v374 = vrot.slane %v263, 1
        %v375 = vrot.slane %v264, 1
        %v376 = vsel %vm353, %v374, %v375
        %v377 = vrot.slane %v265, 1
        %v378 = vsel %vm353, %v375, %v377
        %v379 = vrot.slane %v266, 1
        %v380 = vrot.slane %v267, 1
        %v381 = vsel %vm353, %v379, %v380
        %v382 = vrot.slane %v268, 1
        %v383 = vsel %vm353, %v380, %v382
        %v384 = vrot.slane %v269, 1
        %v385 = vrot.slane %v270, 1
        %v386 = vsel %vm353, %v384, %v385
        %v387 = vrot.slane %v271, 1
        %v388 = vsel %vm353, %v385, %v387
        %v389 = vrot.slane %v272, 1
        %v390 = vrot.slane %v273, 1
        %v391 = vsel %vm353, %v389, %v390
        %v392 = vrot.slane %v274, 1
        %v393 = vsel %vm353, %v390, %v392
        %v394 = vrot.slane %v275, 1
        %v395 = vrot.slane %v276, 1
        %v396 = vsel %vm353, %v394, %v395
        %v397 = vrot.slane %v277, 1
        %v398 = vsel %vm353, %v395, %v397
        %v399 = vrot.slane %v278, 1
        %v400 = vrot.slane %v279, 1
        %v401 = vsel %vm353, %v399, %v400
        %v402 = vrot.slane %v280, 1
        %v403 = vsel %vm353, %v400, %v402
        %v404 = vrot.slane %v281, 1
        %v405 = vrot.slane %v282, 1
        %v406 = vsel %vm353, %v404, %v405
        %v407 = vrot.slane %v283, 1
        %v408 = vsel %vm353, %v405, %v407
        %v409 = vrot.slane %v284, 1
        %v410 = vrot.slane %v285, 1
        %v411 = vsel %vm353, %v409, %v410
        %v412 = vrot.slane %v286, 1
        %v413 = vsel %vm353, %v410, %v412
        %v414 = vrot.slane %v287, 1
        %v415 = vrot.slane %v288, 1
        %v416 = vsel %vm353, %v414, %v415
        %v417 = vrot.slane %v289, 1
        %v418 = vsel %vm353, %v415, %v417
        %v419 = vrot.slane %v290, 1
        %v420 = vrot.slane %v291, 1
        %v421 = vsel %vm353, %v419, %v420
        %v422 = vrot.slane %v292, 1
        %v423 = vsel %vm353, %v420, %v422
        %v424 = vrot.slane %v293, 1
        %v425 = vrot.slane %v294, 1
        %v426 = vsel %vm353, %v424, %v425
        %v427 = vrot.slane %v295, 1
        %v428 = vsel %vm353, %v425, %v427
        %v429 = vrot.slane %v296, 1
        %v430 = vrot.slane %v297, 1
        %v431 = vsel %vm353, %v429, %v430
        %v432 = vrot.slane %v298, 1
        %v433 = vsel %vm353, %v430, %v432
        %vm434 = vcmask 1045504
        %v435 = vrot.slane %v251, 2
        %v436 = vrot.slane %v252, 2
        %v437 = vsel %vm434, %v435, %v436
        %v438 = vrot.slane %v253, 2
        %v439 = vsel %vm434, %v436, %v438
        %v440 = vrot.slane %v254, 2
        %v441 = vrot.slane %v255, 2
        %v442 = vsel %vm434, %v440, %v441
        %v443 = vrot.slane %v256, 2
        %v444 = vsel %vm434, %v441, %v443
        %v445 = vrot.slane %v257, 2
        %v446 = vrot.slane %v258, 2
        %v447 = vsel %vm434, %v445, %v446
        %v448 = vrot.slane %v259, 2
        %v449 = vsel %vm434, %v446, %v448
        %v450 = vrot.slane %v260, 2
        %v451 = vrot.slane %v261, 2
        %v452 = vsel %vm434, %v450, %v451
        %v453 = vrot.slane %v262, 2
        %v454 = vsel %vm434, %v451, %v453
        %v455 = vrot.slane %v263, 2
        %v456 = vrot.slane %v264, 2
        %v457 = vsel %vm434, %v455, %v456
        %v458 = vrot.slane %v265, 2
        %v459 = vsel %vm434, %v456, %v458
        %v460 = vrot.slane %v266, 2
        %v461 = vrot.slane %v267, 2
        %v462 = vsel %vm434, %v460, %v461
        %v463 = vrot.slane %v268, 2
        %v464 = vsel %vm434, %v461, %v463
        %v465 = vrot.slane %v269, 2
        %v466 = vrot.slane %v270, 2
        %v467 = vsel %vm434, %v465, %v466
        %v468 = vrot.slane %v271, 2
        %v469 = vsel %vm434, %v466, %v468
        %v470 = vrot.slane %v272, 2
        %v471 = vrot.slane %v273, 2
        %v472 = vsel %vm434, %v470, %v471
        %v473 = vrot.slane %v274, 2
        %v474 = vsel %vm434, %v471, %v473
        %v475 = vrot.slane %v275, 2
        %v476 = vrot.slane %v276, 2
        %v477 = vsel %vm434, %v475, %v476
        %v478 = vrot.slane %v277, 2
        %v479 = vsel %vm434, %v476, %v478
        %v480 = vrot.slane %v278, 2
        %v481 = vrot.slane %v279, 2
        %v482 = vsel %vm434, %v480, %v481
        %v483 = vrot.slane %v280, 2
        %v484 = vsel %vm434, %v481, %v483
        %v485 = vrot.slane %v281, 2
        %v486 = vrot.slane %v282, 2
        %v487 = vsel %vm434, %v485, %v486
        %v488 = vrot.slane %v283, 2
        %v489 = vsel %vm434, %v486, %v488
        %v490 = vrot.slane %v284, 2
        %v491 = vrot.slane %v285, 2
        %v492 = vsel %vm434, %v490, %v491
        %v493 = vrot.slane %v286, 2
        %v494 = vsel %vm434, %v491, %v493
        %v495 = vrot.slane %v287, 2
        %v496 = vrot.slane %v288, 2
        %v497 = vsel %vm434, %v495, %v496
        %v498 = vrot.slane %v289, 2
        %v499 = vsel %vm434, %v496, %v498
        %v500 = vrot.slane %v290, 2
        %v501 = vrot.slane %v291, 2
        %v502 = vsel %vm434, %v500, %v501
        %v503 = vrot.slane %v292, 2
        %v504 = vsel %vm434, %v501, %v503
        %v505 = vrot.slane %v293, 2
        %v506 = vrot.slane %v294, 2
        %v507 = vsel %vm434, %v505, %v506
        %v508 = vrot.slane %v295, 2
        %v509 = vsel %vm434, %v506, %v508
        %v510 = vrot.slane %v296, 2
        %v511 = vrot.slane %v297, 2
        %v512 = vsel %vm434, %v510, %v511
        %v513 = vrot.slane %v298, 2
        %v514 = vsel %vm434, %v511, %v513
        %v518 = vrot.slane %v299, 1
        %v519 = vrot.slane %v300, 1
        %v520 = vsel %vm353, %v518, %v519
        %v521 = vrot.slane %v301, 1
        %v522 = vsel %vm353, %v519, %v521
        %v523 = vrot.slane %v299, 2
        %v524 = vrot.slane %v300, 2
        %v525 = vsel %vm434, %v523, %v524
        %v526 = vrot.slane %v301, 2
        %v527 = vsel %vm434, %v524, %v526
        %v531 = vrot.slane %v302, 1
        %v532 = vrot.slane %v303, 1
        %v533 = vsel %vm353, %v531, %v532
        %v534 = vrot.slane %v304, 1
        %v535 = vsel %vm353, %v532, %v534
        %v536 = vrot.slane %v302, 2
        %v537 = vrot.slane %v303, 2
        %v538 = vsel %vm434, %v536, %v537
        %v539 = vrot.slane %v304, 2
        %v540 = vsel %vm434, %v537, %v539
        %541 = vrot.lane.b32.xlu0 %v356, 8
        %v542 = vpop.permute.xlu0 %541
        %543 = vrot.lane.b32.xlu0 %v358, 8
        %v544 = vpop.permute.xlu0 %543
        %545 = vrot.lane.b32.xlu0 %v361, 8
        %v546 = vpop.permute.xlu0 %545
        %547 = vrot.lane.b32.xlu0 %v363, 8
        %v548 = vpop.permute.xlu0 %547
        %549 = vrot.lane.b32.xlu0 %v366, 8
        %v550 = vpop.permute.xlu0 %549
        %551 = vrot.lane.b32.xlu0 %v368, 8
        %v552 = vpop.permute.xlu0 %551
        %553 = vrot.lane.b32.xlu0 %v371, 8
        %v554 = vpop.permute.xlu0 %553
        %555 = vrot.lane.b32.xlu0 %v373, 8
        %v556 = vpop.permute.xlu0 %555
        %557 = vrot.lane.b32.xlu0 %v376, 8
        %v558 = vpop.permute.xlu0 %557
        %559 = vrot.lane.b32.xlu0 %v378, 8
        %v560 = vpop.permute.xlu0 %559
        %561 = vrot.lane.b32.xlu0 %v381, 8
        %v562 = vpop.permute.xlu0 %561
        %563 = vrot.lane.b32.xlu0 %v383, 8
        %v564 = vpop.permute.xlu0 %563
        %565 = vrot.lane.b32.xlu0 %v386, 8
        %v566 = vpop.permute.xlu0 %565
        %567 = vrot.lane.b32.xlu0 %v388, 8
        %v568 = vpop.permute.xlu0 %567
        %569 = vrot.lane.b32.xlu0 %v391, 8
        %v570 = vpop.permute.xlu0 %569
        %571 = vrot.lane.b32.xlu0 %v393, 8
        %v572 = vpop.permute.xlu0 %571
        %573 = vrot.lane.b32.xlu0 %v396, 8
        %v574 = vpop.permute.xlu0 %573
        %575 = vrot.lane.b32.xlu0 %v398, 8
        %v576 = vpop.permute.xlu0 %575
        %577 = vrot.lane.b32.xlu0 %v401, 8
        %v578 = vpop.permute.xlu0 %577
        %579 = vrot.lane.b32.xlu0 %v403, 8
        %v580 = vpop.permute.xlu0 %579
        %581 = vrot.lane.b32.xlu0 %v406, 8
        %v582 = vpop.permute.xlu0 %581
        %583 = vrot.lane.b32.xlu0 %v408, 8
        %v584 = vpop.permute.xlu0 %583
        %585 = vrot.lane.b32.xlu0 %v411, 8
        %v586 = vpop.permute.xlu0 %585
        %587 = vrot.lane.b32.xlu0 %v413, 8
        %v588 = vpop.permute.xlu0 %587
        %589 = vrot.lane.b32.xlu0 %v416, 8
        %v590 = vpop.permute.xlu0 %589
        %591 = vrot.lane.b32.xlu0 %v418, 8
        %v592 = vpop.permute.xlu0 %591
        %593 = vrot.lane.b32.xlu0 %v421, 8
        %v594 = vpop.permute.xlu0 %593
        %595 = vrot.lane.b32.xlu0 %v423, 8
        %v596 = vpop.permute.xlu0 %595
        %597 = vrot.lane.b32.xlu0 %v426, 8
        %v598 = vpop.permute.xlu0 %597
        %599 = vrot.lane.b32.xlu0 %v428, 8
        %v600 = vpop.permute.xlu0 %599
        %601 = vrot.lane.b32.xlu0 %v431, 8
        %v602 = vpop.permute.xlu0 %601
        %603 = vrot.lane.b32.xlu0 %v433, 8
        %v604 = vpop.permute.xlu0 %603
        %637 = vrot.lane.b32.xlu0 %v437, 16
        %v638 = vpop.permute.xlu0 %637
        %639 = vrot.lane.b32.xlu0 %v439, 16
        %v640 = vpop.permute.xlu0 %639
        %641 = vrot.lane.b32.xlu0 %v442, 16
        %v642 = vpop.permute.xlu0 %641
        %643 = vrot.lane.b32.xlu0 %v444, 16
        %v644 = vpop.permute.xlu0 %643
        %645 = vrot.lane.b32.xlu0 %v447, 16
        %v646 = vpop.permute.xlu0 %645
        %647 = vrot.lane.b32.xlu0 %v449, 16
        %v648 = vpop.permute.xlu0 %647
        %649 = vrot.lane.b32.xlu0 %v452, 16
        %v650 = vpop.permute.xlu0 %649
        %651 = vrot.lane.b32.xlu0 %v454, 16
        %v652 = vpop.permute.xlu0 %651
        %653 = vrot.lane.b32.xlu0 %v457, 16
        %v654 = vpop.permute.xlu0 %653
        %655 = vrot.lane.b32.xlu0 %v459, 16
        %v656 = vpop.permute.xlu0 %655
        %657 = vrot.lane.b32.xlu0 %v462, 16
        %v658 = vpop.permute.xlu0 %657
        %659 = vrot.lane.b32.xlu0 %v464, 16
        %v660 = vpop.permute.xlu0 %659
        %661 = vrot.lane.b32.xlu0 %v467, 16
        %v662 = vpop.permute.xlu0 %661
        %663 = vrot.lane.b32.xlu0 %v469, 16
        %v664 = vpop.permute.xlu0 %663
        %665 = vrot.lane.b32.xlu0 %v472, 16
        %v666 = vpop.permute.xlu0 %665
        %667 = vrot.lane.b32.xlu0 %v474, 16
        %v668 = vpop.permute.xlu0 %667
        %669 = vrot.lane.b32.xlu0 %v477, 16
        %v670 = vpop.permute.xlu0 %669
        %671 = vrot.lane.b32.xlu0 %v479, 16
        %v672 = vpop.permute.xlu0 %671
        %673 = vrot.lane.b32.xlu0 %v482, 16
        %v674 = vpop.permute.xlu0 %673
        %675 = vrot.lane.b32.xlu0 %v484, 16
        %v676 = vpop.permute.xlu0 %675
        %677 = vrot.lane.b32.xlu0 %v487, 16
        %v678 = vpop.permute.xlu0 %677
        %679 = vrot.lane.b32.xlu0 %v489, 16
        %v680 = vpop.permute.xlu0 %679
        %681 = vrot.lane.b32.xlu0 %v492, 16
        %v682 = vpop.permute.xlu0 %681
        %683 = vrot.lane.b32.xlu0 %v494, 16
        %v684 = vpop.permute.xlu0 %683
        %685 = vrot.lane.b32.xlu0 %v497, 16
        %v686 = vpop.permute.xlu0 %685
        %687 = vrot.lane.b32.xlu0 %v499, 16
        %v688 = vpop.permute.xlu0 %687
        %689 = vrot.lane.b32.xlu0 %v502, 16
        %v690 = vpop.permute.xlu0 %689
        %691 = vrot.lane.b32.xlu0 %v504, 16
        %v692 = vpop.permute.xlu0 %691
        %693 = vrot.lane.b32.xlu0 %v507, 16
        %v694 = vpop.permute.xlu0 %693
        %695 = vrot.lane.b32.xlu0 %v509, 16
        %v696 = vpop.permute.xlu0 %695
        %697 = vrot.lane.b32.xlu0 %v512, 16
        %v698 = vpop.permute.xlu0 %697
        %699 = vrot.lane.b32.xlu0 %v514, 16
        %v700 = vpop.permute.xlu0 %699
        %733 = vrot.lane.b32.xlu0 %v254, 24
        %v734 = vpop.permute.xlu0 %733
        %735 = vrot.lane.b32.xlu0 %v255, 24
        %v736 = vpop.permute.xlu0 %735
        %737 = vrot.lane.b32.xlu0 %v257, 24
        %v738 = vpop.permute.xlu0 %737
        %739 = vrot.lane.b32.xlu0 %v258, 24
        %v740 = vpop.permute.xlu0 %739
        %741 = vrot.lane.b32.xlu0 %v260, 24
        %v742 = vpop.permute.xlu0 %741
        %743 = vrot.lane.b32.xlu0 %v261, 24
        %v744 = vpop.permute.xlu0 %743
        %745 = vrot.lane.b32.xlu0 %v263, 24
        %v746 = vpop.permute.xlu0 %745
        %747 = vrot.lane.b32.xlu0 %v264, 24
        %v748 = vpop.permute.xlu0 %747
        %749 = vrot.lane.b32.xlu0 %v266, 24
        %v750 = vpop.permute.xlu0 %749
        %751 = vrot.lane.b32.xlu0 %v267, 24
        %v752 = vpop.permute.xlu0 %751
        %753 = vrot.lane.b32.xlu0 %v269, 24
        %v754 = vpop.permute.xlu0 %753
        %755 = vrot.lane.b32.xlu0 %v270, 24
        %v756 = vpop.permute.xlu0 %755
        %757 = vrot.lane.b32.xlu0 %v272, 24
        %v758 = vpop.permute.xlu0 %757
        %759 = vrot.lane.b32.xlu0 %v273, 24
        %v760 = vpop.permute.xlu0 %759
        %761 = vrot.lane.b32.xlu0 %v275, 24
        %v762 = vpop.permute.xlu0 %761
        %763 = vrot.lane.b32.xlu0 %v276, 24
        %v764 = vpop.permute.xlu0 %763
        %765 = vrot.lane.b32.xlu0 %v278, 24
        %v766 = vpop.permute.xlu0 %765
        %767 = vrot.lane.b32.xlu0 %v279, 24
        %v768 = vpop.permute.xlu0 %767
        %769 = vrot.lane.b32.xlu0 %v281, 24
        %v770 = vpop.permute.xlu0 %769
        %771 = vrot.lane.b32.xlu0 %v282, 24
        %v772 = vpop.permute.xlu0 %771
        %773 = vrot.lane.b32.xlu0 %v284, 24
        %v774 = vpop.permute.xlu0 %773
        %775 = vrot.lane.b32.xlu0 %v285, 24
        %v776 = vpop.permute.xlu0 %775
        %777 = vrot.lane.b32.xlu0 %v287, 24
        %v778 = vpop.permute.xlu0 %777
        %779 = vrot.lane.b32.xlu0 %v288, 24
        %v780 = vpop.permute.xlu0 %779
        %781 = vrot.lane.b32.xlu0 %v290, 24
        %v782 = vpop.permute.xlu0 %781
        %783 = vrot.lane.b32.xlu0 %v291, 24
        %v784 = vpop.permute.xlu0 %783
        %785 = vrot.lane.b32.xlu0 %v293, 24
        %v786 = vpop.permute.xlu0 %785
        %787 = vrot.lane.b32.xlu0 %v294, 24
        %v788 = vpop.permute.xlu0 %787
        %789 = vrot.lane.b32.xlu0 %v296, 24
        %v790 = vpop.permute.xlu0 %789
        %791 = vrot.lane.b32.xlu0 %v297, 24
        %v792 = vpop.permute.xlu0 %791
        %793 = vrot.lane.b32.xlu0 %v299, 24
        %v794 = vpop.permute.xlu0 %793
        %795 = vrot.lane.b32.xlu0 %v300, 24
        %v796 = vpop.permute.xlu0 %795
        %829 = vrot.lane.b32.xlu0 %v361, 32
        %v830 = vpop.permute.xlu0 %829
        %831 = vrot.lane.b32.xlu0 %v363, 32
        %v832 = vpop.permute.xlu0 %831
        %833 = vrot.lane.b32.xlu0 %v366, 32
        %v834 = vpop.permute.xlu0 %833
        %835 = vrot.lane.b32.xlu0 %v368, 32
        %v836 = vpop.permute.xlu0 %835
        %837 = vrot.lane.b32.xlu0 %v371, 32
        %v838 = vpop.permute.xlu0 %837
        %839 = vrot.lane.b32.xlu0 %v373, 32
        %v840 = vpop.permute.xlu0 %839
        %841 = vrot.lane.b32.xlu0 %v376, 32
        %v842 = vpop.permute.xlu0 %841
        %843 = vrot.lane.b32.xlu0 %v378, 32
        %v844 = vpop.permute.xlu0 %843
        %845 = vrot.lane.b32.xlu0 %v381, 32
        %v846 = vpop.permute.xlu0 %845
        %847 = vrot.lane.b32.xlu0 %v383, 32
        %v848 = vpop.permute.xlu0 %847
        %849 = vrot.lane.b32.xlu0 %v386, 32
        %v850 = vpop.permute.xlu0 %849
        %851 = vrot.lane.b32.xlu0 %v388, 32
        %v852 = vpop.permute.xlu0 %851
        %853 = vrot.lane.b32.xlu0 %v391, 32
        %v854 = vpop.permute.xlu0 %853
        %855 = vrot.lane.b32.xlu0 %v393, 32
        %v856 = vpop.permute.xlu0 %855
        %857 = vrot.lane.b32.xlu0 %v396, 32
        %v858 = vpop.permute.xlu0 %857
        %859 = vrot.lane.b32.xlu0 %v398, 32
        %v860 = vpop.permute.xlu0 %859
        %861 = vrot.lane.b32.xlu0 %v401, 32
        %v862 = vpop.permute.xlu0 %861
        %863 = vrot.lane.b32.xlu0 %v403, 32
        %v864 = vpop.permute.xlu0 %863
        %865 = vrot.lane.b32.xlu0 %v406, 32
        %v866 = vpop.permute.xlu0 %865
        %867 = vrot.lane.b32.xlu0 %v408, 32
        %v868 = vpop.permute.xlu0 %867
        %869 = vrot.lane.b32.xlu0 %v411, 32
        %v870 = vpop.permute.xlu0 %869
        %871 = vrot.lane.b32.xlu0 %v413, 32
        %v872 = vpop.permute.xlu0 %871
        %873 = vrot.lane.b32.xlu0 %v416, 32
        %v874 = vpop.permute.xlu0 %873
        %875 = vrot.lane.b32.xlu0 %v418, 32
        %v876 = vpop.permute.xlu0 %875
        %877 = vrot.lane.b32.xlu0 %v421, 32
        %v878 = vpop.permute.xlu0 %877
        %879 = vrot.lane.b32.xlu0 %v423, 32
        %v880 = vpop.permute.xlu0 %879
        %881 = vrot.lane.b32.xlu0 %v426, 32
        %v882 = vpop.permute.xlu0 %881
        %883 = vrot.lane.b32.xlu0 %v428, 32
        %v884 = vpop.permute.xlu0 %883
        %885 = vrot.lane.b32.xlu0 %v431, 32
        %v886 = vpop.permute.xlu0 %885
        %887 = vrot.lane.b32.xlu0 %v433, 32
        %v888 = vpop.permute.xlu0 %887
        %889 = vrot.lane.b32.xlu0 %v520, 32
        %v890 = vpop.permute.xlu0 %889
        %891 = vrot.lane.b32.xlu0 %v522, 32
        %v892 = vpop.permute.xlu0 %891
        %925 = vrot.lane.b32.xlu0 %v442, 40
        %v926 = vpop.permute.xlu0 %925
        %927 = vrot.lane.b32.xlu0 %v444, 40
        %v928 = vpop.permute.xlu0 %927
        %929 = vrot.lane.b32.xlu0 %v447, 40
        %v930 = vpop.permute.xlu0 %929
        %931 = vrot.lane.b32.xlu0 %v449, 40
        %v932 = vpop.permute.xlu0 %931
        %933 = vrot.lane.b32.xlu0 %v452, 40
        %v934 = vpop.permute.xlu0 %933
        %935 = vrot.lane.b32.xlu0 %v454, 40
        %v936 = vpop.permute.xlu0 %935
        %937 = vrot.lane.b32.xlu0 %v457, 40
        %v938 = vpop.permute.xlu0 %937
        %939 = vrot.lane.b32.xlu0 %v459, 40
        %v940 = vpop.permute.xlu0 %939
        %941 = vrot.lane.b32.xlu0 %v462, 40
        %v942 = vpop.permute.xlu0 %941
        %943 = vrot.lane.b32.xlu0 %v464, 40
        %v944 = vpop.permute.xlu0 %943
        %945 = vrot.lane.b32.xlu0 %v467, 40
        %v946 = vpop.permute.xlu0 %945
        %947 = vrot.lane.b32.xlu0 %v469, 40
        %v948 = vpop.permute.xlu0 %947
        %949 = vrot.lane.b32.xlu0 %v472, 40
        %v950 = vpop.permute.xlu0 %949
        %951 = vrot.lane.b32.xlu0 %v474, 40
        %v952 = vpop.permute.xlu0 %951
        %953 = vrot.lane.b32.xlu0 %v477, 40
        %v954 = vpop.permute.xlu0 %953
        %955 = vrot.lane.b32.xlu0 %v479, 40
        %v956 = vpop.permute.xlu0 %955
        %957 = vrot.lane.b32.xlu0 %v482, 40
        %v958 = vpop.permute.xlu0 %957
        %959 = vrot.lane.b32.xlu0 %v484, 40
        %v960 = vpop.permute.xlu0 %959
        %961 = vrot.lane.b32.xlu0 %v487, 40
        %v962 = vpop.permute.xlu0 %961
        %963 = vrot.lane.b32.xlu0 %v489, 40
        %v964 = vpop.permute.xlu0 %963
        %965 = vrot.lane.b32.xlu0 %v492, 40
        %v966 = vpop.permute.xlu0 %965
        %967 = vrot.lane.b32.xlu0 %v494, 40
        %v968 = vpop.permute.xlu0 %967
        %969 = vrot.lane.b32.xlu0 %v497, 40
        %v970 = vpop.permute.xlu0 %969
        %971 = vrot.lane.b32.xlu0 %v499, 40
        %v972 = vpop.permute.xlu0 %971
        %973 = vrot.lane.b32.xlu0 %v502, 40
        %v974 = vpop.permute.xlu0 %973
        %975 = vrot.lane.b32.xlu0 %v504, 40
        %v976 = vpop.permute.xlu0 %975
        %977 = vrot.lane.b32.xlu0 %v507, 40
        %v978 = vpop.permute.xlu0 %977
        %979 = vrot.lane.b32.xlu0 %v509, 40
        %v980 = vpop.permute.xlu0 %979
        %981 = vrot.lane.b32.xlu0 %v512, 40
        %v982 = vpop.permute.xlu0 %981
        %983 = vrot.lane.b32.xlu0 %v514, 40
        %v984 = vpop.permute.xlu0 %983
        %985 = vrot.lane.b32.xlu0 %v525, 40
        %v986 = vpop.permute.xlu0 %985
        %987 = vrot.lane.b32.xlu0 %v527, 40
        %v988 = vpop.permute.xlu0 %987
        %1021 = vrot.lane.b32.xlu0 %v257, 48
        %v1022 = vpop.permute.xlu0 %1021
        %1023 = vrot.lane.b32.xlu0 %v258, 48
        %v1024 = vpop.permute.xlu0 %1023
        %1025 = vrot.lane.b32.xlu0 %v260, 48
        %v1026 = vpop.permute.xlu0 %1025
        %1027 = vrot.lane.b32.xlu0 %v261, 48
        %v1028 = vpop.permute.xlu0 %1027
        %1029 = vrot.lane.b32.xlu0 %v263, 48
        %v1030 = vpop.permute.xlu0 %1029
        %1031 = vrot.lane.b32.xlu0 %v264, 48
        %v1032 = vpop.permute.xlu0 %1031
        %1033 = vrot.lane.b32.xlu0 %v266, 48
        %v1034 = vpop.permute.xlu0 %1033
        %1035 = vrot.lane.b32.xlu0 %v267, 48
        %v1036 = vpop.permute.xlu0 %1035
        %1037 = vrot.lane.b32.xlu0 %v269, 48
        %v1038 = vpop.permute.xlu0 %1037
        %1039 = vrot.lane.b32.xlu0 %v270, 48
        %v1040 = vpop.permute.xlu0 %1039
        %1041 = vrot.lane.b32.xlu0 %v272, 48
        %v1042 = vpop.permute.xlu0 %1041
        %1043 = vrot.lane.b32.xlu0 %v273, 48
        %v1044 = vpop.permute.xlu0 %1043
        %1045 = vrot.lane.b32.xlu0 %v275, 48
        %v1046 = vpop.permute.xlu0 %1045
        %1047 = vrot.lane.b32.xlu0 %v276, 48
        %v1048 = vpop.permute.xlu0 %1047
        %1049 = vrot.lane.b32.xlu0 %v278, 48
        %v1050 = vpop.permute.xlu0 %1049
        %1051 = vrot.lane.b32.xlu0 %v279, 48
        %v1052 = vpop.permute.xlu0 %1051
        %1053 = vrot.lane.b32.xlu0 %v281, 48
        %v1054 = vpop.permute.xlu0 %1053
        %1055 = vrot.lane.b32.xlu0 %v282, 48
        %v1056 = vpop.permute.xlu0 %1055
        %1057 = vrot.lane.b32.xlu0 %v284, 48
        %v1058 = vpop.permute.xlu0 %1057
        %1059 = vrot.lane.b32.xlu0 %v285, 48
        %v1060 = vpop.permute.xlu0 %1059
        %1061 = vrot.lane.b32.xlu0 %v287, 48
        %v1062 = vpop.permute.xlu0 %1061
        %1063 = vrot.lane.b32.xlu0 %v288, 48
        %v1064 = vpop.permute.xlu0 %1063
        %1065 = vrot.lane.b32.xlu0 %v290, 48
        %v1066 = vpop.permute.xlu0 %1065
        %1067 = vrot.lane.b32.xlu0 %v291, 48
        %v1068 = vpop.permute.xlu0 %1067
        %1069 = vrot.lane.b32.xlu0 %v293, 48
        %v1070 = vpop.permute.xlu0 %1069
        %1071 = vrot.lane.b32.xlu0 %v294, 48
        %v1072 = vpop.permute.xlu0 %1071
        %1073 = vrot.lane.b32.xlu0 %v296, 48
        %v1074 = vpop.permute.xlu0 %1073
        %1075 = vrot.lane.b32.xlu0 %v297, 48
        %v1076 = vpop.permute.xlu0 %1075
        %1077 = vrot.lane.b32.xlu0 %v299, 48
        %v1078 = vpop.permute.xlu0 %1077
        %1079 = vrot.lane.b32.xlu0 %v300, 48
        %v1080 = vpop.permute.xlu0 %1079
        %1081 = vrot.lane.b32.xlu0 %v302, 48
        %v1082 = vpop.permute.xlu0 %1081
        %1083 = vrot.lane.b32.xlu0 %v303, 48
        %v1084 = vpop.permute.xlu0 %1083
        %1117 = vrot.lane.b32.xlu0 %v366, 56
        %v1118 = vpop.permute.xlu0 %1117
        %1119 = vrot.lane.b32.xlu0 %v368, 56
        %v1120 = vpop.permute.xlu0 %1119
        %1121 = vrot.lane.b32.xlu0 %v371, 56
        %v1122 = vpop.permute.xlu0 %1121
        %1123 = vrot.lane.b32.xlu0 %v373, 56
        %v1124 = vpop.permute.xlu0 %1123
        %1125 = vrot.lane.b32.xlu0 %v376, 56
        %v1126 = vpop.permute.xlu0 %1125
        %1127 = vrot.lane.b32.xlu0 %v378, 56
        %v1128 = vpop.permute.xlu0 %1127
        %1129 = vrot.lane.b32.xlu0 %v381, 56
        %v1130 = vpop.permute.xlu0 %1129
        %1131 = vrot.lane.b32.xlu0 %v383, 56
        %v1132 = vpop.permute.xlu0 %1131
        %1133 = vrot.lane.b32.xlu0 %v386, 56
        %v1134 = vpop.permute.xlu0 %1133
        %1135 = vrot.lane.b32.xlu0 %v388, 56
        %v1136 = vpop.permute.xlu0 %1135
        %1137 = vrot.lane.b32.xlu0 %v391, 56
        %v1138 = vpop.permute.xlu0 %1137
        %1139 = vrot.lane.b32.xlu0 %v393, 56
        %v1140 = vpop.permute.xlu0 %1139
        %1141 = vrot.lane.b32.xlu0 %v396, 56
        %v1142 = vpop.permute.xlu0 %1141
        %1143 = vrot.lane.b32.xlu0 %v398, 56
        %v1144 = vpop.permute.xlu0 %1143
        %1145 = vrot.lane.b32.xlu0 %v401, 56
        %v1146 = vpop.permute.xlu0 %1145
        %1147 = vrot.lane.b32.xlu0 %v403, 56
        %v1148 = vpop.permute.xlu0 %1147
        %1149 = vrot.lane.b32.xlu0 %v406, 56
        %v1150 = vpop.permute.xlu0 %1149
        %1151 = vrot.lane.b32.xlu0 %v408, 56
        %v1152 = vpop.permute.xlu0 %1151
        %1153 = vrot.lane.b32.xlu0 %v411, 56
        %v1154 = vpop.permute.xlu0 %1153
        %1155 = vrot.lane.b32.xlu0 %v413, 56
        %v1156 = vpop.permute.xlu0 %1155
        %1157 = vrot.lane.b32.xlu0 %v416, 56
        %v1158 = vpop.permute.xlu0 %1157
        %1159 = vrot.lane.b32.xlu0 %v418, 56
        %v1160 = vpop.permute.xlu0 %1159
        %1161 = vrot.lane.b32.xlu0 %v421, 56
        %v1162 = vpop.permute.xlu0 %1161
        %1163 = vrot.lane.b32.xlu0 %v423, 56
        %v1164 = vpop.permute.xlu0 %1163
        %1165 = vrot.lane.b32.xlu0 %v426, 56
        %v1166 = vpop.permute.xlu0 %1165
        %1167 = vrot.lane.b32.xlu0 %v428, 56
        %v1168 = vpop.permute.xlu0 %1167
        %1169 = vrot.lane.b32.xlu0 %v431, 56
        %v1170 = vpop.permute.xlu0 %1169
        %1171 = vrot.lane.b32.xlu0 %v433, 56
        %v1172 = vpop.permute.xlu0 %1171
        %1173 = vrot.lane.b32.xlu0 %v520, 56
        %v1174 = vpop.permute.xlu0 %1173
        %1175 = vrot.lane.b32.xlu0 %v522, 56
        %v1176 = vpop.permute.xlu0 %1175
        %1177 = vrot.lane.b32.xlu0 %v533, 56
        %v1178 = vpop.permute.xlu0 %1177
        %1179 = vrot.lane.b32.xlu0 %v535, 56
        %v1180 = vpop.permute.xlu0 %1179
        %1213 = vrot.lane.b32.xlu0 %v447, 64
        %v1214 = vpop.permute.xlu0 %1213
        %1215 = vrot.lane.b32.xlu0 %v449, 64
        %v1216 = vpop.permute.xlu0 %1215
        %1217 = vrot.lane.b32.xlu0 %v452, 64
        %v1218 = vpop.permute.xlu0 %1217
        %1219 = vrot.lane.b32.xlu0 %v454, 64
        %v1220 = vpop.permute.xlu0 %1219
        %1221 = vrot.lane.b32.xlu0 %v457, 64
        %v1222 = vpop.permute.xlu0 %1221
        %1223 = vrot.lane.b32.xlu0 %v459, 64
        %v1224 = vpop.permute.xlu0 %1223
        %1225 = vrot.lane.b32.xlu0 %v462, 64
        %v1226 = vpop.permute.xlu0 %1225
        %1227 = vrot.lane.b32.xlu0 %v464, 64
        %v1228 = vpop.permute.xlu0 %1227
        %1229 = vrot.lane.b32.xlu0 %v467, 64
        %v1230 = vpop.permute.xlu0 %1229
        %1231 = vrot.lane.b32.xlu0 %v469, 64
        %v1232 = vpop.permute.xlu0 %1231
        %1233 = vrot.lane.b32.xlu0 %v472, 64
        %v1234 = vpop.permute.xlu0 %1233
        %1235 = vrot.lane.b32.xlu0 %v474, 64
        %v1236 = vpop.permute.xlu0 %1235
        %1237 = vrot.lane.b32.xlu0 %v477, 64
        %v1238 = vpop.permute.xlu0 %1237
        %1239 = vrot.lane.b32.xlu0 %v479, 64
        %v1240 = vpop.permute.xlu0 %1239
        %1241 = vrot.lane.b32.xlu0 %v482, 64
        %v1242 = vpop.permute.xlu0 %1241
        %1243 = vrot.lane.b32.xlu0 %v484, 64
        %v1244 = vpop.permute.xlu0 %1243
        %1245 = vrot.lane.b32.xlu0 %v487, 64
        %v1246 = vpop.permute.xlu0 %1245
        %1247 = vrot.lane.b32.xlu0 %v489, 64
        %v1248 = vpop.permute.xlu0 %1247
        %1249 = vrot.lane.b32.xlu0 %v492, 64
        %v1250 = vpop.permute.xlu0 %1249
        %1251 = vrot.lane.b32.xlu0 %v494, 64
        %v1252 = vpop.permute.xlu0 %1251
        %1253 = vrot.lane.b32.xlu0 %v497, 64
        %v1254 = vpop.permute.xlu0 %1253
        %1255 = vrot.lane.b32.xlu0 %v499, 64
        %v1256 = vpop.permute.xlu0 %1255
        %1257 = vrot.lane.b32.xlu0 %v502, 64
        %v1258 = vpop.permute.xlu0 %1257
        %1259 = vrot.lane.b32.xlu0 %v504, 64
        %v1260 = vpop.permute.xlu0 %1259
        %1261 = vrot.lane.b32.xlu0 %v507, 64
        %v1262 = vpop.permute.xlu0 %1261
        %1263 = vrot.lane.b32.xlu0 %v509, 64
        %v1264 = vpop.permute.xlu0 %1263
        %1265 = vrot.lane.b32.xlu0 %v512, 64
        %v1266 = vpop.permute.xlu0 %1265
        %1267 = vrot.lane.b32.xlu0 %v514, 64
        %v1268 = vpop.permute.xlu0 %1267
        %1269 = vrot.lane.b32.xlu0 %v525, 64
        %v1270 = vpop.permute.xlu0 %1269
        %1271 = vrot.lane.b32.xlu0 %v527, 64
        %v1272 = vpop.permute.xlu0 %1271
        %1273 = vrot.lane.b32.xlu0 %v538, 64
        %v1274 = vpop.permute.xlu0 %1273
        %1275 = vrot.lane.b32.xlu0 %v540, 64
        %v1276 = vpop.permute.xlu0 %1275
        %vm1309 = vcmask 64512
        %v1310 = vsel %vm1309, %v251, %v542
        %v1311 = vsel %vm1309, %v252, %v544
        %v1312 = vsel %vm1309, %v254, %v546
        %v1313 = vsel %vm1309, %v255, %v548
        %v1314 = vsel %vm1309, %v257, %v550
        %v1315 = vsel %vm1309, %v258, %v552
        %v1316 = vsel %vm1309, %v260, %v554
        %v1317 = vsel %vm1309, %v261, %v556
        %v1318 = vsel %vm1309, %v263, %v558
        %v1319 = vsel %vm1309, %v264, %v560
        %v1320 = vsel %vm1309, %v266, %v562
        %v1321 = vsel %vm1309, %v267, %v564
        %v1322 = vsel %vm1309, %v269, %v566
        %v1323 = vsel %vm1309, %v270, %v568
        %v1324 = vsel %vm1309, %v272, %v570
        %v1325 = vsel %vm1309, %v273, %v572
        %v1326 = vsel %vm1309, %v275, %v574
        %v1327 = vsel %vm1309, %v276, %v576
        %v1328 = vsel %vm1309, %v278, %v578
        %v1329 = vsel %vm1309, %v279, %v580
        %v1330 = vsel %vm1309, %v281, %v582
        %v1331 = vsel %vm1309, %v282, %v584
        %v1332 = vsel %vm1309, %v284, %v586
        %v1333 = vsel %vm1309, %v285, %v588
        %v1334 = vsel %vm1309, %v287, %v590
        %v1335 = vsel %vm1309, %v288, %v592
        %v1336 = vsel %vm1309, %v290, %v594
        %v1337 = vsel %vm1309, %v291, %v596
        %v1338 = vsel %vm1309, %v293, %v598
        %v1339 = vsel %vm1309, %v294, %v600
        %v1340 = vsel %vm1309, %v296, %v602
        %v1341 = vsel %vm1309, %v297, %v604
        %vm1342 = vcmask 130048
        %v1343 = vsel %vm1342, %v1310, %v638
        %v1344 = vsel %vm1342, %v1311, %v640
        %v1345 = vsel %vm1342, %v1312, %v642
        %v1346 = vsel %vm1342, %v1313, %v644
        %v1347 = vsel %vm1342, %v1314, %v646
        %v1348 = vsel %vm1342, %v1315, %v648
        %v1349 = vsel %vm1342, %v1316, %v650
        %v1350 = vsel %vm1342, %v1317, %v652
        %v1351 = vsel %vm1342, %v1318, %v654
        %v1352 = vsel %vm1342, %v1319, %v656
        %v1353 = vsel %vm1342, %v1320, %v658
        %v1354 = vsel %vm1342, %v1321, %v660
        %v1355 = vsel %vm1342, %v1322, %v662
        %v1356 = vsel %vm1342, %v1323, %v664
        %v1357 = vsel %vm1342, %v1324, %v666
        %v1358 = vsel %vm1342, %v1325, %v668
        %v1359 = vsel %vm1342, %v1326, %v670
        %v1360 = vsel %vm1342, %v1327, %v672
        %v1361 = vsel %vm1342, %v1328, %v674
        %v1362 = vsel %vm1342, %v1329, %v676
        %v1363 = vsel %vm1342, %v1330, %v678
        %v1364 = vsel %vm1342, %v1331, %v680
        %v1365 = vsel %vm1342, %v1332, %v682
        %v1366 = vsel %vm1342, %v1333, %v684
        %v1367 = vsel %vm1342, %v1334, %v686
        %v1368 = vsel %vm1342, %v1335, %v688
        %v1369 = vsel %vm1342, %v1336, %v690
        %v1370 = vsel %vm1342, %v1337, %v692
        %v1371 = vsel %vm1342, %v1338, %v694
        %v1372 = vsel %vm1342, %v1339, %v696
        %v1373 = vsel %vm1342, %v1340, %v698
        %v1374 = vsel %vm1342, %v1341, %v700
        %vm1375 = vcmask 195584
        %v1376 = vsel %vm1375, %v1343, %v734
        %v1377 = vsel %vm1375, %v1344, %v736
        %v1378 = vsel %vm1375, %v1345, %v738
        %v1379 = vsel %vm1375, %v1346, %v740
        %v1380 = vsel %vm1375, %v1347, %v742
        %v1381 = vsel %vm1375, %v1348, %v744
        %v1382 = vsel %vm1375, %v1349, %v746
        %v1383 = vsel %vm1375, %v1350, %v748
        %v1384 = vsel %vm1375, %v1351, %v750
        %v1385 = vsel %vm1375, %v1352, %v752
        %v1386 = vsel %vm1375, %v1353, %v754
        %v1387 = vsel %vm1375, %v1354, %v756
        %v1388 = vsel %vm1375, %v1355, %v758
        %v1389 = vsel %vm1375, %v1356, %v760
        %v1390 = vsel %vm1375, %v1357, %v762
        %v1391 = vsel %vm1375, %v1358, %v764
        %v1392 = vsel %vm1375, %v1359, %v766
        %v1393 = vsel %vm1375, %v1360, %v768
        %v1394 = vsel %vm1375, %v1361, %v770
        %v1395 = vsel %vm1375, %v1362, %v772
        %v1396 = vsel %vm1375, %v1363, %v774
        %v1397 = vsel %vm1375, %v1364, %v776
        %v1398 = vsel %vm1375, %v1365, %v778
        %v1399 = vsel %vm1375, %v1366, %v780
        %v1400 = vsel %vm1375, %v1367, %v782
        %v1401 = vsel %vm1375, %v1368, %v784
        %v1402 = vsel %vm1375, %v1369, %v786
        %v1403 = vsel %vm1375, %v1370, %v788
        %v1404 = vsel %vm1375, %v1371, %v790
        %v1405 = vsel %vm1375, %v1372, %v792
        %v1406 = vsel %vm1375, %v1373, %v794
        %v1407 = vsel %vm1375, %v1374, %v796
        %vm1408 = vcmask 261120
        %v1409 = vsel %vm1408, %v1376, %v830
        %v1410 = vsel %vm1408, %v1377, %v832
        %v1411 = vsel %vm1408, %v1378, %v834
        %v1412 = vsel %vm1408, %v1379, %v836
        %v1413 = vsel %vm1408, %v1380, %v838
        %v1414 = vsel %vm1408, %v1381, %v840
        %v1415 = vsel %vm1408, %v1382, %v842
        %v1416 = vsel %vm1408, %v1383, %v844
        %v1417 = vsel %vm1408, %v1384, %v846
        %v1418 = vsel %vm1408, %v1385, %v848
        %v1419 = vsel %vm1408, %v1386, %v850
        %v1420 = vsel %vm1408, %v1387, %v852
        %v1421 = vsel %vm1408, %v1388, %v854
        %v1422 = vsel %vm1408, %v1389, %v856
        %v1423 = vsel %vm1408, %v1390, %v858
        %v1424 = vsel %vm1408, %v1391, %v860
        %v1425 = vsel %vm1408, %v1392, %v862
        %v1426 = vsel %vm1408, %v1393, %v864
        %v1427 = vsel %vm1408, %v1394, %v866
        %v1428 = vsel %vm1408, %v1395, %v868
        %v1429 = vsel %vm1408, %v1396, %v870
        %v1430 = vsel %vm1408, %v1397, %v872
        %v1431 = vsel %vm1408, %v1398, %v874
        %v1432 = vsel %vm1408, %v1399, %v876
        %v1433 = vsel %vm1408, %v1400, %v878
        %v1434 = vsel %vm1408, %v1401, %v880
        %v1435 = vsel %vm1408, %v1402, %v882
        %v1436 = vsel %vm1408, %v1403, %v884
        %v1437 = vsel %vm1408, %v1404, %v886
        %v1438 = vsel %vm1408, %v1405, %v888
        %v1439 = vsel %vm1408, %v1406, %v890
        %v1440 = vsel %vm1408, %v1407, %v892
        %vm1441 = vcmask 326656
        %v1442 = vsel %vm1441, %v1409, %v926
        %v1443 = vsel %vm1441, %v1410, %v928
        %v1444 = vsel %vm1441, %v1411, %v930
        %v1445 = vsel %vm1441, %v1412, %v932
        %v1446 = vsel %vm1441, %v1413, %v934
        %v1447 = vsel %vm1441, %v1414, %v936
        %v1448 = vsel %vm1441, %v1415, %v938
        %v1449 = vsel %vm1441, %v1416, %v940
        %v1450 = vsel %vm1441, %v1417, %v942
        %v1451 = vsel %vm1441, %v1418, %v944
        %v1452 = vsel %vm1441, %v1419, %v946
        %v1453 = vsel %vm1441, %v1420, %v948
        %v1454 = vsel %vm1441, %v1421, %v950
        %v1455 = vsel %vm1441, %v1422, %v952
        %v1456 = vsel %vm1441, %v1423, %v954
        %v1457 = vsel %vm1441, %v1424, %v956
        %v1458 = vsel %vm1441, %v1425, %v958
        %v1459 = vsel %vm1441, %v1426, %v960
        %v1460 = vsel %vm1441, %v1427, %v962
        %v1461 = vsel %vm1441, %v1428, %v964
        %v1462 = vsel %vm1441, %v1429, %v966
        %v1463 = vsel %vm1441, %v1430, %v968
        %v1464 = vsel %vm1441, %v1431, %v970
        %v1465 = vsel %vm1441, %v1432, %v972
        %v1466 = vsel %vm1441, %v1433, %v974
        %v1467 = vsel %vm1441, %v1434, %v976
        %v1468 = vsel %vm1441, %v1435, %v978
        %v1469 = vsel %vm1441, %v1436, %v980
        %v1470 = vsel %vm1441, %v1437, %v982
        %v1471 = vsel %vm1441, %v1438, %v984
        %v1472 = vsel %vm1441, %v1439, %v986
        %v1473 = vsel %vm1441, %v1440, %v988
        %vm1474 = vcmask 392192
        %v1475 = vsel %vm1474, %v1442, %v1022
        %v1476 = vsel %vm1474, %v1443, %v1024
        %v1477 = vsel %vm1474, %v1444, %v1026
        %v1478 = vsel %vm1474, %v1445, %v1028
        %v1479 = vsel %vm1474, %v1446, %v1030
        %v1480 = vsel %vm1474, %v1447, %v1032
        %v1481 = vsel %vm1474, %v1448, %v1034
        %v1482 = vsel %vm1474, %v1449, %v1036
        %v1483 = vsel %vm1474, %v1450, %v1038
        %v1484 = vsel %vm1474, %v1451, %v1040
        %v1485 = vsel %vm1474, %v1452, %v1042
        %v1486 = vsel %vm1474, %v1453, %v1044
        %v1487 = vsel %vm1474, %v1454, %v1046
        %v1488 = vsel %vm1474, %v1455, %v1048
        %v1489 = vsel %vm1474, %v1456, %v1050
        %v1490 = vsel %vm1474, %v1457, %v1052
        %v1491 = vsel %vm1474, %v1458, %v1054
        %v1492 = vsel %vm1474, %v1459, %v1056
        %v1493 = vsel %vm1474, %v1460, %v1058
        %v1494 = vsel %vm1474, %v1461, %v1060
        %v1495 = vsel %vm1474, %v1462, %v1062
        %v1496 = vsel %vm1474, %v1463, %v1064
        %v1497 = vsel %vm1474, %v1464, %v1066
        %v1498 = vsel %vm1474, %v1465, %v1068
        %v1499 = vsel %vm1474, %v1466, %v1070
        %v1500 = vsel %vm1474, %v1467, %v1072
        %v1501 = vsel %vm1474, %v1468, %v1074
        %v1502 = vsel %vm1474, %v1469, %v1076
        %v1503 = vsel %vm1474, %v1470, %v1078
        %v1504 = vsel %vm1474, %v1471, %v1080
        %v1505 = vsel %vm1474, %v1472, %v1082
        %v1506 = vsel %vm1474, %v1473, %v1084
        %vm1507 = vcmask 457728
        %v1508 = vsel %vm1507, %v1475, %v1118
        %v1509 = vsel %vm1507, %v1476, %v1120
        %v1510 = vsel %vm1507, %v1477, %v1122
        %v1511 = vsel %vm1507, %v1478, %v1124
        %v1512 = vsel %vm1507, %v1479, %v1126
        %v1513 = vsel %vm1507, %v1480, %v1128
        %v1514 = vsel %vm1507, %v1481, %v1130
        %v1515 = vsel %vm1507, %v1482, %v1132
        %v1516 = vsel %vm1507, %v1483, %v1134
        %v1517 = vsel %vm1507, %v1484, %v1136
        %v1518 = vsel %vm1507, %v1485, %v1138
        %v1519 = vsel %vm1507, %v1486, %v1140
        %v1520 = vsel %vm1507, %v1487, %v1142
        %v1521 = vsel %vm1507, %v1488, %v1144
        %v1522 = vsel %vm1507, %v1489, %v1146
        %v1523 = vsel %vm1507, %v1490, %v1148
        %v1524 = vsel %vm1507, %v1491, %v1150
        %v1525 = vsel %vm1507, %v1492, %v1152
        %v1526 = vsel %vm1507, %v1493, %v1154
        %v1527 = vsel %vm1507, %v1494, %v1156
        %v1528 = vsel %vm1507, %v1495, %v1158
        %v1529 = vsel %vm1507, %v1496, %v1160
        %v1530 = vsel %vm1507, %v1497, %v1162
        %v1531 = vsel %vm1507, %v1498, %v1164
        %v1532 = vsel %vm1507, %v1499, %v1166
        %v1533 = vsel %vm1507, %v1500, %v1168
        %v1534 = vsel %vm1507, %v1501, %v1170
        %v1535 = vsel %vm1507, %v1502, %v1172
        %v1536 = vsel %vm1507, %v1503, %v1174
        %v1537 = vsel %vm1507, %v1504, %v1176
        %v1538 = vsel %vm1507, %v1505, %v1178
        %v1539 = vsel %vm1507, %v1506, %v1180
        %vm1540 = vcmask 523264
        %v1541 = vsel %vm1540, %v1508, %v1214
        %v1542 = vsel %vm1540, %v1509, %v1216
        %v1543 = vsel %vm1540, %v1510, %v1218
        %v1544 = vsel %vm1540, %v1511, %v1220
        %v1545 = vsel %vm1540, %v1512, %v1222
        %v1546 = vsel %vm1540, %v1513, %v1224
        %v1547 = vsel %vm1540, %v1514, %v1226
        %v1548 = vsel %vm1540, %v1515, %v1228
        %v1549 = vsel %vm1540, %v1516, %v1230
        %v1550 = vsel %vm1540, %v1517, %v1232
        %v1551 = vsel %vm1540, %v1518, %v1234
        %v1552 = vsel %vm1540, %v1519, %v1236
        %v1553 = vsel %vm1540, %v1520, %v1238
        %v1554 = vsel %vm1540, %v1521, %v1240
        %v1555 = vsel %vm1540, %v1522, %v1242
        %v1556 = vsel %vm1540, %v1523, %v1244
        %v1557 = vsel %vm1540, %v1524, %v1246
        %v1558 = vsel %vm1540, %v1525, %v1248
        %v1559 = vsel %vm1540, %v1526, %v1250
        %v1560 = vsel %vm1540, %v1527, %v1252
        %v1561 = vsel %vm1540, %v1528, %v1254
        %v1562 = vsel %vm1540, %v1529, %v1256
        %v1563 = vsel %vm1540, %v1530, %v1258
        %v1564 = vsel %vm1540, %v1531, %v1260
        %v1565 = vsel %vm1540, %v1532, %v1262
        %v1566 = vsel %vm1540, %v1533, %v1264
        %v1567 = vsel %vm1540, %v1534, %v1266
        %v1568 = vsel %vm1540, %v1535, %v1268
        %v1569 = vsel %vm1540, %v1536, %v1270
        %v1570 = vsel %vm1540, %v1537, %v1272
        %v1571 = vsel %vm1540, %v1538, %v1274
        %v1572 = vsel %vm1540, %v1539, %v1276
        %v1573 = vld [vmem:[%s1] sm:$0xff]
        %v1574 = vld [vmem:[%s1 + $0x8] sm:$0xff]
        %v1575 = vld [vmem:[%s1 + $0x10] sm:$0xff]
        %v1576 = vld [vmem:[%s1 + $0x18] sm:$0xff]
        %v1577 = vld [vmem:[%s1 + $0x20] sm:$0xff]
        %v1578 = vld [vmem:[%s1 + $0x28] sm:$0xff]
        %v1579 = vld [vmem:[%s1 + $0x30] sm:$0xff]
        %v1580 = vld [vmem:[%s1 + $0x38] sm:$0xff]
        %v1581 = vld [vmem:[%s1 + $0x40] sm:$0xff]
        %v1582 = vld [vmem:[#allocation3] sm:$0x1]
        %v1584 = vlaneseq
        %v1585 = vshrl.u32 %v1584, 7
        %v1586 = vsub.s32 0, %v1585
        %v1587 = vrot.slane %v1582, %v1586
        %vm1589 = vcmask 588800
        %v1591 = vsel %vm1589, %v1541, 0
        %v1594 = vsel %vm1589, %v1542, 0
        %v1597 = vsel %vm1589, %v1543, 0
        %v1600 = vsel %vm1589, %v1544, 0
        %v1603 = vsel %vm1589, %v1545, 0
        %v1606 = vsel %vm1589, %v1546, 0
        %v1609 = vsel %vm1589, %v1547, 0
        %v1612 = vsel %vm1589, %v1548, 0
        %v1615 = vsel %vm1589, %v1549, 0
        %v1618 = vsel %vm1589, %v1550, 0
        %v1621 = vsel %vm1589, %v1551, 0
        %v1624 = vsel %vm1589, %v1552, 0
        %v1627 = vsel %vm1589, %v1553, 0
        %v1630 = vsel %vm1589, %v1554, 0
        %v1633 = vsel %vm1589, %v1555, 0
        %v1636 = vsel %vm1589, %v1556, 0
        %v1639 = vsel %vm1589, %v1557, 0
        %v1642 = vsel %vm1589, %v1558, 0
        %v1645 = vsel %vm1589, %v1559, 0
        %v1648 = vsel %vm1589, %v1560, 0
        %v1651 = vsel %vm1589, %v1561, 0
        %v1654 = vsel %vm1589, %v1562, 0
        %v1657 = vsel %vm1589, %v1563, 0
        %v1660 = vsel %vm1589, %v1564, 0
        %v1663 = vsel %vm1589, %v1565, 0
        %v1666 = vsel %vm1589, %v1566, 0
        %v1669 = vsel %vm1589, %v1567, 0
        %v1672 = vsel %vm1589, %v1568, 0
        %v1675 = vsel %vm1589, %v1569, 0
        %v1678 = vsel %vm1589, %v1570, 0
        %v1681 = vsel %vm1589, %v1571, 0
        %v1684 = vsel %vm1589, %v1572, 0
        %1686 = vmatprep.subr.mxu0 0.0
        %1687 = vmatpush1.msra.mxu0 0.0
        %1688 = vmatprep.subr.mxu0 0.0
        %1689 = vmatpush1.msra.mxu0 0.0
        %1690 = vmatprep.subr.mxu0 0.0
        %1691 = vmatpush1.msra.mxu0 0.0
        %1692 = vmatprep.subr.mxu0 0.0
        %1693 = vmatpush1.msra.mxu0 0.0
        %1694 = vmatprep.subr.mxu0 0.0
        %1695 = vmatpush1.msra.mxu0 0.0
        %1696 = vmatprep.subr.mxu0 0.0
        %1697 = vmatpush1.msra.mxu0 0.0
        %1698 = vmatprep.subr.mxu0 0.0
        %1699 = vmatpush1.msra.mxu0 0.0
        %1700 = vmatprep.subr.mxu0 0.0
        %1701 = vmatpush1.msra.mxu0 %v1581
        %1702 = vmatprep.subr.mxu0 0.0
        %1703 = vmatpush1.msra.mxu0 %v1580
        %1704 = vmatprep.subr.mxu0 0.0
        %1705 = vmatpush1.msra.mxu0 %v1579
        %1706 = vmatprep.subr.mxu0 0.0
        %1707 = vmatpush1.msra.mxu0 %v1578
        %1708 = vmatprep.subr.mxu0 0.0
        %1709 = vmatpush1.msra.mxu0 %v1577
        %1710 = vmatprep.subr.mxu0 0.0
        %1711 = vmatpush1.msra.mxu0 %v1576
        %1712 = vmatprep.subr.mxu0 0.0
        %1713 = vmatpush1.msra.mxu0 %v1575
        %1714 = vmatprep.subr.mxu0 0.0
        %1715 = vmatpush1.msra.mxu0 %v1574
        %1716 = vmatprep.subr.mxu0 0.0
        %1717 = vmatpush1.msra.mxu0 %v1573
        %1718 = vmatprep.subr.mxu0 0.0
        %1719 = vmatpush2.msra.mxu0 0.0
        %1720 = vmatprep.subr.mxu0 0.0
        %1721 = vmatpush2.msra.mxu0 0.0
        %1722 = vmatprep.subr.mxu0 0.0
        %1723 = vmatpush2.msra.mxu0 0.0
        %1724 = vmatprep.subr.mxu0 0.0
        %1725 = vmatpush2.msra.mxu0 0.0
        %1726 = vmatprep.subr.mxu0 0.0
        %1727 = vmatpush2.msra.mxu0 0.0
        %1728 = vmatprep.subr.mxu0 0.0
        %1729 = vmatpush2.msra.mxu0 0.0
        %1730 = vmatprep.subr.mxu0 0.0
        %1731 = vmatpush2.msra.mxu0 0.0
        %1732 = vmatprep.subr.mxu0 0.0
        %1733 = vmatpush2.msra.mxu0 0.0
        %1734 = vmatprep.subr.mxu0 0.0
        %1735 = vmatpush2.msra.mxu0 0.0
        %1736 = vmatprep.subr.mxu0 0.0
        %1737 = vmatpush2.msra.mxu0 0.0
        %1738 = vmatprep.subr.mxu0 0.0
        %1739 = vmatpush2.msra.mxu0 0.0
        %1740 = vmatprep.subr.mxu0 0.0
        %1741 = vmatpush2.msra.mxu0 0.0
        %1742 = vmatprep.subr.mxu0 0.0
        %1743 = vmatpush2.msra.mxu0 0.0
        %1744 = vmatprep.subr.mxu0 0.0
        %1745 = vmatpush2.msra.mxu0 0.0
        %1746 = vmatprep.subr.mxu0 0.0
        %1747 = vmatpush2.msra.mxu0 0.0
        %1748 = vmatprep.subr.mxu0 0.0
        %1749 = vmatpush2.msra.mxu0 0.0
        %1750 = vmatprep.mubr.f32.mxu0 0.0
        %1751 = vmatmul.mubr.f32.gmra.mxu0 %v1591
        %v1752 = vpop.f32.mrf.mxu0
        %v1753 = vadd.f32 %v1587, %v1752
        %v1754 = vpop.f32.mrf.mxu0
        %1755 = vmatprep.mubr.f32.mxu0 0.0
        %1756 = vmatmul.mubr.f32.gmra.mxu0 %v1594
        %v1757 = vpop.f32.mrf.mxu0
        %v1758 = vadd.f32 %v1587, %v1757
        %v1759 = vpop.f32.mrf.mxu0
        %1760 = vmatprep.mubr.f32.mxu0 0.0
        %1761 = vmatmul.mubr.f32.gmra.mxu0 %v1597
        %v1762 = vpop.f32.mrf.mxu0
        %v1763 = vadd.f32 %v1587, %v1762
        %v1764 = vpop.f32.mrf.mxu0
        %1765 = vmatprep.mubr.f32.mxu0 0.0
        %1766 = vmatmul.mubr.f32.gmra.mxu0 %v1600
        %v1767 = vpop.f32.mrf.mxu0
        %v1768 = vadd.f32 %v1587, %v1767
        %v1769 = vpop.f32.mrf.mxu0
        %1770 = vmatprep.mubr.f32.mxu0 0.0
        %1771 = vmatmul.mubr.f32.gmra.mxu0 %v1603
        %v1772 = vpop.f32.mrf.mxu0
        %v1773 = vadd.f32 %v1587, %v1772
        %v1774 = vpop.f32.mrf.mxu0
        %1775 = vmatprep.mubr.f32.mxu0 0.0
        %1776 = vmatmul.mubr.f32.gmra.mxu0 %v1606
        %v1777 = vpop.f32.mrf.mxu0
        %v1778 = vadd.f32 %v1587, %v1777
        %v1779 = vpop.f32.mrf.mxu0
        %1780 = vmatprep.mubr.f32.mxu0 0.0
        %1781 = vmatmul.mubr.f32.gmra.mxu0 %v1609
        %v1782 = vpop.f32.mrf.mxu0
        %v1783 = vadd.f32 %v1587, %v1782
        %v1784 = vpop.f32.mrf.mxu0
        %1785 = vmatprep.mubr.f32.mxu0 0.0
        %1786 = vmatmul.mubr.f32.gmra.mxu0 %v1612
        %v1787 = vpop.f32.mrf.mxu0
        %v1788 = vadd.f32 %v1587, %v1787
        %v1789 = vpop.f32.mrf.mxu0
        %1790 = vmatprep.mubr.f32.mxu0 0.0
        %1791 = vmatmul.mubr.f32.gmra.mxu0 %v1615
        %v1792 = vpop.f32.mrf.mxu0
        %v1793 = vadd.f32 %v1587, %v1792
        %v1794 = vpop.f32.mrf.mxu0
        %1795 = vmatprep.mubr.f32.mxu0 0.0
        %1796 = vmatmul.mubr.f32.gmra.mxu0 %v1618
        %v1797 = vpop.f32.mrf.mxu0
        %v1798 = vadd.f32 %v1587, %v1797
        %v1799 = vpop.f32.mrf.mxu0
        %1800 = vmatprep.mubr.f32.mxu0 0.0
        %1801 = vmatmul.mubr.f32.gmra.mxu0 %v1621
        %v1802 = vpop.f32.mrf.mxu0
        %v1803 = vadd.f32 %v1587, %v1802
        %v1804 = vpop.f32.mrf.mxu0
        %1805 = vmatprep.mubr.f32.mxu0 0.0
        %1806 = vmatmul.mubr.f32.gmra.mxu0 %v1624
        %v1807 = vpop.f32.mrf.mxu0
        %v1808 = vadd.f32 %v1587, %v1807
        %v1809 = vpop.f32.mrf.mxu0
        %1810 = vmatprep.mubr.f32.mxu0 0.0
        %1811 = vmatmul.mubr.f32.gmra.mxu0 %v1627
        %v1812 = vpop.f32.mrf.mxu0
        %v1813 = vadd.f32 %v1587, %v1812
        %v1814 = vpop.f32.mrf.mxu0
        %1815 = vmatprep.mubr.f32.mxu0 0.0
        %1816 = vmatmul.mubr.f32.gmra.mxu0 %v1630
        %v1817 = vpop.f32.mrf.mxu0
        %v1818 = vadd.f32 %v1587, %v1817
        %v1819 = vpop.f32.mrf.mxu0
        %1820 = vmatprep.mubr.f32.mxu0 0.0
        %1821 = vmatmul.mubr.f32.gmra.mxu0 %v1633
        %v1822 = vpop.f32.mrf.mxu0
        %v1823 = vadd.f32 %v1587, %v1822
        %v1824 = vpop.f32.mrf.mxu0
        %1825 = vmatprep.mubr.f32.mxu0 0.0
        %1826 = vmatmul.mubr.f32.gmra.mxu0 %v1636
        %v1827 = vpop.f32.mrf.mxu0
        %v1828 = vadd.f32 %v1587, %v1827
        %v1829 = vpop.f32.mrf.mxu0
        %1830 = vmatprep.mubr.f32.mxu0 0.0
        %1831 = vmatmul.mubr.f32.gmra.mxu0 %v1639
        %v1832 = vpop.f32.mrf.mxu0
        %v1833 = vadd.f32 %v1587, %v1832
        %v1834 = vpop.f32.mrf.mxu0
        %1835 = vmatprep.mubr.f32.mxu0 0.0
        %1836 = vmatmul.mubr.f32.gmra.mxu0 %v1642
        %v1837 = vpop.f32.mrf.mxu0
        %v1838 = vadd.f32 %v1587, %v1837
        %v1839 = vpop.f32.mrf.mxu0
        %1840 = vmatprep.mubr.f32.mxu0 0.0
        %1841 = vmatmul.mubr.f32.gmra.mxu0 %v1645
        %v1842 = vpop.f32.mrf.mxu0
        %v1843 = vadd.f32 %v1587, %v1842
        %v1844 = vpop.f32.mrf.mxu0
        %1845 = vmatprep.mubr.f32.mxu0 0.0
        %1846 = vmatmul.mubr.f32.gmra.mxu0 %v1648
        %v1847 = vpop.f32.mrf.mxu0
        %v1848 = vadd.f32 %v1587, %v1847
        %v1849 = vpop.f32.mrf.mxu0
        %1850 = vmatprep.mubr.f32.mxu0 0.0
        %1851 = vmatmul.mubr.f32.gmra.mxu0 %v1651
        %v1852 = vpop.f32.mrf.mxu0
        %v1853 = vadd.f32 %v1587, %v1852
        %v1854 = vpop.f32.mrf.mxu0
        %1855 = vmatprep.mubr.f32.mxu0 0.0
        %1856 = vmatmul.mubr.f32.gmra.mxu0 %v1654
        %v1857 = vpop.f32.mrf.mxu0
        %v1858 = vadd.f32 %v1587, %v1857
        %v1859 = vpop.f32.mrf.mxu0
        %1860 = vmatprep.mubr.f32.mxu0 0.0
        %1861 = vmatmul.mubr.f32.gmra.mxu0 %v1657
        %v1862 = vpop.f32.mrf.mxu0
        %v1863 = vadd.f32 %v1587, %v1862
        %v1864 = vpop.f32.mrf.mxu0
        %1865 = vmatprep.mubr.f32.mxu0 0.0
        %1866 = vmatmul.mubr.f32.gmra.mxu0 %v1660
        %v1867 = vpop.f32.mrf.mxu0
        %v1868 = vadd.f32 %v1587, %v1867
        %v1869 = vpop.f32.mrf.mxu0
        %1870 = vmatprep.mubr.f32.mxu0 0.0
        %1871 = vmatmul.mubr.f32.gmra.mxu0 %v1663
        %v1872 = vpop.f32.mrf.mxu0
        %v1873 = vadd.f32 %v1587, %v1872
        %v1874 = vpop.f32.mrf.mxu0
        %1875 = vmatprep.mubr.f32.mxu0 0.0
        %1876 = vmatmul.mubr.f32.gmra.mxu0 %v1666
        %v1877 = vpop.f32.mrf.mxu0
        %v1878 = vadd.f32 %v1587, %v1877
        %v1879 = vpop.f32.mrf.mxu0
        %1880 = vmatprep.mubr.f32.mxu0 0.0
        %1881 = vmatmul.mubr.f32.gmra.mxu0 %v1669
        %v1882 = vpop.f32.mrf.mxu0
        %v1883 = vadd.f32 %v1587, %v1882
        %v1884 = vpop.f32.mrf.mxu0
        %1885 = vmatprep.mubr.f32.mxu0 0.0
        %1886 = vmatmul.mubr.f32.gmra.mxu0 %v1672
        %v1887 = vpop.f32.mrf.mxu0
        %v1888 = vadd.f32 %v1587, %v1887
        %v1889 = vpop.f32.mrf.mxu0
        %1890 = vmatprep.mubr.f32.mxu0 0.0
        %1891 = vmatmul.mubr.f32.gmra.mxu0 %v1675
        %v1892 = vpop.f32.mrf.mxu0
        %v1893 = vadd.f32 %v1587, %v1892
        %v1894 = vpop.f32.mrf.mxu0
        %1895 = vmatprep.mubr.f32.mxu0 0.0
        %1896 = vmatmul.mubr.f32.gmra.mxu0 %v1678
        %v1897 = vpop.f32.mrf.mxu0
        %v1898 = vadd.f32 %v1587, %v1897
        %v1899 = vpop.f32.mrf.mxu0
        %1900 = vmatprep.mubr.f32.mxu0 0.0
        %1901 = vmatmul.mubr.f32.gmra.mxu0 %v1681
        %v1902 = vpop.f32.mrf.mxu0
        %v1903 = vadd.f32 %v1587, %v1902
        %v1904 = vpop.f32.mrf.mxu0
        %1905 = vmatprep.mubr.f32.mxu0 0.0
        %1906 = vmatmul.mubr.f32.gmra.mxu0 %v1684
        %v1907 = vpop.f32.mrf.mxu0
        %v1908 = vadd.f32 %v1587, %v1907
        %v1909 = vpop.f32.mrf.mxu0
        %1910 = vdwg.mxu0
        %v1911 = vmax.f32 %v1753, 0.0
        %v1912 = vmax.f32 %v1758, 0.0
        %v1913 = vmax.f32 %v1763, 0.0
        %v1914 = vmax.f32 %v1768, 0.0
        %v1915 = vmax.f32 %v1773, 0.0
        %v1916 = vmax.f32 %v1778, 0.0
        %v1917 = vmax.f32 %v1783, 0.0
        %v1918 = vmax.f32 %v1788, 0.0
        %v1919 = vmax.f32 %v1793, 0.0
        %v1920 = vmax.f32 %v1798, 0.0
        %v1921 = vmax.f32 %v1803, 0.0
        %v1922 = vmax.f32 %v1808, 0.0
        %v1923 = vmax.f32 %v1813, 0.0
        %v1924 = vmax.f32 %v1818, 0.0
        %v1925 = vmax.f32 %v1823, 0.0
        %v1926 = vmax.f32 %v1828, 0.0
        %v1927 = vmax.f32 %v1833, 0.0
        %v1928 = vmax.f32 %v1838, 0.0
        %v1929 = vmax.f32 %v1843, 0.0
        %v1930 = vmax.f32 %v1848, 0.0
        %v1931 = vmax.f32 %v1853, 0.0
        %v1932 = vmax.f32 %v1858, 0.0
        %v1933 = vmax.f32 %v1863, 0.0
        %v1934 = vmax.f32 %v1868, 0.0
        %v1935 = vmax.f32 %v1873, 0.0
        %v1936 = vmax.f32 %v1878, 0.0
        %v1937 = vmax.f32 %v1883, 0.0
        %v1938 = vmax.f32 %v1888, 0.0
        %v1939 = vmax.f32 %v1893, 0.0
        %v1940 = vmax.f32 %v1898, 0.0
        %v1941 = vmax.f32 %v1903, 0.0
        %v1942 = vmax.f32 %v1908, 0.0
        %1943 = vst.msk [vmem:[#allocation2] sm:$0xff] %vm1408, 0.0
        %1944 = vst.msk [vmem:[#allocation2 + $0x8] sm:$0xff] %vm1408, 0.0
        %vm1945 = vcmask 254976
        %1946 = vst.msk [vmem:[#allocation2 + $0x10] sm:$0x3] %vm1945, 0.0
        %1947 = vst.msk [vmem:[#allocation2 + $0x18] sm:$0xff] %vm1408, 0.0
        %1948 = vst.msk [vmem:[#allocation2 + $0x20] sm:$0xff] %vm1408, 0.0
        %1949 = vst.msk [vmem:[#allocation2 + $0x28] sm:$0x3] %vm1945, 0.0
        %1950 = vst.msk [vmem:[#allocation2 + $0x30] sm:$0xff] %vm1408, 0.0
        %1951 = vst.msk [vmem:[#allocation2 + $0x38] sm:$0xff] %vm1408, 0.0
        %1952 = vst.msk [vmem:[#allocation2 + $0x40] sm:$0x3] %vm1945, 0.0
        %1953 = vst.msk [vmem:[#allocation2 + $0x48] sm:$0xff] %vm1408, 0.0
        %1954 = vst.msk [vmem:[#allocation2 + $0x50] sm:$0xff] %vm1408, 0.0
        %1955 = vst.msk [vmem:[#allocation2 + $0x58] sm:$0x3] %vm1945, 0.0
        %1956 = vst.msk [vmem:[#allocation2 + $0x60] sm:$0xff] %vm1408, 0.0
        %1957 = vst.msk [vmem:[#allocation2 + $0x68] sm:$0xff] %vm1408, 0.0
        %1958 = vst.msk [vmem:[#allocation2 + $0x70] sm:$0x3] %vm1945, 0.0
        %1959 = vst.msk [vmem:[#allocation2 + $0x78] sm:$0xff] %vm1408, 0.0
        %1960 = vst.msk [vmem:[#allocation2 + $0x80] sm:$0xff] %vm1408, 0.0
        %1961 = vst.msk [vmem:[#allocation2 + $0x88] sm:$0x3] %vm1945, 0.0
        %1962 = vst.msk [vmem:[#allocation2 + $0x90] sm:$0xff] %vm1408, 0.0
        %1963 = vst.msk [vmem:[#allocation2 + $0x98] sm:$0xff] %vm1408, 0.0
        %1964 = vst.msk [vmem:[#allocation2 + $0xa0] sm:$0x3] %vm1945, 0.0
        %1965 = vst.msk [vmem:[#allocation2 + $0xa8] sm:$0xff] %vm1408, 0.0
        %1966 = vst.msk [vmem:[#allocation2 + $0xb0] sm:$0xff] %vm1408, 0.0
        %1967 = vst.msk [vmem:[#allocation2 + $0xb8] sm:$0x3] %vm1945, 0.0
        %1968 = vst.msk [vmem:[#allocation2 + $0xc0] sm:$0xff] %vm1408, 0.0
        %1969 = vst.msk [vmem:[#allocation2 + $0xc8] sm:$0xff] %vm1408, 0.0
        %1970 = vst.msk [vmem:[#allocation2 + $0xd0] sm:$0x3] %vm1945, 0.0
        %1971 = vst.msk [vmem:[#allocation2 + $0xd8] sm:$0xff] %vm1408, 0.0
        %1972 = vst.msk [vmem:[#allocation2 + $0xe0] sm:$0xff] %vm1408, 0.0
        %1973 = vst.msk [vmem:[#allocation2 + $0xe8] sm:$0x3] %vm1945, 0.0
        %1974 = vst.msk [vmem:[#allocation2 + $0xf0] sm:$0xff] %vm1408, 0.0
        %1975 = vst.msk [vmem:[#allocation2 + $0xf8] sm:$0xff] %vm1408, 0.0
        %1976 = vst.msk [vmem:[#allocation2 + $0x100] sm:$0x3] %vm1945, 0.0
        %1977 = vst.msk [vmem:[#allocation2 + $0x108] sm:$0xff] %vm1408, 0.0
        %1978 = vst.msk [vmem:[#allocation2 + $0x110] sm:$0xff] %vm1408, 0.0
        %1979 = vst.msk [vmem:[#allocation2 + $0x118] sm:$0x3] %vm1945, 0.0
        %1980 = vst.msk [vmem:[#allocation2 + $0x120] sm:$0xff] %vm1408, 0.0
        %1981 = vst.msk [vmem:[#allocation2 + $0x128] sm:$0xff] %vm1408, 0.0
        %1982 = vst.msk [vmem:[#allocation2 + $0x130] sm:$0x3] %vm1945, 0.0
        %1983 = vst.msk [vmem:[#allocation2 + $0x138] sm:$0xff] %vm1408, 0.0
        %1984 = vst.msk [vmem:[#allocation2 + $0x140] sm:$0xff] %vm1408, 0.0
        %1985 = vst.msk [vmem:[#allocation2 + $0x148] sm:$0x3] %vm1945, 0.0
        %1986 = vst.msk [vmem:[#allocation2 + $0x150] sm:$0xff] %vm1408, 0.0
        %1987 = vst.msk [vmem:[#allocation2 + $0x158] sm:$0xff] %vm1408, 0.0
        %1988 = vst.msk [vmem:[#allocation2 + $0x160] sm:$0x3] %vm1945, 0.0
        %1989 = vst.msk [vmem:[#allocation2 + $0x168] sm:$0xff] %vm1408, 0.0
        %1990 = vst.msk [vmem:[#allocation2 + $0x170] sm:$0xff] %vm1408, 0.0
        %1991 = vst.msk [vmem:[#allocation2 + $0x178] sm:$0x3] %vm1945, 0.0
        %1992 = vst.msk [vmem:[#allocation2 + $0x180] sm:$0xff] %vm1408, 0.0
        %1993 = vst.msk [vmem:[#allocation2 + $0x188] sm:$0xff] %vm1408, 0.0
        %1994 = vst.msk [vmem:[#allocation2 + $0x190] sm:$0x3] %vm1945, 0.0
        %1995 = vst.msk [vmem:[#allocation2 + $0x198] sm:$0xff] %vm1408, 0.0
        %1996 = vst.msk [vmem:[#allocation2 + $0x1a0] sm:$0xff] %vm1408, 0.0
        %1997 = vst.msk [vmem:[#allocation2 + $0x1a8] sm:$0x3] %vm1945, 0.0
        %s1998 = scalar_lea.vmem [#allocation2], 24
        %1999 = vst.msk [vmem:[%s1998 + $0x1] sm:$0xff] %vm1408, %v1911
        %2000 = vst.msk [vmem:[%s1998 + $0x9] sm:$0xff] %vm1408, %v1912
        %2001 = vst.msk [vmem:[%s1998 + $0x19] sm:$0xff] %vm1408, %v1913
        %2002 = vst.msk [vmem:[%s1998 + $0x21] sm:$0xff] %vm1408, %v1914
        %2003 = vst.msk [vmem:[%s1998 + $0x31] sm:$0xff] %vm1408, %v1915
        %2004 = vst.msk [vmem:[%s1998 + $0x39] sm:$0xff] %vm1408, %v1916
        %2005 = vst.msk [vmem:[%s1998 + $0x49] sm:$0xff] %vm1408, %v1917
        %2006 = vst.msk [vmem:[%s1998 + $0x51] sm:$0xff] %vm1408, %v1918
        %2007 = vst.msk [vmem:[%s1998 + $0x61] sm:$0xff] %vm1408, %v1919
        %2008 = vst.msk [vmem:[%s1998 + $0x69] sm:$0xff] %vm1408, %v1920
        %2009 = vst.msk [vmem:[%s1998 + $0x79] sm:$0xff] %vm1408, %v1921
        %2010 = vst.msk [vmem:[%s1998 + $0x81] sm:$0xff] %vm1408, %v1922
        %2011 = vst.msk [vmem:[%s1998 + $0x91] sm:$0xff] %vm1408, %v1923
        %2012 = vst.msk [vmem:[%s1998 + $0x99] sm:$0xff] %vm1408, %v1924
        %2013 = vst.msk [vmem:[%s1998 + $0xa9] sm:$0xff] %vm1408, %v1925
        %2014 = vst.msk [vmem:[%s1998 + $0xb1] sm:$0xff] %vm1408, %v1926
        %2015 = vst.msk [vmem:[%s1998 + $0xc1] sm:$0xff] %vm1408, %v1927
        %2016 = vst.msk [vmem:[%s1998 + $0xc9] sm:$0xff] %vm1408, %v1928
        %2017 = vst.msk [vmem:[%s1998 + $0xd9] sm:$0xff] %vm1408, %v1929
        %2018 = vst.msk [vmem:[%s1998 + $0xe1] sm:$0xff] %vm1408, %v1930
        %2019 = vst.msk [vmem:[%s1998 + $0xf1] sm:$0xff] %vm1408, %v1931
        %2020 = vst.msk [vmem:[%s1998 + $0xf9] sm:$0xff] %vm1408, %v1932
        %2021 = vst.msk [vmem:[%s1998 + $0x109] sm:$0xff] %vm1408, %v1933
        %2022 = vst.msk [vmem:[%s1998 + $0x111] sm:$0xff] %vm1408, %v1934
        %2023 = vst.msk [vmem:[%s1998 + $0x121] sm:$0xff] %vm1408, %v1935
        %2024 = vst.msk [vmem:[%s1998 + $0x129] sm:$0xff] %vm1408, %v1936
        %2025 = vst.msk [vmem:[%s1998 + $0x139] sm:$0xff] %vm1408, %v1937
        %2026 = vst.msk [vmem:[%s1998 + $0x141] sm:$0xff] %vm1408, %v1938
        %2027 = vst.msk [vmem:[%s1998 + $0x151] sm:$0xff] %vm1408, %v1939
        %2028 = vst.msk [vmem:[%s1998 + $0x159] sm:$0xff] %vm1408, %v1940
        %2029 = vst.msk [vmem:[%s1998 + $0x169] sm:$0xff] %vm1408, %v1941
        %2030 = vst.msk [vmem:[%s1998 + $0x171] sm:$0xff] %vm1408, %v1942
        %v2031 = vld [vmem:[#allocation2] sm:$0xff]
        %v2032 = vld [vmem:[#allocation2 + $0x8] sm:$0xff]
        %v2033 = vld [vmem:[#allocation2 + $0x18] sm:$0xff]
        %v2034 = vld [vmem:[#allocation2 + $0x20] sm:$0xff]
        %v2035 = vld [vmem:[#allocation2 + $0x30] sm:$0xff]
        %v2036 = vld [vmem:[#allocation2 + $0x38] sm:$0xff]
        %v2037 = vld [vmem:[#allocation2 + $0x48] sm:$0xff]
        %v2038 = vld [vmem:[#allocation2 + $0x50] sm:$0xff]
        %v2039 = vld [vmem:[#allocation2 + $0x60] sm:$0xff]
        %v2040 = vld [vmem:[#allocation2 + $0x68] sm:$0xff]
        %v2041 = vld [vmem:[#allocation2 + $0x78] sm:$0xff]
        %v2042 = vld [vmem:[#allocation2 + $0x80] sm:$0xff]
        %v2043 = vld [vmem:[#allocation2 + $0x90] sm:$0xff]
        %v2044 = vld [vmem:[#allocation2 + $0x98] sm:$0xff]
        %v2045 = vld [vmem:[#allocation2 + $0xa8] sm:$0xff]
        %v2046 = vld [vmem:[#allocation2 + $0xb0] sm:$0xff]
        %v2047 = vld [vmem:[#allocation2 + $0xc0] sm:$0xff]
        %v2048 = vld [vmem:[#allocation2 + $0xc8] sm:$0xff]
        %v2049 = vld [vmem:[#allocation2 + $0xd8] sm:$0xff]
        %v2050 = vld [vmem:[#allocation2 + $0xe0] sm:$0xff]
        %v2051 = vld [vmem:[#allocation2 + $0xf0] sm:$0xff]
        %v2052 = vld [vmem:[#allocation2 + $0xf8] sm:$0xff]
        %v2053 = vld [vmem:[#allocation2 + $0x108] sm:$0xff]
        %v2054 = vld [vmem:[#allocation2 + $0x110] sm:$0xff]
        %v2055 = vld [vmem:[#allocation2 + $0x120] sm:$0xff]
        %v2056 = vld [vmem:[#allocation2 + $0x128] sm:$0xff]
        %v2057 = vld [vmem:[#allocation2 + $0x138] sm:$0xff]
        %v2058 = vld [vmem:[#allocation2 + $0x140] sm:$0xff]
        %v2059 = vld [vmem:[#allocation2 + $0x150] sm:$0xff]
        %v2060 = vld [vmem:[#allocation2 + $0x158] sm:$0xff]
        %v2061 = vld [vmem:[#allocation2 + $0x168] sm:$0xff]
        %v2062 = vld [vmem:[#allocation2 + $0x170] sm:$0xff]
        %v2063 = vld [vmem:[#allocation2 + $0x1] sm:$0xff]
        %v2064 = vld [vmem:[#allocation2 + $0x9] sm:$0xff]
        %v2065 = vld [vmem:[#allocation2 + $0x19] sm:$0xff]
        %v2066 = vld [vmem:[#allocation2 + $0x21] sm:$0xff]
        %v2067 = vld [vmem:[#allocation2 + $0x31] sm:$0xff]
        %v2068 = vld [vmem:[#allocation2 + $0x39] sm:$0xff]
        %v2069 = vld [vmem:[#allocation2 + $0x49] sm:$0xff]
        %v2070 = vld [vmem:[#allocation2 + $0x51] sm:$0xff]
        %v2071 = vld [vmem:[#allocation2 + $0x61] sm:$0xff]
        %v2072 = vld [vmem:[#allocation2 + $0x69] sm:$0xff]
        %v2073 = vld [vmem:[#allocation2 + $0x79] sm:$0xff]
        %v2074 = vld [vmem:[#allocation2 + $0x81] sm:$0xff]
        %v2075 = vld [vmem:[#allocation2 + $0x91] sm:$0xff]
        %v2076 = vld [vmem:[#allocation2 + $0x99] sm:$0xff]
        %v2077 = vld [vmem:[#allocation2 + $0xa9] sm:$0xff]
        %v2078 = vld [vmem:[#allocation2 + $0xb1] sm:$0xff]
        %v2079 = vld [vmem:[#allocation2 + $0xc1] sm:$0xff]
        %v2080 = vld [vmem:[#allocation2 + $0xc9] sm:$0xff]
        %v2081 = vld [vmem:[#allocation2 + $0xd9] sm:$0xff]
        %v2082 = vld [vmem:[#allocation2 + $0xe1] sm:$0xff]
        %v2083 = vld [vmem:[#allocation2 + $0xf1] sm:$0xff]
        %v2084 = vld [vmem:[#allocation2 + $0xf9] sm:$0xff]
        %v2085 = vld [vmem:[#allocation2 + $0x109] sm:$0xff]
        %v2086 = vld [vmem:[#allocation2 + $0x111] sm:$0xff]
        %v2087 = vld [vmem:[#allocation2 + $0x121] sm:$0xff]
        %v2088 = vld [vmem:[#allocation2 + $0x129] sm:$0xff]
        %v2089 = vld [vmem:[#allocation2 + $0x139] sm:$0xff]
        %v2090 = vld [vmem:[#allocation2 + $0x141] sm:$0xff]
        %v2091 = vld [vmem:[#allocation2 + $0x151] sm:$0xff]
        %v2092 = vld [vmem:[#allocation2 + $0x159] sm:$0xff]
        %v2093 = vld [vmem:[#allocation2 + $0x169] sm:$0xff]
        %v2094 = vld [vmem:[#allocation2 + $0x171] sm:$0xff]
        %v2095 = vld [vmem:[#allocation2 + $0x2] sm:$0xff]
        %v2096 = vld [vmem:[#allocation2 + $0xa] sm:$0xff]
        %v2097 = vld [vmem:[#allocation2 + $0x1a] sm:$0xff]
        %v2098 = vld [vmem:[#allocation2 + $0x22] sm:$0xff]
        %v2099 = vld [vmem:[#allocation2 + $0x32] sm:$0xff]
        %v2100 = vld [vmem:[#allocation2 + $0x3a] sm:$0xff]
        %v2101 = vld [vmem:[#allocation2 + $0x4a] sm:$0xff]
        %v2102 = vld [vmem:[#allocation2 + $0x52] sm:$0xff]
        %v2103 = vld [vmem:[#allocation2 + $0x62] sm:$0xff]
        %v2104 = vld [vmem:[#allocation2 + $0x6a] sm:$0xff]
        %v2105 = vld [vmem:[#allocation2 + $0x7a] sm:$0xff]
        %v2106 = vld [vmem:[#allocation2 + $0x82] sm:$0xff]
        %v2107 = vld [vmem:[#allocation2 + $0x92] sm:$0xff]
        %v2108 = vld [vmem:[#allocation2 + $0x9a] sm:$0xff]
        %v2109 = vld [vmem:[#allocation2 + $0xaa] sm:$0xff]
        %v2110 = vld [vmem:[#allocation2 + $0xb2] sm:$0xff]
        %v2111 = vld [vmem:[#allocation2 + $0xc2] sm:$0xff]
        %v2112 = vld [vmem:[#allocation2 + $0xca] sm:$0xff]
        %v2113 = vld [vmem:[#allocation2 + $0xda] sm:$0xff]
        %v2114 = vld [vmem:[#allocation2 + $0xe2] sm:$0xff]
        %v2115 = vld [vmem:[#allocation2 + $0xf2] sm:$0xff]
        %v2116 = vld [vmem:[#allocation2 + $0xfa] sm:$0xff]
        %v2117 = vld [vmem:[#allocation2 + $0x10a] sm:$0xff]
        %v2118 = vld [vmem:[#allocation2 + $0x112] sm:$0xff]
        %v2119 = vld [vmem:[#allocation2 + $0x122] sm:$0xff]
        %v2120 = vld [vmem:[#allocation2 + $0x12a] sm:$0xff]
        %v2121 = vld [vmem:[#allocation2 + $0x13a] sm:$0xff]
        %v2122 = vld [vmem:[#allocation2 + $0x142] sm:$0xff]
        %v2123 = vld [vmem:[#allocation2 + $0x152] sm:$0xff]
        %v2124 = vld [vmem:[#allocation2 + $0x15a] sm:$0xff]
        %v2125 = vld [vmem:[#allocation2 + $0x16a] sm:$0xff]
        %v2126 = vld [vmem:[#allocation2 + $0x172] sm:$0xff]
        %v2127 = vld [vmem:[%s1998] sm:$0xff]
        %v2128 = vld [vmem:[%s1998 + $0x8] sm:$0xff]
        %v2129 = vld [vmem:[%s1998 + $0x18] sm:$0xff]
        %v2130 = vld [vmem:[%s1998 + $0x20] sm:$0xff]
        %v2131 = vld [vmem:[%s1998 + $0x30] sm:$0xff]
        %v2132 = vld [vmem:[%s1998 + $0x38] sm:$0xff]
        %v2133 = vld [vmem:[%s1998 + $0x48] sm:$0xff]
        %v2134 = vld [vmem:[%s1998 + $0x50] sm:$0xff]
        %v2135 = vld [vmem:[%s1998 + $0x60] sm:$0xff]
        %v2136 = vld [vmem:[%s1998 + $0x68] sm:$0xff]
        %v2137 = vld [vmem:[%s1998 + $0x78] sm:$0xff]
        %v2138 = vld [vmem:[%s1998 + $0x80] sm:$0xff]
        %v2139 = vld [vmem:[%s1998 + $0x90] sm:$0xff]
        %v2140 = vld [vmem:[%s1998 + $0x98] sm:$0xff]
        %v2141 = vld [vmem:[%s1998 + $0xa8] sm:$0xff]
        %v2142 = vld [vmem:[%s1998 + $0xb0] sm:$0xff]
        %v2143 = vld [vmem:[%s1998 + $0xc0] sm:$0xff]
        %v2144 = vld [vmem:[%s1998 + $0xc8] sm:$0xff]
        %v2145 = vld [vmem:[%s1998 + $0xd8] sm:$0xff]
        %v2146 = vld [vmem:[%s1998 + $0xe0] sm:$0xff]
        %v2147 = vld [vmem:[%s1998 + $0xf0] sm:$0xff]
        %v2148 = vld [vmem:[%s1998 + $0xf8] sm:$0xff]
        %v2149 = vld [vmem:[%s1998 + $0x108] sm:$0xff]
        %v2150 = vld [vmem:[%s1998 + $0x110] sm:$0xff]
        %v2151 = vld [vmem:[%s1998 + $0x120] sm:$0xff]
        %v2152 = vld [vmem:[%s1998 + $0x128] sm:$0xff]
        %v2153 = vld [vmem:[%s1998 + $0x138] sm:$0xff]
        %v2154 = vld [vmem:[%s1998 + $0x140] sm:$0xff]
        %v2155 = vld [vmem:[%s1998 + $0x150] sm:$0xff]
        %v2156 = vld [vmem:[%s1998 + $0x158] sm:$0xff]
        %v2157 = vld [vmem:[%s1998 + $0x168] sm:$0xff]
        %v2158 = vld [vmem:[%s1998 + $0x170] sm:$0xff]
        %v2159 = vld [vmem:[%s1998 + $0x1] sm:$0xff]
        %v2160 = vld [vmem:[%s1998 + $0x9] sm:$0xff]
        %v2161 = vld [vmem:[%s1998 + $0x19] sm:$0xff]
        %v2162 = vld [vmem:[%s1998 + $0x21] sm:$0xff]
        %v2163 = vld [vmem:[%s1998 + $0x31] sm:$0xff]
        %v2164 = vld [vmem:[%s1998 + $0x39] sm:$0xff]
        %v2165 = vld [vmem:[%s1998 + $0x49] sm:$0xff]
        %v2166 = vld [vmem:[%s1998 + $0x51] sm:$0xff]
        %v2167 = vld [vmem:[%s1998 + $0x61] sm:$0xff]
        %v2168 = vld [vmem:[%s1998 + $0x69] sm:$0xff]
        %v2169 = vld [vmem:[%s1998 + $0x79] sm:$0xff]
        %v2170 = vld [vmem:[%s1998 + $0x81] sm:$0xff]
        %v2171 = vld [vmem:[%s1998 + $0x91] sm:$0xff]
        %v2172 = vld [vmem:[%s1998 + $0x99] sm:$0xff]
        %v2173 = vld [vmem:[%s1998 + $0xa9] sm:$0xff]
        %v2174 = vld [vmem:[%s1998 + $0xb1] sm:$0xff]
        %v2175 = vld [vmem:[%s1998 + $0xc1] sm:$0xff]
        %v2176 = vld [vmem:[%s1998 + $0xc9] sm:$0xff]
        %v2177 = vld [vmem:[%s1998 + $0xd9] sm:$0xff]
        %v2178 = vld [vmem:[%s1998 + $0xe1] sm:$0xff]
        %v2179 = vld [vmem:[%s1998 + $0xf1] sm:$0xff]
        %v2180 = vld [vmem:[%s1998 + $0xf9] sm:$0xff]
        %v2181 = vld [vmem:[%s1998 + $0x109] sm:$0xff]
        %v2182 = vld [vmem:[%s1998 + $0x111] sm:$0xff]
        %v2183 = vld [vmem:[%s1998 + $0x121] sm:$0xff]
        %v2184 = vld [vmem:[%s1998 + $0x129] sm:$0xff]
        %v2185 = vld [vmem:[%s1998 + $0x139] sm:$0xff]
        %v2186 = vld [vmem:[%s1998 + $0x141] sm:$0xff]
        %v2187 = vld [vmem:[%s1998 + $0x151] sm:$0xff]
        %v2188 = vld [vmem:[%s1998 + $0x159] sm:$0xff]
        %v2189 = vld [vmem:[%s1998 + $0x169] sm:$0xff]
        %v2190 = vld [vmem:[%s1998 + $0x171] sm:$0xff]
        %v2191 = vld [vmem:[%s1998 + $0x2] sm:$0xff]
        %v2192 = vld [vmem:[%s1998 + $0xa] sm:$0xff]
        %v2193 = vld [vmem:[%s1998 + $0x1a] sm:$0xff]
        %v2194 = vld [vmem:[%s1998 + $0x22] sm:$0xff]
        %v2195 = vld [vmem:[%s1998 + $0x32] sm:$0xff]
        %v2196 = vld [vmem:[%s1998 + $0x3a] sm:$0xff]
        %v2197 = vld [vmem:[%s1998 + $0x4a] sm:$0xff]
        %v2198 = vld [vmem:[%s1998 + $0x52] sm:$0xff]
        %v2199 = vld [vmem:[%s1998 + $0x62] sm:$0xff]
        %v2200 = vld [vmem:[%s1998 + $0x6a] sm:$0xff]
        %v2201 = vld [vmem:[%s1998 + $0x7a] sm:$0xff]
        %v2202 = vld [vmem:[%s1998 + $0x82] sm:$0xff]
        %v2203 = vld [vmem:[%s1998 + $0x92] sm:$0xff]
        %v2204 = vld [vmem:[%s1998 + $0x9a] sm:$0xff]
        %v2205 = vld [vmem:[%s1998 + $0xaa] sm:$0xff]
        %v2206 = vld [vmem:[%s1998 + $0xb2] sm:$0xff]
        %v2207 = vld [vmem:[%s1998 + $0xc2] sm:$0xff]
        %v2208 = vld [vmem:[%s1998 + $0xca] sm:$0xff]
        %v2209 = vld [vmem:[%s1998 + $0xda] sm:$0xff]
        %v2210 = vld [vmem:[%s1998 + $0xe2] sm:$0xff]
        %v2211 = vld [vmem:[%s1998 + $0xf2] sm:$0xff]
        %v2212 = vld [vmem:[%s1998 + $0xfa] sm:$0xff]
        %v2213 = vld [vmem:[%s1998 + $0x10a] sm:$0xff]
        %v2214 = vld [vmem:[%s1998 + $0x112] sm:$0xff]
        %v2215 = vld [vmem:[%s1998 + $0x122] sm:$0xff]
        %v2216 = vld [vmem:[%s1998 + $0x12a] sm:$0xff]
        %v2217 = vld [vmem:[%s1998 + $0x13a] sm:$0xff]
        %v2218 = vld [vmem:[%s1998 + $0x142] sm:$0xff]
        %v2219 = vld [vmem:[%s1998 + $0x152] sm:$0xff]
        %v2220 = vld [vmem:[%s1998 + $0x15a] sm:$0xff]
        %v2221 = vld [vmem:[%s1998 + $0x16a] sm:$0xff]
        %v2222 = vld [vmem:[%s1998 + $0x172] sm:$0xff]
        %s2223 = scalar_lea.vmem [#allocation2], 48
        %v2224 = vld [vmem:[%s2223] sm:$0xff]
        %v2225 = vld [vmem:[%s2223 + $0x8] sm:$0xff]
        %v2226 = vld [vmem:[%s2223 + $0x18] sm:$0xff]
        %v2227 = vld [vmem:[%s2223 + $0x20] sm:$0xff]
        %v2228 = vld [vmem:[%s2223 + $0x30] sm:$0xff]
        %v2229 = vld [vmem:[%s2223 + $0x38] sm:$0xff]
        %v2230 = vld [vmem:[%s2223 + $0x48] sm:$0xff]
        %v2231 = vld [vmem:[%s2223 + $0x50] sm:$0xff]
        %v2232 = vld [vmem:[%s2223 + $0x60] sm:$0xff]
        %v2233 = vld [vmem:[%s2223 + $0x68] sm:$0xff]
        %v2234 = vld [vmem:[%s2223 + $0x78] sm:$0xff]
        %v2235 = vld [vmem:[%s2223 + $0x80] sm:$0xff]
        %v2236 = vld [vmem:[%s2223 + $0x90] sm:$0xff]
        %v2237 = vld [vmem:[%s2223 + $0x98] sm:$0xff]
        %v2238 = vld [vmem:[%s2223 + $0xa8] sm:$0xff]
        %v2239 = vld [vmem:[%s2223 + $0xb0] sm:$0xff]
        %v2240 = vld [vmem:[%s2223 + $0xc0] sm:$0xff]
        %v2241 = vld [vmem:[%s2223 + $0xc8] sm:$0xff]
        %v2242 = vld [vmem:[%s2223 + $0xd8] sm:$0xff]
        %v2243 = vld [vmem:[%s2223 + $0xe0] sm:$0xff]
        %v2244 = vld [vmem:[%s2223 + $0xf0] sm:$0xff]
        %v2245 = vld [vmem:[%s2223 + $0xf8] sm:$0xff]
        %v2246 = vld [vmem:[%s2223 + $0x108] sm:$0xff]
        %v2247 = vld [vmem:[%s2223 + $0x110] sm:$0xff]
        %v2248 = vld [vmem:[%s2223 + $0x120] sm:$0xff]
        %v2249 = vld [vmem:[%s2223 + $0x128] sm:$0xff]
        %v2250 = vld [vmem:[%s2223 + $0x138] sm:$0xff]
        %v2251 = vld [vmem:[%s2223 + $0x140] sm:$0xff]
        %v2252 = vld [vmem:[%s2223 + $0x150] sm:$0xff]
        %v2253 = vld [vmem:[%s2223 + $0x158] sm:$0xff]
        %v2254 = vld [vmem:[%s2223 + $0x168] sm:$0xff]
        %v2255 = vld [vmem:[%s2223 + $0x170] sm:$0xff]
        %v2256 = vld [vmem:[%s2223 + $0x1] sm:$0xff]
        %v2257 = vld [vmem:[%s2223 + $0x9] sm:$0xff]
        %v2258 = vld [vmem:[%s2223 + $0x19] sm:$0xff]
        %v2259 = vld [vmem:[%s2223 + $0x21] sm:$0xff]
        %v2260 = vld [vmem:[%s2223 + $0x31] sm:$0xff]
        %v2261 = vld [vmem:[%s2223 + $0x39] sm:$0xff]
        %v2262 = vld [vmem:[%s2223 + $0x49] sm:$0xff]
        %v2263 = vld [vmem:[%s2223 + $0x51] sm:$0xff]
        %v2264 = vld [vmem:[%s2223 + $0x61] sm:$0xff]
        %v2265 = vld [vmem:[%s2223 + $0x69] sm:$0xff]
        %v2266 = vld [vmem:[%s2223 + $0x79] sm:$0xff]
        %v2267 = vld [vmem:[%s2223 + $0x81] sm:$0xff]
        %v2268 = vld [vmem:[%s2223 + $0x91] sm:$0xff]
        %v2269 = vld [vmem:[%s2223 + $0x99] sm:$0xff]
        %v2270 = vld [vmem:[%s2223 + $0xa9] sm:$0xff]
        %v2271 = vld [vmem:[%s2223 + $0xb1] sm:$0xff]
        %v2272 = vld [vmem:[%s2223 + $0xc1] sm:$0xff]
        %v2273 = vld [vmem:[%s2223 + $0xc9] sm:$0xff]
        %v2274 = vld [vmem:[%s2223 + $0xd9] sm:$0xff]
        %v2275 = vld [vmem:[%s2223 + $0xe1] sm:$0xff]
        %v2276 = vld [vmem:[%s2223 + $0xf1] sm:$0xff]
        %v2277 = vld [vmem:[%s2223 + $0xf9] sm:$0xff]
        %v2278 = vld [vmem:[%s2223 + $0x109] sm:$0xff]
        %v2279 = vld [vmem:[%s2223 + $0x111] sm:$0xff]
        %v2280 = vld [vmem:[%s2223 + $0x121] sm:$0xff]
        %v2281 = vld [vmem:[%s2223 + $0x129] sm:$0xff]
        %v2282 = vld [vmem:[%s2223 + $0x139] sm:$0xff]
        %v2283 = vld [vmem:[%s2223 + $0x141] sm:$0xff]
        %v2284 = vld [vmem:[%s2223 + $0x151] sm:$0xff]
        %v2285 = vld [vmem:[%s2223 + $0x159] sm:$0xff]
        %v2286 = vld [vmem:[%s2223 + $0x169] sm:$0xff]
        %v2287 = vld [vmem:[%s2223 + $0x171] sm:$0xff]
        %v2288 = vld [vmem:[%s2223 + $0x2] sm:$0xff]
        %v2289 = vld [vmem:[%s2223 + $0xa] sm:$0xff]
        %v2290 = vld [vmem:[%s2223 + $0x1a] sm:$0xff]
        %v2291 = vld [vmem:[%s2223 + $0x22] sm:$0xff]
        %v2292 = vld [vmem:[%s2223 + $0x32] sm:$0xff]
        %v2293 = vld [vmem:[%s2223 + $0x3a] sm:$0xff]
        %v2294 = vld [vmem:[%s2223 + $0x4a] sm:$0xff]
        %v2295 = vld [vmem:[%s2223 + $0x52] sm:$0xff]
        %v2296 = vld [vmem:[%s2223 + $0x62] sm:$0xff]
        %v2297 = vld [vmem:[%s2223 + $0x6a] sm:$0xff]
        %v2298 = vld [vmem:[%s2223 + $0x7a] sm:$0xff]
        %v2299 = vld [vmem:[%s2223 + $0x82] sm:$0xff]
        %v2300 = vld [vmem:[%s2223 + $0x92] sm:$0xff]
        %v2301 = vld [vmem:[%s2223 + $0x9a] sm:$0xff]
        %v2302 = vld [vmem:[%s2223 + $0xaa] sm:$0xff]
        %v2303 = vld [vmem:[%s2223 + $0xb2] sm:$0xff]
        %v2304 = vld [vmem:[%s2223 + $0xc2] sm:$0xff]
        %v2305 = vld [vmem:[%s2223 + $0xca] sm:$0xff]
        %v2306 = vld [vmem:[%s2223 + $0xda] sm:$0xff]
        %v2307 = vld [vmem:[%s2223 + $0xe2] sm:$0xff]
        %v2308 = vld [vmem:[%s2223 + $0xf2] sm:$0xff]
        %v2309 = vld [vmem:[%s2223 + $0xfa] sm:$0xff]
        %v2310 = vld [vmem:[%s2223 + $0x10a] sm:$0xff]
        %v2311 = vld [vmem:[%s2223 + $0x112] sm:$0xff]
        %v2312 = vld [vmem:[%s2223 + $0x122] sm:$0xff]
        %v2313 = vld [vmem:[%s2223 + $0x12a] sm:$0xff]
        %v2314 = vld [vmem:[%s2223 + $0x13a] sm:$0xff]
        %v2315 = vld [vmem:[%s2223 + $0x142] sm:$0xff]
        %v2316 = vld [vmem:[%s2223 + $0x152] sm:$0xff]
        %v2317 = vld [vmem:[%s2223 + $0x15a] sm:$0xff]
        %v2318 = vld [vmem:[%s2223 + $0x16a] sm:$0xff]
        %v2319 = vld [vmem:[%s2223 + $0x172] sm:$0xff]
        %2352 = vrot.lane.b32.xlu0 %v2063, 32
        %v2353 = vpop.permute.xlu0 %2352
        %2354 = vrot.lane.b32.xlu0 %v2064, 32
        %v2355 = vpop.permute.xlu0 %2354
        %2356 = vrot.lane.b32.xlu0 %v2065, 32
        %v2357 = vpop.permute.xlu0 %2356
        %2358 = vrot.lane.b32.xlu0 %v2066, 32
        %v2359 = vpop.permute.xlu0 %2358
        %2360 = vrot.lane.b32.xlu0 %v2067, 32
        %v2361 = vpop.permute.xlu0 %2360
        %2362 = vrot.lane.b32.xlu0 %v2068, 32
        %v2363 = vpop.permute.xlu0 %2362
        %2364 = vrot.lane.b32.xlu0 %v2069, 32
        %v2365 = vpop.permute.xlu0 %2364
        %2366 = vrot.lane.b32.xlu0 %v2070, 32
        %v2367 = vpop.permute.xlu0 %2366
        %2368 = vrot.lane.b32.xlu0 %v2071, 32
        %v2369 = vpop.permute.xlu0 %2368
        %2370 = vrot.lane.b32.xlu0 %v2072, 32
        %v2371 = vpop.permute.xlu0 %2370
        %2372 = vrot.lane.b32.xlu0 %v2073, 32
        %v2373 = vpop.permute.xlu0 %2372
        %2374 = vrot.lane.b32.xlu0 %v2074, 32
        %v2375 = vpop.permute.xlu0 %2374
        %2376 = vrot.lane.b32.xlu0 %v2075, 32
        %v2377 = vpop.permute.xlu0 %2376
        %2378 = vrot.lane.b32.xlu0 %v2076, 32
        %v2379 = vpop.permute.xlu0 %2378
        %2380 = vrot.lane.b32.xlu0 %v2077, 32
        %v2381 = vpop.permute.xlu0 %2380
        %2382 = vrot.lane.b32.xlu0 %v2078, 32
        %v2383 = vpop.permute.xlu0 %2382
        %2384 = vrot.lane.b32.xlu0 %v2079, 32
        %v2385 = vpop.permute.xlu0 %2384
        %2386 = vrot.lane.b32.xlu0 %v2080, 32
        %v2387 = vpop.permute.xlu0 %2386
        %2388 = vrot.lane.b32.xlu0 %v2081, 32
        %v2389 = vpop.permute.xlu0 %2388
        %2390 = vrot.lane.b32.xlu0 %v2082, 32
        %v2391 = vpop.permute.xlu0 %2390
        %2392 = vrot.lane.b32.xlu0 %v2083, 32
        %v2393 = vpop.permute.xlu0 %2392
        %2394 = vrot.lane.b32.xlu0 %v2084, 32
        %v2395 = vpop.permute.xlu0 %2394
        %2396 = vrot.lane.b32.xlu0 %v2085, 32
        %v2397 = vpop.permute.xlu0 %2396
        %2398 = vrot.lane.b32.xlu0 %v2086, 32
        %v2399 = vpop.permute.xlu0 %2398
        %2400 = vrot.lane.b32.xlu0 %v2087, 32
        %v2401 = vpop.permute.xlu0 %2400
        %2402 = vrot.lane.b32.xlu0 %v2088, 32
        %v2403 = vpop.permute.xlu0 %2402
        %2404 = vrot.lane.b32.xlu0 %v2089, 32
        %v2405 = vpop.permute.xlu0 %2404
        %2406 = vrot.lane.b32.xlu0 %v2090, 32
        %v2407 = vpop.permute.xlu0 %2406
        %2408 = vrot.lane.b32.xlu0 %v2091, 32
        %v2409 = vpop.permute.xlu0 %2408
        %2410 = vrot.lane.b32.xlu0 %v2092, 32
        %v2411 = vpop.permute.xlu0 %2410
        %2412 = vrot.lane.b32.xlu0 %v2093, 32
        %v2413 = vpop.permute.xlu0 %2412
        %2414 = vrot.lane.b32.xlu0 %v2094, 32
        %v2415 = vpop.permute.xlu0 %2414
        %2480 = vrot.lane.b32.xlu0 %v2095, 64
        %v2481 = vpop.permute.xlu0 %2480
        %2482 = vrot.lane.b32.xlu0 %v2096, 64
        %v2483 = vpop.permute.xlu0 %2482
        %2484 = vrot.lane.b32.xlu0 %v2097, 64
        %v2485 = vpop.permute.xlu0 %2484
        %2486 = vrot.lane.b32.xlu0 %v2098, 64
        %v2487 = vpop.permute.xlu0 %2486
        %2488 = vrot.lane.b32.xlu0 %v2099, 64
        %v2489 = vpop.permute.xlu0 %2488
        %2490 = vrot.lane.b32.xlu0 %v2100, 64
        %v2491 = vpop.permute.xlu0 %2490
        %2492 = vrot.lane.b32.xlu0 %v2101, 64
        %v2493 = vpop.permute.xlu0 %2492
        %2494 = vrot.lane.b32.xlu0 %v2102, 64
        %v2495 = vpop.permute.xlu0 %2494
        %2496 = vrot.lane.b32.xlu0 %v2103, 64
        %v2497 = vpop.permute.xlu0 %2496
        %2498 = vrot.lane.b32.xlu0 %v2104, 64
        %v2499 = vpop.permute.xlu0 %2498
        %2500 = vrot.lane.b32.xlu0 %v2105, 64
        %v2501 = vpop.permute.xlu0 %2500
        %2502 = vrot.lane.b32.xlu0 %v2106, 64
        %v2503 = vpop.permute.xlu0 %2502
        %2504 = vrot.lane.b32.xlu0 %v2107, 64
        %v2505 = vpop.permute.xlu0 %2504
        %2506 = vrot.lane.b32.xlu0 %v2108, 64
        %v2507 = vpop.permute.xlu0 %2506
        %2508 = vrot.lane.b32.xlu0 %v2109, 64
        %v2509 = vpop.permute.xlu0 %2508
        %2510 = vrot.lane.b32.xlu0 %v2110, 64
        %v2511 = vpop.permute.xlu0 %2510
        %2512 = vrot.lane.b32.xlu0 %v2111, 64
        %v2513 = vpop.permute.xlu0 %2512
        %2514 = vrot.lane.b32.xlu0 %v2112, 64
        %v2515 = vpop.permute.xlu0 %2514
        %2516 = vrot.lane.b32.xlu0 %v2113, 64
        %v2517 = vpop.permute.xlu0 %2516
        %2518 = vrot.lane.b32.xlu0 %v2114, 64
        %v2519 = vpop.permute.xlu0 %2518
        %2520 = vrot.lane.b32.xlu0 %v2115, 64
        %v2521 = vpop.permute.xlu0 %2520
        %2522 = vrot.lane.b32.xlu0 %v2116, 64
        %v2523 = vpop.permute.xlu0 %2522
        %2524 = vrot.lane.b32.xlu0 %v2117, 64
        %v2525 = vpop.permute.xlu0 %2524
        %2526 = vrot.lane.b32.xlu0 %v2118, 64
        %v2527 = vpop.permute.xlu0 %2526
        %2528 = vrot.lane.b32.xlu0 %v2119, 64
        %v2529 = vpop.permute.xlu0 %2528
        %2530 = vrot.lane.b32.xlu0 %v2120, 64
        %v2531 = vpop.permute.xlu0 %2530
        %2532 = vrot.lane.b32.xlu0 %v2121, 64
        %v2533 = vpop.permute.xlu0 %2532
        %2534 = vrot.lane.b32.xlu0 %v2122, 64
        %v2535 = vpop.permute.xlu0 %2534
        %2536 = vrot.lane.b32.xlu0 %v2123, 64
        %v2537 = vpop.permute.xlu0 %2536
        %2538 = vrot.lane.b32.xlu0 %v2124, 64
        %v2539 = vpop.permute.xlu0 %2538
        %2540 = vrot.lane.b32.xlu0 %v2125, 64
        %v2541 = vpop.permute.xlu0 %2540
        %2542 = vrot.lane.b32.xlu0 %v2126, 64
        %v2543 = vpop.permute.xlu0 %2542
        %2608 = vrot.lane.b32.xlu0 %v2127, 96
        %v2609 = vpop.permute.xlu0 %2608
        %2610 = vrot.lane.b32.xlu0 %v2128, 96
        %v2611 = vpop.permute.xlu0 %2610
        %2612 = vrot.lane.b32.xlu0 %v2129, 96
        %v2613 = vpop.permute.xlu0 %2612
        %2614 = vrot.lane.b32.xlu0 %v2130, 96
        %v2615 = vpop.permute.xlu0 %2614
        %2616 = vrot.lane.b32.xlu0 %v2131, 96
        %v2617 = vpop.permute.xlu0 %2616
        %2618 = vrot.lane.b32.xlu0 %v2132, 96
        %v2619 = vpop.permute.xlu0 %2618
        %2620 = vrot.lane.b32.xlu0 %v2133, 96
        %v2621 = vpop.permute.xlu0 %2620
        %2622 = vrot.lane.b32.xlu0 %v2134, 96
        %v2623 = vpop.permute.xlu0 %2622
        %2624 = vrot.lane.b32.xlu0 %v2135, 96
        %v2625 = vpop.permute.xlu0 %2624
        %2626 = vrot.lane.b32.xlu0 %v2136, 96
        %v2627 = vpop.permute.xlu0 %2626
        %2628 = vrot.lane.b32.xlu0 %v2137, 96
        %v2629 = vpop.permute.xlu0 %2628
        %2630 = vrot.lane.b32.xlu0 %v2138, 96
        %v2631 = vpop.permute.xlu0 %2630
        %2632 = vrot.lane.b32.xlu0 %v2139, 96
        %v2633 = vpop.permute.xlu0 %2632
        %2634 = vrot.lane.b32.xlu0 %v2140, 96
        %v2635 = vpop.permute.xlu0 %2634
        %2636 = vrot.lane.b32.xlu0 %v2141, 96
        %v2637 = vpop.permute.xlu0 %2636
        %2638 = vrot.lane.b32.xlu0 %v2142, 96
        %v2639 = vpop.permute.xlu0 %2638
        %2640 = vrot.lane.b32.xlu0 %v2143, 96
        %v2641 = vpop.permute.xlu0 %2640
        %2642 = vrot.lane.b32.xlu0 %v2144, 96
        %v2643 = vpop.permute.xlu0 %2642
        %2644 = vrot.lane.b32.xlu0 %v2145, 96
        %v2645 = vpop.permute.xlu0 %2644
        %2646 = vrot.lane.b32.xlu0 %v2146, 96
        %v2647 = vpop.permute.xlu0 %2646
        %2648 = vrot.lane.b32.xlu0 %v2147, 96
        %v2649 = vpop.permute.xlu0 %2648
        %2650 = vrot.lane.b32.xlu0 %v2148, 96
        %v2651 = vpop.permute.xlu0 %2650
        %2652 = vrot.lane.b32.xlu0 %v2149, 96
        %v2653 = vpop.permute.xlu0 %2652
        %2654 = vrot.lane.b32.xlu0 %v2150, 96
        %v2655 = vpop.permute.xlu0 %2654
        %2656 = vrot.lane.b32.xlu0 %v2151, 96
        %v2657 = vpop.permute.xlu0 %2656
        %2658 = vrot.lane.b32.xlu0 %v2152, 96
        %v2659 = vpop.permute.xlu0 %2658
        %2660 = vrot.lane.b32.xlu0 %v2153, 96
        %v2661 = vpop.permute.xlu0 %2660
        %2662 = vrot.lane.b32.xlu0 %v2154, 96
        %v2663 = vpop.permute.xlu0 %2662
        %2664 = vrot.lane.b32.xlu0 %v2155, 96
        %v2665 = vpop.permute.xlu0 %2664
        %2666 = vrot.lane.b32.xlu0 %v2156, 96
        %v2667 = vpop.permute.xlu0 %2666
        %2668 = vrot.lane.b32.xlu0 %v2157, 96
        %v2669 = vpop.permute.xlu0 %2668
        %2670 = vrot.lane.b32.xlu0 %v2158, 96
        %v2671 = vpop.permute.xlu0 %2670
        %2736 = vrot.lane.b32.xlu0 %v2191, 32
        %v2737 = vpop.permute.xlu0 %2736
        %2738 = vrot.lane.b32.xlu0 %v2192, 32
        %v2739 = vpop.permute.xlu0 %2738
        %2740 = vrot.lane.b32.xlu0 %v2193, 32
        %v2741 = vpop.permute.xlu0 %2740
        %2742 = vrot.lane.b32.xlu0 %v2194, 32
        %v2743 = vpop.permute.xlu0 %2742
        %2744 = vrot.lane.b32.xlu0 %v2195, 32
        %v2745 = vpop.permute.xlu0 %2744
        %2746 = vrot.lane.b32.xlu0 %v2196, 32
        %v2747 = vpop.permute.xlu0 %2746
        %2748 = vrot.lane.b32.xlu0 %v2197, 32
        %v2749 = vpop.permute.xlu0 %2748
        %2750 = vrot.lane.b32.xlu0 %v2198, 32
        %v2751 = vpop.permute.xlu0 %2750
        %2752 = vrot.lane.b32.xlu0 %v2199, 32
        %v2753 = vpop.permute.xlu0 %2752
        %2754 = vrot.lane.b32.xlu0 %v2200, 32
        %v2755 = vpop.permute.xlu0 %2754
        %2756 = vrot.lane.b32.xlu0 %v2201, 32
        %v2757 = vpop.permute.xlu0 %2756
        %2758 = vrot.lane.b32.xlu0 %v2202, 32
        %v2759 = vpop.permute.xlu0 %2758
        %2760 = vrot.lane.b32.xlu0 %v2203, 32
        %v2761 = vpop.permute.xlu0 %2760
        %2762 = vrot.lane.b32.xlu0 %v2204, 32
        %v2763 = vpop.permute.xlu0 %2762
        %2764 = vrot.lane.b32.xlu0 %v2205, 32
        %v2765 = vpop.permute.xlu0 %2764
        %2766 = vrot.lane.b32.xlu0 %v2206, 32
        %v2767 = vpop.permute.xlu0 %2766
        %2768 = vrot.lane.b32.xlu0 %v2207, 32
        %v2769 = vpop.permute.xlu0 %2768
        %2770 = vrot.lane.b32.xlu0 %v2208, 32
        %v2771 = vpop.permute.xlu0 %2770
        %2772 = vrot.lane.b32.xlu0 %v2209, 32
        %v2773 = vpop.permute.xlu0 %2772
        %2774 = vrot.lane.b32.xlu0 %v2210, 32
        %v2775 = vpop.permute.xlu0 %2774
        %2776 = vrot.lane.b32.xlu0 %v2211, 32
        %v2777 = vpop.permute.xlu0 %2776
        %2778 = vrot.lane.b32.xlu0 %v2212, 32
        %v2779 = vpop.permute.xlu0 %2778
        %2780 = vrot.lane.b32.xlu0 %v2213, 32
        %v2781 = vpop.permute.xlu0 %2780
        %2782 = vrot.lane.b32.xlu0 %v2214, 32
        %v2783 = vpop.permute.xlu0 %2782
        %2784 = vrot.lane.b32.xlu0 %v2215, 32
        %v2785 = vpop.permute.xlu0 %2784
        %2786 = vrot.lane.b32.xlu0 %v2216, 32
        %v2787 = vpop.permute.xlu0 %2786
        %2788 = vrot.lane.b32.xlu0 %v2217, 32
        %v2789 = vpop.permute.xlu0 %2788
        %2790 = vrot.lane.b32.xlu0 %v2218, 32
        %v2791 = vpop.permute.xlu0 %2790
        %2792 = vrot.lane.b32.xlu0 %v2219, 32
        %v2793 = vpop.permute.xlu0 %2792
        %2794 = vrot.lane.b32.xlu0 %v2220, 32
        %v2795 = vpop.permute.xlu0 %2794
        %2796 = vrot.lane.b32.xlu0 %v2221, 32
        %v2797 = vpop.permute.xlu0 %2796
        %2798 = vrot.lane.b32.xlu0 %v2222, 32
        %v2799 = vpop.permute.xlu0 %2798
        %2864 = vrot.lane.b32.xlu0 %v2224, 64
        %v2865 = vpop.permute.xlu0 %2864
        %2866 = vrot.lane.b32.xlu0 %v2225, 64
        %v2867 = vpop.permute.xlu0 %2866
        %2868 = vrot.lane.b32.xlu0 %v2226, 64
        %v2869 = vpop.permute.xlu0 %2868
        %2870 = vrot.lane.b32.xlu0 %v2227, 64
        %v2871 = vpop.permute.xlu0 %2870
        %2872 = vrot.lane.b32.xlu0 %v2228, 64
        %v2873 = vpop.permute.xlu0 %2872
        %2874 = vrot.lane.b32.xlu0 %v2229, 64
        %v2875 = vpop.permute.xlu0 %2874
        %2876 = vrot.lane.b32.xlu0 %v2230, 64
        %v2877 = vpop.permute.xlu0 %2876
        %2878 = vrot.lane.b32.xlu0 %v2231, 64
        %v2879 = vpop.permute.xlu0 %2878
        %2880 = vrot.lane.b32.xlu0 %v2232, 64
        %v2881 = vpop.permute.xlu0 %2880
        %2882 = vrot.lane.b32.xlu0 %v2233, 64
        %v2883 = vpop.permute.xlu0 %2882
        %2884 = vrot.lane.b32.xlu0 %v2234, 64
        %v2885 = vpop.permute.xlu0 %2884
        %2886 = vrot.lane.b32.xlu0 %v2235, 64
        %v2887 = vpop.permute.xlu0 %2886
        %2888 = vrot.lane.b32.xlu0 %v2236, 64
        %v2889 = vpop.permute.xlu0 %2888
        %2890 = vrot.lane.b32.xlu0 %v2237, 64
        %v2891 = vpop.permute.xlu0 %2890
        %2892 = vrot.lane.b32.xlu0 %v2238, 64
        %v2893 = vpop.permute.xlu0 %2892
        %2894 = vrot.lane.b32.xlu0 %v2239, 64
        %v2895 = vpop.permute.xlu0 %2894
        %2896 = vrot.lane.b32.xlu0 %v2240, 64
        %v2897 = vpop.permute.xlu0 %2896
        %2898 = vrot.lane.b32.xlu0 %v2241, 64
        %v2899 = vpop.permute.xlu0 %2898
        %2900 = vrot.lane.b32.xlu0 %v2242, 64
        %v2901 = vpop.permute.xlu0 %2900
        %2902 = vrot.lane.b32.xlu0 %v2243, 64
        %v2903 = vpop.permute.xlu0 %2902
        %2904 = vrot.lane.b32.xlu0 %v2244, 64
        %v2905 = vpop.permute.xlu0 %2904
        %2906 = vrot.lane.b32.xlu0 %v2245, 64
        %v2907 = vpop.permute.xlu0 %2906
        %2908 = vrot.lane.b32.xlu0 %v2246, 64
        %v2909 = vpop.permute.xlu0 %2908
        %2910 = vrot.lane.b32.xlu0 %v2247, 64
        %v2911 = vpop.permute.xlu0 %2910
        %2912 = vrot.lane.b32.xlu0 %v2248, 64
        %v2913 = vpop.permute.xlu0 %2912
        %2914 = vrot.lane.b32.xlu0 %v2249, 64
        %v2915 = vpop.permute.xlu0 %2914
        %2916 = vrot.lane.b32.xlu0 %v2250, 64
        %v2917 = vpop.permute.xlu0 %2916
        %2918 = vrot.lane.b32.xlu0 %v2251, 64
        %v2919 = vpop.permute.xlu0 %2918
        %2920 = vrot.lane.b32.xlu0 %v2252, 64
        %v2921 = vpop.permute.xlu0 %2920
        %2922 = vrot.lane.b32.xlu0 %v2253, 64
        %v2923 = vpop.permute.xlu0 %2922
        %2924 = vrot.lane.b32.xlu0 %v2254, 64
        %v2925 = vpop.permute.xlu0 %2924
        %2926 = vrot.lane.b32.xlu0 %v2255, 64
        %v2927 = vpop.permute.xlu0 %2926
        %2992 = vrot.lane.b32.xlu0 %v2256, 96
        %v2993 = vpop.permute.xlu0 %2992
        %2994 = vrot.lane.b32.xlu0 %v2257, 96
        %v2995 = vpop.permute.xlu0 %2994
        %2996 = vrot.lane.b32.xlu0 %v2258, 96
        %v2997 = vpop.permute.xlu0 %2996
        %2998 = vrot.lane.b32.xlu0 %v2259, 96
        %v2999 = vpop.permute.xlu0 %2998
        %3000 = vrot.lane.b32.xlu0 %v2260, 96
        %v3001 = vpop.permute.xlu0 %3000
        %3002 = vrot.lane.b32.xlu0 %v2261, 96
        %v3003 = vpop.permute.xlu0 %3002
        %3004 = vrot.lane.b32.xlu0 %v2262, 96
        %v3005 = vpop.permute.xlu0 %3004
        %3006 = vrot.lane.b32.xlu0 %v2263, 96
        %v3007 = vpop.permute.xlu0 %3006
        %3008 = vrot.lane.b32.xlu0 %v2264, 96
        %v3009 = vpop.permute.xlu0 %3008
        %3010 = vrot.lane.b32.xlu0 %v2265, 96
        %v3011 = vpop.permute.xlu0 %3010
        %3012 = vrot.lane.b32.xlu0 %v2266, 96
        %v3013 = vpop.permute.xlu0 %3012
        %3014 = vrot.lane.b32.xlu0 %v2267, 96
        %v3015 = vpop.permute.xlu0 %3014
        %3016 = vrot.lane.b32.xlu0 %v2268, 96
        %v3017 = vpop.permute.xlu0 %3016
        %3018 = vrot.lane.b32.xlu0 %v2269, 96
        %v3019 = vpop.permute.xlu0 %3018
        %3020 = vrot.lane.b32.xlu0 %v2270, 96
        %v3021 = vpop.permute.xlu0 %3020
        %3022 = vrot.lane.b32.xlu0 %v2271, 96
        %v3023 = vpop.permute.xlu0 %3022
        %3024 = vrot.lane.b32.xlu0 %v2272, 96
        %v3025 = vpop.permute.xlu0 %3024
        %3026 = vrot.lane.b32.xlu0 %v2273, 96
        %v3027 = vpop.permute.xlu0 %3026
        %3028 = vrot.lane.b32.xlu0 %v2274, 96
        %v3029 = vpop.permute.xlu0 %3028
        %3030 = vrot.lane.b32.xlu0 %v2275, 96
        %v3031 = vpop.permute.xlu0 %3030
        %3032 = vrot.lane.b32.xlu0 %v2276, 96
        %v3033 = vpop.permute.xlu0 %3032
        %3034 = vrot.lane.b32.xlu0 %v2277, 96
        %v3035 = vpop.permute.xlu0 %3034
        %3036 = vrot.lane.b32.xlu0 %v2278, 96
        %v3037 = vpop.permute.xlu0 %3036
        %3038 = vrot.lane.b32.xlu0 %v2279, 96
        %v3039 = vpop.permute.xlu0 %3038
        %3040 = vrot.lane.b32.xlu0 %v2280, 96
        %v3041 = vpop.permute.xlu0 %3040
        %3042 = vrot.lane.b32.xlu0 %v2281, 96
        %v3043 = vpop.permute.xlu0 %3042
        %3044 = vrot.lane.b32.xlu0 %v2282, 96
        %v3045 = vpop.permute.xlu0 %3044
        %3046 = vrot.lane.b32.xlu0 %v2283, 96
        %v3047 = vpop.permute.xlu0 %3046
        %3048 = vrot.lane.b32.xlu0 %v2284, 96
        %v3049 = vpop.permute.xlu0 %3048
        %3050 = vrot.lane.b32.xlu0 %v2285, 96
        %v3051 = vpop.permute.xlu0 %3050
        %3052 = vrot.lane.b32.xlu0 %v2286, 96
        %v3053 = vpop.permute.xlu0 %3052
        %3054 = vrot.lane.b32.xlu0 %v2287, 96
        %v3055 = vpop.permute.xlu0 %3054
        %v3088 = vsel %vm1408, %v2031, %v2353
        %v3089 = vsel %vm1408, %v2032, %v2355
        %v3090 = vsel %vm1408, %v2033, %v2357
        %v3091 = vsel %vm1408, %v2034, %v2359
        %v3092 = vsel %vm1408, %v2035, %v2361
        %v3093 = vsel %vm1408, %v2036, %v2363
        %v3094 = vsel %vm1408, %v2037, %v2365
        %v3095 = vsel %vm1408, %v2038, %v2367
        %v3096 = vsel %vm1408, %v2039, %v2369
        %v3097 = vsel %vm1408, %v2040, %v2371
        %v3098 = vsel %vm1408, %v2041, %v2373
        %v3099 = vsel %vm1408, %v2042, %v2375
        %v3100 = vsel %vm1408, %v2043, %v2377
        %v3101 = vsel %vm1408, %v2044, %v2379
        %v3102 = vsel %vm1408, %v2045, %v2381
        %v3103 = vsel %vm1408, %v2046, %v2383
        %v3104 = vsel %vm1408, %v2047, %v2385
        %v3105 = vsel %vm1408, %v2048, %v2387
        %v3106 = vsel %vm1408, %v2049, %v2389
        %v3107 = vsel %vm1408, %v2050, %v2391
        %v3108 = vsel %vm1408, %v2051, %v2393
        %v3109 = vsel %vm1408, %v2052, %v2395
        %v3110 = vsel %vm1408, %v2053, %v2397
        %v3111 = vsel %vm1408, %v2054, %v2399
        %v3112 = vsel %vm1408, %v2055, %v2401
        %v3113 = vsel %vm1408, %v2056, %v2403
        %v3114 = vsel %vm1408, %v2057, %v2405
        %v3115 = vsel %vm1408, %v2058, %v2407
        %v3116 = vsel %vm1408, %v2059, %v2409
        %v3117 = vsel %vm1408, %v2060, %v2411
        %v3118 = vsel %vm1408, %v2061, %v2413
        %v3119 = vsel %vm1408, %v2062, %v2415
        %v3120 = vsel %vm1540, %v3088, %v2481
        %v3121 = vsel %vm1540, %v3089, %v2483
        %v3122 = vsel %vm1540, %v3090, %v2485
        %v3123 = vsel %vm1540, %v3091, %v2487
        %v3124 = vsel %vm1540, %v3092, %v2489
        %v3125 = vsel %vm1540, %v3093, %v2491
        %v3126 = vsel %vm1540, %v3094, %v2493
        %v3127 = vsel %vm1540, %v3095, %v2495
        %v3128 = vsel %vm1540, %v3096, %v2497
        %v3129 = vsel %vm1540, %v3097, %v2499
        %v3130 = vsel %vm1540, %v3098, %v2501
        %v3131 = vsel %vm1540, %v3099, %v2503
        %v3132 = vsel %vm1540, %v3100, %v2505
        %v3133 = vsel %vm1540, %v3101, %v2507
        %v3134 = vsel %vm1540, %v3102, %v2509
        %v3135 = vsel %vm1540, %v3103, %v2511
        %v3136 = vsel %vm1540, %v3104, %v2513
        %v3137 = vsel %vm1540, %v3105, %v2515
        %v3138 = vsel %vm1540, %v3106, %v2517
        %v3139 = vsel %vm1540, %v3107, %v2519
        %v3140 = vsel %vm1540, %v3108, %v2521
        %v3141 = vsel %vm1540, %v3109, %v2523
        %v3142 = vsel %vm1540, %v3110, %v2525
        %v3143 = vsel %vm1540, %v3111, %v2527
        %v3144 = vsel %vm1540, %v3112, %v2529
        %v3145 = vsel %vm1540, %v3113, %v2531
        %v3146 = vsel %vm1540, %v3114, %v2533
        %v3147 = vsel %vm1540, %v3115, %v2535
        %v3148 = vsel %vm1540, %v3116, %v2537
        %v3149 = vsel %vm1540, %v3117, %v2539
        %v3150 = vsel %vm1540, %v3118, %v2541
        %v3151 = vsel %vm1540, %v3119, %v2543
        %vm3152 = vcmask 785408
        %v3153 = vsel %vm3152, %v3120, %v2609
        %v3154 = vsel %vm3152, %v3121, %v2611
        %v3155 = vsel %vm3152, %v3122, %v2613
        %v3156 = vsel %vm3152, %v3123, %v2615
        %v3157 = vsel %vm3152, %v3124, %v2617
        %v3158 = vsel %vm3152, %v3125, %v2619
        %v3159 = vsel %vm3152, %v3126, %v2621
        %v3160 = vsel %vm3152, %v3127, %v2623
        %v3161 = vsel %vm3152, %v3128, %v2625
        %v3162 = vsel %vm3152, %v3129, %v2627
        %v3163 = vsel %vm3152, %v3130, %v2629
        %v3164 = vsel %vm3152, %v3131, %v2631
        %v3165 = vsel %vm3152, %v3132, %v2633
        %v3166 = vsel %vm3152, %v3133, %v2635
        %v3167 = vsel %vm3152, %v3134, %v2637
        %v3168 = vsel %vm3152, %v3135, %v2639
        %v3169 = vsel %vm3152, %v3136, %v2641
        %v3170 = vsel %vm3152, %v3137, %v2643
        %v3171 = vsel %vm3152, %v3138, %v2645
        %v3172 = vsel %vm3152, %v3139, %v2647
        %v3173 = vsel %vm3152, %v3140, %v2649
        %v3174 = vsel %vm3152, %v3141, %v2651
        %v3175 = vsel %vm3152, %v3142, %v2653
        %v3176 = vsel %vm3152, %v3143, %v2655
        %v3177 = vsel %vm3152, %v3144, %v2657
        %v3178 = vsel %vm3152, %v3145, %v2659
        %v3179 = vsel %vm3152, %v3146, %v2661
        %v3180 = vsel %vm3152, %v3147, %v2663
        %v3181 = vsel %vm3152, %v3148, %v2665
        %v3182 = vsel %vm3152, %v3149, %v2667
        %v3183 = vsel %vm3152, %v3150, %v2669
        %v3184 = vsel %vm3152, %v3151, %v2671
        %v3185 = vsel %vm1408, %v2159, %v2737
        %v3186 = vsel %vm1408, %v2160, %v2739
        %v3187 = vsel %vm1408, %v2161, %v2741
        %v3188 = vsel %vm1408, %v2162, %v2743
        %v3189 = vsel %vm1408, %v2163, %v2745
        %v3190 = vsel %vm1408, %v2164, %v2747
        %v3191 = vsel %vm1408, %v2165, %v2749
        %v3192 = vsel %vm1408, %v2166, %v2751
        %v3193 = vsel %vm1408, %v2167, %v2753
        %v3194 = vsel %vm1408, %v2168, %v2755
        %v3195 = vsel %vm1408, %v2169, %v2757
        %v3196 = vsel %vm1408, %v2170, %v2759
        %v3197 = vsel %vm1408, %v2171, %v2761
        %v3198 = vsel %vm1408, %v2172, %v2763
        %v3199 = vsel %vm1408, %v2173, %v2765
        %v3200 = vsel %vm1408, %v2174, %v2767
        %v3201 = vsel %vm1408, %v2175, %v2769
        %v3202 = vsel %vm1408, %v2176, %v2771
        %v3203 = vsel %vm1408, %v2177, %v2773
        %v3204 = vsel %vm1408, %v2178, %v2775
        %v3205 = vsel %vm1408, %v2179, %v2777
        %v3206 = vsel %vm1408, %v2180, %v2779
        %v3207 = vsel %vm1408, %v2181, %v2781
        %v3208 = vsel %vm1408, %v2182, %v2783
        %v3209 = vsel %vm1408, %v2183, %v2785
        %v3210 = vsel %vm1408, %v2184, %v2787
        %v3211 = vsel %vm1408, %v2185, %v2789
        %v3212 = vsel %vm1408, %v2186, %v2791
        %v3213 = vsel %vm1408, %v2187, %v2793
        %v3214 = vsel %vm1408, %v2188, %v2795
        %v3215 = vsel %vm1408, %v2189, %v2797
        %v3216 = vsel %vm1408, %v2190, %v2799
        %v3217 = vsel %vm1540, %v3185, %v2865
        %v3218 = vsel %vm1540, %v3186, %v2867
        %v3219 = vsel %vm1540, %v3187, %v2869
        %v3220 = vsel %vm1540, %v3188, %v2871
        %v3221 = vsel %vm1540, %v3189, %v2873
        %v3222 = vsel %vm1540, %v3190, %v2875
        %v3223 = vsel %vm1540, %v3191, %v2877
        %v3224 = vsel %vm1540, %v3192, %v2879
        %v3225 = vsel %vm1540, %v3193, %v2881
        %v3226 = vsel %vm1540, %v3194, %v2883
        %v3227 = vsel %vm1540, %v3195, %v2885
        %v3228 = vsel %vm1540, %v3196, %v2887
        %v3229 = vsel %vm1540, %v3197, %v2889
        %v3230 = vsel %vm1540, %v3198, %v2891
        %v3231 = vsel %vm1540, %v3199, %v2893
        %v3232 = vsel %vm1540, %v3200, %v2895
        %v3233 = vsel %vm1540, %v3201, %v2897
        %v3234 = vsel %vm1540, %v3202, %v2899
        %v3235 = vsel %vm1540, %v3203, %v2901
        %v3236 = vsel %vm1540, %v3204, %v2903
        %v3237 = vsel %vm1540, %v3205, %v2905
        %v3238 = vsel %vm1540, %v3206, %v2907
        %v3239 = vsel %vm1540, %v3207, %v2909
        %v3240 = vsel %vm1540, %v3208, %v2911
        %v3241 = vsel %vm1540, %v3209, %v2913
        %v3242 = vsel %vm1540, %v3210, %v2915
        %v3243 = vsel %vm1540, %v3211, %v2917
        %v3244 = vsel %vm1540, %v3212, %v2919
        %v3245 = vsel %vm1540, %v3213, %v2921
        %v3246 = vsel %vm1540, %v3214, %v2923
        %v3247 = vsel %vm1540, %v3215, %v2925
        %v3248 = vsel %vm1540, %v3216, %v2927
        %v3249 = vsel %vm3152, %v3217, %v2993
        %v3250 = vsel %vm3152, %v3218, %v2995
        %v3251 = vsel %vm3152, %v3219, %v2997
        %v3252 = vsel %vm3152, %v3220, %v2999
        %v3253 = vsel %vm3152, %v3221, %v3001
        %v3254 = vsel %vm3152, %v3222, %v3003
        %v3255 = vsel %vm3152, %v3223, %v3005
        %v3256 = vsel %vm3152, %v3224, %v3007
        %v3257 = vsel %vm3152, %v3225, %v3009
        %v3258 = vsel %vm3152, %v3226, %v3011
        %v3259 = vsel %vm3152, %v3227, %v3013
        %v3260 = vsel %vm3152, %v3228, %v3015
        %v3261 = vsel %vm3152, %v3229, %v3017
        %v3262 = vsel %vm3152, %v3230, %v3019
        %v3263 = vsel %vm3152, %v3231, %v3021
        %v3264 = vsel %vm3152, %v3232, %v3023
        %v3265 = vsel %vm3152, %v3233, %v3025
        %v3266 = vsel %vm3152, %v3234, %v3027
        %v3267 = vsel %vm3152, %v3235, %v3029
        %v3268 = vsel %vm3152, %v3236, %v3031
        %v3269 = vsel %vm3152, %v3237, %v3033
        %v3270 = vsel %vm3152, %v3238, %v3035
        %v3271 = vsel %vm3152, %v3239, %v3037
        %v3272 = vsel %vm3152, %v3240, %v3039
        %v3273 = vsel %vm3152, %v3241, %v3041
        %v3274 = vsel %vm3152, %v3242, %v3043
        %v3275 = vsel %vm3152, %v3243, %v3045
        %v3276 = vsel %vm3152, %v3244, %v3047
        %v3277 = vsel %vm3152, %v3245, %v3049
        %v3278 = vsel %vm3152, %v3246, %v3051
        %v3279 = vsel %vm3152, %v3247, %v3053
        %v3280 = vsel %vm3152, %v3248, %v3055
        %v3281 = vld [vmem:[%s3] sm:$0xff]
        %v3282 = vld [vmem:[%s3 + $0x8] sm:$0xff]
        %v3283 = vld [vmem:[%s3 + $0x10] sm:$0xff]
        %v3284 = vld [vmem:[%s3 + $0x18] sm:$0xff]
        %v3285 = vld [vmem:[%s3 + $0x20] sm:$0xff]
        %v3286 = vld [vmem:[%s3 + $0x28] sm:$0xff]
        %v3287 = vld [vmem:[%s3 + $0x30] sm:$0xff]
        %v3288 = vld [vmem:[%s3 + $0x38] sm:$0xff]
        %v3289 = vld [vmem:[%s3 + $0x40] sm:$0xff]
        %v3290 = vld [vmem:[%s3 + $0x48] sm:$0xff]
        %v3291 = vld [vmem:[%s3 + $0x50] sm:$0xff]
        %v3292 = vld [vmem:[%s3 + $0x58] sm:$0xff]
        %v3293 = vld [vmem:[%s3 + $0x60] sm:$0xff]
        %v3294 = vld [vmem:[%s3 + $0x68] sm:$0xff]
        %v3295 = vld [vmem:[%s3 + $0x70] sm:$0xff]
        %v3296 = vld [vmem:[%s3 + $0x78] sm:$0xff]
        %v3297 = vld [vmem:[%s3 + $0x80] sm:$0xff]
        %v3298 = vld [vmem:[%s3 + $0x88] sm:$0xff]
        %v3299 = vld [vmem:[%s3 + $0x90] sm:$0xff]
        %v3300 = vld [vmem:[%s3 + $0x98] sm:$0xff]
        %v3301 = vld [vmem:[%s3 + $0xa0] sm:$0xff]
        %v3302 = vld [vmem:[%s3 + $0xa8] sm:$0xff]
        %v3303 = vld [vmem:[%s3 + $0xb0] sm:$0xff]
        %v3304 = vld [vmem:[%s3 + $0xb8] sm:$0xff]
        %v3305 = vld [vmem:[%s3 + $0xc0] sm:$0xff]
        %v3306 = vld [vmem:[%s3 + $0xc8] sm:$0xff]
        %v3307 = vld [vmem:[%s3 + $0xd0] sm:$0xff]
        %v3308 = vld [vmem:[%s3 + $0xd8] sm:$0xff]
        %v3309 = vld [vmem:[%s3 + $0xe0] sm:$0xff]
        %v3310 = vld [vmem:[%s3 + $0xe8] sm:$0xff]
        %v3311 = vld [vmem:[%s3 + $0xf0] sm:$0xff]
        %v3312 = vld [vmem:[%s3 + $0xf8] sm:$0xff]
        %v3313 = vld [vmem:[%s3 + $0x100] sm:$0xff]
        %v3314 = vld [vmem:[%s3 + $0x108] sm:$0xff]
        %v3315 = vld [vmem:[%s3 + $0x110] sm:$0xff]
        %v3316 = vld [vmem:[%s3 + $0x118] sm:$0xff]
        %v3317 = vld [vmem:[#allocation5] sm:$0x1]
        %v3319 = vlaneseq
        %v3320 = vshrl.u32 %v3319, 7
        %v3321 = vsub.s32 0, %v3320
        %v3322 = vrot.slane %v3317, %v3321
        %v3325 = vsel %vm1408, %v2288, 0
        %v3328 = vsel %vm1408, %v2289, 0
        %v3331 = vsel %vm1408, %v2290, 0
        %v3334 = vsel %vm1408, %v2291, 0
        %v3337 = vsel %vm1408, %v2292, 0
        %v3340 = vsel %vm1408, %v2293, 0
        %v3343 = vsel %vm1408, %v2294, 0
        %v3346 = vsel %vm1408, %v2295, 0
        %v3349 = vsel %vm1408, %v2296, 0
        %v3352 = vsel %vm1408, %v2297, 0
        %v3355 = vsel %vm1408, %v2298, 0
        %v3358 = vsel %vm1408, %v2299, 0
        %v3361 = vsel %vm1408, %v2300, 0
        %v3364 = vsel %vm1408, %v2301, 0
        %v3367 = vsel %vm1408, %v2302, 0
        %v3370 = vsel %vm1408, %v2303, 0
        %v3373 = vsel %vm1408, %v2304, 0
        %v3376 = vsel %vm1408, %v2305, 0
        %v3379 = vsel %vm1408, %v2306, 0
        %v3382 = vsel %vm1408, %v2307, 0
        %v3385 = vsel %vm1408, %v2308, 0
        %v3388 = vsel %vm1408, %v2309, 0
        %v3391 = vsel %vm1408, %v2310, 0
        %v3394 = vsel %vm1408, %v2311, 0
        %v3397 = vsel %vm1408, %v2312, 0
        %v3400 = vsel %vm1408, %v2313, 0
        %v3403 = vsel %vm1408, %v2314, 0
        %v3406 = vsel %vm1408, %v2315, 0
        %v3409 = vsel %vm1408, %v2316, 0
        %v3412 = vsel %vm1408, %v2317, 0
        %v3415 = vsel %vm1408, %v2318, 0
        %v3418 = vsel %vm1408, %v2319, 0
        %3420 = vmatprep.subr.mxu0 0.0
        %3421 = vmatpush1.msra.mxu0 %v3296
        %3422 = vmatprep.subr.mxu0 0.0
        %3423 = vmatpush1.msra.mxu0 %v3295
        %3424 = vmatprep.subr.mxu0 0.0
        %3425 = vmatpush1.msra.mxu0 %v3294
        %3426 = vmatprep.subr.mxu0 0.0
        %3427 = vmatpush1.msra.mxu0 %v3293
        %3428 = vmatprep.subr.mxu0 0.0
        %3429 = vmatpush1.msra.mxu0 %v3292
        %3430 = vmatprep.subr.mxu0 0.0
        %3431 = vmatpush1.msra.mxu0 %v3291
        %3432 = vmatprep.subr.mxu0 0.0
        %3433 = vmatpush1.msra.mxu0 %v3290
        %3434 = vmatprep.subr.mxu0 0.0
        %3435 = vmatpush1.msra.mxu0 %v3289
        %3436 = vmatprep.subr.mxu0 0.0
        %3437 = vmatpush1.msra.mxu0 %v3288
        %3438 = vmatprep.subr.mxu0 0.0
        %3439 = vmatpush1.msra.mxu0 %v3287
        %3440 = vmatprep.subr.mxu0 0.0
        %3441 = vmatpush1.msra.mxu0 %v3286
        %3442 = vmatprep.subr.mxu0 0.0
        %3443 = vmatpush1.msra.mxu0 %v3285
        %3444 = vmatprep.subr.mxu0 0.0
        %3445 = vmatpush1.msra.mxu0 %v3284
        %3446 = vmatprep.subr.mxu0 0.0
        %3447 = vmatpush1.msra.mxu0 %v3283
        %3448 = vmatprep.subr.mxu0 0.0
        %3449 = vmatpush1.msra.mxu0 %v3282
        %3450 = vmatprep.subr.mxu0 0.0
        %3451 = vmatpush1.msra.mxu0 %v3281
        %3452 = vmatprep.subr.mxu0 0.0
        %3453 = vmatpush2.msra.mxu0 %v3312
        %3454 = vmatprep.subr.mxu0 0.0
        %3455 = vmatpush2.msra.mxu0 %v3311
        %3456 = vmatprep.subr.mxu0 0.0
        %3457 = vmatpush2.msra.mxu0 %v3310
        %3458 = vmatprep.subr.mxu0 0.0
        %3459 = vmatpush2.msra.mxu0 %v3309
        %3460 = vmatprep.subr.mxu0 0.0
        %3461 = vmatpush2.msra.mxu0 %v3308
        %3462 = vmatprep.subr.mxu0 0.0
        %3463 = vmatpush2.msra.mxu0 %v3307
        %3464 = vmatprep.subr.mxu0 0.0
        %3465 = vmatpush2.msra.mxu0 %v3306
        %3466 = vmatprep.subr.mxu0 0.0
        %3467 = vmatpush2.msra.mxu0 %v3305
        %3468 = vmatprep.subr.mxu0 0.0
        %3469 = vmatpush2.msra.mxu0 %v3304
        %3470 = vmatprep.subr.mxu0 0.0
        %3471 = vmatpush2.msra.mxu0 %v3303
        %3472 = vmatprep.subr.mxu0 0.0
        %3473 = vmatpush2.msra.mxu0 %v3302
        %3474 = vmatprep.subr.mxu0 0.0
        %3475 = vmatpush2.msra.mxu0 %v3301
        %3476 = vmatprep.subr.mxu0 0.0
        %3477 = vmatpush2.msra.mxu0 %v3300
        %3478 = vmatprep.subr.mxu0 0.0
        %3479 = vmatpush2.msra.mxu0 %v3299
        %3480 = vmatprep.subr.mxu0 0.0
        %3481 = vmatpush2.msra.mxu0 %v3298
        %3482 = vmatprep.subr.mxu0 0.0
        %3483 = vmatpush2.msra.mxu0 %v3297
        %3484 = vmatprep.mubr.f32.mxu0 %v3249
        %3485 = vmatmul.mubr.f32.gmra.mxu0 %v3153
        %v3486 = vpop.f32.mrf.mxu0
        %v3487 = vadd.f32 %v3322, %v3486
        %v3488 = vpop.f32.mrf.mxu0
        %3489 = vmatprep.mubr.f32.mxu0 %v3250
        %3490 = vmatmul.mubr.f32.gmra.mxu0 %v3154
        %v3491 = vpop.f32.mrf.mxu0
        %v3492 = vadd.f32 %v3322, %v3491
        %v3493 = vpop.f32.mrf.mxu0
        %3494 = vmatprep.mubr.f32.mxu0 %v3251
        %3495 = vmatmul.mubr.f32.gmra.mxu0 %v3155
        %v3496 = vpop.f32.mrf.mxu0
        %v3497 = vadd.f32 %v3322, %v3496
        %v3498 = vpop.f32.mrf.mxu0
        %3499 = vmatprep.mubr.f32.mxu0 %v3252
        %3500 = vmatmul.mubr.f32.gmra.mxu0 %v3156
        %v3501 = vpop.f32.mrf.mxu0
        %v3502 = vadd.f32 %v3322, %v3501
        %v3503 = vpop.f32.mrf.mxu0
        %3504 = vmatprep.mubr.f32.mxu0 %v3253
        %3505 = vmatmul.mubr.f32.gmra.mxu0 %v3157
        %v3506 = vpop.f32.mrf.mxu0
        %v3507 = vadd.f32 %v3322, %v3506
        %v3508 = vpop.f32.mrf.mxu0
        %3509 = vmatprep.mubr.f32.mxu0 %v3254
        %3510 = vmatmul.mubr.f32.gmra.mxu0 %v3158
        %v3511 = vpop.f32.mrf.mxu0
        %v3512 = vadd.f32 %v3322, %v3511
        %v3513 = vpop.f32.mrf.mxu0
        %3514 = vmatprep.mubr.f32.mxu0 %v3255
        %3515 = vmatmul.mubr.f32.gmra.mxu0 %v3159
        %v3516 = vpop.f32.mrf.mxu0
        %v3517 = vadd.f32 %v3322, %v3516
        %v3518 = vpop.f32.mrf.mxu0
        %3519 = vmatprep.mubr.f32.mxu0 %v3256
        %3520 = vmatmul.mubr.f32.gmra.mxu0 %v3160
        %v3521 = vpop.f32.mrf.mxu0
        %v3522 = vadd.f32 %v3322, %v3521
        %v3523 = vpop.f32.mrf.mxu0
        %3524 = vmatprep.mubr.f32.mxu0 %v3257
        %3525 = vmatmul.mubr.f32.gmra.mxu0 %v3161
        %v3526 = vpop.f32.mrf.mxu0
        %v3527 = vadd.f32 %v3322, %v3526
        %v3528 = vpop.f32.mrf.mxu0
        %3529 = vmatprep.mubr.f32.mxu0 %v3258
        %3530 = vmatmul.mubr.f32.gmra.mxu0 %v3162
        %v3531 = vpop.f32.mrf.mxu0
        %v3532 = vadd.f32 %v3322, %v3531
        %v3533 = vpop.f32.mrf.mxu0
        %3534 = vmatprep.mubr.f32.mxu0 %v3259
        %3535 = vmatmul.mubr.f32.gmra.mxu0 %v3163
        %v3536 = vpop.f32.mrf.mxu0
        %v3537 = vadd.f32 %v3322, %v3536
        %v3538 = vpop.f32.mrf.mxu0
        %3539 = vmatprep.mubr.f32.mxu0 %v3260
        %3540 = vmatmul.mubr.f32.gmra.mxu0 %v3164
        %v3541 = vpop.f32.mrf.mxu0
        %v3542 = vadd.f32 %v3322, %v3541
        %v3543 = vpop.f32.mrf.mxu0
        %3544 = vmatprep.mubr.f32.mxu0 %v3261
        %3545 = vmatmul.mubr.f32.gmra.mxu0 %v3165
        %v3546 = vpop.f32.mrf.mxu0
        %v3547 = vadd.f32 %v3322, %v3546
        %v3548 = vpop.f32.mrf.mxu0
        %3549 = vmatprep.mubr.f32.mxu0 %v3262
        %3550 = vmatmul.mubr.f32.gmra.mxu0 %v3166
        %v3551 = vpop.f32.mrf.mxu0
        %v3552 = vadd.f32 %v3322, %v3551
        %v3553 = vpop.f32.mrf.mxu0
        %3554 = vmatprep.mubr.f32.mxu0 %v3263
        %3555 = vmatmul.mubr.f32.gmra.mxu0 %v3167
        %v3556 = vpop.f32.mrf.mxu0
        %v3557 = vadd.f32 %v3322, %v3556
        %v3558 = vpop.f32.mrf.mxu0
        %3559 = vmatprep.mubr.f32.mxu0 %v3264
        %3560 = vmatmul.mubr.f32.gmra.mxu0 %v3168
        %v3561 = vpop.f32.mrf.mxu0
        %v3562 = vadd.f32 %v3322, %v3561
        %v3563 = vpop.f32.mrf.mxu0
        %3564 = vmatprep.mubr.f32.mxu0 %v3265
        %3565 = vmatmul.mubr.f32.gmra.mxu0 %v3169
        %v3566 = vpop.f32.mrf.mxu0
        %v3567 = vadd.f32 %v3322, %v3566
        %v3568 = vpop.f32.mrf.mxu0
        %3569 = vmatprep.mubr.f32.mxu0 %v3266
        %3570 = vmatmul.mubr.f32.gmra.mxu0 %v3170
        %v3571 = vpop.f32.mrf.mxu0
        %v3572 = vadd.f32 %v3322, %v3571
        %v3573 = vpop.f32.mrf.mxu0
        %3574 = vmatprep.mubr.f32.mxu0 %v3267
        %3575 = vmatmul.mubr.f32.gmra.mxu0 %v3171
        %v3576 = vpop.f32.mrf.mxu0
        %v3577 = vadd.f32 %v3322, %v3576
        %v3578 = vpop.f32.mrf.mxu0
        %3579 = vmatprep.mubr.f32.mxu0 %v3268
        %3580 = vmatmul.mubr.f32.gmra.mxu0 %v3172
        %v3581 = vpop.f32.mrf.mxu0
        %v3582 = vadd.f32 %v3322, %v3581
        %v3583 = vpop.f32.mrf.mxu0
        %3584 = vmatprep.mubr.f32.mxu0 %v3269
        %3585 = vmatmul.mubr.f32.gmra.mxu0 %v3173
        %v3586 = vpop.f32.mrf.mxu0
        %v3587 = vadd.f32 %v3322, %v3586
        %v3588 = vpop.f32.mrf.mxu0
        %3589 = vmatprep.mubr.f32.mxu0 %v3270
        %3590 = vmatmul.mubr.f32.gmra.mxu0 %v3174
        %v3591 = vpop.f32.mrf.mxu0
        %v3592 = vadd.f32 %v3322, %v3591
        %v3593 = vpop.f32.mrf.mxu0
        %3594 = vmatprep.mubr.f32.mxu0 %v3271
        %3595 = vmatmul.mubr.f32.gmra.mxu0 %v3175
        %v3596 = vpop.f32.mrf.mxu0
        %v3597 = vadd.f32 %v3322, %v3596
        %v3598 = vpop.f32.mrf.mxu0
        %3599 = vmatprep.mubr.f32.mxu0 %v3272
        %3600 = vmatmul.mubr.f32.gmra.mxu0 %v3176
        %v3601 = vpop.f32.mrf.mxu0
        %v3602 = vadd.f32 %v3322, %v3601
        %v3603 = vpop.f32.mrf.mxu0
        %3604 = vmatprep.mubr.f32.mxu0 %v3273
        %3605 = vmatmul.mubr.f32.gmra.mxu0 %v3177
        %v3606 = vpop.f32.mrf.mxu0
        %v3607 = vadd.f32 %v3322, %v3606
        %v3608 = vpop.f32.mrf.mxu0
        %3609 = vmatprep.mubr.f32.mxu0 %v3274
        %3610 = vmatmul.mubr.f32.gmra.mxu0 %v3178
        %v3611 = vpop.f32.mrf.mxu0
        %v3612 = vadd.f32 %v3322, %v3611
        %v3613 = vpop.f32.mrf.mxu0
        %3614 = vmatprep.mubr.f32.mxu0 %v3275
        %3615 = vmatmul.mubr.f32.gmra.mxu0 %v3179
        %v3616 = vpop.f32.mrf.mxu0
        %v3617 = vadd.f32 %v3322, %v3616
        %v3618 = vpop.f32.mrf.mxu0
        %3619 = vmatprep.mubr.f32.mxu0 %v3276
        %3620 = vmatmul.mubr.f32.gmra.mxu0 %v3180
        %v3621 = vpop.f32.mrf.mxu0
        %v3622 = vadd.f32 %v3322, %v3621
        %v3623 = vpop.f32.mrf.mxu0
        %3624 = vmatprep.mubr.f32.mxu0 %v3277
        %3625 = vmatmul.mubr.f32.gmra.mxu0 %v3181
        %v3626 = vpop.f32.mrf.mxu0
        %v3627 = vadd.f32 %v3322, %v3626
        %v3628 = vpop.f32.mrf.mxu0
        %3629 = vmatprep.mubr.f32.mxu0 %v3278
        %3630 = vmatmul.mubr.f32.gmra.mxu0 %v3182
        %v3631 = vpop.f32.mrf.mxu0
        %v3632 = vadd.f32 %v3322, %v3631
        %v3633 = vpop.f32.mrf.mxu0
        %3634 = vmatprep.mubr.f32.mxu0 %v3279
        %3635 = vmatmul.mubr.f32.gmra.mxu0 %v3183
        %v3636 = vpop.f32.mrf.mxu0
        %v3637 = vadd.f32 %v3322, %v3636
        %v3638 = vpop.f32.mrf.mxu0
        %3639 = vmatprep.mubr.f32.mxu0 %v3280
        %3640 = vmatmul.mubr.f32.gmra.mxu0 %v3184
        %v3641 = vpop.f32.mrf.mxu0
        %v3642 = vadd.f32 %v3322, %v3641
        %v3643 = vpop.f32.mrf.mxu0
        %3644 = vdwg.mxu0
        %3645 = vmatprep.subr.mxu0 0.0
        %3646 = vmatpush1.msra.mxu0 0.0
        %3647 = vmatprep.subr.mxu0 0.0
        %3648 = vmatpush1.msra.mxu0 0.0
        %3649 = vmatprep.subr.mxu0 0.0
        %3650 = vmatpush1.msra.mxu0 0.0
        %3651 = vmatprep.subr.mxu0 0.0
        %3652 = vmatpush1.msra.mxu0 0.0
        %3653 = vmatprep.subr.mxu0 0.0
        %3654 = vmatpush1.msra.mxu0 0.0
        %3655 = vmatprep.subr.mxu0 0.0
        %3656 = vmatpush1.msra.mxu0 0.0
        %3657 = vmatprep.subr.mxu0 0.0
        %3658 = vmatpush1.msra.mxu0 0.0
        %3659 = vmatprep.subr.mxu0 0.0
        %3660 = vmatpush1.msra.mxu0 0.0
        %3661 = vmatprep.subr.mxu0 0.0
        %3662 = vmatpush1.msra.mxu0 0.0
        %3663 = vmatprep.subr.mxu0 0.0
        %3664 = vmatpush1.msra.mxu0 0.0
        %3665 = vmatprep.subr.mxu0 0.0
        %3666 = vmatpush1.msra.mxu0 0.0
        %3667 = vmatprep.subr.mxu0 0.0
        %3668 = vmatpush1.msra.mxu0 0.0
        %3669 = vmatprep.subr.mxu0 0.0
        %3670 = vmatpush1.msra.mxu0 %v3316
        %3671 = vmatprep.subr.mxu0 0.0
        %3672 = vmatpush1.msra.mxu0 %v3315
        %3673 = vmatprep.subr.mxu0 0.0
        %3674 = vmatpush1.msra.mxu0 %v3314
        %3675 = vmatprep.subr.mxu0 0.0
        %3676 = vmatpush1.msra.mxu0 %v3313
        %3677 = vmatprep.subr.mxu0 0.0
        %3678 = vmatpush2.msra.mxu0 0.0
        %3679 = vmatprep.subr.mxu0 0.0
        %3680 = vmatpush2.msra.mxu0 0.0
        %3681 = vmatprep.subr.mxu0 0.0
        %3682 = vmatpush2.msra.mxu0 0.0
        %3683 = vmatprep.subr.mxu0 0.0
        %3684 = vmatpush2.msra.mxu0 0.0
        %3685 = vmatprep.subr.mxu0 0.0
        %3686 = vmatpush2.msra.mxu0 0.0
        %3687 = vmatprep.subr.mxu0 0.0
        %3688 = vmatpush2.msra.mxu0 0.0
        %3689 = vmatprep.subr.mxu0 0.0
        %3690 = vmatpush2.msra.mxu0 0.0
        %3691 = vmatprep.subr.mxu0 0.0
        %3692 = vmatpush2.msra.mxu0 0.0
        %3693 = vmatprep.subr.mxu0 0.0
        %3694 = vmatpush2.msra.mxu0 0.0
        %3695 = vmatprep.subr.mxu0 0.0
        %3696 = vmatpush2.msra.mxu0 0.0
        %3697 = vmatprep.subr.mxu0 0.0
        %3698 = vmatpush2.msra.mxu0 0.0
        %3699 = vmatprep.subr.mxu0 0.0
        %3700 = vmatpush2.msra.mxu0 0.0
        %3701 = vmatprep.subr.mxu0 0.0
        %3702 = vmatpush2.msra.mxu0 0.0
        %3703 = vmatprep.subr.mxu0 0.0
        %3704 = vmatpush2.msra.mxu0 0.0
        %3705 = vmatprep.subr.mxu0 0.0
        %3706 = vmatpush2.msra.mxu0 0.0
        %3707 = vmatprep.subr.mxu0 0.0
        %3708 = vmatpush2.msra.mxu0 0.0
        %3709 = vmatprep.mubr.f32.mxu0 0.0
        %3710 = vmatmul.mubr.f32.gmra.mxu0 %v3325
        %v3711 = vpop.f32.mrf.mxu0
        %v3712 = vadd.f32 %v3487, %v3711
        %v3713 = vpop.f32.mrf.mxu0
        %3714 = vmatprep.mubr.f32.mxu0 0.0
        %3715 = vmatmul.mubr.f32.gmra.mxu0 %v3328
        %v3716 = vpop.f32.mrf.mxu0
        %v3717 = vadd.f32 %v3492, %v3716
        %v3718 = vpop.f32.mrf.mxu0
        %3719 = vmatprep.mubr.f32.mxu0 0.0
        %3720 = vmatmul.mubr.f32.gmra.mxu0 %v3331
        %v3721 = vpop.f32.mrf.mxu0
        %v3722 = vadd.f32 %v3497, %v3721
        %v3723 = vpop.f32.mrf.mxu0
        %3724 = vmatprep.mubr.f32.mxu0 0.0
        %3725 = vmatmul.mubr.f32.gmra.mxu0 %v3334
        %v3726 = vpop.f32.mrf.mxu0
        %v3727 = vadd.f32 %v3502, %v3726
        %v3728 = vpop.f32.mrf.mxu0
        %3729 = vmatprep.mubr.f32.mxu0 0.0
        %3730 = vmatmul.mubr.f32.gmra.mxu0 %v3337
        %v3731 = vpop.f32.mrf.mxu0
        %v3732 = vadd.f32 %v3507, %v3731
        %v3733 = vpop.f32.mrf.mxu0
        %3734 = vmatprep.mubr.f32.mxu0 0.0
        %3735 = vmatmul.mubr.f32.gmra.mxu0 %v3340
        %v3736 = vpop.f32.mrf.mxu0
        %v3737 = vadd.f32 %v3512, %v3736
        %v3738 = vpop.f32.mrf.mxu0
        %3739 = vmatprep.mubr.f32.mxu0 0.0
        %3740 = vmatmul.mubr.f32.gmra.mxu0 %v3343
        %v3741 = vpop.f32.mrf.mxu0
        %v3742 = vadd.f32 %v3517, %v3741
        %v3743 = vpop.f32.mrf.mxu0
        %3744 = vmatprep.mubr.f32.mxu0 0.0
        %3745 = vmatmul.mubr.f32.gmra.mxu0 %v3346
        %v3746 = vpop.f32.mrf.mxu0
        %v3747 = vadd.f32 %v3522, %v3746
        %v3748 = vpop.f32.mrf.mxu0
        %3749 = vmatprep.mubr.f32.mxu0 0.0
        %3750 = vmatmul.mubr.f32.gmra.mxu0 %v3349
        %v3751 = vpop.f32.mrf.mxu0
        %v3752 = vadd.f32 %v3527, %v3751
        %v3753 = vpop.f32.mrf.mxu0
        %3754 = vmatprep.mubr.f32.mxu0 0.0
        %3755 = vmatmul.mubr.f32.gmra.mxu0 %v3352
        %v3756 = vpop.f32.mrf.mxu0
        %v3757 = vadd.f32 %v3532, %v3756
        %v3758 = vpop.f32.mrf.mxu0
        %3759 = vmatprep.mubr.f32.mxu0 0.0
        %3760 = vmatmul.mubr.f32.gmra.mxu0 %v3355
        %v3761 = vpop.f32.mrf.mxu0
        %v3762 = vadd.f32 %v3537, %v3761
        %v3763 = vpop.f32.mrf.mxu0
        %3764 = vmatprep.mubr.f32.mxu0 0.0
        %3765 = vmatmul.mubr.f32.gmra.mxu0 %v3358
        %v3766 = vpop.f32.mrf.mxu0
        %v3767 = vadd.f32 %v3542, %v3766
        %v3768 = vpop.f32.mrf.mxu0
        %3769 = vmatprep.mubr.f32.mxu0 0.0
        %3770 = vmatmul.mubr.f32.gmra.mxu0 %v3361
        %v3771 = vpop.f32.mrf.mxu0
        %v3772 = vadd.f32 %v3547, %v3771
        %v3773 = vpop.f32.mrf.mxu0
        %3774 = vmatprep.mubr.f32.mxu0 0.0
        %3775 = vmatmul.mubr.f32.gmra.mxu0 %v3364
        %v3776 = vpop.f32.mrf.mxu0
        %v3777 = vadd.f32 %v3552, %v3776
        %v3778 = vpop.f32.mrf.mxu0
        %3779 = vmatprep.mubr.f32.mxu0 0.0
        %3780 = vmatmul.mubr.f32.gmra.mxu0 %v3367
        %v3781 = vpop.f32.mrf.mxu0
        %v3782 = vadd.f32 %v3557, %v3781
        %v3783 = vpop.f32.mrf.mxu0
        %3784 = vmatprep.mubr.f32.mxu0 0.0
        %3785 = vmatmul.mubr.f32.gmra.mxu0 %v3370
        %v3786 = vpop.f32.mrf.mxu0
        %v3787 = vadd.f32 %v3562, %v3786
        %v3788 = vpop.f32.mrf.mxu0
        %3789 = vmatprep.mubr.f32.mxu0 0.0
        %3790 = vmatmul.mubr.f32.gmra.mxu0 %v3373
        %v3791 = vpop.f32.mrf.mxu0
        %v3792 = vadd.f32 %v3567, %v3791
        %v3793 = vpop.f32.mrf.mxu0
        %3794 = vmatprep.mubr.f32.mxu0 0.0
        %3795 = vmatmul.mubr.f32.gmra.mxu0 %v3376
        %v3796 = vpop.f32.mrf.mxu0
        %v3797 = vadd.f32 %v3572, %v3796
        %v3798 = vpop.f32.mrf.mxu0
        %3799 = vmatprep.mubr.f32.mxu0 0.0
        %3800 = vmatmul.mubr.f32.gmra.mxu0 %v3379
        %v3801 = vpop.f32.mrf.mxu0
        %v3802 = vadd.f32 %v3577, %v3801
        %v3803 = vpop.f32.mrf.mxu0
        %3804 = vmatprep.mubr.f32.mxu0 0.0
        %3805 = vmatmul.mubr.f32.gmra.mxu0 %v3382
        %v3806 = vpop.f32.mrf.mxu0
        %v3807 = vadd.f32 %v3582, %v3806
        %v3808 = vpop.f32.mrf.mxu0
        %3809 = vmatprep.mubr.f32.mxu0 0.0
        %3810 = vmatmul.mubr.f32.gmra.mxu0 %v3385
        %v3811 = vpop.f32.mrf.mxu0
        %v3812 = vadd.f32 %v3587, %v3811
        %v3813 = vpop.f32.mrf.mxu0
        %3814 = vmatprep.mubr.f32.mxu0 0.0
        %3815 = vmatmul.mubr.f32.gmra.mxu0 %v3388
        %v3816 = vpop.f32.mrf.mxu0
        %v3817 = vadd.f32 %v3592, %v3816
        %v3818 = vpop.f32.mrf.mxu0
        %3819 = vmatprep.mubr.f32.mxu0 0.0
        %3820 = vmatmul.mubr.f32.gmra.mxu0 %v3391
        %v3821 = vpop.f32.mrf.mxu0
        %v3822 = vadd.f32 %v3597, %v3821
        %v3823 = vpop.f32.mrf.mxu0
        %3824 = vmatprep.mubr.f32.mxu0 0.0
        %3825 = vmatmul.mubr.f32.gmra.mxu0 %v3394
        %v3826 = vpop.f32.mrf.mxu0
        %v3827 = vadd.f32 %v3602, %v3826
        %v3828 = vpop.f32.mrf.mxu0
        %3829 = vmatprep.mubr.f32.mxu0 0.0
        %3830 = vmatmul.mubr.f32.gmra.mxu0 %v3397
        %v3831 = vpop.f32.mrf.mxu0
        %v3832 = vadd.f32 %v3607, %v3831
        %v3833 = vpop.f32.mrf.mxu0
        %3834 = vmatprep.mubr.f32.mxu0 0.0
        %3835 = vmatmul.mubr.f32.gmra.mxu0 %v3400
        %v3836 = vpop.f32.mrf.mxu0
        %v3837 = vadd.f32 %v3612, %v3836
        %v3838 = vpop.f32.mrf.mxu0
        %3839 = vmatprep.mubr.f32.mxu0 0.0
        %3840 = vmatmul.mubr.f32.gmra.mxu0 %v3403
        %v3841 = vpop.f32.mrf.mxu0
        %v3842 = vadd.f32 %v3617, %v3841
        %v3843 = vpop.f32.mrf.mxu0
        %3844 = vmatprep.mubr.f32.mxu0 0.0
        %3845 = vmatmul.mubr.f32.gmra.mxu0 %v3406
        %v3846 = vpop.f32.mrf.mxu0
        %v3847 = vadd.f32 %v3622, %v3846
        %v3848 = vpop.f32.mrf.mxu0
        %3849 = vmatprep.mubr.f32.mxu0 0.0
        %3850 = vmatmul.mubr.f32.gmra.mxu0 %v3409
        %v3851 = vpop.f32.mrf.mxu0
        %v3852 = vadd.f32 %v3627, %v3851
        %v3853 = vpop.f32.mrf.mxu0
        %3854 = vmatprep.mubr.f32.mxu0 0.0
        %3855 = vmatmul.mubr.f32.gmra.mxu0 %v3412
        %v3856 = vpop.f32.mrf.mxu0
        %v3857 = vadd.f32 %v3632, %v3856
        %v3858 = vpop.f32.mrf.mxu0
        %3859 = vmatprep.mubr.f32.mxu0 0.0
        %3860 = vmatmul.mubr.f32.gmra.mxu0 %v3415
        %v3861 = vpop.f32.mrf.mxu0
        %v3862 = vadd.f32 %v3637, %v3861
        %v3863 = vpop.f32.mrf.mxu0
        %3864 = vmatprep.mubr.f32.mxu0 0.0
        %3865 = vmatmul.mubr.f32.gmra.mxu0 %v3418
        %v3866 = vpop.f32.mrf.mxu0
        %v3867 = vadd.f32 %v3642, %v3866
        %v3868 = vpop.f32.mrf.mxu0
        %3869 = vdwg.mxu0
        %v3870 = vmax.f32 %v3712, 0.0
        %v3871 = vmax.f32 %v3717, 0.0
        %v3872 = vmax.f32 %v3722, 0.0
        %v3873 = vmax.f32 %v3727, 0.0
        %v3874 = vmax.f32 %v3732, 0.0
        %v3875 = vmax.f32 %v3737, 0.0
        %v3876 = vmax.f32 %v3742, 0.0
        %v3877 = vmax.f32 %v3747, 0.0
        %v3878 = vmax.f32 %v3752, 0.0
        %v3879 = vmax.f32 %v3757, 0.0
        %v3880 = vmax.f32 %v3762, 0.0
        %v3881 = vmax.f32 %v3767, 0.0
        %v3882 = vmax.f32 %v3772, 0.0
        %v3883 = vmax.f32 %v3777, 0.0
        %v3884 = vmax.f32 %v3782, 0.0
        %v3885 = vmax.f32 %v3787, 0.0
        %v3886 = vmax.f32 %v3792, 0.0
        %v3887 = vmax.f32 %v3797, 0.0
        %v3888 = vmax.f32 %v3802, 0.0
        %v3889 = vmax.f32 %v3807, 0.0
        %v3890 = vmax.f32 %v3812, 0.0
        %v3891 = vmax.f32 %v3817, 0.0
        %v3892 = vmax.f32 %v3822, 0.0
        %v3893 = vmax.f32 %v3827, 0.0
        %v3894 = vmax.f32 %v3832, 0.0
        %v3895 = vmax.f32 %v3837, 0.0
        %v3896 = vmax.f32 %v3842, 0.0
        %v3897 = vmax.f32 %v3847, 0.0
        %v3898 = vmax.f32 %v3852, 0.0
        %v3899 = vmax.f32 %v3857, 0.0
        %v3900 = vmax.f32 %v3862, 0.0
        %v3901 = vmax.f32 %v3867, 0.0
        %3902 = vst.msk [vmem:[%s250] sm:$0xff] %vm1408, %v3870
        %3903 = vst.msk [vmem:[%s250 + $0x8] sm:$0xff] %vm1408, %v3871
        %3904 = vst.msk [vmem:[%s250 + $0x10] sm:$0xff] %vm1408, %v3872
        %3905 = vst.msk [vmem:[%s250 + $0x18] sm:$0xff] %vm1408, %v3873
        %3906 = vst.msk [vmem:[%s250 + $0x20] sm:$0xff] %vm1408, %v3874
        %3907 = vst.msk [vmem:[%s250 + $0x28] sm:$0xff] %vm1408, %v3875
        %3908 = vst.msk [vmem:[%s250 + $0x30] sm:$0xff] %vm1408, %v3876
        %3909 = vst.msk [vmem:[%s250 + $0x38] sm:$0xff] %vm1408, %v3877
        %3910 = vst.msk [vmem:[%s250 + $0x40] sm:$0xff] %vm1408, %v3878
        %3911 = vst.msk [vmem:[%s250 + $0x48] sm:$0xff] %vm1408, %v3879
        %3912 = vst.msk [vmem:[%s250 + $0x50] sm:$0xff] %vm1408, %v3880
        %3913 = vst.msk [vmem:[%s250 + $0x58] sm:$0xff] %vm1408, %v3881
        %3914 = vst.msk [vmem:[%s250 + $0x60] sm:$0xff] %vm1408, %v3882
        %3915 = vst.msk [vmem:[%s250 + $0x68] sm:$0xff] %vm1408, %v3883
        %3916 = vst.msk [vmem:[%s250 + $0x70] sm:$0xff] %vm1408, %v3884
        %3917 = vst.msk [vmem:[%s250 + $0x78] sm:$0xff] %vm1408, %v3885
        %3918 = vst.msk [vmem:[%s250 + $0x80] sm:$0xff] %vm1408, %v3886
        %3919 = vst.msk [vmem:[%s250 + $0x88] sm:$0xff] %vm1408, %v3887
        %3920 = vst.msk [vmem:[%s250 + $0x90] sm:$0xff] %vm1408, %v3888
        %3921 = vst.msk [vmem:[%s250 + $0x98] sm:$0xff] %vm1408, %v3889
        %3922 = vst.msk [vmem:[%s250 + $0xa0] sm:$0xff] %vm1408, %v3890
        %3923 = vst.msk [vmem:[%s250 + $0xa8] sm:$0xff] %vm1408, %v3891
        %3924 = vst.msk [vmem:[%s250 + $0xb0] sm:$0xff] %vm1408, %v3892
        %3925 = vst.msk [vmem:[%s250 + $0xb8] sm:$0xff] %vm1408, %v3893
        %3926 = vst.msk [vmem:[%s250 + $0xc0] sm:$0xff] %vm1408, %v3894
        %3927 = vst.msk [vmem:[%s250 + $0xc8] sm:$0xff] %vm1408, %v3895
        %3928 = vst.msk [vmem:[%s250 + $0xd0] sm:$0xff] %vm1408, %v3896
        %3929 = vst.msk [vmem:[%s250 + $0xd8] sm:$0xff] %vm1408, %v3897
        %3930 = vst.msk [vmem:[%s250 + $0xe0] sm:$0xff] %vm1408, %v3898
        %3931 = vst.msk [vmem:[%s250 + $0xe8] sm:$0xff] %vm1408, %v3899
        %3932 = vst.msk [vmem:[%s250 + $0xf0] sm:$0xff] %vm1408, %v3900
        %3933 = vst.msk [vmem:[%s250 + $0xf8] sm:$0xff] %vm1408, %v3901
        %p3934 = scmp.lt.s32.totalorder %s18, 1
        %s3935 = scalar_select %p3934, %s18, 1
        %s3936 = smul.addr %s3935, 32
        %s3937 = smul.addr %s3936, 8
        %s3938 = scalar_lea.vmem %s5, %s3937
        // Predicated region
        $region49: #{action_prediction_forward.2} parent=39 // pred_check
          %p3939 = pneg %p146
        $region50: #{action_prediction_forward.2} parent=39 // pred_check_branch
          %3941 = sbr.rel (%p3939) target = $region52
        $region51: #{action_prediction_forward.2} parent=39 // pred_region
          _
        $region52: #{action_prediction_forward.2} parent=39 // pred_fallthru
          _
      $region40: #{action_prediction_forward.2} parent=5 // pred_fallthru
        _
      %p3942 = scmp.le.s32.totalorder 2, %s13
      // Predicated region
      $region53: #{action_prediction_forward.2} parent=5 // pred_check
        %p3943 = pneg %p3942
      $region54: #{action_prediction_forward.2} parent=5 // pred_check_branch
        %3945 = sbr.rel (%p3943) target = $region56
      $region55: #{action_prediction_forward.2} parent=5 // pred_region
        %s3946 = ssub.s32 %s13, 2
        // Predicated region
        $region57: #{action_prediction_forward.2} parent=55 // pred_check
          %p3947 = pneg %p152
        $region58: #{action_prediction_forward.2} parent=55 // pred_check_branch
          %3949 = sbr.rel (%p3947) target = $region60
        $region59: #{action_prediction_forward.2} parent=55 // pred_region
          %p3950 = scmp.lt.s32.totalorder %s19, 1
          %s3951 = scalar_select %p3950, %s19, 1
          %s3952 = smul.addr %s3951, 32
          %s3953 = smul.addr %s3952, 8
          %s3954 = scalar_lea.vmem %s5, %s3953
        $region60: #{action_prediction_forward.2} parent=55 // pred_fallthru
          _
      $region56: #{action_prediction_forward.2} parent=5 // pred_fallthru
        _
    $region6: #{action_prediction_forward.2} parent=1 // loop_footer
      %s17 = sadd.s32 1, %s13
    $region7: #{action_prediction_forward.2} parent=1 // loop_footer_branch
      %12 = sbr.rel target = $region3
    $region8: #{action_prediction_forward.2} parent=1 // loop_exit
      _
    %3955 = vsyncpa [#allocation4], 1
    %s3956 = scalar_lea.sflag [#allocation4], 1
    %3957 = vsyncpa %s3956, 1
    %3958 = vsyncpa [#allocation6], 1

// kernel: action_prediction_forward.3
$region0: #{action_prediction_forward.3}
  #allocation0 [shape = 'u32[]', space=smem, size = 0x4, offset = 0x4, fixed_abs, tag = 'smem constant byte address 0x4 - core index']
  #allocation1 [shape = 'u32[144,128]{1,0:T(1,128)}', space=vmem, size = 0x12000, scoped, tag = 'internal scratch']
  %s0 = inlined_call_operand.vmem [shape: f32[2,8192], index: 0, kind: input, shape index: {}]
  %s1 = inlined_call_operand.vmem [shape: f32[2,24], index: 1, kind: input, shape index: {}]
  %s2 = inlined_call_operand.vmem [shape: f32[8192,32], index: 2, kind: input, shape index: {}]
  %s3 = inlined_call_operand.vmem [shape: f32[1,32], index: 3, kind: input, shape index: {}]
  %s4 = inlined_call_operand.vmem [shape: f32[24,32], index: 4, kind: input, shape index: {}]
  %s5 = inlined_call_operand.vmem [shape: f32[1,32], index: 5, kind: input, shape index: {}]
  %s6 = inlined_call_operand.vmem [shape: f32[32,32], index: 6, kind: input, shape index: {}]
  %s7 = inlined_call_operand.vmem [shape: f32[1,32], index: 7, kind: input, shape index: {}]
  %s8 = inlined_call_operand.vmem [shape: f32[32,32], index: 8, kind: input, shape index: {}]
  %s9 = inlined_call_operand.vmem [shape: f32[1,32], index: 9, kind: input, shape index: {}]
  %s10 = inlined_call_operand.vmem [shape: f32[64,32], index: 10, kind: input, shape index: {}]
  %s11 = inlined_call_operand.vmem [shape: f32[1,32], index: 11, kind: input, shape index: {}]
  %s12 = inlined_call_operand.vmem [shape: f32[32,32], index: 12, kind: input, shape index: {}]
  %s13 = inlined_call_operand.vmem [shape: f32[1,32], index: 13, kind: input, shape index: {}]
  %s14 = inlined_call_operand.vmem [shape: f32[32,19], index: 14, kind: input, shape index: {}]
  %s15 = inlined_call_operand.vmem [shape: f32[1,19], index: 15, kind: input, shape index: {}]
  %s16 = inlined_call_operand.hbm [shape: f32[2,19], index: 16, kind: output, shape index: {}]
  %s17 = sld [smem:[#allocation0]]
  $region74: #{action_prediction_forward.3} parent=0
    _
  %s19 = ssub.s32 1, %s17
  %s20 = scalar_select 0, %s19, %s17
  $region1: #{action_prediction_forward.3} parent=0
    #allocation2 [shape = 'u8[1024]{0}', space=vmem, size = 0x400, scoped, tag = 'output window, operand 0, single buffered']
    #allocation3 [shape = 's32[1]{0}', space=sflag, size = 0x4, scoped, tag = 'scoped memory for action_prediction_forward.3']
    %21 = vsyncpa [#allocation3], 0
    // Predicated region
    $region2: #{action_prediction_forward.3} parent=1 // pred_check
      _
    $region3: #{action_prediction_forward.3} parent=1 // pred_check_branch
      %23 = sbr.rel (0) target = $region5
    $region4: #{action_prediction_forward.3} parent=1 // pred_region
      _
    $region5: #{action_prediction_forward.3} parent=1 // pred_fallthru
      _
    // Predicated region
    $region6: #{action_prediction_forward.3} parent=1 // pred_check
      _
    $region7: #{action_prediction_forward.3} parent=1 // pred_check_branch
      %25 = sbr.rel (0) target = $region9
    $region8: #{action_prediction_forward.3} parent=1 // pred_region
      _
    $region9: #{action_prediction_forward.3} parent=1 // pred_fallthru
      _
    // Predicated region
    $region10: #{action_prediction_forward.3} parent=1 // pred_check
      _
    $region11: #{action_prediction_forward.3} parent=1 // pred_check_branch
      %27 = sbr.rel (0) target = $region13
    $region12: #{action_prediction_forward.3} parent=1 // pred_region
      _
    $region13: #{action_prediction_forward.3} parent=1 // pred_fallthru
      _
    // Predicated region
    $region14: #{action_prediction_forward.3} parent=1 // pred_check
      _
    $region15: #{action_prediction_forward.3} parent=1 // pred_check_branch
      %29 = sbr.rel (0) target = $region17
    $region16: #{action_prediction_forward.3} parent=1 // pred_region
      _
    $region17: #{action_prediction_forward.3} parent=1 // pred_fallthru
      _
    // Predicated region
    $region18: #{action_prediction_forward.3} parent=1 // pred_check
      _
    $region19: #{action_prediction_forward.3} parent=1 // pred_check_branch
      %31 = sbr.rel (0) target = $region21
    $region20: #{action_prediction_forward.3} parent=1 // pred_region
      _
    $region21: #{action_prediction_forward.3} parent=1 // pred_fallthru
      _
    // Predicated region
    $region22: #{action_prediction_forward.3} parent=1 // pred_check
      _
    $region23: #{action_prediction_forward.3} parent=1 // pred_check_branch
      %33 = sbr.rel (0) target = $region25
    $region24: #{action_prediction_forward.3} parent=1 // pred_region
      _
    $region25: #{action_prediction_forward.3} parent=1 // pred_fallthru
      _
    // Predicated region
    $region26: #{action_prediction_forward.3} parent=1 // pred_check
      _
    $region27: #{action_prediction_forward.3} parent=1 // pred_check_branch
      %35 = sbr.rel (0) target = $region29
    $region28: #{action_prediction_forward.3} parent=1 // pred_region
      _
    $region29: #{action_prediction_forward.3} parent=1 // pred_fallthru
      _
    // Predicated region
    $region30: #{action_prediction_forward.3} parent=1 // pred_check
      _
    $region31: #{action_prediction_forward.3} parent=1 // pred_check_branch
      %37 = sbr.rel (0) target = $region33
    $region32: #{action_prediction_forward.3} parent=1 // pred_region
      _
    $region33: #{action_prediction_forward.3} parent=1 // pred_fallthru
      _
    // Predicated region
    $region34: #{action_prediction_forward.3} parent=1 // pred_check
      _
    $region35: #{action_prediction_forward.3} parent=1 // pred_check_branch
      %39 = sbr.rel (0) target = $region37
    $region36: #{action_prediction_forward.3} parent=1 // pred_region
      _
    $region37: #{action_prediction_forward.3} parent=1 // pred_fallthru
      _
    // Predicated region
    $region38: #{action_prediction_forward.3} parent=1 // pred_check
      _
    $region39: #{action_prediction_forward.3} parent=1 // pred_check_branch
      %41 = sbr.rel (0) target = $region41
    $region40: #{action_prediction_forward.3} parent=1 // pred_region
      _
    $region41: #{action_prediction_forward.3} parent=1 // pred_fallthru
      _
    // Predicated region
    $region42: #{action_prediction_forward.3} parent=1 // pred_check
      _
    $region43: #{action_prediction_forward.3} parent=1 // pred_check_branch
      %43 = sbr.rel (0) target = $region45
    $region44: #{action_prediction_forward.3} parent=1 // pred_region
      _
    $region45: #{action_prediction_forward.3} parent=1 // pred_fallthru
      _
    // Predicated region
    $region46: #{action_prediction_forward.3} parent=1 // pred_check
      _
    $region47: #{action_prediction_forward.3} parent=1 // pred_check_branch
      %45 = sbr.rel (0) target = $region49
    $region48: #{action_prediction_forward.3} parent=1 // pred_region
      _
    $region49: #{action_prediction_forward.3} parent=1 // pred_fallthru
      _
    // Predicated region
    $region50: #{action_prediction_forward.3} parent=1 // pred_check
      _
    $region51: #{action_prediction_forward.3} parent=1 // pred_check_branch
      %47 = sbr.rel (0) target = $region53
    $region52: #{action_prediction_forward.3} parent=1 // pred_region
      _
    $region53: #{action_prediction_forward.3} parent=1 // pred_fallthru
      _
    // Predicated region
    $region54: #{action_prediction_forward.3} parent=1 // pred_check
      _
    $region55: #{action_prediction_forward.3} parent=1 // pred_check_branch
      %49 = sbr.rel (0) target = $region57
    $region56: #{action_prediction_forward.3} parent=1 // pred_region
      _
    $region57: #{action_prediction_forward.3} parent=1 // pred_fallthru
      _
    // Predicated region
    $region58: #{action_prediction_forward.3} parent=1 // pred_check
      _
    $region59: #{action_prediction_forward.3} parent=1 // pred_check_branch
      %51 = sbr.rel (0) target = $region61
    $region60: #{action_prediction_forward.3} parent=1 // pred_region
      _
    $region61: #{action_prediction_forward.3} parent=1 // pred_fallthru
      _
    // Predicated region
    $region62: #{action_prediction_forward.3} parent=1 // pred_check
      _
    $region63: #{action_prediction_forward.3} parent=1 // pred_check_branch
      %53 = sbr.rel (0) target = $region65
    $region64: #{action_prediction_forward.3} parent=1 // pred_region
      _
    $region65: #{action_prediction_forward.3} parent=1 // pred_fallthru
      _
    %v54 = vld [vmem:[%s0] sm:$0xff]
    %v55 = vld [vmem:[%s0 + $0x8] sm:$0xff]
    %v56 = vld [vmem:[%s0 + $0x10] sm:$0xff]
    %v57 = vld [vmem:[%s0 + $0x18] sm:$0xff]
    %v58 = vld [vmem:[%s0 + $0x20] sm:$0xff]
    %v59 = vld [vmem:[%s0 + $0x28] sm:$0xff]
    %v60 = vld [vmem:[%s0 + $0x30] sm:$0xff]
    %v61 = vld [vmem:[%s0 + $0x38] sm:$0xff]
    %v62 = vld [vmem:[%s0 + $0x40] sm:$0xff]
    %v63 = vld [vmem:[%s0 + $0x48] sm:$0xff]
    %v64 = vld [vmem:[%s0 + $0x50] sm:$0xff]
    %v65 = vld [vmem:[%s0 + $0x58] sm:$0xff]
    %v66 = vld [vmem:[%s0 + $0x60] sm:$0xff]
    %v67 = vld [vmem:[%s0 + $0x68] sm:$0xff]
    %v68 = vld [vmem:[%s0 + $0x70] sm:$0xff]
    %v69 = vld [vmem:[%s0 + $0x78] sm:$0xff]
    %v70 = vld [vmem:[%s2] sm:$0xff]
    %v71 = vld [vmem:[%s2 + $0x8] sm:$0xff]
    %v72 = vld [vmem:[%s2 + $0x10] sm:$0xff]
    %v73 = vld [vmem:[%s2 + $0x18] sm:$0xff]
    %v74 = vld [vmem:[%s2 + $0x20] sm:$0xff]
    %v75 = vld [vmem:[%s2 + $0x28] sm:$0xff]
    %v76 = vld [vmem:[%s2 + $0x30] sm:$0xff]
    %v77 = vld [vmem:[%s2 + $0x38] sm:$0xff]
    %v78 = vld [vmem:[%s2 + $0x40] sm:$0xff]
    %v79 = vld [vmem:[%s2 + $0x48] sm:$0xff]
    %v80 = vld [vmem:[%s2 + $0x50] sm:$0xff]
    %v81 = vld [vmem:[%s2 + $0x58] sm:$0xff]
    %v82 = vld [vmem:[%s2 + $0x60] sm:$0xff]
    %v83 = vld [vmem:[%s2 + $0x68] sm:$0xff]
    %v84 = vld [vmem:[%s2 + $0x70] sm:$0xff]
    %v85 = vld [vmem:[%s2 + $0x78] sm:$0xff]
    %v86 = vld [vmem:[%s2 + $0x80] sm:$0xff]
    %v87 = vld [vmem:[%s2 + $0x88] sm:$0xff]
    %v88 = vld [vmem:[%s2 + $0x90] sm:$0xff]
    %v89 = vld [vmem:[%s2 + $0x98] sm:$0xff]
    %v90 = vld [vmem:[%s2 + $0xa0] sm:$0xff]
    %v91 = vld [vmem:[%s2 + $0xa8] sm:$0xff]
    %v92 = vld [vmem:[%s2 + $0xb0] sm:$0xff]
    %v93 = vld [vmem:[%s2 + $0xb8] sm:$0xff]
    %v94 = vld [vmem:[%s2 + $0xc0] sm:$0xff]
    %v95 = vld [vmem:[%s2 + $0xc8] sm:$0xff]
    %v96 = vld [vmem:[%s2 + $0xd0] sm:$0xff]
    %v97 = vld [vmem:[%s2 + $0xd8] sm:$0xff]
    %v98 = vld [vmem:[%s2 + $0xe0] sm:$0xff]
    %v99 = vld [vmem:[%s2 + $0xe8] sm:$0xff]
    %v100 = vld [vmem:[%s2 + $0xf0] sm:$0xff]
    %v101 = vld [vmem:[%s2 + $0xf8] sm:$0xff]
    %v102 = vld [vmem:[%s2 + $0x100] sm:$0xff]
    %v103 = vld [vmem:[%s2 + $0x108] sm:$0xff]
    %v104 = vld [vmem:[%s2 + $0x110] sm:$0xff]
    %v105 = vld [vmem:[%s2 + $0x118] sm:$0xff]
    %v106 = vld [vmem:[%s2 + $0x120] sm:$0xff]
    %v107 = vld [vmem:[%s2 + $0x128] sm:$0xff]
    %v108 = vld [vmem:[%s2 + $0x130] sm:$0xff]
    %v109 = vld [vmem:[%s2 + $0x138] sm:$0xff]
    %v110 = vld [vmem:[%s2 + $0x140] sm:$0xff]
    %v111 = vld [vmem:[%s2 + $0x148] sm:$0xff]
    %v112 = vld [vmem:[%s2 + $0x150] sm:$0xff]
    %v113 = vld [vmem:[%s2 + $0x158] sm:$0xff]
    %v114 = vld [vmem:[%s2 + $0x160] sm:$0xff]
    %v115 = vld [vmem:[%s2 + $0x168] sm:$0xff]
    %v116 = vld [vmem:[%s2 + $0x170] sm:$0xff]
    %v117 = vld [vmem:[%s2 + $0x178] sm:$0xff]
    %v118 = vld [vmem:[%s2 + $0x180] sm:$0xff]
    %v119 = vld [vmem:[%s2 + $0x188] sm:$0xff]
    %v120 = vld [vmem:[%s2 + $0x190] sm:$0xff]
    %v121 = vld [vmem:[%s2 + $0x198] sm:$0xff]
    %v122 = vld [vmem:[%s2 + $0x1a0] sm:$0xff]
    %v123 = vld [vmem:[%s2 + $0x1a8] sm:$0xff]
    %v124 = vld [vmem:[%s2 + $0x1b0] sm:$0xff]
    %v125 = vld [vmem:[%s2 + $0x1b8] sm:$0xff]
    %v126 = vld [vmem:[%s2 + $0x1c0] sm:$0xff]
    %v127 = vld [vmem:[%s2 + $0x1c8] sm:$0xff]
    %v128 = vld [vmem:[%s2 + $0x1d0] sm:$0xff]
    %v129 = vld [vmem:[%s2 + $0x1d8] sm:$0xff]
    %v130 = vld [vmem:[%s2 + $0x1e0] sm:$0xff]
    %v131 = vld [vmem:[%s2 + $0x1e8] sm:$0xff]
    %v132 = vld [vmem:[%s2 + $0x1f0] sm:$0xff]
    %v133 = vld [vmem:[%s2 + $0x1f8] sm:$0xff]
    %v134 = vld [vmem:[%s2 + $0x200] sm:$0xff]
    %v135 = vld [vmem:[%s2 + $0x208] sm:$0xff]
    %v136 = vld [vmem:[%s2 + $0x210] sm:$0xff]
    %v137 = vld [vmem:[%s2 + $0x218] sm:$0xff]
    %v138 = vld [vmem:[%s2 + $0x220] sm:$0xff]
    %v139 = vld [vmem:[%s2 + $0x228] sm:$0xff]
    %v140 = vld [vmem:[%s2 + $0x230] sm:$0xff]
    %v141 = vld [vmem:[%s2 + $0x238] sm:$0xff]
    %v142 = vld [vmem:[%s2 + $0x240] sm:$0xff]
    %v143 = vld [vmem:[%s2 + $0x248] sm:$0xff]
    %v144 = vld [vmem:[%s2 + $0x250] sm:$0xff]
    %v145 = vld [vmem:[%s2 + $0x258] sm:$0xff]
    %v146 = vld [vmem:[%s2 + $0x260] sm:$0xff]
    %v147 = vld [vmem:[%s2 + $0x268] sm:$0xff]
    %v148 = vld [vmem:[%s2 + $0x270] sm:$0xff]
    %v149 = vld [vmem:[%s2 + $0x278] sm:$0xff]
    %v150 = vld [vmem:[%s2 + $0x280] sm:$0xff]
    %v151 = vld [vmem:[%s2 + $0x288] sm:$0xff]
    %v152 = vld [vmem:[%s2 + $0x290] sm:$0xff]
    %v153 = vld [vmem:[%s2 + $0x298] sm:$0xff]
    %v154 = vld [vmem:[%s2 + $0x2a0] sm:$0xff]
    %v155 = vld [vmem:[%s2 + $0x2a8] sm:$0xff]
    %v156 = vld [vmem:[%s2 + $0x2b0] sm:$0xff]
    %v157 = vld [vmem:[%s2 + $0x2b8] sm:$0xff]
    %v158 = vld [vmem:[%s2 + $0x2c0] sm:$0xff]
    %v159 = vld [vmem:[%s2 + $0x2c8] sm:$0xff]
    %v160 = vld [vmem:[%s2 + $0x2d0] sm:$0xff]
    %v161 = vld [vmem:[%s2 + $0x2d8] sm:$0xff]
    %v162 = vld [vmem:[%s2 + $0x2e0] sm:$0xff]
    %v163 = vld [vmem:[%s2 + $0x2e8] sm:$0xff]
    %v164 = vld [vmem:[%s2 + $0x2f0] sm:$0xff]
    %v165 = vld [vmem:[%s2 + $0x2f8] sm:$0xff]
    %v166 = vld [vmem:[%s2 + $0x300] sm:$0xff]
    %v167 = vld [vmem:[%s2 + $0x308] sm:$0xff]
    %v168 = vld [vmem:[%s2 + $0x310] sm:$0xff]
    %v169 = vld [vmem:[%s2 + $0x318] sm:$0xff]
    %v170 = vld [vmem:[%s2 + $0x320] sm:$0xff]
    %v171 = vld [vmem:[%s2 + $0x328] sm:$0xff]
    %v172 = vld [vmem:[%s2 + $0x330] sm:$0xff]
    %v173 = vld [vmem:[%s2 + $0x338] sm:$0xff]
    %v174 = vld [vmem:[%s2 + $0x340] sm:$0xff]
    %v175 = vld [vmem:[%s2 + $0x348] sm:$0xff]
    %v176 = vld [vmem:[%s2 + $0x350] sm:$0xff]
    %v177 = vld [vmem:[%s2 + $0x358] sm:$0xff]
    %v178 = vld [vmem:[%s2 + $0x360] sm:$0xff]
    %v179 = vld [vmem:[%s2 + $0x368] sm:$0xff]
    %v180 = vld [vmem:[%s2 + $0x370] sm:$0xff]
    %v181 = vld [vmem:[%s2 + $0x378] sm:$0xff]
    %v182 = vld [vmem:[%s2 + $0x380] sm:$0xff]
    %v183 = vld [vmem:[%s2 + $0x388] sm:$0xff]
    %v184 = vld [vmem:[%s2 + $0x390] sm:$0xff]
    %v185 = vld [vmem:[%s2 + $0x398] sm:$0xff]
    %v186 = vld [vmem:[%s2 + $0x3a0] sm:$0xff]
    %v187 = vld [vmem:[%s2 + $0x3a8] sm:$0xff]
    %v188 = vld [vmem:[%s2 + $0x3b0] sm:$0xff]
    %v189 = vld [vmem:[%s2 + $0x3b8] sm:$0xff]
    %v190 = vld [vmem:[%s2 + $0x3c0] sm:$0xff]
    %v191 = vld [vmem:[%s2 + $0x3c8] sm:$0xff]
    %v192 = vld [vmem:[%s2 + $0x3d0] sm:$0xff]
    %v193 = vld [vmem:[%s2 + $0x3d8] sm:$0xff]
    %v194 = vld [vmem:[%s2 + $0x3e0] sm:$0xff]
    %v195 = vld [vmem:[%s2 + $0x3e8] sm:$0xff]
    %v196 = vld [vmem:[%s2 + $0x3f0] sm:$0xff]
    %v197 = vld [vmem:[%s2 + $0x3f8] sm:$0xff]
    %v198 = vld [vmem:[%s2 + $0x400] sm:$0xff]
    %v199 = vld [vmem:[%s2 + $0x408] sm:$0xff]
    %v200 = vld [vmem:[%s2 + $0x410] sm:$0xff]
    %v201 = vld [vmem:[%s2 + $0x418] sm:$0xff]
    %v202 = vld [vmem:[%s2 + $0x420] sm:$0xff]
    %v203 = vld [vmem:[%s2 + $0x428] sm:$0xff]
    %v204 = vld [vmem:[%s2 + $0x430] sm:$0xff]
    %v205 = vld [vmem:[%s2 + $0x438] sm:$0xff]
    %v206 = vld [vmem:[%s2 + $0x440] sm:$0xff]
    %v207 = vld [vmem:[%s2 + $0x448] sm:$0xff]
    %v208 = vld [vmem:[%s2 + $0x450] sm:$0xff]
    %v209 = vld [vmem:[%s2 + $0x458] sm:$0xff]
    %v210 = vld [vmem:[%s2 + $0x460] sm:$0xff]
    %v211 = vld [vmem:[%s2 + $0x468] sm:$0xff]
    %v212 = vld [vmem:[%s2 + $0x470] sm:$0xff]
    %v213 = vld [vmem:[%s2 + $0x478] sm:$0xff]
    %v214 = vld [vmem:[%s2 + $0x480] sm:$0xff]
    %v215 = vld [vmem:[%s2 + $0x488] sm:$0xff]
    %v216 = vld [vmem:[%s2 + $0x490] sm:$0xff]
    %v217 = vld [vmem:[%s2 + $0x498] sm:$0xff]
    %v218 = vld [vmem:[%s2 + $0x4a0] sm:$0xff]
    %v219 = vld [vmem:[%s2 + $0x4a8] sm:$0xff]
    %v220 = vld [vmem:[%s2 + $0x4b0] sm:$0xff]
    %v221 = vld [vmem:[%s2 + $0x4b8] sm:$0xff]
    %v222 = vld [vmem:[%s2 + $0x4c0] sm:$0xff]
    %v223 = vld [vmem:[%s2 + $0x4c8] sm:$0xff]
    %v224 = vld [vmem:[%s2 + $0x4d0] sm:$0xff]
    %v225 = vld [vmem:[%s2 + $0x4d8] sm:$0xff]
    %v226 = vld [vmem:[%s2 + $0x4e0] sm:$0xff]
    %v227 = vld [vmem:[%s2 + $0x4e8] sm:$0xff]
    %v228 = vld [vmem:[%s2 + $0x4f0] sm:$0xff]
    %v229 = vld [vmem:[%s2 + $0x4f8] sm:$0xff]
    %v230 = vld [vmem:[%s2 + $0x500] sm:$0xff]
    %v231 = vld [vmem:[%s2 + $0x508] sm:$0xff]
    %v232 = vld [vmem:[%s2 + $0x510] sm:$0xff]
    %v233 = vld [vmem:[%s2 + $0x518] sm:$0xff]
    %v234 = vld [vmem:[%s2 + $0x520] sm:$0xff]
    %v235 = vld [vmem:[%s2 + $0x528] sm:$0xff]
    %v236 = vld [vmem:[%s2 + $0x530] sm:$0xff]
    %v237 = vld [vmem:[%s2 + $0x538] sm:$0xff]
    %v238 = vld [vmem:[%s2 + $0x540] sm:$0xff]
    %v239 = vld [vmem:[%s2 + $0x548] sm:$0xff]
    %v240 = vld [vmem:[%s2 + $0x550] sm:$0xff]
    %v241 = vld [vmem:[%s2 + $0x558] sm:$0xff]
    %v242 = vld [vmem:[%s2 + $0x560] sm:$0xff]
    %v243 = vld [vmem:[%s2 + $0x568] sm:$0xff]
    %v244 = vld [vmem:[%s2 + $0x570] sm:$0xff]
    %v245 = vld [vmem:[%s2 + $0x578] sm:$0xff]
    %v246 = vld [vmem:[%s2 + $0x580] sm:$0xff]
    %v247 = vld [vmem:[%s2 + $0x588] sm:$0xff]
    %v248 = vld [vmem:[%s2 + $0x590] sm:$0xff]
    %v249 = vld [vmem:[%s2 + $0x598] sm:$0xff]
    %v250 = vld [vmem:[%s2 + $0x5a0] sm:$0xff]
    %v251 = vld [vmem:[%s2 + $0x5a8] sm:$0xff]
    %v252 = vld [vmem:[%s2 + $0x5b0] sm:$0xff]
    %v253 = vld [vmem:[%s2 + $0x5b8] sm:$0xff]
    %v254 = vld [vmem:[%s2 + $0x5c0] sm:$0xff]
    %v255 = vld [vmem:[%s2 + $0x5c8] sm:$0xff]
    %v256 = vld [vmem:[%s2 + $0x5d0] sm:$0xff]
    %v257 = vld [vmem:[%s2 + $0x5d8] sm:$0xff]
    %v258 = vld [vmem:[%s2 + $0x5e0] sm:$0xff]
    %v259 = vld [vmem:[%s2 + $0x5e8] sm:$0xff]
    %v260 = vld [vmem:[%s2 + $0x5f0] sm:$0xff]
    %v261 = vld [vmem:[%s2 + $0x5f8] sm:$0xff]
    %v262 = vld [vmem:[%s2 + $0x600] sm:$0xff]
    %v263 = vld [vmem:[%s2 + $0x608] sm:$0xff]
    %v264 = vld [vmem:[%s2 + $0x610] sm:$0xff]
    %v265 = vld [vmem:[%s2 + $0x618] sm:$0xff]
    %v266 = vld [vmem:[%s2 + $0x620] sm:$0xff]
    %v267 = vld [vmem:[%s2 + $0x628] sm:$0xff]
    %v268 = vld [vmem:[%s2 + $0x630] sm:$0xff]
    %v269 = vld [vmem:[%s2 + $0x638] sm:$0xff]
    %v270 = vld [vmem:[%s2 + $0x640] sm:$0xff]
    %v271 = vld [vmem:[%s2 + $0x648] sm:$0xff]
    %v272 = vld [vmem:[%s2 + $0x650] sm:$0xff]
    %v273 = vld [vmem:[%s2 + $0x658] sm:$0xff]
    %v274 = vld [vmem:[%s2 + $0x660] sm:$0xff]
    %v275 = vld [vmem:[%s2 + $0x668] sm:$0xff]
    %v276 = vld [vmem:[%s2 + $0x670] sm:$0xff]
    %v277 = vld [vmem:[%s2 + $0x678] sm:$0xff]
    %v278 = vld [vmem:[%s2 + $0x680] sm:$0xff]
    %v279 = vld [vmem:[%s2 + $0x688] sm:$0xff]
    %v280 = vld [vmem:[%s2 + $0x690] sm:$0xff]
    %v281 = vld [vmem:[%s2 + $0x698] sm:$0xff]
    %v282 = vld [vmem:[%s2 + $0x6a0] sm:$0xff]
    %v283 = vld [vmem:[%s2 + $0x6a8] sm:$0xff]
    %v284 = vld [vmem:[%s2 + $0x6b0] sm:$0xff]
    %v285 = vld [vmem:[%s2 + $0x6b8] sm:$0xff]
    %v286 = vld [vmem:[%s2 + $0x6c0] sm:$0xff]
    %v287 = vld [vmem:[%s2 + $0x6c8] sm:$0xff]
    %v288 = vld [vmem:[%s2 + $0x6d0] sm:$0xff]
    %v289 = vld [vmem:[%s2 + $0x6d8] sm:$0xff]
    %v290 = vld [vmem:[%s2 + $0x6e0] sm:$0xff]
    %v291 = vld [vmem:[%s2 + $0x6e8] sm:$0xff]
    %v292 = vld [vmem:[%s2 + $0x6f0] sm:$0xff]
    %v293 = vld [vmem:[%s2 + $0x6f8] sm:$0xff]
    %v294 = vld [vmem:[%s2 + $0x700] sm:$0xff]
    %v295 = vld [vmem:[%s2 + $0x708] sm:$0xff]
    %v296 = vld [vmem:[%s2 + $0x710] sm:$0xff]
    %v297 = vld [vmem:[%s2 + $0x718] sm:$0xff]
    %v298 = vld [vmem:[%s2 + $0x720] sm:$0xff]
    %v299 = vld [vmem:[%s2 + $0x728] sm:$0xff]
    %v300 = vld [vmem:[%s2 + $0x730] sm:$0xff]
    %v301 = vld [vmem:[%s2 + $0x738] sm:$0xff]
    %v302 = vld [vmem:[%s2 + $0x740] sm:$0xff]
    %v303 = vld [vmem:[%s2 + $0x748] sm:$0xff]
    %v304 = vld [vmem:[%s2 + $0x750] sm:$0xff]
    %v305 = vld [vmem:[%s2 + $0x758] sm:$0xff]
    %v306 = vld [vmem:[%s2 + $0x760] sm:$0xff]
    %v307 = vld [vmem:[%s2 + $0x768] sm:$0xff]
    %v308 = vld [vmem:[%s2 + $0x770] sm:$0xff]
    %v309 = vld [vmem:[%s2 + $0x778] sm:$0xff]
    %v310 = vld [vmem:[%s2 + $0x780] sm:$0xff]
    %v311 = vld [vmem:[%s2 + $0x788] sm:$0xff]
    %v312 = vld [vmem:[%s2 + $0x790] sm:$0xff]
    %v313 = vld [vmem:[%s2 + $0x798] sm:$0xff]
    %v314 = vld [vmem:[%s2 + $0x7a0] sm:$0xff]
    %v315 = vld [vmem:[%s2 + $0x7a8] sm:$0xff]
    %v316 = vld [vmem:[%s2 + $0x7b0] sm:$0xff]
    %v317 = vld [vmem:[%s2 + $0x7b8] sm:$0xff]
    %v318 = vld [vmem:[%s2 + $0x7c0] sm:$0xff]
    %v319 = vld [vmem:[%s2 + $0x7c8] sm:$0xff]
    %v320 = vld [vmem:[%s2 + $0x7d0] sm:$0xff]
    %v321 = vld [vmem:[%s2 + $0x7d8] sm:$0xff]
    %v322 = vld [vmem:[%s2 + $0x7e0] sm:$0xff]
    %v323 = vld [vmem:[%s2 + $0x7e8] sm:$0xff]
    %v324 = vld [vmem:[%s2 + $0x7f0] sm:$0xff]
    %v325 = vld [vmem:[%s2 + $0x7f8] sm:$0xff]
    %v326 = vld [vmem:[%s2 + $0x800] sm:$0xff]
    %v327 = vld [vmem:[%s2 + $0x808] sm:$0xff]
    %v328 = vld [vmem:[%s2 + $0x810] sm:$0xff]
    %v329 = vld [vmem:[%s2 + $0x818] sm:$0xff]
    %v330 = vld [vmem:[%s2 + $0x820] sm:$0xff]
    %v331 = vld [vmem:[%s2 + $0x828] sm:$0xff]
    %v332 = vld [vmem:[%s2 + $0x830] sm:$0xff]
    %v333 = vld [vmem:[%s2 + $0x838] sm:$0xff]
    %v334 = vld [vmem:[%s2 + $0x840] sm:$0xff]
    %v335 = vld [vmem:[%s2 + $0x848] sm:$0xff]
    %v336 = vld [vmem:[%s2 + $0x850] sm:$0xff]
    %v337 = vld [vmem:[%s2 + $0x858] sm:$0xff]
    %v338 = vld [vmem:[%s2 + $0x860] sm:$0xff]
    %v339 = vld [vmem:[%s2 + $0x868] sm:$0xff]
    %v340 = vld [vmem:[%s2 + $0x870] sm:$0xff]
    %v341 = vld [vmem:[%s2 + $0x878] sm:$0xff]
    %v342 = vld [vmem:[%s2 + $0x880] sm:$0xff]
    %v343 = vld [vmem:[%s2 + $0x888] sm:$0xff]
    %v344 = vld [vmem:[%s2 + $0x890] sm:$0xff]
    %v345 = vld [vmem:[%s2 + $0x898] sm:$0xff]
    %v346 = vld [vmem:[%s2 + $0x8a0] sm:$0xff]
    %v347 = vld [vmem:[%s2 + $0x8a8] sm:$0xff]
    %v348 = vld [vmem:[%s2 + $0x8b0] sm:$0xff]
    %v349 = vld [vmem:[%s2 + $0x8b8] sm:$0xff]
    %v350 = vld [vmem:[%s2 + $0x8c0] sm:$0xff]
    %v351 = vld [vmem:[%s2 + $0x8c8] sm:$0xff]
    %v352 = vld [vmem:[%s2 + $0x8d0] sm:$0xff]
    %v353 = vld [vmem:[%s2 + $0x8d8] sm:$0xff]
    %v354 = vld [vmem:[%s2 + $0x8e0] sm:$0xff]
    %v355 = vld [vmem:[%s2 + $0x8e8] sm:$0xff]
    %v356 = vld [vmem:[%s2 + $0x8f0] sm:$0xff]
    %v357 = vld [vmem:[%s2 + $0x8f8] sm:$0xff]
    %v358 = vld [vmem:[%s2 + $0x900] sm:$0xff]
    %v359 = vld [vmem:[%s2 + $0x908] sm:$0xff]
    %v360 = vld [vmem:[%s2 + $0x910] sm:$0xff]
    %v361 = vld [vmem:[%s2 + $0x918] sm:$0xff]
    %v362 = vld [vmem:[%s2 + $0x920] sm:$0xff]
    %v363 = vld [vmem:[%s2 + $0x928] sm:$0xff]
    %v364 = vld [vmem:[%s2 + $0x930] sm:$0xff]
    %v365 = vld [vmem:[%s2 + $0x938] sm:$0xff]
    %v366 = vld [vmem:[%s2 + $0x940] sm:$0xff]
    %v367 = vld [vmem:[%s2 + $0x948] sm:$0xff]
    %v368 = vld [vmem:[%s2 + $0x950] sm:$0xff]
    %v369 = vld [vmem:[%s2 + $0x958] sm:$0xff]
    %v370 = vld [vmem:[%s2 + $0x960] sm:$0xff]
    %v371 = vld [vmem:[%s2 + $0x968] sm:$0xff]
    %v372 = vld [vmem:[%s2 + $0x970] sm:$0xff]
    %v373 = vld [vmem:[%s2 + $0x978] sm:$0xff]
    %v374 = vld [vmem:[%s2 + $0x980] sm:$0xff]
    %v375 = vld [vmem:[%s2 + $0x988] sm:$0xff]
    %v376 = vld [vmem:[%s2 + $0x990] sm:$0xff]
    %v377 = vld [vmem:[%s2 + $0x998] sm:$0xff]
    %v378 = vld [vmem:[%s2 + $0x9a0] sm:$0xff]
    %v379 = vld [vmem:[%s2 + $0x9a8] sm:$0xff]
    %v380 = vld [vmem:[%s2 + $0x9b0] sm:$0xff]
    %v381 = vld [vmem:[%s2 + $0x9b8] sm:$0xff]
    %v382 = vld [vmem:[%s2 + $0x9c0] sm:$0xff]
    %v383 = vld [vmem:[%s2 + $0x9c8] sm:$0xff]
    %v384 = vld [vmem:[%s2 + $0x9d0] sm:$0xff]
    %v385 = vld [vmem:[%s2 + $0x9d8] sm:$0xff]
    %v386 = vld [vmem:[%s2 + $0x9e0] sm:$0xff]
    %v387 = vld [vmem:[%s2 + $0x9e8] sm:$0xff]
    %v388 = vld [vmem:[%s2 + $0x9f0] sm:$0xff]
    %v389 = vld [vmem:[%s2 + $0x9f8] sm:$0xff]
    %v390 = vld [vmem:[%s2 + $0xa00] sm:$0xff]
    %v391 = vld [vmem:[%s2 + $0xa08] sm:$0xff]
    %v392 = vld [vmem:[%s2 + $0xa10] sm:$0xff]
    %v393 = vld [vmem:[%s2 + $0xa18] sm:$0xff]
    %v394 = vld [vmem:[%s2 + $0xa20] sm:$0xff]
    %v395 = vld [vmem:[%s2 + $0xa28] sm:$0xff]
    %v396 = vld [vmem:[%s2 + $0xa30] sm:$0xff]
    %v397 = vld [vmem:[%s2 + $0xa38] sm:$0xff]
    %v398 = vld [vmem:[%s2 + $0xa40] sm:$0xff]
    %v399 = vld [vmem:[%s2 + $0xa48] sm:$0xff]
    %v400 = vld [vmem:[%s2 + $0xa50] sm:$0xff]
    %v401 = vld [vmem:[%s2 + $0xa58] sm:$0xff]
    %v402 = vld [vmem:[%s2 + $0xa60] sm:$0xff]
    %v403 = vld [vmem:[%s2 + $0xa68] sm:$0xff]
    %v404 = vld [vmem:[%s2 + $0xa70] sm:$0xff]
    %v405 = vld [vmem:[%s2 + $0xa78] sm:$0xff]
    %v406 = vld [vmem:[%s2 + $0xa80] sm:$0xff]
    %v407 = vld [vmem:[%s2 + $0xa88] sm:$0xff]
    %v408 = vld [vmem:[%s2 + $0xa90] sm:$0xff]
    %v409 = vld [vmem:[%s2 + $0xa98] sm:$0xff]
    %v410 = vld [vmem:[%s2 + $0xaa0] sm:$0xff]
    %v411 = vld [vmem:[%s2 + $0xaa8] sm:$0xff]
    %v412 = vld [vmem:[%s2 + $0xab0] sm:$0xff]
    %v413 = vld [vmem:[%s2 + $0xab8] sm:$0xff]
    %v414 = vld [vmem:[%s2 + $0xac0] sm:$0xff]
    %v415 = vld [vmem:[%s2 + $0xac8] sm:$0xff]
    %v416 = vld [vmem:[%s2 + $0xad0] sm:$0xff]
    %v417 = vld [vmem:[%s2 + $0xad8] sm:$0xff]
    %v418 = vld [vmem:[%s2 + $0xae0] sm:$0xff]
    %v419 = vld [vmem:[%s2 + $0xae8] sm:$0xff]
    %v420 = vld [vmem:[%s2 + $0xaf0] sm:$0xff]
    %v421 = vld [vmem:[%s2 + $0xaf8] sm:$0xff]
    %v422 = vld [vmem:[%s2 + $0xb00] sm:$0xff]
    %v423 = vld [vmem:[%s2 + $0xb08] sm:$0xff]
    %v424 = vld [vmem:[%s2 + $0xb10] sm:$0xff]
    %v425 = vld [vmem:[%s2 + $0xb18] sm:$0xff]
    %v426 = vld [vmem:[%s2 + $0xb20] sm:$0xff]
    %v427 = vld [vmem:[%s2 + $0xb28] sm:$0xff]
    %v428 = vld [vmem:[%s2 + $0xb30] sm:$0xff]
    %v429 = vld [vmem:[%s2 + $0xb38] sm:$0xff]
    %v430 = vld [vmem:[%s2 + $0xb40] sm:$0xff]
    %v431 = vld [vmem:[%s2 + $0xb48] sm:$0xff]
    %v432 = vld [vmem:[%s2 + $0xb50] sm:$0xff]
    %v433 = vld [vmem:[%s2 + $0xb58] sm:$0xff]
    %v434 = vld [vmem:[%s2 + $0xb60] sm:$0xff]
    %v435 = vld [vmem:[%s2 + $0xb68] sm:$0xff]
    %v436 = vld [vmem:[%s2 + $0xb70] sm:$0xff]
    %v437 = vld [vmem:[%s2 + $0xb78] sm:$0xff]
    %v438 = vld [vmem:[%s2 + $0xb80] sm:$0xff]
    %v439 = vld [vmem:[%s2 + $0xb88] sm:$0xff]
    %v440 = vld [vmem:[%s2 + $0xb90] sm:$0xff]
    %v441 = vld [vmem:[%s2 + $0xb98] sm:$0xff]
    %v442 = vld [vmem:[%s2 + $0xba0] sm:$0xff]
    %v443 = vld [vmem:[%s2 + $0xba8] sm:$0xff]
    %v444 = vld [vmem:[%s2 + $0xbb0] sm:$0xff]
    %v445 = vld [vmem:[%s2 + $0xbb8] sm:$0xff]
    %v446 = vld [vmem:[%s2 + $0xbc0] sm:$0xff]
    %v447 = vld [vmem:[%s2 + $0xbc8] sm:$0xff]
    %v448 = vld [vmem:[%s2 + $0xbd0] sm:$0xff]
    %v449 = vld [vmem:[%s2 + $0xbd8] sm:$0xff]
    %v450 = vld [vmem:[%s2 + $0xbe0] sm:$0xff]
    %v451 = vld [vmem:[%s2 + $0xbe8] sm:$0xff]
    %v452 = vld [vmem:[%s2 + $0xbf0] sm:$0xff]
    %v453 = vld [vmem:[%s2 + $0xbf8] sm:$0xff]
    %v454 = vld [vmem:[%s2 + $0xc00] sm:$0xff]
    %v455 = vld [vmem:[%s2 + $0xc08] sm:$0xff]
    %v456 = vld [vmem:[%s2 + $0xc10] sm:$0xff]
    %v457 = vld [vmem:[%s2 + $0xc18] sm:$0xff]
    %v458 = vld [vmem:[%s2 + $0xc20] sm:$0xff]
    %v459 = vld [vmem:[%s2 + $0xc28] sm:$0xff]
    %v460 = vld [vmem:[%s2 + $0xc30] sm:$0xff]
    %v461 = vld [vmem:[%s2 + $0xc38] sm:$0xff]
    %v462 = vld [vmem:[%s2 + $0xc40] sm:$0xff]
    %v463 = vld [vmem:[%s2 + $0xc48] sm:$0xff]
    %v464 = vld [vmem:[%s2 + $0xc50] sm:$0xff]
    %v465 = vld [vmem:[%s2 + $0xc58] sm:$0xff]
    %v466 = vld [vmem:[%s2 + $0xc60] sm:$0xff]
    %v467 = vld [vmem:[%s2 + $0xc68] sm:$0xff]
    %v468 = vld [vmem:[%s2 + $0xc70] sm:$0xff]
    %v469 = vld [vmem:[%s2 + $0xc78] sm:$0xff]
    %v470 = vld [vmem:[%s2 + $0xc80] sm:$0xff]
    %v471 = vld [vmem:[%s2 + $0xc88] sm:$0xff]
    %v472 = vld [vmem:[%s2 + $0xc90] sm:$0xff]
    %v473 = vld [vmem:[%s2 + $0xc98] sm:$0xff]
    %v474 = vld [vmem:[%s2 + $0xca0] sm:$0xff]
    %v475 = vld [vmem:[%s2 + $0xca8] sm:$0xff]
    %v476 = vld [vmem:[%s2 + $0xcb0] sm:$0xff]
    %v477 = vld [vmem:[%s2 + $0xcb8] sm:$0xff]
    %v478 = vld [vmem:[%s2 + $0xcc0] sm:$0xff]
    %v479 = vld [vmem:[%s2 + $0xcc8] sm:$0xff]
    %v480 = vld [vmem:[%s2 + $0xcd0] sm:$0xff]
    %v481 = vld [vmem:[%s2 + $0xcd8] sm:$0xff]
    %v482 = vld [vmem:[%s2 + $0xce0] sm:$0xff]
    %v483 = vld [vmem:[%s2 + $0xce8] sm:$0xff]
    %v484 = vld [vmem:[%s2 + $0xcf0] sm:$0xff]
    %v485 = vld [vmem:[%s2 + $0xcf8] sm:$0xff]
    %v486 = vld [vmem:[%s2 + $0xd00] sm:$0xff]
    %v487 = vld [vmem:[%s2 + $0xd08] sm:$0xff]
    %v488 = vld [vmem:[%s2 + $0xd10] sm:$0xff]
    %v489 = vld [vmem:[%s2 + $0xd18] sm:$0xff]
    %v490 = vld [vmem:[%s2 + $0xd20] sm:$0xff]
    %v491 = vld [vmem:[%s2 + $0xd28] sm:$0xff]
    %v492 = vld [vmem:[%s2 + $0xd30] sm:$0xff]
    %v493 = vld [vmem:[%s2 + $0xd38] sm:$0xff]
    %v494 = vld [vmem:[%s2 + $0xd40] sm:$0xff]
    %v495 = vld [vmem:[%s2 + $0xd48] sm:$0xff]
    %v496 = vld [vmem:[%s2 + $0xd50] sm:$0xff]
    %v497 = vld [vmem:[%s2 + $0xd58] sm:$0xff]
    %v498 = vld [vmem:[%s2 + $0xd60] sm:$0xff]
    %v499 = vld [vmem:[%s2 + $0xd68] sm:$0xff]
    %v500 = vld [vmem:[%s2 + $0xd70] sm:$0xff]
    %v501 = vld [vmem:[%s2 + $0xd78] sm:$0xff]
    %v502 = vld [vmem:[%s2 + $0xd80] sm:$0xff]
    %v503 = vld [vmem:[%s2 + $0xd88] sm:$0xff]
    %v504 = vld [vmem:[%s2 + $0xd90] sm:$0xff]
    %v505 = vld [vmem:[%s2 + $0xd98] sm:$0xff]
    %v506 = vld [vmem:[%s2 + $0xda0] sm:$0xff]
    %v507 = vld [vmem:[%s2 + $0xda8] sm:$0xff]
    %v508 = vld [vmem:[%s2 + $0xdb0] sm:$0xff]
    %v509 = vld [vmem:[%s2 + $0xdb8] sm:$0xff]
    %v510 = vld [vmem:[%s2 + $0xdc0] sm:$0xff]
    %v511 = vld [vmem:[%s2 + $0xdc8] sm:$0xff]
    %v512 = vld [vmem:[%s2 + $0xdd0] sm:$0xff]
    %v513 = vld [vmem:[%s2 + $0xdd8] sm:$0xff]
    %v514 = vld [vmem:[%s2 + $0xde0] sm:$0xff]
    %v515 = vld [vmem:[%s2 + $0xde8] sm:$0xff]
    %v516 = vld [vmem:[%s2 + $0xdf0] sm:$0xff]
    %v517 = vld [vmem:[%s2 + $0xdf8] sm:$0xff]
    %v518 = vld [vmem:[%s2 + $0xe00] sm:$0xff]
    %v519 = vld [vmem:[%s2 + $0xe08] sm:$0xff]
    %v520 = vld [vmem:[%s2 + $0xe10] sm:$0xff]
    %v521 = vld [vmem:[%s2 + $0xe18] sm:$0xff]
    %v522 = vld [vmem:[%s2 + $0xe20] sm:$0xff]
    %v523 = vld [vmem:[%s2 + $0xe28] sm:$0xff]
    %v524 = vld [vmem:[%s2 + $0xe30] sm:$0xff]
    %v525 = vld [vmem:[%s2 + $0xe38] sm:$0xff]
    %v526 = vld [vmem:[%s2 + $0xe40] sm:$0xff]
    %v527 = vld [vmem:[%s2 + $0xe48] sm:$0xff]
    %v528 = vld [vmem:[%s2 + $0xe50] sm:$0xff]
    %v529 = vld [vmem:[%s2 + $0xe58] sm:$0xff]
    %v530 = vld [vmem:[%s2 + $0xe60] sm:$0xff]
    %v531 = vld [vmem:[%s2 + $0xe68] sm:$0xff]
    %v532 = vld [vmem:[%s2 + $0xe70] sm:$0xff]
    %v533 = vld [vmem:[%s2 + $0xe78] sm:$0xff]
    %v534 = vld [vmem:[%s2 + $0xe80] sm:$0xff]
    %v535 = vld [vmem:[%s2 + $0xe88] sm:$0xff]
    %v536 = vld [vmem:[%s2 + $0xe90] sm:$0xff]
    %v537 = vld [vmem:[%s2 + $0xe98] sm:$0xff]
    %v538 = vld [vmem:[%s2 + $0xea0] sm:$0xff]
    %v539 = vld [vmem:[%s2 + $0xea8] sm:$0xff]
    %v540 = vld [vmem:[%s2 + $0xeb0] sm:$0xff]
    %v541 = vld [vmem:[%s2 + $0xeb8] sm:$0xff]
    %v542 = vld [vmem:[%s2 + $0xec0] sm:$0xff]
    %v543 = vld [vmem:[%s2 + $0xec8] sm:$0xff]
    %v544 = vld [vmem:[%s2 + $0xed0] sm:$0xff]
    %v545 = vld [vmem:[%s2 + $0xed8] sm:$0xff]
    %v546 = vld [vmem:[%s2 + $0xee0] sm:$0xff]
    %v547 = vld [vmem:[%s2 + $0xee8] sm:$0xff]
    %v548 = vld [vmem:[%s2 + $0xef0] sm:$0xff]
    %v549 = vld [vmem:[%s2 + $0xef8] sm:$0xff]
    %v550 = vld [vmem:[%s2 + $0xf00] sm:$0xff]
    %v551 = vld [vmem:[%s2 + $0xf08] sm:$0xff]
    %v552 = vld [vmem:[%s2 + $0xf10] sm:$0xff]
    %v553 = vld [vmem:[%s2 + $0xf18] sm:$0xff]
    %v554 = vld [vmem:[%s2 + $0xf20] sm:$0xff]
    %v555 = vld [vmem:[%s2 + $0xf28] sm:$0xff]
    %v556 = vld [vmem:[%s2 + $0xf30] sm:$0xff]
    %v557 = vld [vmem:[%s2 + $0xf38] sm:$0xff]
    %v558 = vld [vmem:[%s2 + $0xf40] sm:$0xff]
    %v559 = vld [vmem:[%s2 + $0xf48] sm:$0xff]
    %v560 = vld [vmem:[%s2 + $0xf50] sm:$0xff]
    %v561 = vld [vmem:[%s2 + $0xf58] sm:$0xff]
    %v562 = vld [vmem:[%s2 + $0xf60] sm:$0xff]
    %v563 = vld [vmem:[%s2 + $0xf68] sm:$0xff]
    %v564 = vld [vmem:[%s2 + $0xf70] sm:$0xff]
    %v565 = vld [vmem:[%s2 + $0xf78] sm:$0xff]
    %v566 = vld [vmem:[%s2 + $0xf80] sm:$0xff]
    %v567 = vld [vmem:[%s2 + $0xf88] sm:$0xff]
    %v568 = vld [vmem:[%s2 + $0xf90] sm:$0xff]
    %v569 = vld [vmem:[%s2 + $0xf98] sm:$0xff]
    %v570 = vld [vmem:[%s2 + $0xfa0] sm:$0xff]
    %v571 = vld [vmem:[%s2 + $0xfa8] sm:$0xff]
    %v572 = vld [vmem:[%s2 + $0xfb0] sm:$0xff]
    %v573 = vld [vmem:[%s2 + $0xfb8] sm:$0xff]
    %v574 = vld [vmem:[%s2 + $0xfc0] sm:$0xff]
    %v575 = vld [vmem:[%s2 + $0xfc8] sm:$0xff]
    %v576 = vld [vmem:[%s2 + $0xfd0] sm:$0xff]
    %v577 = vld [vmem:[%s2 + $0xfd8] sm:$0xff]
    %v578 = vld [vmem:[%s2 + $0xfe0] sm:$0xff]
    %v579 = vld [vmem:[%s2 + $0xfe8] sm:$0xff]
    %v580 = vld [vmem:[%s2 + $0xff0] sm:$0xff]
    %v581 = vld [vmem:[%s2 + $0xff8] sm:$0xff]
    %v582 = vld [vmem:[%s2 + $0x1000] sm:$0xff]
    %v583 = vld [vmem:[%s2 + $0x1008] sm:$0xff]
    %v584 = vld [vmem:[%s2 + $0x1010] sm:$0xff]
    %v585 = vld [vmem:[%s2 + $0x1018] sm:$0xff]
    %v586 = vld [vmem:[%s2 + $0x1020] sm:$0xff]
    %v587 = vld [vmem:[%s2 + $0x1028] sm:$0xff]
    %v588 = vld [vmem:[%s2 + $0x1030] sm:$0xff]
    %v589 = vld [vmem:[%s2 + $0x1038] sm:$0xff]
    %v590 = vld [vmem:[%s2 + $0x1040] sm:$0xff]
    %v591 = vld [vmem:[%s2 + $0x1048] sm:$0xff]
    %v592 = vld [vmem:[%s2 + $0x1050] sm:$0xff]
    %v593 = vld [vmem:[%s2 + $0x1058] sm:$0xff]
    %v594 = vld [vmem:[%s2 + $0x1060] sm:$0xff]
    %v595 = vld [vmem:[%s2 + $0x1068] sm:$0xff]
    %v596 = vld [vmem:[%s2 + $0x1070] sm:$0xff]
    %v597 = vld [vmem:[%s2 + $0x1078] sm:$0xff]
    %v598 = vld [vmem:[%s2 + $0x1080] sm:$0xff]
    %v599 = vld [vmem:[%s2 + $0x1088] sm:$0xff]
    %v600 = vld [vmem:[%s2 + $0x1090] sm:$0xff]
    %v601 = vld [vmem:[%s2 + $0x1098] sm:$0xff]
    %v602 = vld [vmem:[%s2 + $0x10a0] sm:$0xff]
    %v603 = vld [vmem:[%s2 + $0x10a8] sm:$0xff]
    %v604 = vld [vmem:[%s2 + $0x10b0] sm:$0xff]
    %v605 = vld [vmem:[%s2 + $0x10b8] sm:$0xff]
    %v606 = vld [vmem:[%s2 + $0x10c0] sm:$0xff]
    %v607 = vld [vmem:[%s2 + $0x10c8] sm:$0xff]
    %v608 = vld [vmem:[%s2 + $0x10d0] sm:$0xff]
    %v609 = vld [vmem:[%s2 + $0x10d8] sm:$0xff]
    %v610 = vld [vmem:[%s2 + $0x10e0] sm:$0xff]
    %v611 = vld [vmem:[%s2 + $0x10e8] sm:$0xff]
    %v612 = vld [vmem:[%s2 + $0x10f0] sm:$0xff]
    %v613 = vld [vmem:[%s2 + $0x10f8] sm:$0xff]
    %v614 = vld [vmem:[%s2 + $0x1100] sm:$0xff]
    %v615 = vld [vmem:[%s2 + $0x1108] sm:$0xff]
    %v616 = vld [vmem:[%s2 + $0x1110] sm:$0xff]
    %v617 = vld [vmem:[%s2 + $0x1118] sm:$0xff]
    %v618 = vld [vmem:[%s2 + $0x1120] sm:$0xff]
    %v619 = vld [vmem:[%s2 + $0x1128] sm:$0xff]
    %v620 = vld [vmem:[%s2 + $0x1130] sm:$0xff]
    %v621 = vld [vmem:[%s2 + $0x1138] sm:$0xff]
    %v622 = vld [vmem:[%s2 + $0x1140] sm:$0xff]
    %v623 = vld [vmem:[%s2 + $0x1148] sm:$0xff]
    %v624 = vld [vmem:[%s2 + $0x1150] sm:$0xff]
    %v625 = vld [vmem:[%s2 + $0x1158] sm:$0xff]
    %v626 = vld [vmem:[%s2 + $0x1160] sm:$0xff]
    %v627 = vld [vmem:[%s2 + $0x1168] sm:$0xff]
    %v628 = vld [vmem:[%s2 + $0x1170] sm:$0xff]
    %v629 = vld [vmem:[%s2 + $0x1178] sm:$0xff]
    %v630 = vld [vmem:[%s2 + $0x1180] sm:$0xff]
    %v631 = vld [vmem:[%s2 + $0x1188] sm:$0xff]
    %v632 = vld [vmem:[%s2 + $0x1190] sm:$0xff]
    %v633 = vld [vmem:[%s2 + $0x1198] sm:$0xff]
    %v634 = vld [vmem:[%s2 + $0x11a0] sm:$0xff]
    %v635 = vld [vmem:[%s2 + $0x11a8] sm:$0xff]
    %v636 = vld [vmem:[%s2 + $0x11b0] sm:$0xff]
    %v637 = vld [vmem:[%s2 + $0x11b8] sm:$0xff]
    %v638 = vld [vmem:[%s2 + $0x11c0] sm:$0xff]
    %v639 = vld [vmem:[%s2 + $0x11c8] sm:$0xff]
    %v640 = vld [vmem:[%s2 + $0x11d0] sm:$0xff]
    %v641 = vld [vmem:[%s2 + $0x11d8] sm:$0xff]
    %v642 = vld [vmem:[%s2 + $0x11e0] sm:$0xff]
    %v643 = vld [vmem:[%s2 + $0x11e8] sm:$0xff]
    %v644 = vld [vmem:[%s2 + $0x11f0] sm:$0xff]
    %v645 = vld [vmem:[%s2 + $0x11f8] sm:$0xff]
    %v646 = vld [vmem:[%s2 + $0x1200] sm:$0xff]
    %v647 = vld [vmem:[%s2 + $0x1208] sm:$0xff]
    %v648 = vld [vmem:[%s2 + $0x1210] sm:$0xff]
    %v649 = vld [vmem:[%s2 + $0x1218] sm:$0xff]
    %v650 = vld [vmem:[%s2 + $0x1220] sm:$0xff]
    %v651 = vld [vmem:[%s2 + $0x1228] sm:$0xff]
    %v652 = vld [vmem:[%s2 + $0x1230] sm:$0xff]
    %v653 = vld [vmem:[%s2 + $0x1238] sm:$0xff]
    %v654 = vld [vmem:[%s2 + $0x1240] sm:$0xff]
    %v655 = vld [vmem:[%s2 + $0x1248] sm:$0xff]
    %v656 = vld [vmem:[%s2 + $0x1250] sm:$0xff]
    %v657 = vld [vmem:[%s2 + $0x1258] sm:$0xff]
    %v658 = vld [vmem:[%s2 + $0x1260] sm:$0xff]
    %v659 = vld [vmem:[%s2 + $0x1268] sm:$0xff]
    %v660 = vld [vmem:[%s2 + $0x1270] sm:$0xff]
    %v661 = vld [vmem:[%s2 + $0x1278] sm:$0xff]
    %v662 = vld [vmem:[%s2 + $0x1280] sm:$0xff]
    %v663 = vld [vmem:[%s2 + $0x1288] sm:$0xff]
    %v664 = vld [vmem:[%s2 + $0x1290] sm:$0xff]
    %v665 = vld [vmem:[%s2 + $0x1298] sm:$0xff]
    %v666 = vld [vmem:[%s2 + $0x12a0] sm:$0xff]
    %v667 = vld [vmem:[%s2 + $0x12a8] sm:$0xff]
    %v668 = vld [vmem:[%s2 + $0x12b0] sm:$0xff]
    %v669 = vld [vmem:[%s2 + $0x12b8] sm:$0xff]
    %v670 = vld [vmem:[%s2 + $0x12c0] sm:$0xff]
    %v671 = vld [vmem:[%s2 + $0x12c8] sm:$0xff]
    %v672 = vld [vmem:[%s2 + $0x12d0] sm:$0xff]
    %v673 = vld [vmem:[%s2 + $0x12d8] sm:$0xff]
    %v674 = vld [vmem:[%s2 + $0x12e0] sm:$0xff]
    %v675 = vld [vmem:[%s2 + $0x12e8] sm:$0xff]
    %v676 = vld [vmem:[%s2 + $0x12f0] sm:$0xff]
    %v677 = vld [vmem:[%s2 + $0x12f8] sm:$0xff]
    %v678 = vld [vmem:[%s2 + $0x1300] sm:$0xff]
    %v679 = vld [vmem:[%s2 + $0x1308] sm:$0xff]
    %v680 = vld [vmem:[%s2 + $0x1310] sm:$0xff]
    %v681 = vld [vmem:[%s2 + $0x1318] sm:$0xff]
    %v682 = vld [vmem:[%s2 + $0x1320] sm:$0xff]
    %v683 = vld [vmem:[%s2 + $0x1328] sm:$0xff]
    %v684 = vld [vmem:[%s2 + $0x1330] sm:$0xff]
    %v685 = vld [vmem:[%s2 + $0x1338] sm:$0xff]
    %v686 = vld [vmem:[%s2 + $0x1340] sm:$0xff]
    %v687 = vld [vmem:[%s2 + $0x1348] sm:$0xff]
    %v688 = vld [vmem:[%s2 + $0x1350] sm:$0xff]
    %v689 = vld [vmem:[%s2 + $0x1358] sm:$0xff]
    %v690 = vld [vmem:[%s2 + $0x1360] sm:$0xff]
    %v691 = vld [vmem:[%s2 + $0x1368] sm:$0xff]
    %v692 = vld [vmem:[%s2 + $0x1370] sm:$0xff]
    %v693 = vld [vmem:[%s2 + $0x1378] sm:$0xff]
    %v694 = vld [vmem:[%s2 + $0x1380] sm:$0xff]
    %v695 = vld [vmem:[%s2 + $0x1388] sm:$0xff]
    %v696 = vld [vmem:[%s2 + $0x1390] sm:$0xff]
    %v697 = vld [vmem:[%s2 + $0x1398] sm:$0xff]
    %v698 = vld [vmem:[%s2 + $0x13a0] sm:$0xff]
    %v699 = vld [vmem:[%s2 + $0x13a8] sm:$0xff]
    %v700 = vld [vmem:[%s2 + $0x13b0] sm:$0xff]
    %v701 = vld [vmem:[%s2 + $0x13b8] sm:$0xff]
    %v702 = vld [vmem:[%s2 + $0x13c0] sm:$0xff]
    %v703 = vld [vmem:[%s2 + $0x13c8] sm:$0xff]
    %v704 = vld [vmem:[%s2 + $0x13d0] sm:$0xff]
    %v705 = vld [vmem:[%s2 + $0x13d8] sm:$0xff]
    %v706 = vld [vmem:[%s2 + $0x13e0] sm:$0xff]
    %v707 = vld [vmem:[%s2 + $0x13e8] sm:$0xff]
    %v708 = vld [vmem:[%s2 + $0x13f0] sm:$0xff]
    %v709 = vld [vmem:[%s2 + $0x13f8] sm:$0xff]
    %v710 = vld [vmem:[%s2 + $0x1400] sm:$0xff]
    %v711 = vld [vmem:[%s2 + $0x1408] sm:$0xff]
    %v712 = vld [vmem:[%s2 + $0x1410] sm:$0xff]
    %v713 = vld [vmem:[%s2 + $0x1418] sm:$0xff]
    %v714 = vld [vmem:[%s2 + $0x1420] sm:$0xff]
    %v715 = vld [vmem:[%s2 + $0x1428] sm:$0xff]
    %v716 = vld [vmem:[%s2 + $0x1430] sm:$0xff]
    %v717 = vld [vmem:[%s2 + $0x1438] sm:$0xff]
    %v718 = vld [vmem:[%s2 + $0x1440] sm:$0xff]
    %v719 = vld [vmem:[%s2 + $0x1448] sm:$0xff]
    %v720 = vld [vmem:[%s2 + $0x1450] sm:$0xff]
    %v721 = vld [vmem:[%s2 + $0x1458] sm:$0xff]
    %v722 = vld [vmem:[%s2 + $0x1460] sm:$0xff]
    %v723 = vld [vmem:[%s2 + $0x1468] sm:$0xff]
    %v724 = vld [vmem:[%s2 + $0x1470] sm:$0xff]
    %v725 = vld [vmem:[%s2 + $0x1478] sm:$0xff]
    %v726 = vld [vmem:[%s2 + $0x1480] sm:$0xff]
    %v727 = vld [vmem:[%s2 + $0x1488] sm:$0xff]
    %v728 = vld [vmem:[%s2 + $0x1490] sm:$0xff]
    %v729 = vld [vmem:[%s2 + $0x1498] sm:$0xff]
    %v730 = vld [vmem:[%s2 + $0x14a0] sm:$0xff]
    %v731 = vld [vmem:[%s2 + $0x14a8] sm:$0xff]
    %v732 = vld [vmem:[%s2 + $0x14b0] sm:$0xff]
    %v733 = vld [vmem:[%s2 + $0x14b8] sm:$0xff]
    %v734 = vld [vmem:[%s2 + $0x14c0] sm:$0xff]
    %v735 = vld [vmem:[%s2 + $0x14c8] sm:$0xff]
    %v736 = vld [vmem:[%s2 + $0x14d0] sm:$0xff]
    %v737 = vld [vmem:[%s2 + $0x14d8] sm:$0xff]
    %v738 = vld [vmem:[%s2 + $0x14e0] sm:$0xff]
    %v739 = vld [vmem:[%s2 + $0x14e8] sm:$0xff]
    %v740 = vld [vmem:[%s2 + $0x14f0] sm:$0xff]
    %v741 = vld [vmem:[%s2 + $0x14f8] sm:$0xff]
    %v742 = vld [vmem:[%s2 + $0x1500] sm:$0xff]
    %v743 = vld [vmem:[%s2 + $0x1508] sm:$0xff]
    %v744 = vld [vmem:[%s2 + $0x1510] sm:$0xff]
    %v745 = vld [vmem:[%s2 + $0x1518] sm:$0xff]
    %v746 = vld [vmem:[%s2 + $0x1520] sm:$0xff]
    %v747 = vld [vmem:[%s2 + $0x1528] sm:$0xff]
    %v748 = vld [vmem:[%s2 + $0x1530] sm:$0xff]
    %v749 = vld [vmem:[%s2 + $0x1538] sm:$0xff]
    %v750 = vld [vmem:[%s2 + $0x1540] sm:$0xff]
    %v751 = vld [vmem:[%s2 + $0x1548] sm:$0xff]
    %v752 = vld [vmem:[%s2 + $0x1550] sm:$0xff]
    %v753 = vld [vmem:[%s2 + $0x1558] sm:$0xff]
    %v754 = vld [vmem:[%s2 + $0x1560] sm:$0xff]
    %v755 = vld [vmem:[%s2 + $0x1568] sm:$0xff]
    %v756 = vld [vmem:[%s2 + $0x1570] sm:$0xff]
    %v757 = vld [vmem:[%s2 + $0x1578] sm:$0xff]
    %v758 = vld [vmem:[%s2 + $0x1580] sm:$0xff]
    %v759 = vld [vmem:[%s2 + $0x1588] sm:$0xff]
    %v760 = vld [vmem:[%s2 + $0x1590] sm:$0xff]
    %v761 = vld [vmem:[%s2 + $0x1598] sm:$0xff]
    %v762 = vld [vmem:[%s2 + $0x15a0] sm:$0xff]
    %v763 = vld [vmem:[%s2 + $0x15a8] sm:$0xff]
    %v764 = vld [vmem:[%s2 + $0x15b0] sm:$0xff]
    %v765 = vld [vmem:[%s2 + $0x15b8] sm:$0xff]
    %v766 = vld [vmem:[%s2 + $0x15c0] sm:$0xff]
    %v767 = vld [vmem:[%s2 + $0x15c8] sm:$0xff]
    %v768 = vld [vmem:[%s2 + $0x15d0] sm:$0xff]
    %v769 = vld [vmem:[%s2 + $0x15d8] sm:$0xff]
    %v770 = vld [vmem:[%s2 + $0x15e0] sm:$0xff]
    %v771 = vld [vmem:[%s2 + $0x15e8] sm:$0xff]
    %v772 = vld [vmem:[%s2 + $0x15f0] sm:$0xff]
    %v773 = vld [vmem:[%s2 + $0x15f8] sm:$0xff]
    %v774 = vld [vmem:[%s2 + $0x1600] sm:$0xff]
    %v775 = vld [vmem:[%s2 + $0x1608] sm:$0xff]
    %v776 = vld [vmem:[%s2 + $0x1610] sm:$0xff]
    %v777 = vld [vmem:[%s2 + $0x1618] sm:$0xff]
    %v778 = vld [vmem:[%s2 + $0x1620] sm:$0xff]
    %v779 = vld [vmem:[%s2 + $0x1628] sm:$0xff]
    %v780 = vld [vmem:[%s2 + $0x1630] sm:$0xff]
    %v781 = vld [vmem:[%s2 + $0x1638] sm:$0xff]
    %v782 = vld [vmem:[%s2 + $0x1640] sm:$0xff]
    %v783 = vld [vmem:[%s2 + $0x1648] sm:$0xff]
    %v784 = vld [vmem:[%s2 + $0x1650] sm:$0xff]
    %v785 = vld [vmem:[%s2 + $0x1658] sm:$0xff]
    %v786 = vld [vmem:[%s2 + $0x1660] sm:$0xff]
    %v787 = vld [vmem:[%s2 + $0x1668] sm:$0xff]
    %v788 = vld [vmem:[%s2 + $0x1670] sm:$0xff]
    %v789 = vld [vmem:[%s2 + $0x1678] sm:$0xff]
    %v790 = vld [vmem:[%s2 + $0x1680] sm:$0xff]
    %v791 = vld [vmem:[%s2 + $0x1688] sm:$0xff]
    %v792 = vld [vmem:[%s2 + $0x1690] sm:$0xff]
    %v793 = vld [vmem:[%s2 + $0x1698] sm:$0xff]
    %v794 = vld [vmem:[%s2 + $0x16a0] sm:$0xff]
    %v795 = vld [vmem:[%s2 + $0x16a8] sm:$0xff]
    %v796 = vld [vmem:[%s2 + $0x16b0] sm:$0xff]
    %v797 = vld [vmem:[%s2 + $0x16b8] sm:$0xff]
    %v798 = vld [vmem:[%s2 + $0x16c0] sm:$0xff]
    %v799 = vld [vmem:[%s2 + $0x16c8] sm:$0xff]
    %v800 = vld [vmem:[%s2 + $0x16d0] sm:$0xff]
    %v801 = vld [vmem:[%s2 + $0x16d8] sm:$0xff]
    %v802 = vld [vmem:[%s2 + $0x16e0] sm:$0xff]
    %v803 = vld [vmem:[%s2 + $0x16e8] sm:$0xff]
    %v804 = vld [vmem:[%s2 + $0x16f0] sm:$0xff]
    %v805 = vld [vmem:[%s2 + $0x16f8] sm:$0xff]
    %v806 = vld [vmem:[%s2 + $0x1700] sm:$0xff]
    %v807 = vld [vmem:[%s2 + $0x1708] sm:$0xff]
    %v808 = vld [vmem:[%s2 + $0x1710] sm:$0xff]
    %v809 = vld [vmem:[%s2 + $0x1718] sm:$0xff]
    %v810 = vld [vmem:[%s2 + $0x1720] sm:$0xff]
    %v811 = vld [vmem:[%s2 + $0x1728] sm:$0xff]
    %v812 = vld [vmem:[%s2 + $0x1730] sm:$0xff]
    %v813 = vld [vmem:[%s2 + $0x1738] sm:$0xff]
    %v814 = vld [vmem:[%s2 + $0x1740] sm:$0xff]
    %v815 = vld [vmem:[%s2 + $0x1748] sm:$0xff]
    %v816 = vld [vmem:[%s2 + $0x1750] sm:$0xff]
    %v817 = vld [vmem:[%s2 + $0x1758] sm:$0xff]
    %v818 = vld [vmem:[%s2 + $0x1760] sm:$0xff]
    %v819 = vld [vmem:[%s2 + $0x1768] sm:$0xff]
    %v820 = vld [vmem:[%s2 + $0x1770] sm:$0xff]
    %v821 = vld [vmem:[%s2 + $0x1778] sm:$0xff]
    %v822 = vld [vmem:[%s2 + $0x1780] sm:$0xff]
    %v823 = vld [vmem:[%s2 + $0x1788] sm:$0xff]
    %v824 = vld [vmem:[%s2 + $0x1790] sm:$0xff]
    %v825 = vld [vmem:[%s2 + $0x1798] sm:$0xff]
    %v826 = vld [vmem:[%s2 + $0x17a0] sm:$0xff]
    %v827 = vld [vmem:[%s2 + $0x17a8] sm:$0xff]
    %v828 = vld [vmem:[%s2 + $0x17b0] sm:$0xff]
    %v829 = vld [vmem:[%s2 + $0x17b8] sm:$0xff]
    %v830 = vld [vmem:[%s2 + $0x17c0] sm:$0xff]
    %v831 = vld [vmem:[%s2 + $0x17c8] sm:$0xff]
    %v832 = vld [vmem:[%s2 + $0x17d0] sm:$0xff]
    %v833 = vld [vmem:[%s2 + $0x17d8] sm:$0xff]
    %v834 = vld [vmem:[%s2 + $0x17e0] sm:$0xff]
    %v835 = vld [vmem:[%s2 + $0x17e8] sm:$0xff]
    %v836 = vld [vmem:[%s2 + $0x17f0] sm:$0xff]
    %v837 = vld [vmem:[%s2 + $0x17f8] sm:$0xff]
    %v838 = vld [vmem:[%s2 + $0x1800] sm:$0xff]
    %v839 = vld [vmem:[%s2 + $0x1808] sm:$0xff]
    %v840 = vld [vmem:[%s2 + $0x1810] sm:$0xff]
    %v841 = vld [vmem:[%s2 + $0x1818] sm:$0xff]
    %v842 = vld [vmem:[%s2 + $0x1820] sm:$0xff]
    %v843 = vld [vmem:[%s2 + $0x1828] sm:$0xff]
    %v844 = vld [vmem:[%s2 + $0x1830] sm:$0xff]
    %v845 = vld [vmem:[%s2 + $0x1838] sm:$0xff]
    %v846 = vld [vmem:[%s2 + $0x1840] sm:$0xff]
    %v847 = vld [vmem:[%s2 + $0x1848] sm:$0xff]
    %v848 = vld [vmem:[%s2 + $0x1850] sm:$0xff]
    %v849 = vld [vmem:[%s2 + $0x1858] sm:$0xff]
    %v850 = vld [vmem:[%s2 + $0x1860] sm:$0xff]
    %v851 = vld [vmem:[%s2 + $0x1868] sm:$0xff]
    %v852 = vld [vmem:[%s2 + $0x1870] sm:$0xff]
    %v853 = vld [vmem:[%s2 + $0x1878] sm:$0xff]
    %v854 = vld [vmem:[%s2 + $0x1880] sm:$0xff]
    %v855 = vld [vmem:[%s2 + $0x1888] sm:$0xff]
    %v856 = vld [vmem:[%s2 + $0x1890] sm:$0xff]
    %v857 = vld [vmem:[%s2 + $0x1898] sm:$0xff]
    %v858 = vld [vmem:[%s2 + $0x18a0] sm:$0xff]
    %v859 = vld [vmem:[%s2 + $0x18a8] sm:$0xff]
    %v860 = vld [vmem:[%s2 + $0x18b0] sm:$0xff]
    %v861 = vld [vmem:[%s2 + $0x18b8] sm:$0xff]
    %v862 = vld [vmem:[%s2 + $0x18c0] sm:$0xff]
    %v863 = vld [vmem:[%s2 + $0x18c8] sm:$0xff]
    %v864 = vld [vmem:[%s2 + $0x18d0] sm:$0xff]
    %v865 = vld [vmem:[%s2 + $0x18d8] sm:$0xff]
    %v866 = vld [vmem:[%s2 + $0x18e0] sm:$0xff]
    %v867 = vld [vmem:[%s2 + $0x18e8] sm:$0xff]
    %v868 = vld [vmem:[%s2 + $0x18f0] sm:$0xff]
    %v869 = vld [vmem:[%s2 + $0x18f8] sm:$0xff]
    %v870 = vld [vmem:[%s2 + $0x1900] sm:$0xff]
    %v871 = vld [vmem:[%s2 + $0x1908] sm:$0xff]
    %v872 = vld [vmem:[%s2 + $0x1910] sm:$0xff]
    %v873 = vld [vmem:[%s2 + $0x1918] sm:$0xff]
    %v874 = vld [vmem:[%s2 + $0x1920] sm:$0xff]
    %v875 = vld [vmem:[%s2 + $0x1928] sm:$0xff]
    %v876 = vld [vmem:[%s2 + $0x1930] sm:$0xff]
    %v877 = vld [vmem:[%s2 + $0x1938] sm:$0xff]
    %v878 = vld [vmem:[%s2 + $0x1940] sm:$0xff]
    %v879 = vld [vmem:[%s2 + $0x1948] sm:$0xff]
    %v880 = vld [vmem:[%s2 + $0x1950] sm:$0xff]
    %v881 = vld [vmem:[%s2 + $0x1958] sm:$0xff]
    %v882 = vld [vmem:[%s2 + $0x1960] sm:$0xff]
    %v883 = vld [vmem:[%s2 + $0x1968] sm:$0xff]
    %v884 = vld [vmem:[%s2 + $0x1970] sm:$0xff]
    %v885 = vld [vmem:[%s2 + $0x1978] sm:$0xff]
    %v886 = vld [vmem:[%s2 + $0x1980] sm:$0xff]
    %v887 = vld [vmem:[%s2 + $0x1988] sm:$0xff]
    %v888 = vld [vmem:[%s2 + $0x1990] sm:$0xff]
    %v889 = vld [vmem:[%s2 + $0x1998] sm:$0xff]
    %v890 = vld [vmem:[%s2 + $0x19a0] sm:$0xff]
    %v891 = vld [vmem:[%s2 + $0x19a8] sm:$0xff]
    %v892 = vld [vmem:[%s2 + $0x19b0] sm:$0xff]
    %v893 = vld [vmem:[%s2 + $0x19b8] sm:$0xff]
    %v894 = vld [vmem:[%s2 + $0x19c0] sm:$0xff]
    %v895 = vld [vmem:[%s2 + $0x19c8] sm:$0xff]
    %v896 = vld [vmem:[%s2 + $0x19d0] sm:$0xff]
    %v897 = vld [vmem:[%s2 + $0x19d8] sm:$0xff]
    %v898 = vld [vmem:[%s2 + $0x19e0] sm:$0xff]
    %v899 = vld [vmem:[%s2 + $0x19e8] sm:$0xff]
    %v900 = vld [vmem:[%s2 + $0x19f0] sm:$0xff]
    %v901 = vld [vmem:[%s2 + $0x19f8] sm:$0xff]
    %v902 = vld [vmem:[%s2 + $0x1a00] sm:$0xff]
    %v903 = vld [vmem:[%s2 + $0x1a08] sm:$0xff]
    %v904 = vld [vmem:[%s2 + $0x1a10] sm:$0xff]
    %v905 = vld [vmem:[%s2 + $0x1a18] sm:$0xff]
    %v906 = vld [vmem:[%s2 + $0x1a20] sm:$0xff]
    %v907 = vld [vmem:[%s2 + $0x1a28] sm:$0xff]
    %v908 = vld [vmem:[%s2 + $0x1a30] sm:$0xff]
    %v909 = vld [vmem:[%s2 + $0x1a38] sm:$0xff]
    %v910 = vld [vmem:[%s2 + $0x1a40] sm:$0xff]
    %v911 = vld [vmem:[%s2 + $0x1a48] sm:$0xff]
    %v912 = vld [vmem:[%s2 + $0x1a50] sm:$0xff]
    %v913 = vld [vmem:[%s2 + $0x1a58] sm:$0xff]
    %v914 = vld [vmem:[%s2 + $0x1a60] sm:$0xff]
    %v915 = vld [vmem:[%s2 + $0x1a68] sm:$0xff]
    %v916 = vld [vmem:[%s2 + $0x1a70] sm:$0xff]
    %v917 = vld [vmem:[%s2 + $0x1a78] sm:$0xff]
    %v918 = vld [vmem:[%s2 + $0x1a80] sm:$0xff]
    %v919 = vld [vmem:[%s2 + $0x1a88] sm:$0xff]
    %v920 = vld [vmem:[%s2 + $0x1a90] sm:$0xff]
    %v921 = vld [vmem:[%s2 + $0x1a98] sm:$0xff]
    %v922 = vld [vmem:[%s2 + $0x1aa0] sm:$0xff]
    %v923 = vld [vmem:[%s2 + $0x1aa8] sm:$0xff]
    %v924 = vld [vmem:[%s2 + $0x1ab0] sm:$0xff]
    %v925 = vld [vmem:[%s2 + $0x1ab8] sm:$0xff]
    %v926 = vld [vmem:[%s2 + $0x1ac0] sm:$0xff]
    %v927 = vld [vmem:[%s2 + $0x1ac8] sm:$0xff]
    %v928 = vld [vmem:[%s2 + $0x1ad0] sm:$0xff]
    %v929 = vld [vmem:[%s2 + $0x1ad8] sm:$0xff]
    %v930 = vld [vmem:[%s2 + $0x1ae0] sm:$0xff]
    %v931 = vld [vmem:[%s2 + $0x1ae8] sm:$0xff]
    %v932 = vld [vmem:[%s2 + $0x1af0] sm:$0xff]
    %v933 = vld [vmem:[%s2 + $0x1af8] sm:$0xff]
    %v934 = vld [vmem:[%s2 + $0x1b00] sm:$0xff]
    %v935 = vld [vmem:[%s2 + $0x1b08] sm:$0xff]
    %v936 = vld [vmem:[%s2 + $0x1b10] sm:$0xff]
    %v937 = vld [vmem:[%s2 + $0x1b18] sm:$0xff]
    %v938 = vld [vmem:[%s2 + $0x1b20] sm:$0xff]
    %v939 = vld [vmem:[%s2 + $0x1b28] sm:$0xff]
    %v940 = vld [vmem:[%s2 + $0x1b30] sm:$0xff]
    %v941 = vld [vmem:[%s2 + $0x1b38] sm:$0xff]
    %v942 = vld [vmem:[%s2 + $0x1b40] sm:$0xff]
    %v943 = vld [vmem:[%s2 + $0x1b48] sm:$0xff]
    %v944 = vld [vmem:[%s2 + $0x1b50] sm:$0xff]
    %v945 = vld [vmem:[%s2 + $0x1b58] sm:$0xff]
    %v946 = vld [vmem:[%s2 + $0x1b60] sm:$0xff]
    %v947 = vld [vmem:[%s2 + $0x1b68] sm:$0xff]
    %v948 = vld [vmem:[%s2 + $0x1b70] sm:$0xff]
    %v949 = vld [vmem:[%s2 + $0x1b78] sm:$0xff]
    %v950 = vld [vmem:[%s2 + $0x1b80] sm:$0xff]
    %v951 = vld [vmem:[%s2 + $0x1b88] sm:$0xff]
    %v952 = vld [vmem:[%s2 + $0x1b90] sm:$0xff]
    %v953 = vld [vmem:[%s2 + $0x1b98] sm:$0xff]
    %v954 = vld [vmem:[%s2 + $0x1ba0] sm:$0xff]
    %v955 = vld [vmem:[%s2 + $0x1ba8] sm:$0xff]
    %v956 = vld [vmem:[%s2 + $0x1bb0] sm:$0xff]
    %v957 = vld [vmem:[%s2 + $0x1bb8] sm:$0xff]
    %v958 = vld [vmem:[%s2 + $0x1bc0] sm:$0xff]
    %v959 = vld [vmem:[%s2 + $0x1bc8] sm:$0xff]
    %v960 = vld [vmem:[%s2 + $0x1bd0] sm:$0xff]
    %v961 = vld [vmem:[%s2 + $0x1bd8] sm:$0xff]
    %v962 = vld [vmem:[%s2 + $0x1be0] sm:$0xff]
    %v963 = vld [vmem:[%s2 + $0x1be8] sm:$0xff]
    %v964 = vld [vmem:[%s2 + $0x1bf0] sm:$0xff]
    %v965 = vld [vmem:[%s2 + $0x1bf8] sm:$0xff]
    %v966 = vld [vmem:[%s2 + $0x1c00] sm:$0xff]
    %v967 = vld [vmem:[%s2 + $0x1c08] sm:$0xff]
    %v968 = vld [vmem:[%s2 + $0x1c10] sm:$0xff]
    %v969 = vld [vmem:[%s2 + $0x1c18] sm:$0xff]
    %v970 = vld [vmem:[%s2 + $0x1c20] sm:$0xff]
    %v971 = vld [vmem:[%s2 + $0x1c28] sm:$0xff]
    %v972 = vld [vmem:[%s2 + $0x1c30] sm:$0xff]
    %v973 = vld [vmem:[%s2 + $0x1c38] sm:$0xff]
    %v974 = vld [vmem:[%s2 + $0x1c40] sm:$0xff]
    %v975 = vld [vmem:[%s2 + $0x1c48] sm:$0xff]
    %v976 = vld [vmem:[%s2 + $0x1c50] sm:$0xff]
    %v977 = vld [vmem:[%s2 + $0x1c58] sm:$0xff]
    %v978 = vld [vmem:[%s2 + $0x1c60] sm:$0xff]
    %v979 = vld [vmem:[%s2 + $0x1c68] sm:$0xff]
    %v980 = vld [vmem:[%s2 + $0x1c70] sm:$0xff]
    %v981 = vld [vmem:[%s2 + $0x1c78] sm:$0xff]
    %v982 = vld [vmem:[%s2 + $0x1c80] sm:$0xff]
    %v983 = vld [vmem:[%s2 + $0x1c88] sm:$0xff]
    %v984 = vld [vmem:[%s2 + $0x1c90] sm:$0xff]
    %v985 = vld [vmem:[%s2 + $0x1c98] sm:$0xff]
    %v986 = vld [vmem:[%s2 + $0x1ca0] sm:$0xff]
    %v987 = vld [vmem:[%s2 + $0x1ca8] sm:$0xff]
    %v988 = vld [vmem:[%s2 + $0x1cb0] sm:$0xff]
    %v989 = vld [vmem:[%s2 + $0x1cb8] sm:$0xff]
    %v990 = vld [vmem:[%s2 + $0x1cc0] sm:$0xff]
    %v991 = vld [vmem:[%s2 + $0x1cc8] sm:$0xff]
    %v992 = vld [vmem:[%s2 + $0x1cd0] sm:$0xff]
    %v993 = vld [vmem:[%s2 + $0x1cd8] sm:$0xff]
    %v994 = vld [vmem:[%s2 + $0x1ce0] sm:$0xff]
    %v995 = vld [vmem:[%s2 + $0x1ce8] sm:$0xff]
    %v996 = vld [vmem:[%s2 + $0x1cf0] sm:$0xff]
    %v997 = vld [vmem:[%s2 + $0x1cf8] sm:$0xff]
    %v998 = vld [vmem:[%s2 + $0x1d00] sm:$0xff]
    %v999 = vld [vmem:[%s2 + $0x1d08] sm:$0xff]
    %v1000 = vld [vmem:[%s2 + $0x1d10] sm:$0xff]
    %v1001 = vld [vmem:[%s2 + $0x1d18] sm:$0xff]
    %v1002 = vld [vmem:[%s2 + $0x1d20] sm:$0xff]
    %v1003 = vld [vmem:[%s2 + $0x1d28] sm:$0xff]
    %v1004 = vld [vmem:[%s2 + $0x1d30] sm:$0xff]
    %v1005 = vld [vmem:[%s2 + $0x1d38] sm:$0xff]
    %v1006 = vld [vmem:[%s2 + $0x1d40] sm:$0xff]
    %v1007 = vld [vmem:[%s2 + $0x1d48] sm:$0xff]
    %v1008 = vld [vmem:[%s2 + $0x1d50] sm:$0xff]
    %v1009 = vld [vmem:[%s2 + $0x1d58] sm:$0xff]
    %v1010 = vld [vmem:[%s2 + $0x1d60] sm:$0xff]
    %v1011 = vld [vmem:[%s2 + $0x1d68] sm:$0xff]
    %v1012 = vld [vmem:[%s2 + $0x1d70] sm:$0xff]
    %v1013 = vld [vmem:[%s2 + $0x1d78] sm:$0xff]
    %v1014 = vld [vmem:[%s2 + $0x1d80] sm:$0xff]
    %v1015 = vld [vmem:[%s2 + $0x1d88] sm:$0xff]
    %v1016 = vld [vmem:[%s2 + $0x1d90] sm:$0xff]
    %v1017 = vld [vmem:[%s2 + $0x1d98] sm:$0xff]
    %v1018 = vld [vmem:[%s2 + $0x1da0] sm:$0xff]
    %v1019 = vld [vmem:[%s2 + $0x1da8] sm:$0xff]
    %v1020 = vld [vmem:[%s2 + $0x1db0] sm:$0xff]
    %v1021 = vld [vmem:[%s2 + $0x1db8] sm:$0xff]
    %v1022 = vld [vmem:[%s2 + $0x1dc0] sm:$0xff]
    %v1023 = vld [vmem:[%s2 + $0x1dc8] sm:$0xff]
    %v1024 = vld [vmem:[%s2 + $0x1dd0] sm:$0xff]
    %v1025 = vld [vmem:[%s2 + $0x1dd8] sm:$0xff]
    %v1026 = vld [vmem:[%s2 + $0x1de0] sm:$0xff]
    %v1027 = vld [vmem:[%s2 + $0x1de8] sm:$0xff]
    %v1028 = vld [vmem:[%s2 + $0x1df0] sm:$0xff]
    %v1029 = vld [vmem:[%s2 + $0x1df8] sm:$0xff]
    %v1030 = vld [vmem:[%s2 + $0x1e00] sm:$0xff]
    %v1031 = vld [vmem:[%s2 + $0x1e08] sm:$0xff]
    %v1032 = vld [vmem:[%s2 + $0x1e10] sm:$0xff]
    %v1033 = vld [vmem:[%s2 + $0x1e18] sm:$0xff]
    %v1034 = vld [vmem:[%s2 + $0x1e20] sm:$0xff]
    %v1035 = vld [vmem:[%s2 + $0x1e28] sm:$0xff]
    %v1036 = vld [vmem:[%s2 + $0x1e30] sm:$0xff]
    %v1037 = vld [vmem:[%s2 + $0x1e38] sm:$0xff]
    %v1038 = vld [vmem:[%s2 + $0x1e40] sm:$0xff]
    %v1039 = vld [vmem:[%s2 + $0x1e48] sm:$0xff]
    %v1040 = vld [vmem:[%s2 + $0x1e50] sm:$0xff]
    %v1041 = vld [vmem:[%s2 + $0x1e58] sm:$0xff]
    %v1042 = vld [vmem:[%s2 + $0x1e60] sm:$0xff]
    %v1043 = vld [vmem:[%s2 + $0x1e68] sm:$0xff]
    %v1044 = vld [vmem:[%s2 + $0x1e70] sm:$0xff]
    %v1045 = vld [vmem:[%s2 + $0x1e78] sm:$0xff]
    %v1046 = vld [vmem:[%s2 + $0x1e80] sm:$0xff]
    %v1047 = vld [vmem:[%s2 + $0x1e88] sm:$0xff]
    %v1048 = vld [vmem:[%s2 + $0x1e90] sm:$0xff]
    %v1049 = vld [vmem:[%s2 + $0x1e98] sm:$0xff]
    %v1050 = vld [vmem:[%s2 + $0x1ea0] sm:$0xff]
    %v1051 = vld [vmem:[%s2 + $0x1ea8] sm:$0xff]
    %v1052 = vld [vmem:[%s2 + $0x1eb0] sm:$0xff]
    %v1053 = vld [vmem:[%s2 + $0x1eb8] sm:$0xff]
    %v1054 = vld [vmem:[%s2 + $0x1ec0] sm:$0xff]
    %v1055 = vld [vmem:[%s2 + $0x1ec8] sm:$0xff]
    %v1056 = vld [vmem:[%s2 + $0x1ed0] sm:$0xff]
    %v1057 = vld [vmem:[%s2 + $0x1ed8] sm:$0xff]
    %v1058 = vld [vmem:[%s2 + $0x1ee0] sm:$0xff]
    %v1059 = vld [vmem:[%s2 + $0x1ee8] sm:$0xff]
    %v1060 = vld [vmem:[%s2 + $0x1ef0] sm:$0xff]
    %v1061 = vld [vmem:[%s2 + $0x1ef8] sm:$0xff]
    %v1062 = vld [vmem:[%s2 + $0x1f00] sm:$0xff]
    %v1063 = vld [vmem:[%s2 + $0x1f08] sm:$0xff]
    %v1064 = vld [vmem:[%s2 + $0x1f10] sm:$0xff]
    %v1065 = vld [vmem:[%s2 + $0x1f18] sm:$0xff]
    %v1066 = vld [vmem:[%s2 + $0x1f20] sm:$0xff]
    %v1067 = vld [vmem:[%s2 + $0x1f28] sm:$0xff]
    %v1068 = vld [vmem:[%s2 + $0x1f30] sm:$0xff]
    %v1069 = vld [vmem:[%s2 + $0x1f38] sm:$0xff]
    %v1070 = vld [vmem:[%s2 + $0x1f40] sm:$0xff]
    %v1071 = vld [vmem:[%s2 + $0x1f48] sm:$0xff]
    %v1072 = vld [vmem:[%s2 + $0x1f50] sm:$0xff]
    %v1073 = vld [vmem:[%s2 + $0x1f58] sm:$0xff]
    %v1074 = vld [vmem:[%s2 + $0x1f60] sm:$0xff]
    %v1075 = vld [vmem:[%s2 + $0x1f68] sm:$0xff]
    %v1076 = vld [vmem:[%s2 + $0x1f70] sm:$0xff]
    %v1077 = vld [vmem:[%s2 + $0x1f78] sm:$0xff]
    %v1078 = vld [vmem:[%s2 + $0x1f80] sm:$0xff]
    %v1079 = vld [vmem:[%s2 + $0x1f88] sm:$0xff]
    %v1080 = vld [vmem:[%s2 + $0x1f90] sm:$0xff]
    %v1081 = vld [vmem:[%s2 + $0x1f98] sm:$0xff]
    %v1082 = vld [vmem:[%s2 + $0x1fa0] sm:$0xff]
    %v1083 = vld [vmem:[%s2 + $0x1fa8] sm:$0xff]
    %v1084 = vld [vmem:[%s2 + $0x1fb0] sm:$0xff]
    %v1085 = vld [vmem:[%s2 + $0x1fb8] sm:$0xff]
    %v1086 = vld [vmem:[%s2 + $0x1fc0] sm:$0xff]
    %v1087 = vld [vmem:[%s2 + $0x1fc8] sm:$0xff]
    %v1088 = vld [vmem:[%s2 + $0x1fd0] sm:$0xff]
    %v1089 = vld [vmem:[%s2 + $0x1fd8] sm:$0xff]
    %v1090 = vld [vmem:[%s2 + $0x1fe0] sm:$0xff]
    %v1091 = vld [vmem:[%s2 + $0x1fe8] sm:$0xff]
    %v1092 = vld [vmem:[%s2 + $0x1ff0] sm:$0xff]
    %v1093 = vld [vmem:[%s2 + $0x1ff8] sm:$0xff]
    %v1094 = vld [vmem:[%s3] sm:$0x1]
    %v1096 = vlaneseq
    %v1097 = vshrl.u32 %v1096, 7
    %v1098 = vsub.s32 0, %v1097
    %v1099 = vrot.slane %v1094, %v1098
    %v1117 = vcombine.high %v54, %v54
    %v1119 = vunpack.c.l.s4 1983009808
    %v1120 = vunpack.c.0.s8 %v1119
    %v1121 = vlaneseq
    %v1122 = vshrl.u32 %v1121, 7
    %v1123 = vsub.s32 %v1120, %v1122
    %v1124 = vrot.slane %v54, %v1123
    %v1126 = vunpack.c.l.s4 1983009808
    %v1127 = vunpack.c.0.s8 %v1126
    %v1128 = vlaneseq
    %v1129 = vshrl.u32 %v1128, 7
    %v1130 = vsub.s32 %v1127, %v1129
    %v1131 = vrot.slane %v1117, %v1130
    %v1132 = vcombine.high %v1124, %v1124
    %v1133 = vcombine.high %v1131, %v1131
    %v1134 = vcombine.high %v55, %v55
    %v1136 = vunpack.c.l.s4 1983009808
    %v1137 = vunpack.c.0.s8 %v1136
    %v1138 = vlaneseq
    %v1139 = vshrl.u32 %v1138, 7
    %v1140 = vsub.s32 %v1137, %v1139
    %v1141 = vrot.slane %v55, %v1140
    %v1143 = vunpack.c.l.s4 1983009808
    %v1144 = vunpack.c.0.s8 %v1143
    %v1145 = vlaneseq
    %v1146 = vshrl.u32 %v1145, 7
    %v1147 = vsub.s32 %v1144, %v1146
    %v1148 = vrot.slane %v1134, %v1147
    %v1149 = vcombine.high %v1141, %v1141
    %v1150 = vcombine.high %v1148, %v1148
    %v1151 = vcombine.high %v56, %v56
    %v1153 = vunpack.c.l.s4 1983009808
    %v1154 = vunpack.c.0.s8 %v1153
    %v1155 = vlaneseq
    %v1156 = vshrl.u32 %v1155, 7
    %v1157 = vsub.s32 %v1154, %v1156
    %v1158 = vrot.slane %v56, %v1157
    %v1160 = vunpack.c.l.s4 1983009808
    %v1161 = vunpack.c.0.s8 %v1160
    %v1162 = vlaneseq
    %v1163 = vshrl.u32 %v1162, 7
    %v1164 = vsub.s32 %v1161, %v1163
    %v1165 = vrot.slane %v1151, %v1164
    %v1166 = vcombine.high %v1158, %v1158
    %v1167 = vcombine.high %v1165, %v1165
    %v1168 = vcombine.high %v57, %v57
    %v1170 = vunpack.c.l.s4 1983009808
    %v1171 = vunpack.c.0.s8 %v1170
    %v1172 = vlaneseq
    %v1173 = vshrl.u32 %v1172, 7
    %v1174 = vsub.s32 %v1171, %v1173
    %v1175 = vrot.slane %v57, %v1174
    %v1177 = vunpack.c.l.s4 1983009808
    %v1178 = vunpack.c.0.s8 %v1177
    %v1179 = vlaneseq
    %v1180 = vshrl.u32 %v1179, 7
    %v1181 = vsub.s32 %v1178, %v1180
    %v1182 = vrot.slane %v1168, %v1181
    %v1183 = vcombine.high %v1175, %v1175
    %v1184 = vcombine.high %v1182, %v1182
    %v1185 = vcombine.high %v58, %v58
    %v1187 = vunpack.c.l.s4 1983009808
    %v1188 = vunpack.c.0.s8 %v1187
    %v1189 = vlaneseq
    %v1190 = vshrl.u32 %v1189, 7
    %v1191 = vsub.s32 %v1188, %v1190
    %v1192 = vrot.slane %v58, %v1191
    %v1194 = vunpack.c.l.s4 1983009808
    %v1195 = vunpack.c.0.s8 %v1194
    %v1196 = vlaneseq
    %v1197 = vshrl.u32 %v1196, 7
    %v1198 = vsub.s32 %v1195, %v1197
    %v1199 = vrot.slane %v1185, %v1198
    %v1200 = vcombine.high %v1192, %v1192
    %v1201 = vcombine.high %v1199, %v1199
    %v1202 = vcombine.high %v59, %v59
    %v1204 = vunpack.c.l.s4 1983009808
    %v1205 = vunpack.c.0.s8 %v1204
    %v1206 = vlaneseq
    %v1207 = vshrl.u32 %v1206, 7
    %v1208 = vsub.s32 %v1205, %v1207
    %v1209 = vrot.slane %v59, %v1208
    %v1211 = vunpack.c.l.s4 1983009808
    %v1212 = vunpack.c.0.s8 %v1211
    %v1213 = vlaneseq
    %v1214 = vshrl.u32 %v1213, 7
    %v1215 = vsub.s32 %v1212, %v1214
    %v1216 = vrot.slane %v1202, %v1215
    %v1217 = vcombine.high %v1209, %v1209
    %v1218 = vcombine.high %v1216, %v1216
    %v1219 = vcombine.high %v60, %v60
    %v1221 = vunpack.c.l.s4 1983009808
    %v1222 = vunpack.c.0.s8 %v1221
    %v1223 = vlaneseq
    %v1224 = vshrl.u32 %v1223, 7
    %v1225 = vsub.s32 %v1222, %v1224
    %v1226 = vrot.slane %v60, %v1225
    %v1228 = vunpack.c.l.s4 1983009808
    %v1229 = vunpack.c.0.s8 %v1228
    %v1230 = vlaneseq
    %v1231 = vshrl.u32 %v1230, 7
    %v1232 = vsub.s32 %v1229, %v1231
    %v1233 = vrot.slane %v1219, %v1232
    %v1234 = vcombine.high %v1226, %v1226
    %v1235 = vcombine.high %v1233, %v1233
    %v1236 = vcombine.high %v61, %v61
    %v1238 = vunpack.c.l.s4 1983009808
    %v1239 = vunpack.c.0.s8 %v1238
    %v1240 = vlaneseq
    %v1241 = vshrl.u32 %v1240, 7
    %v1242 = vsub.s32 %v1239, %v1241
    %v1243 = vrot.slane %v61, %v1242
    %v1245 = vunpack.c.l.s4 1983009808
    %v1246 = vunpack.c.0.s8 %v1245
    %v1247 = vlaneseq
    %v1248 = vshrl.u32 %v1247, 7
    %v1249 = vsub.s32 %v1246, %v1248
    %v1250 = vrot.slane %v1236, %v1249
    %v1251 = vcombine.high %v1243, %v1243
    %v1252 = vcombine.high %v1250, %v1250
    %v1253 = vcombine.high %v62, %v62
    %v1255 = vunpack.c.l.s4 1983009808
    %v1256 = vunpack.c.0.s8 %v1255
    %v1257 = vlaneseq
    %v1258 = vshrl.u32 %v1257, 7
    %v1259 = vsub.s32 %v1256, %v1258
    %v1260 = vrot.slane %v62, %v1259
    %v1262 = vunpack.c.l.s4 1983009808
    %v1263 = vunpack.c.0.s8 %v1262
    %v1264 = vlaneseq
    %v1265 = vshrl.u32 %v1264, 7
    %v1266 = vsub.s32 %v1263, %v1265
    %v1267 = vrot.slane %v1253, %v1266
    %v1268 = vcombine.high %v1260, %v1260
    %v1269 = vcombine.high %v1267, %v1267
    %v1270 = vcombine.high %v63, %v63
    %v1272 = vunpack.c.l.s4 1983009808
    %v1273 = vunpack.c.0.s8 %v1272
    %v1274 = vlaneseq
    %v1275 = vshrl.u32 %v1274, 7
    %v1276 = vsub.s32 %v1273, %v1275
    %v1277 = vrot.slane %v63, %v1276
    %v1279 = vunpack.c.l.s4 1983009808
    %v1280 = vunpack.c.0.s8 %v1279
    %v1281 = vlaneseq
    %v1282 = vshrl.u32 %v1281, 7
    %v1283 = vsub.s32 %v1280, %v1282
    %v1284 = vrot.slane %v1270, %v1283
    %v1285 = vcombine.high %v1277, %v1277
    %v1286 = vcombine.high %v1284, %v1284
    %v1287 = vcombine.high %v64, %v64
    %v1289 = vunpack.c.l.s4 1983009808
    %v1290 = vunpack.c.0.s8 %v1289
    %v1291 = vlaneseq
    %v1292 = vshrl.u32 %v1291, 7
    %v1293 = vsub.s32 %v1290, %v1292
    %v1294 = vrot.slane %v64, %v1293
    %v1296 = vunpack.c.l.s4 1983009808
    %v1297 = vunpack.c.0.s8 %v1296
    %v1298 = vlaneseq
    %v1299 = vshrl.u32 %v1298, 7
    %v1300 = vsub.s32 %v1297, %v1299
    %v1301 = vrot.slane %v1287, %v1300
    %v1302 = vcombine.high %v1294, %v1294
    %v1303 = vcombine.high %v1301, %v1301
    %v1304 = vcombine.high %v65, %v65
    %v1306 = vunpack.c.l.s4 1983009808
    %v1307 = vunpack.c.0.s8 %v1306
    %v1308 = vlaneseq
    %v1309 = vshrl.u32 %v1308, 7
    %v1310 = vsub.s32 %v1307, %v1309
    %v1311 = vrot.slane %v65, %v1310
    %v1313 = vunpack.c.l.s4 1983009808
    %v1314 = vunpack.c.0.s8 %v1313
    %v1315 = vlaneseq
    %v1316 = vshrl.u32 %v1315, 7
    %v1317 = vsub.s32 %v1314, %v1316
    %v1318 = vrot.slane %v1304, %v1317
    %v1319 = vcombine.high %v1311, %v1311
    %v1320 = vcombine.high %v1318, %v1318
    %v1321 = vcombine.high %v66, %v66
    %v1323 = vunpack.c.l.s4 1983009808
    %v1324 = vunpack.c.0.s8 %v1323
    %v1325 = vlaneseq
    %v1326 = vshrl.u32 %v1325, 7
    %v1327 = vsub.s32 %v1324, %v1326
    %v1328 = vrot.slane %v66, %v1327
    %v1330 = vunpack.c.l.s4 1983009808
    %v1331 = vunpack.c.0.s8 %v1330
    %v1332 = vlaneseq
    %v1333 = vshrl.u32 %v1332, 7
    %v1334 = vsub.s32 %v1331, %v1333
    %v1335 = vrot.slane %v1321, %v1334
    %v1336 = vcombine.high %v1328, %v1328
    %v1337 = vcombine.high %v1335, %v1335
    %v1338 = vcombine.high %v67, %v67
    %v1340 = vunpack.c.l.s4 1983009808
    %v1341 = vunpack.c.0.s8 %v1340
    %v1342 = vlaneseq
    %v1343 = vshrl.u32 %v1342, 7
    %v1344 = vsub.s32 %v1341, %v1343
    %v1345 = vrot.slane %v67, %v1344
    %v1347 = vunpack.c.l.s4 1983009808
    %v1348 = vunpack.c.0.s8 %v1347
    %v1349 = vlaneseq
    %v1350 = vshrl.u32 %v1349, 7
    %v1351 = vsub.s32 %v1348, %v1350
    %v1352 = vrot.slane %v1338, %v1351
    %v1353 = vcombine.high %v1345, %v1345
    %v1354 = vcombine.high %v1352, %v1352
    %v1355 = vcombine.high %v68, %v68
    %v1357 = vunpack.c.l.s4 1983009808
    %v1358 = vunpack.c.0.s8 %v1357
    %v1359 = vlaneseq
    %v1360 = vshrl.u32 %v1359, 7
    %v1361 = vsub.s32 %v1358, %v1360
    %v1362 = vrot.slane %v68, %v1361
    %v1364 = vunpack.c.l.s4 1983009808
    %v1365 = vunpack.c.0.s8 %v1364
    %v1366 = vlaneseq
    %v1367 = vshrl.u32 %v1366, 7
    %v1368 = vsub.s32 %v1365, %v1367
    %v1369 = vrot.slane %v1355, %v1368
    %v1370 = vcombine.high %v1362, %v1362
    %v1371 = vcombine.high %v1369, %v1369
    %v1372 = vcombine.high %v69, %v69
    %v1374 = vunpack.c.l.s4 1983009808
    %v1375 = vunpack.c.0.s8 %v1374
    %v1376 = vlaneseq
    %v1377 = vshrl.u32 %v1376, 7
    %v1378 = vsub.s32 %v1375, %v1377
    %v1379 = vrot.slane %v69, %v1378
    %v1381 = vunpack.c.l.s4 1983009808
    %v1382 = vunpack.c.0.s8 %v1381
    %v1383 = vlaneseq
    %v1384 = vshrl.u32 %v1383, 7
    %v1385 = vsub.s32 %v1382, %v1384
    %v1386 = vrot.slane %v1372, %v1385
    %v1387 = vcombine.high %v1379, %v1379
    %v1388 = vcombine.high %v1386, %v1386
    %1453 = vmatprep.subr.mxu0 0.0
    %1454 = vmatpush1.msra.mxu0 %v85
    %1455 = vmatprep.subr.mxu0 0.0
    %1456 = vmatpush1.msra.mxu0 %v84
    %1457 = vmatprep.subr.mxu0 0.0
    %1458 = vmatpush1.msra.mxu0 %v83
    %1459 = vmatprep.subr.mxu0 0.0
    %1460 = vmatpush1.msra.mxu0 %v82
    %1461 = vmatprep.subr.mxu0 0.0
    %1462 = vmatpush1.msra.mxu0 %v81
    %1463 = vmatprep.subr.mxu0 0.0
    %1464 = vmatpush1.msra.mxu0 %v80
    %1465 = vmatprep.subr.mxu0 0.0
    %1466 = vmatpush1.msra.mxu0 %v79
    %1467 = vmatprep.subr.mxu0 0.0
    %1468 = vmatpush1.msra.mxu0 %v78
    %1469 = vmatprep.subr.mxu0 0.0
    %1470 = vmatpush1.msra.mxu0 %v77
    %1471 = vmatprep.subr.mxu0 0.0
    %1472 = vmatpush1.msra.mxu0 %v76
    %1473 = vmatprep.subr.mxu0 0.0
    %1474 = vmatpush1.msra.mxu0 %v75
    %1475 = vmatprep.subr.mxu0 0.0
    %1476 = vmatpush1.msra.mxu0 %v74
    %1477 = vmatprep.subr.mxu0 0.0
    %1478 = vmatpush1.msra.mxu0 %v73
    %1479 = vmatprep.subr.mxu0 0.0
    %1480 = vmatpush1.msra.mxu0 %v72
    %1481 = vmatprep.subr.mxu0 0.0
    %1482 = vmatpush1.msra.mxu0 %v71
    %1483 = vmatprep.subr.mxu0 0.0
    %1484 = vmatpush1.msra.mxu0 %v70
    %1485 = vmatprep.subr.mxu0 0.0
    %1486 = vmatpush2.msra.mxu0 %v101
    %1487 = vmatprep.subr.mxu0 0.0
    %1488 = vmatpush2.msra.mxu0 %v100
    %1489 = vmatprep.subr.mxu0 0.0
    %1490 = vmatpush2.msra.mxu0 %v99
    %1491 = vmatprep.subr.mxu0 0.0
    %1492 = vmatpush2.msra.mxu0 %v98
    %1493 = vmatprep.subr.mxu0 0.0
    %1494 = vmatpush2.msra.mxu0 %v97
    %1495 = vmatprep.subr.mxu0 0.0
    %1496 = vmatpush2.msra.mxu0 %v96
    %1497 = vmatprep.subr.mxu0 0.0
    %1498 = vmatpush2.msra.mxu0 %v95
    %1499 = vmatprep.subr.mxu0 0.0
    %1500 = vmatpush2.msra.mxu0 %v94
    %1501 = vmatprep.subr.mxu0 0.0
    %1502 = vmatpush2.msra.mxu0 %v93
    %1503 = vmatprep.subr.mxu0 0.0
    %1504 = vmatpush2.msra.mxu0 %v92
    %1505 = vmatprep.subr.mxu0 0.0
    %1506 = vmatpush2.msra.mxu0 %v91
    %1507 = vmatprep.subr.mxu0 0.0
    %1508 = vmatpush2.msra.mxu0 %v90
    %1509 = vmatprep.subr.mxu0 0.0
    %1510 = vmatpush2.msra.mxu0 %v89
    %1511 = vmatprep.subr.mxu0 0.0
    %1512 = vmatpush2.msra.mxu0 %v88
    %1513 = vmatprep.subr.mxu0 0.0
    %1514 = vmatpush2.msra.mxu0 %v87
    %1515 = vmatprep.subr.mxu0 0.0
    %1516 = vmatpush2.msra.mxu0 %v86
    %1517 = vmatprep.mubr.f32.mxu0 %v1132
    %1518 = vmatmul.mubr.f32.gmra.mxu0 %v1124
    %v1519 = vpop.f32.mrf.mxu0
    %v1520 = vadd.f32 %v1099, %v1519
    %v1521 = vpop.f32.mrf.mxu0
    %1522 = vdwg.mxu0
    %1523 = vmatprep.subr.mxu0 0.0
    %1524 = vmatpush1.msra.mxu0 %v117
    %1525 = vmatprep.subr.mxu0 0.0
    %1526 = vmatpush1.msra.mxu0 %v116
    %1527 = vmatprep.subr.mxu0 0.0
    %1528 = vmatpush1.msra.mxu0 %v115
    %1529 = vmatprep.subr.mxu0 0.0
    %1530 = vmatpush1.msra.mxu0 %v114
    %1531 = vmatprep.subr.mxu0 0.0
    %1532 = vmatpush1.msra.mxu0 %v113
    %1533 = vmatprep.subr.mxu0 0.0
    %1534 = vmatpush1.msra.mxu0 %v112
    %1535 = vmatprep.subr.mxu0 0.0
    %1536 = vmatpush1.msra.mxu0 %v111
    %1537 = vmatprep.subr.mxu0 0.0
    %1538 = vmatpush1.msra.mxu0 %v110
    %1539 = vmatprep.subr.mxu0 0.0
    %1540 = vmatpush1.msra.mxu0 %v109
    %1541 = vmatprep.subr.mxu0 0.0
    %1542 = vmatpush1.msra.mxu0 %v108
    %1543 = vmatprep.subr.mxu0 0.0
    %1544 = vmatpush1.msra.mxu0 %v107
    %1545 = vmatprep.subr.mxu0 0.0
    %1546 = vmatpush1.msra.mxu0 %v106
    %1547 = vmatprep.subr.mxu0 0.0
    %1548 = vmatpush1.msra.mxu0 %v105
    %1549 = vmatprep.subr.mxu0 0.0
    %1550 = vmatpush1.msra.mxu0 %v104
    %1551 = vmatprep.subr.mxu0 0.0
    %1552 = vmatpush1.msra.mxu0 %v103
    %1553 = vmatprep.subr.mxu0 0.0
    %1554 = vmatpush1.msra.mxu0 %v102
    %1555 = vmatprep.subr.mxu0 0.0
    %1556 = vmatpush2.msra.mxu0 %v133
    %1557 = vmatprep.subr.mxu0 0.0
    %1558 = vmatpush2.msra.mxu0 %v132
    %1559 = vmatprep.subr.mxu0 0.0
    %1560 = vmatpush2.msra.mxu0 %v131
    %1561 = vmatprep.subr.mxu0 0.0
    %1562 = vmatpush2.msra.mxu0 %v130
    %1563 = vmatprep.subr.mxu0 0.0
    %1564 = vmatpush2.msra.mxu0 %v129
    %1565 = vmatprep.subr.mxu0 0.0
    %1566 = vmatpush2.msra.mxu0 %v128
    %1567 = vmatprep.subr.mxu0 0.0
    %1568 = vmatpush2.msra.mxu0 %v127
    %1569 = vmatprep.subr.mxu0 0.0
    %1570 = vmatpush2.msra.mxu0 %v126
    %1571 = vmatprep.subr.mxu0 0.0
    %1572 = vmatpush2.msra.mxu0 %v125
    %1573 = vmatprep.subr.mxu0 0.0
    %1574 = vmatpush2.msra.mxu0 %v124
    %1575 = vmatprep.subr.mxu0 0.0
    %1576 = vmatpush2.msra.mxu0 %v123
    %1577 = vmatprep.subr.mxu0 0.0
    %1578 = vmatpush2.msra.mxu0 %v122
    %1579 = vmatprep.subr.mxu0 0.0
    %1580 = vmatpush2.msra.mxu0 %v121
    %1581 = vmatprep.subr.mxu0 0.0
    %1582 = vmatpush2.msra.mxu0 %v120
    %1583 = vmatprep.subr.mxu0 0.0
    %1584 = vmatpush2.msra.mxu0 %v119
    %1585 = vmatprep.subr.mxu0 0.0
    %1586 = vmatpush2.msra.mxu0 %v118
    %1587 = vmatprep.mubr.f32.mxu0 %v1133
    %1588 = vmatmul.mubr.f32.gmra.mxu0 %v1131
    %v1589 = vpop.f32.mrf.mxu0
    %v1590 = vadd.f32 %v1520, %v1589
    %v1591 = vpop.f32.mrf.mxu0
    %1592 = vdwg.mxu0
    %1593 = vmatprep.subr.mxu0 0.0
    %1594 = vmatpush1.msra.mxu0 %v149
    %1595 = vmatprep.subr.mxu0 0.0
    %1596 = vmatpush1.msra.mxu0 %v148
    %1597 = vmatprep.subr.mxu0 0.0
    %1598 = vmatpush1.msra.mxu0 %v147
    %1599 = vmatprep.subr.mxu0 0.0
    %1600 = vmatpush1.msra.mxu0 %v146
    %1601 = vmatprep.subr.mxu0 0.0
    %1602 = vmatpush1.msra.mxu0 %v145
    %1603 = vmatprep.subr.mxu0 0.0
    %1604 = vmatpush1.msra.mxu0 %v144
    %1605 = vmatprep.subr.mxu0 0.0
    %1606 = vmatpush1.msra.mxu0 %v143
    %1607 = vmatprep.subr.mxu0 0.0
    %1608 = vmatpush1.msra.mxu0 %v142
    %1609 = vmatprep.subr.mxu0 0.0
    %1610 = vmatpush1.msra.mxu0 %v141
    %1611 = vmatprep.subr.mxu0 0.0
    %1612 = vmatpush1.msra.mxu0 %v140
    %1613 = vmatprep.subr.mxu0 0.0
    %1614 = vmatpush1.msra.mxu0 %v139
    %1615 = vmatprep.subr.mxu0 0.0
    %1616 = vmatpush1.msra.mxu0 %v138
    %1617 = vmatprep.subr.mxu0 0.0
    %1618 = vmatpush1.msra.mxu0 %v137
    %1619 = vmatprep.subr.mxu0 0.0
    %1620 = vmatpush1.msra.mxu0 %v136
    %1621 = vmatprep.subr.mxu0 0.0
    %1622 = vmatpush1.msra.mxu0 %v135
    %1623 = vmatprep.subr.mxu0 0.0
    %1624 = vmatpush1.msra.mxu0 %v134
    %1625 = vmatprep.subr.mxu0 0.0
    %1626 = vmatpush2.msra.mxu0 %v165
    %1627 = vmatprep.subr.mxu0 0.0
    %1628 = vmatpush2.msra.mxu0 %v164
    %1629 = vmatprep.subr.mxu0 0.0
    %1630 = vmatpush2.msra.mxu0 %v163
    %1631 = vmatprep.subr.mxu0 0.0
    %1632 = vmatpush2.msra.mxu0 %v162
    %1633 = vmatprep.subr.mxu0 0.0
    %1634 = vmatpush2.msra.mxu0 %v161
    %1635 = vmatprep.subr.mxu0 0.0
    %1636 = vmatpush2.msra.mxu0 %v160
    %1637 = vmatprep.subr.mxu0 0.0
    %1638 = vmatpush2.msra.mxu0 %v159
    %1639 = vmatprep.subr.mxu0 0.0
    %1640 = vmatpush2.msra.mxu0 %v158
    %1641 = vmatprep.subr.mxu0 0.0
    %1642 = vmatpush2.msra.mxu0 %v157
    %1643 = vmatprep.subr.mxu0 0.0
    %1644 = vmatpush2.msra.mxu0 %v156
    %1645 = vmatprep.subr.mxu0 0.0
    %1646 = vmatpush2.msra.mxu0 %v155
    %1647 = vmatprep.subr.mxu0 0.0
    %1648 = vmatpush2.msra.mxu0 %v154
    %1649 = vmatprep.subr.mxu0 0.0
    %1650 = vmatpush2.msra.mxu0 %v153
    %1651 = vmatprep.subr.mxu0 0.0
    %1652 = vmatpush2.msra.mxu0 %v152
    %1653 = vmatprep.subr.mxu0 0.0
    %1654 = vmatpush2.msra.mxu0 %v151
    %1655 = vmatprep.subr.mxu0 0.0
    %1656 = vmatpush2.msra.mxu0 %v150
    %1657 = vmatprep.mubr.f32.mxu0 %v1149
    %1658 = vmatmul.mubr.f32.gmra.mxu0 %v1141
    %v1659 = vpop.f32.mrf.mxu0
    %v1660 = vadd.f32 %v1590, %v1659
    %v1661 = vpop.f32.mrf.mxu0
    %1662 = vdwg.mxu0
    %1663 = vmatprep.subr.mxu0 0.0
    %1664 = vmatpush1.msra.mxu0 %v181
    %1665 = vmatprep.subr.mxu0 0.0
    %1666 = vmatpush1.msra.mxu0 %v180
    %1667 = vmatprep.subr.mxu0 0.0
    %1668 = vmatpush1.msra.mxu0 %v179
    %1669 = vmatprep.subr.mxu0 0.0
    %1670 = vmatpush1.msra.mxu0 %v178
    %1671 = vmatprep.subr.mxu0 0.0
    %1672 = vmatpush1.msra.mxu0 %v177
    %1673 = vmatprep.subr.mxu0 0.0
    %1674 = vmatpush1.msra.mxu0 %v176
    %1675 = vmatprep.subr.mxu0 0.0
    %1676 = vmatpush1.msra.mxu0 %v175
    %1677 = vmatprep.subr.mxu0 0.0
    %1678 = vmatpush1.msra.mxu0 %v174
    %1679 = vmatprep.subr.mxu0 0.0
    %1680 = vmatpush1.msra.mxu0 %v173
    %1681 = vmatprep.subr.mxu0 0.0
    %1682 = vmatpush1.msra.mxu0 %v172
    %1683 = vmatprep.subr.mxu0 0.0
    %1684 = vmatpush1.msra.mxu0 %v171
    %1685 = vmatprep.subr.mxu0 0.0
    %1686 = vmatpush1.msra.mxu0 %v170
    %1687 = vmatprep.subr.mxu0 0.0
    %1688 = vmatpush1.msra.mxu0 %v169
    %1689 = vmatprep.subr.mxu0 0.0
    %1690 = vmatpush1.msra.mxu0 %v168
    %1691 = vmatprep.subr.mxu0 0.0
    %1692 = vmatpush1.msra.mxu0 %v167
    %1693 = vmatprep.subr.mxu0 0.0
    %1694 = vmatpush1.msra.mxu0 %v166
    %1695 = vmatprep.subr.mxu0 0.0
    %1696 = vmatpush2.msra.mxu0 %v197
    %1697 = vmatprep.subr.mxu0 0.0
    %1698 = vmatpush2.msra.mxu0 %v196
    %1699 = vmatprep.subr.mxu0 0.0
    %1700 = vmatpush2.msra.mxu0 %v195
    %1701 = vmatprep.subr.mxu0 0.0
    %1702 = vmatpush2.msra.mxu0 %v194
    %1703 = vmatprep.subr.mxu0 0.0
    %1704 = vmatpush2.msra.mxu0 %v193
    %1705 = vmatprep.subr.mxu0 0.0
    %1706 = vmatpush2.msra.mxu0 %v192
    %1707 = vmatprep.subr.mxu0 0.0
    %1708 = vmatpush2.msra.mxu0 %v191
    %1709 = vmatprep.subr.mxu0 0.0
    %1710 = vmatpush2.msra.mxu0 %v190
    %1711 = vmatprep.subr.mxu0 0.0
    %1712 = vmatpush2.msra.mxu0 %v189
    %1713 = vmatprep.subr.mxu0 0.0
    %1714 = vmatpush2.msra.mxu0 %v188
    %1715 = vmatprep.subr.mxu0 0.0
    %1716 = vmatpush2.msra.mxu0 %v187
    %1717 = vmatprep.subr.mxu0 0.0
    %1718 = vmatpush2.msra.mxu0 %v186
    %1719 = vmatprep.subr.mxu0 0.0
    %1720 = vmatpush2.msra.mxu0 %v185
    %1721 = vmatprep.subr.mxu0 0.0
    %1722 = vmatpush2.msra.mxu0 %v184
    %1723 = vmatprep.subr.mxu0 0.0
    %1724 = vmatpush2.msra.mxu0 %v183
    %1725 = vmatprep.subr.mxu0 0.0
    %1726 = vmatpush2.msra.mxu0 %v182
    %1727 = vmatprep.mubr.f32.mxu0 %v1150
    %1728 = vmatmul.mubr.f32.gmra.mxu0 %v1148
    %v1729 = vpop.f32.mrf.mxu0
    %v1730 = vadd.f32 %v1660, %v1729
    %v1731 = vpop.f32.mrf.mxu0
    %1732 = vdwg.mxu0
    %1733 = vmatprep.subr.mxu0 0.0
    %1734 = vmatpush1.msra.mxu0 %v213
    %1735 = vmatprep.subr.mxu0 0.0
    %1736 = vmatpush1.msra.mxu0 %v212
    %1737 = vmatprep.subr.mxu0 0.0
    %1738 = vmatpush1.msra.mxu0 %v211
    %1739 = vmatprep.subr.mxu0 0.0
    %1740 = vmatpush1.msra.mxu0 %v210
    %1741 = vmatprep.subr.mxu0 0.0
    %1742 = vmatpush1.msra.mxu0 %v209
    %1743 = vmatprep.subr.mxu0 0.0
    %1744 = vmatpush1.msra.mxu0 %v208
    %1745 = vmatprep.subr.mxu0 0.0
    %1746 = vmatpush1.msra.mxu0 %v207
    %1747 = vmatprep.subr.mxu0 0.0
    %1748 = vmatpush1.msra.mxu0 %v206
    %1749 = vmatprep.subr.mxu0 0.0
    %1750 = vmatpush1.msra.mxu0 %v205
    %1751 = vmatprep.subr.mxu0 0.0
    %1752 = vmatpush1.msra.mxu0 %v204
    %1753 = vmatprep.subr.mxu0 0.0
    %1754 = vmatpush1.msra.mxu0 %v203
    %1755 = vmatprep.subr.mxu0 0.0
    %1756 = vmatpush1.msra.mxu0 %v202
    %1757 = vmatprep.subr.mxu0 0.0
    %1758 = vmatpush1.msra.mxu0 %v201
    %1759 = vmatprep.subr.mxu0 0.0
    %1760 = vmatpush1.msra.mxu0 %v200
    %1761 = vmatprep.subr.mxu0 0.0
    %1762 = vmatpush1.msra.mxu0 %v199
    %1763 = vmatprep.subr.mxu0 0.0
    %1764 = vmatpush1.msra.mxu0 %v198
    %1765 = vmatprep.subr.mxu0 0.0
    %1766 = vmatpush2.msra.mxu0 %v229
    %1767 = vmatprep.subr.mxu0 0.0
    %1768 = vmatpush2.msra.mxu0 %v228
    %1769 = vmatprep.subr.mxu0 0.0
    %1770 = vmatpush2.msra.mxu0 %v227
    %1771 = vmatprep.subr.mxu0 0.0
    %1772 = vmatpush2.msra.mxu0 %v226
    %1773 = vmatprep.subr.mxu0 0.0
    %1774 = vmatpush2.msra.mxu0 %v225
    %1775 = vmatprep.subr.mxu0 0.0
    %1776 = vmatpush2.msra.mxu0 %v224
    %1777 = vmatprep.subr.mxu0 0.0
    %1778 = vmatpush2.msra.mxu0 %v223
    %1779 = vmatprep.subr.mxu0 0.0
    %1780 = vmatpush2.msra.mxu0 %v222
    %1781 = vmatprep.subr.mxu0 0.0
    %1782 = vmatpush2.msra.mxu0 %v221
    %1783 = vmatprep.subr.mxu0 0.0
    %1784 = vmatpush2.msra.mxu0 %v220
    %1785 = vmatprep.subr.mxu0 0.0
    %1786 = vmatpush2.msra.mxu0 %v219
    %1787 = vmatprep.subr.mxu0 0.0
    %1788 = vmatpush2.msra.mxu0 %v218
    %1789 = vmatprep.subr.mxu0 0.0
    %1790 = vmatpush2.msra.mxu0 %v217
    %1791 = vmatprep.subr.mxu0 0.0
    %1792 = vmatpush2.msra.mxu0 %v216
    %1793 = vmatprep.subr.mxu0 0.0
    %1794 = vmatpush2.msra.mxu0 %v215
    %1795 = vmatprep.subr.mxu0 0.0
    %1796 = vmatpush2.msra.mxu0 %v214
    %1797 = vmatprep.mubr.f32.mxu0 %v1166
    %1798 = vmatmul.mubr.f32.gmra.mxu0 %v1158
    %v1799 = vpop.f32.mrf.mxu0
    %v1800 = vadd.f32 %v1730, %v1799
    %v1801 = vpop.f32.mrf.mxu0
    %1802 = vdwg.mxu0
    %1803 = vmatprep.subr.mxu0 0.0
    %1804 = vmatpush1.msra.mxu0 %v245
    %1805 = vmatprep.subr.mxu0 0.0
    %1806 = vmatpush1.msra.mxu0 %v244
    %1807 = vmatprep.subr.mxu0 0.0
    %1808 = vmatpush1.msra.mxu0 %v243
    %1809 = vmatprep.subr.mxu0 0.0
    %1810 = vmatpush1.msra.mxu0 %v242
    %1811 = vmatprep.subr.mxu0 0.0
    %1812 = vmatpush1.msra.mxu0 %v241
    %1813 = vmatprep.subr.mxu0 0.0
    %1814 = vmatpush1.msra.mxu0 %v240
    %1815 = vmatprep.subr.mxu0 0.0
    %1816 = vmatpush1.msra.mxu0 %v239
    %1817 = vmatprep.subr.mxu0 0.0
    %1818 = vmatpush1.msra.mxu0 %v238
    %1819 = vmatprep.subr.mxu0 0.0
    %1820 = vmatpush1.msra.mxu0 %v237
    %1821 = vmatprep.subr.mxu0 0.0
    %1822 = vmatpush1.msra.mxu0 %v236
    %1823 = vmatprep.subr.mxu0 0.0
    %1824 = vmatpush1.msra.mxu0 %v235
    %1825 = vmatprep.subr.mxu0 0.0
    %1826 = vmatpush1.msra.mxu0 %v234
    %1827 = vmatprep.subr.mxu0 0.0
    %1828 = vmatpush1.msra.mxu0 %v233
    %1829 = vmatprep.subr.mxu0 0.0
    %1830 = vmatpush1.msra.mxu0 %v232
    %1831 = vmatprep.subr.mxu0 0.0
    %1832 = vmatpush1.msra.mxu0 %v231
    %1833 = vmatprep.subr.mxu0 0.0
    %1834 = vmatpush1.msra.mxu0 %v230
    %1835 = vmatprep.subr.mxu0 0.0
    %1836 = vmatpush2.msra.mxu0 %v261
    %1837 = vmatprep.subr.mxu0 0.0
    %1838 = vmatpush2.msra.mxu0 %v260
    %1839 = vmatprep.subr.mxu0 0.0
    %1840 = vmatpush2.msra.mxu0 %v259
    %1841 = vmatprep.subr.mxu0 0.0
    %1842 = vmatpush2.msra.mxu0 %v258
    %1843 = vmatprep.subr.mxu0 0.0
    %1844 = vmatpush2.msra.mxu0 %v257
    %1845 = vmatprep.subr.mxu0 0.0
    %1846 = vmatpush2.msra.mxu0 %v256
    %1847 = vmatprep.subr.mxu0 0.0
    %1848 = vmatpush2.msra.mxu0 %v255
    %1849 = vmatprep.subr.mxu0 0.0
    %1850 = vmatpush2.msra.mxu0 %v254
    %1851 = vmatprep.subr.mxu0 0.0
    %1852 = vmatpush2.msra.mxu0 %v253
    %1853 = vmatprep.subr.mxu0 0.0
    %1854 = vmatpush2.msra.mxu0 %v252
    %1855 = vmatprep.subr.mxu0 0.0
    %1856 = vmatpush2.msra.mxu0 %v251
    %1857 = vmatprep.subr.mxu0 0.0
    %1858 = vmatpush2.msra.mxu0 %v250
    %1859 = vmatprep.subr.mxu0 0.0
    %1860 = vmatpush2.msra.mxu0 %v249
    %1861 = vmatprep.subr.mxu0 0.0
    %1862 = vmatpush2.msra.mxu0 %v248
    %1863 = vmatprep.subr.mxu0 0.0
    %1864 = vmatpush2.msra.mxu0 %v247
    %1865 = vmatprep.subr.mxu0 0.0
    %1866 = vmatpush2.msra.mxu0 %v246
    %1867 = vmatprep.mubr.f32.mxu0 %v1167
    %1868 = vmatmul.mubr.f32.gmra.mxu0 %v1165
    %v1869 = vpop.f32.mrf.mxu0
    %v1870 = vadd.f32 %v1800, %v1869
    %v1871 = vpop.f32.mrf.mxu0
    %1872 = vdwg.mxu0
    %1873 = vmatprep.subr.mxu0 0.0
    %1874 = vmatpush1.msra.mxu0 %v277
    %1875 = vmatprep.subr.mxu0 0.0
    %1876 = vmatpush1.msra.mxu0 %v276
    %1877 = vmatprep.subr.mxu0 0.0
    %1878 = vmatpush1.msra.mxu0 %v275
    %1879 = vmatprep.subr.mxu0 0.0
    %1880 = vmatpush1.msra.mxu0 %v274
    %1881 = vmatprep.subr.mxu0 0.0
    %1882 = vmatpush1.msra.mxu0 %v273
    %1883 = vmatprep.subr.mxu0 0.0
    %1884 = vmatpush1.msra.mxu0 %v272
    %1885 = vmatprep.subr.mxu0 0.0
    %1886 = vmatpush1.msra.mxu0 %v271
    %1887 = vmatprep.subr.mxu0 0.0
    %1888 = vmatpush1.msra.mxu0 %v270
    %1889 = vmatprep.subr.mxu0 0.0
    %1890 = vmatpush1.msra.mxu0 %v269
    %1891 = vmatprep.subr.mxu0 0.0
    %1892 = vmatpush1.msra.mxu0 %v268
    %1893 = vmatprep.subr.mxu0 0.0
    %1894 = vmatpush1.msra.mxu0 %v267
    %1895 = vmatprep.subr.mxu0 0.0
    %1896 = vmatpush1.msra.mxu0 %v266
    %1897 = vmatprep.subr.mxu0 0.0
    %1898 = vmatpush1.msra.mxu0 %v265
    %1899 = vmatprep.subr.mxu0 0.0
    %1900 = vmatpush1.msra.mxu0 %v264
    %1901 = vmatprep.subr.mxu0 0.0
    %1902 = vmatpush1.msra.mxu0 %v263
    %1903 = vmatprep.subr.mxu0 0.0
    %1904 = vmatpush1.msra.mxu0 %v262
    %1905 = vmatprep.subr.mxu0 0.0
    %1906 = vmatpush2.msra.mxu0 %v293
    %1907 = vmatprep.subr.mxu0 0.0
    %1908 = vmatpush2.msra.mxu0 %v292
    %1909 = vmatprep.subr.mxu0 0.0
    %1910 = vmatpush2.msra.mxu0 %v291
    %1911 = vmatprep.subr.mxu0 0.0
    %1912 = vmatpush2.msra.mxu0 %v290
    %1913 = vmatprep.subr.mxu0 0.0
    %1914 = vmatpush2.msra.mxu0 %v289
    %1915 = vmatprep.subr.mxu0 0.0
    %1916 = vmatpush2.msra.mxu0 %v288
    %1917 = vmatprep.subr.mxu0 0.0
    %1918 = vmatpush2.msra.mxu0 %v287
    %1919 = vmatprep.subr.mxu0 0.0
    %1920 = vmatpush2.msra.mxu0 %v286
    %1921 = vmatprep.subr.mxu0 0.0
    %1922 = vmatpush2.msra.mxu0 %v285
    %1923 = vmatprep.subr.mxu0 0.0
    %1924 = vmatpush2.msra.mxu0 %v284
    %1925 = vmatprep.subr.mxu0 0.0
    %1926 = vmatpush2.msra.mxu0 %v283
    %1927 = vmatprep.subr.mxu0 0.0
    %1928 = vmatpush2.msra.mxu0 %v282
    %1929 = vmatprep.subr.mxu0 0.0
    %1930 = vmatpush2.msra.mxu0 %v281
    %1931 = vmatprep.subr.mxu0 0.0
    %1932 = vmatpush2.msra.mxu0 %v280
    %1933 = vmatprep.subr.mxu0 0.0
    %1934 = vmatpush2.msra.mxu0 %v279
    %1935 = vmatprep.subr.mxu0 0.0
    %1936 = vmatpush2.msra.mxu0 %v278
    %1937 = vmatprep.mubr.f32.mxu0 %v1183
    %1938 = vmatmul.mubr.f32.gmra.mxu0 %v1175
    %v1939 = vpop.f32.mrf.mxu0
    %v1940 = vadd.f32 %v1870, %v1939
    %v1941 = vpop.f32.mrf.mxu0
    %1942 = vdwg.mxu0
    %1943 = vmatprep.subr.mxu0 0.0
    %1944 = vmatpush1.msra.mxu0 %v309
    %1945 = vmatprep.subr.mxu0 0.0
    %1946 = vmatpush1.msra.mxu0 %v308
    %1947 = vmatprep.subr.mxu0 0.0
    %1948 = vmatpush1.msra.mxu0 %v307
    %1949 = vmatprep.subr.mxu0 0.0
    %1950 = vmatpush1.msra.mxu0 %v306
    %1951 = vmatprep.subr.mxu0 0.0
    %1952 = vmatpush1.msra.mxu0 %v305
    %1953 = vmatprep.subr.mxu0 0.0
    %1954 = vmatpush1.msra.mxu0 %v304
    %1955 = vmatprep.subr.mxu0 0.0
    %1956 = vmatpush1.msra.mxu0 %v303
    %1957 = vmatprep.subr.mxu0 0.0
    %1958 = vmatpush1.msra.mxu0 %v302
    %1959 = vmatprep.subr.mxu0 0.0
    %1960 = vmatpush1.msra.mxu0 %v301
    %1961 = vmatprep.subr.mxu0 0.0
    %1962 = vmatpush1.msra.mxu0 %v300
    %1963 = vmatprep.subr.mxu0 0.0
    %1964 = vmatpush1.msra.mxu0 %v299
    %1965 = vmatprep.subr.mxu0 0.0
    %1966 = vmatpush1.msra.mxu0 %v298
    %1967 = vmatprep.subr.mxu0 0.0
    %1968 = vmatpush1.msra.mxu0 %v297
    %1969 = vmatprep.subr.mxu0 0.0
    %1970 = vmatpush1.msra.mxu0 %v296
    %1971 = vmatprep.subr.mxu0 0.0
    %1972 = vmatpush1.msra.mxu0 %v295
    %1973 = vmatprep.subr.mxu0 0.0
    %1974 = vmatpush1.msra.mxu0 %v294
    %1975 = vmatprep.subr.mxu0 0.0
    %1976 = vmatpush2.msra.mxu0 %v325
    %1977 = vmatprep.subr.mxu0 0.0
    %1978 = vmatpush2.msra.mxu0 %v324
    %1979 = vmatprep.subr.mxu0 0.0
    %1980 = vmatpush2.msra.mxu0 %v323
    %1981 = vmatprep.subr.mxu0 0.0
    %1982 = vmatpush2.msra.mxu0 %v322
    %1983 = vmatprep.subr.mxu0 0.0
    %1984 = vmatpush2.msra.mxu0 %v321
    %1985 = vmatprep.subr.mxu0 0.0
    %1986 = vmatpush2.msra.mxu0 %v320
    %1987 = vmatprep.subr.mxu0 0.0
    %1988 = vmatpush2.msra.mxu0 %v319
    %1989 = vmatprep.subr.mxu0 0.0
    %1990 = vmatpush2.msra.mxu0 %v318
    %1991 = vmatprep.subr.mxu0 0.0
    %1992 = vmatpush2.msra.mxu0 %v317
    %1993 = vmatprep.subr.mxu0 0.0
    %1994 = vmatpush2.msra.mxu0 %v316
    %1995 = vmatprep.subr.mxu0 0.0
    %1996 = vmatpush2.msra.mxu0 %v315
    %1997 = vmatprep.subr.mxu0 0.0
    %1998 = vmatpush2.msra.mxu0 %v314
    %1999 = vmatprep.subr.mxu0 0.0
    %2000 = vmatpush2.msra.mxu0 %v313
    %2001 = vmatprep.subr.mxu0 0.0
    %2002 = vmatpush2.msra.mxu0 %v312
    %2003 = vmatprep.subr.mxu0 0.0
    %2004 = vmatpush2.msra.mxu0 %v311
    %2005 = vmatprep.subr.mxu0 0.0
    %2006 = vmatpush2.msra.mxu0 %v310
    %2007 = vmatprep.mubr.f32.mxu0 %v1184
    %2008 = vmatmul.mubr.f32.gmra.mxu0 %v1182
    %v2009 = vpop.f32.mrf.mxu0
    %v2010 = vadd.f32 %v1940, %v2009
    %v2011 = vpop.f32.mrf.mxu0
    %2012 = vdwg.mxu0
    %2013 = vmatprep.subr.mxu0 0.0
    %2014 = vmatpush1.msra.mxu0 %v341
    %2015 = vmatprep.subr.mxu0 0.0
    %2016 = vmatpush1.msra.mxu0 %v340
    %2017 = vmatprep.subr.mxu0 0.0
    %2018 = vmatpush1.msra.mxu0 %v339
    %2019 = vmatprep.subr.mxu0 0.0
    %2020 = vmatpush1.msra.mxu0 %v338
    %2021 = vmatprep.subr.mxu0 0.0
    %2022 = vmatpush1.msra.mxu0 %v337
    %2023 = vmatprep.subr.mxu0 0.0
    %2024 = vmatpush1.msra.mxu0 %v336
    %2025 = vmatprep.subr.mxu0 0.0
    %2026 = vmatpush1.msra.mxu0 %v335
    %2027 = vmatprep.subr.mxu0 0.0
    %2028 = vmatpush1.msra.mxu0 %v334
    %2029 = vmatprep.subr.mxu0 0.0
    %2030 = vmatpush1.msra.mxu0 %v333
    %2031 = vmatprep.subr.mxu0 0.0
    %2032 = vmatpush1.msra.mxu0 %v332
    %2033 = vmatprep.subr.mxu0 0.0
    %2034 = vmatpush1.msra.mxu0 %v331
    %2035 = vmatprep.subr.mxu0 0.0
    %2036 = vmatpush1.msra.mxu0 %v330
    %2037 = vmatprep.subr.mxu0 0.0
    %2038 = vmatpush1.msra.mxu0 %v329
    %2039 = vmatprep.subr.mxu0 0.0
    %2040 = vmatpush1.msra.mxu0 %v328
    %2041 = vmatprep.subr.mxu0 0.0
    %2042 = vmatpush1.msra.mxu0 %v327
    %2043 = vmatprep.subr.mxu0 0.0
    %2044 = vmatpush1.msra.mxu0 %v326
    %2045 = vmatprep.subr.mxu0 0.0
    %2046 = vmatpush2.msra.mxu0 %v357
    %2047 = vmatprep.subr.mxu0 0.0
    %2048 = vmatpush2.msra.mxu0 %v356
    %2049 = vmatprep.subr.mxu0 0.0
    %2050 = vmatpush2.msra.mxu0 %v355
    %2051 = vmatprep.subr.mxu0 0.0
    %2052 = vmatpush2.msra.mxu0 %v354
    %2053 = vmatprep.subr.mxu0 0.0
    %2054 = vmatpush2.msra.mxu0 %v353
    %2055 = vmatprep.subr.mxu0 0.0
    %2056 = vmatpush2.msra.mxu0 %v352
    %2057 = vmatprep.subr.mxu0 0.0
    %2058 = vmatpush2.msra.mxu0 %v351
    %2059 = vmatprep.subr.mxu0 0.0
    %2060 = vmatpush2.msra.mxu0 %v350
    %2061 = vmatprep.subr.mxu0 0.0
    %2062 = vmatpush2.msra.mxu0 %v349
    %2063 = vmatprep.subr.mxu0 0.0
    %2064 = vmatpush2.msra.mxu0 %v348
    %2065 = vmatprep.subr.mxu0 0.0
    %2066 = vmatpush2.msra.mxu0 %v347
    %2067 = vmatprep.subr.mxu0 0.0
    %2068 = vmatpush2.msra.mxu0 %v346
    %2069 = vmatprep.subr.mxu0 0.0
    %2070 = vmatpush2.msra.mxu0 %v345
    %2071 = vmatprep.subr.mxu0 0.0
    %2072 = vmatpush2.msra.mxu0 %v344
    %2073 = vmatprep.subr.mxu0 0.0
    %2074 = vmatpush2.msra.mxu0 %v343
    %2075 = vmatprep.subr.mxu0 0.0
    %2076 = vmatpush2.msra.mxu0 %v342
    %2077 = vmatprep.mubr.f32.mxu0 %v1200
    %2078 = vmatmul.mubr.f32.gmra.mxu0 %v1192
    %v2079 = vpop.f32.mrf.mxu0
    %v2080 = vadd.f32 %v2010, %v2079
    %v2081 = vpop.f32.mrf.mxu0
    %2082 = vdwg.mxu0
    %2083 = vmatprep.subr.mxu0 0.0
    %2084 = vmatpush1.msra.mxu0 %v373
    %2085 = vmatprep.subr.mxu0 0.0
    %2086 = vmatpush1.msra.mxu0 %v372
    %2087 = vmatprep.subr.mxu0 0.0
    %2088 = vmatpush1.msra.mxu0 %v371
    %2089 = vmatprep.subr.mxu0 0.0
    %2090 = vmatpush1.msra.mxu0 %v370
    %2091 = vmatprep.subr.mxu0 0.0
    %2092 = vmatpush1.msra.mxu0 %v369
    %2093 = vmatprep.subr.mxu0 0.0
    %2094 = vmatpush1.msra.mxu0 %v368
    %2095 = vmatprep.subr.mxu0 0.0
    %2096 = vmatpush1.msra.mxu0 %v367
    %2097 = vmatprep.subr.mxu0 0.0
    %2098 = vmatpush1.msra.mxu0 %v366
    %2099 = vmatprep.subr.mxu0 0.0
    %2100 = vmatpush1.msra.mxu0 %v365
    %2101 = vmatprep.subr.mxu0 0.0
    %2102 = vmatpush1.msra.mxu0 %v364
    %2103 = vmatprep.subr.mxu0 0.0
    %2104 = vmatpush1.msra.mxu0 %v363
    %2105 = vmatprep.subr.mxu0 0.0
    %2106 = vmatpush1.msra.mxu0 %v362
    %2107 = vmatprep.subr.mxu0 0.0
    %2108 = vmatpush1.msra.mxu0 %v361
    %2109 = vmatprep.subr.mxu0 0.0
    %2110 = vmatpush1.msra.mxu0 %v360
    %2111 = vmatprep.subr.mxu0 0.0
    %2112 = vmatpush1.msra.mxu0 %v359
    %2113 = vmatprep.subr.mxu0 0.0
    %2114 = vmatpush1.msra.mxu0 %v358
    %2115 = vmatprep.subr.mxu0 0.0
    %2116 = vmatpush2.msra.mxu0 %v389
    %2117 = vmatprep.subr.mxu0 0.0
    %2118 = vmatpush2.msra.mxu0 %v388
    %2119 = vmatprep.subr.mxu0 0.0
    %2120 = vmatpush2.msra.mxu0 %v387
    %2121 = vmatprep.subr.mxu0 0.0
    %2122 = vmatpush2.msra.mxu0 %v386
    %2123 = vmatprep.subr.mxu0 0.0
    %2124 = vmatpush2.msra.mxu0 %v385
    %2125 = vmatprep.subr.mxu0 0.0
    %2126 = vmatpush2.msra.mxu0 %v384
    %2127 = vmatprep.subr.mxu0 0.0
    %2128 = vmatpush2.msra.mxu0 %v383
    %2129 = vmatprep.subr.mxu0 0.0
    %2130 = vmatpush2.msra.mxu0 %v382
    %2131 = vmatprep.subr.mxu0 0.0
    %2132 = vmatpush2.msra.mxu0 %v381
    %2133 = vmatprep.subr.mxu0 0.0
    %2134 = vmatpush2.msra.mxu0 %v380
    %2135 = vmatprep.subr.mxu0 0.0
    %2136 = vmatpush2.msra.mxu0 %v379
    %2137 = vmatprep.subr.mxu0 0.0
    %2138 = vmatpush2.msra.mxu0 %v378
    %2139 = vmatprep.subr.mxu0 0.0
    %2140 = vmatpush2.msra.mxu0 %v377
    %2141 = vmatprep.subr.mxu0 0.0
    %2142 = vmatpush2.msra.mxu0 %v376
    %2143 = vmatprep.subr.mxu0 0.0
    %2144 = vmatpush2.msra.mxu0 %v375
    %2145 = vmatprep.subr.mxu0 0.0
    %2146 = vmatpush2.msra.mxu0 %v374
    %2147 = vmatprep.mubr.f32.mxu0 %v1201
    %2148 = vmatmul.mubr.f32.gmra.mxu0 %v1199
    %v2149 = vpop.f32.mrf.mxu0
    %v2150 = vadd.f32 %v2080, %v2149
    %v2151 = vpop.f32.mrf.mxu0
    %2152 = vdwg.mxu0
    %2153 = vmatprep.subr.mxu0 0.0
    %2154 = vmatpush1.msra.mxu0 %v405
    %2155 = vmatprep.subr.mxu0 0.0
    %2156 = vmatpush1.msra.mxu0 %v404
    %2157 = vmatprep.subr.mxu0 0.0
    %2158 = vmatpush1.msra.mxu0 %v403
    %2159 = vmatprep.subr.mxu0 0.0
    %2160 = vmatpush1.msra.mxu0 %v402
    %2161 = vmatprep.subr.mxu0 0.0
    %2162 = vmatpush1.msra.mxu0 %v401
    %2163 = vmatprep.subr.mxu0 0.0
    %2164 = vmatpush1.msra.mxu0 %v400
    %2165 = vmatprep.subr.mxu0 0.0
    %2166 = vmatpush1.msra.mxu0 %v399
    %2167 = vmatprep.subr.mxu0 0.0
    %2168 = vmatpush1.msra.mxu0 %v398
    %2169 = vmatprep.subr.mxu0 0.0
    %2170 = vmatpush1.msra.mxu0 %v397
    %2171 = vmatprep.subr.mxu0 0.0
    %2172 = vmatpush1.msra.mxu0 %v396
    %2173 = vmatprep.subr.mxu0 0.0
    %2174 = vmatpush1.msra.mxu0 %v395
    %2175 = vmatprep.subr.mxu0 0.0
    %2176 = vmatpush1.msra.mxu0 %v394
    %2177 = vmatprep.subr.mxu0 0.0
    %2178 = vmatpush1.msra.mxu0 %v393
    %2179 = vmatprep.subr.mxu0 0.0
    %2180 = vmatpush1.msra.mxu0 %v392
    %2181 = vmatprep.subr.mxu0 0.0
    %2182 = vmatpush1.msra.mxu0 %v391
    %2183 = vmatprep.subr.mxu0 0.0
    %2184 = vmatpush1.msra.mxu0 %v390
    %2185 = vmatprep.subr.mxu0 0.0
    %2186 = vmatpush2.msra.mxu0 %v421
    %2187 = vmatprep.subr.mxu0 0.0
    %2188 = vmatpush2.msra.mxu0 %v420
    %2189 = vmatprep.subr.mxu0 0.0
    %2190 = vmatpush2.msra.mxu0 %v419
    %2191 = vmatprep.subr.mxu0 0.0
    %2192 = vmatpush2.msra.mxu0 %v418
    %2193 = vmatprep.subr.mxu0 0.0
    %2194 = vmatpush2.msra.mxu0 %v417
    %2195 = vmatprep.subr.mxu0 0.0
    %2196 = vmatpush2.msra.mxu0 %v416
    %2197 = vmatprep.subr.mxu0 0.0
    %2198 = vmatpush2.msra.mxu0 %v415
    %2199 = vmatprep.subr.mxu0 0.0
    %2200 = vmatpush2.msra.mxu0 %v414
    %2201 = vmatprep.subr.mxu0 0.0
    %2202 = vmatpush2.msra.mxu0 %v413
    %2203 = vmatprep.subr.mxu0 0.0
    %2204 = vmatpush2.msra.mxu0 %v412
    %2205 = vmatprep.subr.mxu0 0.0
    %2206 = vmatpush2.msra.mxu0 %v411
    %2207 = vmatprep.subr.mxu0 0.0
    %2208 = vmatpush2.msra.mxu0 %v410
    %2209 = vmatprep.subr.mxu0 0.0
    %2210 = vmatpush2.msra.mxu0 %v409
    %2211 = vmatprep.subr.mxu0 0.0
    %2212 = vmatpush2.msra.mxu0 %v408
    %2213 = vmatprep.subr.mxu0 0.0
    %2214 = vmatpush2.msra.mxu0 %v407
    %2215 = vmatprep.subr.mxu0 0.0
    %2216 = vmatpush2.msra.mxu0 %v406
    %2217 = vmatprep.mubr.f32.mxu0 %v1217
    %2218 = vmatmul.mubr.f32.gmra.mxu0 %v1209
    %v2219 = vpop.f32.mrf.mxu0
    %v2220 = vadd.f32 %v2150, %v2219
    %v2221 = vpop.f32.mrf.mxu0
    %2222 = vdwg.mxu0
    %2223 = vmatprep.subr.mxu0 0.0
    %2224 = vmatpush1.msra.mxu0 %v437
    %2225 = vmatprep.subr.mxu0 0.0
    %2226 = vmatpush1.msra.mxu0 %v436
    %2227 = vmatprep.subr.mxu0 0.0
    %2228 = vmatpush1.msra.mxu0 %v435
    %2229 = vmatprep.subr.mxu0 0.0
    %2230 = vmatpush1.msra.mxu0 %v434
    %2231 = vmatprep.subr.mxu0 0.0
    %2232 = vmatpush1.msra.mxu0 %v433
    %2233 = vmatprep.subr.mxu0 0.0
    %2234 = vmatpush1.msra.mxu0 %v432
    %2235 = vmatprep.subr.mxu0 0.0
    %2236 = vmatpush1.msra.mxu0 %v431
    %2237 = vmatprep.subr.mxu0 0.0
    %2238 = vmatpush1.msra.mxu0 %v430
    %2239 = vmatprep.subr.mxu0 0.0
    %2240 = vmatpush1.msra.mxu0 %v429
    %2241 = vmatprep.subr.mxu0 0.0
    %2242 = vmatpush1.msra.mxu0 %v428
    %2243 = vmatprep.subr.mxu0 0.0
    %2244 = vmatpush1.msra.mxu0 %v427
    %2245 = vmatprep.subr.mxu0 0.0
    %2246 = vmatpush1.msra.mxu0 %v426
    %2247 = vmatprep.subr.mxu0 0.0
    %2248 = vmatpush1.msra.mxu0 %v425
    %2249 = vmatprep.subr.mxu0 0.0
    %2250 = vmatpush1.msra.mxu0 %v424
    %2251 = vmatprep.subr.mxu0 0.0
    %2252 = vmatpush1.msra.mxu0 %v423
    %2253 = vmatprep.subr.mxu0 0.0
    %2254 = vmatpush1.msra.mxu0 %v422
    %2255 = vmatprep.subr.mxu0 0.0
    %2256 = vmatpush2.msra.mxu0 %v453
    %2257 = vmatprep.subr.mxu0 0.0
    %2258 = vmatpush2.msra.mxu0 %v452
    %2259 = vmatprep.subr.mxu0 0.0
    %2260 = vmatpush2.msra.mxu0 %v451
    %2261 = vmatprep.subr.mxu0 0.0
    %2262 = vmatpush2.msra.mxu0 %v450
    %2263 = vmatprep.subr.mxu0 0.0
    %2264 = vmatpush2.msra.mxu0 %v449
    %2265 = vmatprep.subr.mxu0 0.0
    %2266 = vmatpush2.msra.mxu0 %v448
    %2267 = vmatprep.subr.mxu0 0.0
    %2268 = vmatpush2.msra.mxu0 %v447
    %2269 = vmatprep.subr.mxu0 0.0
    %2270 = vmatpush2.msra.mxu0 %v446
    %2271 = vmatprep.subr.mxu0 0.0
    %2272 = vmatpush2.msra.mxu0 %v445
    %2273 = vmatprep.subr.mxu0 0.0
    %2274 = vmatpush2.msra.mxu0 %v444
    %2275 = vmatprep.subr.mxu0 0.0
    %2276 = vmatpush2.msra.mxu0 %v443
    %2277 = vmatprep.subr.mxu0 0.0
    %2278 = vmatpush2.msra.mxu0 %v442
    %2279 = vmatprep.subr.mxu0 0.0
    %2280 = vmatpush2.msra.mxu0 %v441
    %2281 = vmatprep.subr.mxu0 0.0
    %2282 = vmatpush2.msra.mxu0 %v440
    %2283 = vmatprep.subr.mxu0 0.0
    %2284 = vmatpush2.msra.mxu0 %v439
    %2285 = vmatprep.subr.mxu0 0.0
    %2286 = vmatpush2.msra.mxu0 %v438
    %2287 = vmatprep.mubr.f32.mxu0 %v1218
    %2288 = vmatmul.mubr.f32.gmra.mxu0 %v1216
    %v2289 = vpop.f32.mrf.mxu0
    %v2290 = vadd.f32 %v2220, %v2289
    %v2291 = vpop.f32.mrf.mxu0
    %2292 = vdwg.mxu0
    %2293 = vmatprep.subr.mxu0 0.0
    %2294 = vmatpush1.msra.mxu0 %v469
    %2295 = vmatprep.subr.mxu0 0.0
    %2296 = vmatpush1.msra.mxu0 %v468
    %2297 = vmatprep.subr.mxu0 0.0
    %2298 = vmatpush1.msra.mxu0 %v467
    %2299 = vmatprep.subr.mxu0 0.0
    %2300 = vmatpush1.msra.mxu0 %v466
    %2301 = vmatprep.subr.mxu0 0.0
    %2302 = vmatpush1.msra.mxu0 %v465
    %2303 = vmatprep.subr.mxu0 0.0
    %2304 = vmatpush1.msra.mxu0 %v464
    %2305 = vmatprep.subr.mxu0 0.0
    %2306 = vmatpush1.msra.mxu0 %v463
    %2307 = vmatprep.subr.mxu0 0.0
    %2308 = vmatpush1.msra.mxu0 %v462
    %2309 = vmatprep.subr.mxu0 0.0
    %2310 = vmatpush1.msra.mxu0 %v461
    %2311 = vmatprep.subr.mxu0 0.0
    %2312 = vmatpush1.msra.mxu0 %v460
    %2313 = vmatprep.subr.mxu0 0.0
    %2314 = vmatpush1.msra.mxu0 %v459
    %2315 = vmatprep.subr.mxu0 0.0
    %2316 = vmatpush1.msra.mxu0 %v458
    %2317 = vmatprep.subr.mxu0 0.0
    %2318 = vmatpush1.msra.mxu0 %v457
    %2319 = vmatprep.subr.mxu0 0.0
    %2320 = vmatpush1.msra.mxu0 %v456
    %2321 = vmatprep.subr.mxu0 0.0
    %2322 = vmatpush1.msra.mxu0 %v455
    %2323 = vmatprep.subr.mxu0 0.0
    %2324 = vmatpush1.msra.mxu0 %v454
    %2325 = vmatprep.subr.mxu0 0.0
    %2326 = vmatpush2.msra.mxu0 %v485
    %2327 = vmatprep.subr.mxu0 0.0
    %2328 = vmatpush2.msra.mxu0 %v484
    %2329 = vmatprep.subr.mxu0 0.0
    %2330 = vmatpush2.msra.mxu0 %v483
    %2331 = vmatprep.subr.mxu0 0.0
    %2332 = vmatpush2.msra.mxu0 %v482
    %2333 = vmatprep.subr.mxu0 0.0
    %2334 = vmatpush2.msra.mxu0 %v481
    %2335 = vmatprep.subr.mxu0 0.0
    %2336 = vmatpush2.msra.mxu0 %v480
    %2337 = vmatprep.subr.mxu0 0.0
    %2338 = vmatpush2.msra.mxu0 %v479
    %2339 = vmatprep.subr.mxu0 0.0
    %2340 = vmatpush2.msra.mxu0 %v478
    %2341 = vmatprep.subr.mxu0 0.0
    %2342 = vmatpush2.msra.mxu0 %v477
    %2343 = vmatprep.subr.mxu0 0.0
    %2344 = vmatpush2.msra.mxu0 %v476
    %2345 = vmatprep.subr.mxu0 0.0
    %2346 = vmatpush2.msra.mxu0 %v475
    %2347 = vmatprep.subr.mxu0 0.0
    %2348 = vmatpush2.msra.mxu0 %v474
    %2349 = vmatprep.subr.mxu0 0.0
    %2350 = vmatpush2.msra.mxu0 %v473
    %2351 = vmatprep.subr.mxu0 0.0
    %2352 = vmatpush2.msra.mxu0 %v472
    %2353 = vmatprep.subr.mxu0 0.0
    %2354 = vmatpush2.msra.mxu0 %v471
    %2355 = vmatprep.subr.mxu0 0.0
    %2356 = vmatpush2.msra.mxu0 %v470
    %2357 = vmatprep.mubr.f32.mxu0 %v1234
    %2358 = vmatmul.mubr.f32.gmra.mxu0 %v1226
    %v2359 = vpop.f32.mrf.mxu0
    %v2360 = vadd.f32 %v2290, %v2359
    %v2361 = vpop.f32.mrf.mxu0
    %2362 = vdwg.mxu0
    %2363 = vmatprep.subr.mxu0 0.0
    %2364 = vmatpush1.msra.mxu0 %v501
    %2365 = vmatprep.subr.mxu0 0.0
    %2366 = vmatpush1.msra.mxu0 %v500
    %2367 = vmatprep.subr.mxu0 0.0
    %2368 = vmatpush1.msra.mxu0 %v499
    %2369 = vmatprep.subr.mxu0 0.0
    %2370 = vmatpush1.msra.mxu0 %v498
    %2371 = vmatprep.subr.mxu0 0.0
    %2372 = vmatpush1.msra.mxu0 %v497
    %2373 = vmatprep.subr.mxu0 0.0
    %2374 = vmatpush1.msra.mxu0 %v496
    %2375 = vmatprep.subr.mxu0 0.0
    %2376 = vmatpush1.msra.mxu0 %v495
    %2377 = vmatprep.subr.mxu0 0.0
    %2378 = vmatpush1.msra.mxu0 %v494
    %2379 = vmatprep.subr.mxu0 0.0
    %2380 = vmatpush1.msra.mxu0 %v493
    %2381 = vmatprep.subr.mxu0 0.0
    %2382 = vmatpush1.msra.mxu0 %v492
    %2383 = vmatprep.subr.mxu0 0.0
    %2384 = vmatpush1.msra.mxu0 %v491
    %2385 = vmatprep.subr.mxu0 0.0
    %2386 = vmatpush1.msra.mxu0 %v490
    %2387 = vmatprep.subr.mxu0 0.0
    %2388 = vmatpush1.msra.mxu0 %v489
    %2389 = vmatprep.subr.mxu0 0.0
    %2390 = vmatpush1.msra.mxu0 %v488
    %2391 = vmatprep.subr.mxu0 0.0
    %2392 = vmatpush1.msra.mxu0 %v487
    %2393 = vmatprep.subr.mxu0 0.0
    %2394 = vmatpush1.msra.mxu0 %v486
    %2395 = vmatprep.subr.mxu0 0.0
    %2396 = vmatpush2.msra.mxu0 %v517
    %2397 = vmatprep.subr.mxu0 0.0
    %2398 = vmatpush2.msra.mxu0 %v516
    %2399 = vmatprep.subr.mxu0 0.0
    %2400 = vmatpush2.msra.mxu0 %v515
    %2401 = vmatprep.subr.mxu0 0.0
    %2402 = vmatpush2.msra.mxu0 %v514
    %2403 = vmatprep.subr.mxu0 0.0
    %2404 = vmatpush2.msra.mxu0 %v513
    %2405 = vmatprep.subr.mxu0 0.0
    %2406 = vmatpush2.msra.mxu0 %v512
    %2407 = vmatprep.subr.mxu0 0.0
    %2408 = vmatpush2.msra.mxu0 %v511
    %2409 = vmatprep.subr.mxu0 0.0
    %2410 = vmatpush2.msra.mxu0 %v510
    %2411 = vmatprep.subr.mxu0 0.0
    %2412 = vmatpush2.msra.mxu0 %v509
    %2413 = vmatprep.subr.mxu0 0.0
    %2414 = vmatpush2.msra.mxu0 %v508
    %2415 = vmatprep.subr.mxu0 0.0
    %2416 = vmatpush2.msra.mxu0 %v507
    %2417 = vmatprep.subr.mxu0 0.0
    %2418 = vmatpush2.msra.mxu0 %v506
    %2419 = vmatprep.subr.mxu0 0.0
    %2420 = vmatpush2.msra.mxu0 %v505
    %2421 = vmatprep.subr.mxu0 0.0
    %2422 = vmatpush2.msra.mxu0 %v504
    %2423 = vmatprep.subr.mxu0 0.0
    %2424 = vmatpush2.msra.mxu0 %v503
    %2425 = vmatprep.subr.mxu0 0.0
    %2426 = vmatpush2.msra.mxu0 %v502
    %2427 = vmatprep.mubr.f32.mxu0 %v1235
    %2428 = vmatmul.mubr.f32.gmra.mxu0 %v1233
    %v2429 = vpop.f32.mrf.mxu0
    %v2430 = vadd.f32 %v2360, %v2429
    %v2431 = vpop.f32.mrf.mxu0
    %2432 = vdwg.mxu0
    %2433 = vmatprep.subr.mxu0 0.0
    %2434 = vmatpush1.msra.mxu0 %v533
    %2435 = vmatprep.subr.mxu0 0.0
    %2436 = vmatpush1.msra.mxu0 %v532
    %2437 = vmatprep.subr.mxu0 0.0
    %2438 = vmatpush1.msra.mxu0 %v531
    %2439 = vmatprep.subr.mxu0 0.0
    %2440 = vmatpush1.msra.mxu0 %v530
    %2441 = vmatprep.subr.mxu0 0.0
    %2442 = vmatpush1.msra.mxu0 %v529
    %2443 = vmatprep.subr.mxu0 0.0
    %2444 = vmatpush1.msra.mxu0 %v528
    %2445 = vmatprep.subr.mxu0 0.0
    %2446 = vmatpush1.msra.mxu0 %v527
    %2447 = vmatprep.subr.mxu0 0.0
    %2448 = vmatpush1.msra.mxu0 %v526
    %2449 = vmatprep.subr.mxu0 0.0
    %2450 = vmatpush1.msra.mxu0 %v525
    %2451 = vmatprep.subr.mxu0 0.0
    %2452 = vmatpush1.msra.mxu0 %v524
    %2453 = vmatprep.subr.mxu0 0.0
    %2454 = vmatpush1.msra.mxu0 %v523
    %2455 = vmatprep.subr.mxu0 0.0
    %2456 = vmatpush1.msra.mxu0 %v522
    %2457 = vmatprep.subr.mxu0 0.0
    %2458 = vmatpush1.msra.mxu0 %v521
    %2459 = vmatprep.subr.mxu0 0.0
    %2460 = vmatpush1.msra.mxu0 %v520
    %2461 = vmatprep.subr.mxu0 0.0
    %2462 = vmatpush1.msra.mxu0 %v519
    %2463 = vmatprep.subr.mxu0 0.0
    %2464 = vmatpush1.msra.mxu0 %v518
    %2465 = vmatprep.subr.mxu0 0.0
    %2466 = vmatpush2.msra.mxu0 %v549
    %2467 = vmatprep.subr.mxu0 0.0
    %2468 = vmatpush2.msra.mxu0 %v548
    %2469 = vmatprep.subr.mxu0 0.0
    %2470 = vmatpush2.msra.mxu0 %v547
    %2471 = vmatprep.subr.mxu0 0.0
    %2472 = vmatpush2.msra.mxu0 %v546
    %2473 = vmatprep.subr.mxu0 0.0
    %2474 = vmatpush2.msra.mxu0 %v545
    %2475 = vmatprep.subr.mxu0 0.0
    %2476 = vmatpush2.msra.mxu0 %v544
    %2477 = vmatprep.subr.mxu0 0.0
    %2478 = vmatpush2.msra.mxu0 %v543
    %2479 = vmatprep.subr.mxu0 0.0
    %2480 = vmatpush2.msra.mxu0 %v542
    %2481 = vmatprep.subr.mxu0 0.0
    %2482 = vmatpush2.msra.mxu0 %v541
    %2483 = vmatprep.subr.mxu0 0.0
    %2484 = vmatpush2.msra.mxu0 %v540
    %2485 = vmatprep.subr.mxu0 0.0
    %2486 = vmatpush2.msra.mxu0 %v539
    %2487 = vmatprep.subr.mxu0 0.0
    %2488 = vmatpush2.msra.mxu0 %v538
    %2489 = vmatprep.subr.mxu0 0.0
    %2490 = vmatpush2.msra.mxu0 %v537
    %2491 = vmatprep.subr.mxu0 0.0
    %2492 = vmatpush2.msra.mxu0 %v536
    %2493 = vmatprep.subr.mxu0 0.0
    %2494 = vmatpush2.msra.mxu0 %v535
    %2495 = vmatprep.subr.mxu0 0.0
    %2496 = vmatpush2.msra.mxu0 %v534
    %2497 = vmatprep.mubr.f32.mxu0 %v1251
    %2498 = vmatmul.mubr.f32.gmra.mxu0 %v1243
    %v2499 = vpop.f32.mrf.mxu0
    %v2500 = vadd.f32 %v2430, %v2499
    %v2501 = vpop.f32.mrf.mxu0
    %2502 = vdwg.mxu0
    %2503 = vmatprep.subr.mxu0 0.0
    %2504 = vmatpush1.msra.mxu0 %v565
    %2505 = vmatprep.subr.mxu0 0.0
    %2506 = vmatpush1.msra.mxu0 %v564
    %2507 = vmatprep.subr.mxu0 0.0
    %2508 = vmatpush1.msra.mxu0 %v563
    %2509 = vmatprep.subr.mxu0 0.0
    %2510 = vmatpush1.msra.mxu0 %v562
    %2511 = vmatprep.subr.mxu0 0.0
    %2512 = vmatpush1.msra.mxu0 %v561
    %2513 = vmatprep.subr.mxu0 0.0
    %2514 = vmatpush1.msra.mxu0 %v560
    %2515 = vmatprep.subr.mxu0 0.0
    %2516 = vmatpush1.msra.mxu0 %v559
    %2517 = vmatprep.subr.mxu0 0.0
    %2518 = vmatpush1.msra.mxu0 %v558
    %2519 = vmatprep.subr.mxu0 0.0
    %2520 = vmatpush1.msra.mxu0 %v557
    %2521 = vmatprep.subr.mxu0 0.0
    %2522 = vmatpush1.msra.mxu0 %v556
    %2523 = vmatprep.subr.mxu0 0.0
    %2524 = vmatpush1.msra.mxu0 %v555
    %2525 = vmatprep.subr.mxu0 0.0
    %2526 = vmatpush1.msra.mxu0 %v554
    %2527 = vmatprep.subr.mxu0 0.0
    %2528 = vmatpush1.msra.mxu0 %v553
    %2529 = vmatprep.subr.mxu0 0.0
    %2530 = vmatpush1.msra.mxu0 %v552
    %2531 = vmatprep.subr.mxu0 0.0
    %2532 = vmatpush1.msra.mxu0 %v551
    %2533 = vmatprep.subr.mxu0 0.0
    %2534 = vmatpush1.msra.mxu0 %v550
    %2535 = vmatprep.subr.mxu0 0.0
    %2536 = vmatpush2.msra.mxu0 %v581
    %2537 = vmatprep.subr.mxu0 0.0
    %2538 = vmatpush2.msra.mxu0 %v580
    %2539 = vmatprep.subr.mxu0 0.0
    %2540 = vmatpush2.msra.mxu0 %v579
    %2541 = vmatprep.subr.mxu0 0.0
    %2542 = vmatpush2.msra.mxu0 %v578
    %2543 = vmatprep.subr.mxu0 0.0
    %2544 = vmatpush2.msra.mxu0 %v577
    %2545 = vmatprep.subr.mxu0 0.0
    %2546 = vmatpush2.msra.mxu0 %v576
    %2547 = vmatprep.subr.mxu0 0.0
    %2548 = vmatpush2.msra.mxu0 %v575
    %2549 = vmatprep.subr.mxu0 0.0
    %2550 = vmatpush2.msra.mxu0 %v574
    %2551 = vmatprep.subr.mxu0 0.0
    %2552 = vmatpush2.msra.mxu0 %v573
    %2553 = vmatprep.subr.mxu0 0.0
    %2554 = vmatpush2.msra.mxu0 %v572
    %2555 = vmatprep.subr.mxu0 0.0
    %2556 = vmatpush2.msra.mxu0 %v571
    %2557 = vmatprep.subr.mxu0 0.0
    %2558 = vmatpush2.msra.mxu0 %v570
    %2559 = vmatprep.subr.mxu0 0.0
    %2560 = vmatpush2.msra.mxu0 %v569
    %2561 = vmatprep.subr.mxu0 0.0
    %2562 = vmatpush2.msra.mxu0 %v568
    %2563 = vmatprep.subr.mxu0 0.0
    %2564 = vmatpush2.msra.mxu0 %v567
    %2565 = vmatprep.subr.mxu0 0.0
    %2566 = vmatpush2.msra.mxu0 %v566
    %2567 = vmatprep.mubr.f32.mxu0 %v1252
    %2568 = vmatmul.mubr.f32.gmra.mxu0 %v1250
    %v2569 = vpop.f32.mrf.mxu0
    %v2570 = vadd.f32 %v2500, %v2569
    %v2571 = vpop.f32.mrf.mxu0
    %2572 = vdwg.mxu0
    %2573 = vmatprep.subr.mxu0 0.0
    %2574 = vmatpush1.msra.mxu0 %v597
    %2575 = vmatprep.subr.mxu0 0.0
    %2576 = vmatpush1.msra.mxu0 %v596
    %2577 = vmatprep.subr.mxu0 0.0
    %2578 = vmatpush1.msra.mxu0 %v595
    %2579 = vmatprep.subr.mxu0 0.0
    %2580 = vmatpush1.msra.mxu0 %v594
    %2581 = vmatprep.subr.mxu0 0.0
    %2582 = vmatpush1.msra.mxu0 %v593
    %2583 = vmatprep.subr.mxu0 0.0
    %2584 = vmatpush1.msra.mxu0 %v592
    %2585 = vmatprep.subr.mxu0 0.0
    %2586 = vmatpush1.msra.mxu0 %v591
    %2587 = vmatprep.subr.mxu0 0.0
    %2588 = vmatpush1.msra.mxu0 %v590
    %2589 = vmatprep.subr.mxu0 0.0
    %2590 = vmatpush1.msra.mxu0 %v589
    %2591 = vmatprep.subr.mxu0 0.0
    %2592 = vmatpush1.msra.mxu0 %v588
    %2593 = vmatprep.subr.mxu0 0.0
    %2594 = vmatpush1.msra.mxu0 %v587
    %2595 = vmatprep.subr.mxu0 0.0
    %2596 = vmatpush1.msra.mxu0 %v586
    %2597 = vmatprep.subr.mxu0 0.0
    %2598 = vmatpush1.msra.mxu0 %v585
    %2599 = vmatprep.subr.mxu0 0.0
    %2600 = vmatpush1.msra.mxu0 %v584
    %2601 = vmatprep.subr.mxu0 0.0
    %2602 = vmatpush1.msra.mxu0 %v583
    %2603 = vmatprep.subr.mxu0 0.0
    %2604 = vmatpush1.msra.mxu0 %v582
    %2605 = vmatprep.subr.mxu0 0.0
    %2606 = vmatpush2.msra.mxu0 %v613
    %2607 = vmatprep.subr.mxu0 0.0
    %2608 = vmatpush2.msra.mxu0 %v612
    %2609 = vmatprep.subr.mxu0 0.0
    %2610 = vmatpush2.msra.mxu0 %v611
    %2611 = vmatprep.subr.mxu0 0.0
    %2612 = vmatpush2.msra.mxu0 %v610
    %2613 = vmatprep.subr.mxu0 0.0
    %2614 = vmatpush2.msra.mxu0 %v609
    %2615 = vmatprep.subr.mxu0 0.0
    %2616 = vmatpush2.msra.mxu0 %v608
    %2617 = vmatprep.subr.mxu0 0.0
    %2618 = vmatpush2.msra.mxu0 %v607
    %2619 = vmatprep.subr.mxu0 0.0
    %2620 = vmatpush2.msra.mxu0 %v606
    %2621 = vmatprep.subr.mxu0 0.0
    %2622 = vmatpush2.msra.mxu0 %v605
    %2623 = vmatprep.subr.mxu0 0.0
    %2624 = vmatpush2.msra.mxu0 %v604
    %2625 = vmatprep.subr.mxu0 0.0
    %2626 = vmatpush2.msra.mxu0 %v603
    %2627 = vmatprep.subr.mxu0 0.0
    %2628 = vmatpush2.msra.mxu0 %v602
    %2629 = vmatprep.subr.mxu0 0.0
    %2630 = vmatpush2.msra.mxu0 %v601
    %2631 = vmatprep.subr.mxu0 0.0
    %2632 = vmatpush2.msra.mxu0 %v600
    %2633 = vmatprep.subr.mxu0 0.0
    %2634 = vmatpush2.msra.mxu0 %v599
    %2635 = vmatprep.subr.mxu0 0.0
    %2636 = vmatpush2.msra.mxu0 %v598
    %2637 = vmatprep.mubr.f32.mxu0 %v1268
    %2638 = vmatmul.mubr.f32.gmra.mxu0 %v1260
    %v2639 = vpop.f32.mrf.mxu0
    %v2640 = vadd.f32 %v2570, %v2639
    %v2641 = vpop.f32.mrf.mxu0
    %2642 = vdwg.mxu0
    %2643 = vmatprep.subr.mxu0 0.0
    %2644 = vmatpush1.msra.mxu0 %v629
    %2645 = vmatprep.subr.mxu0 0.0
    %2646 = vmatpush1.msra.mxu0 %v628
    %2647 = vmatprep.subr.mxu0 0.0
    %2648 = vmatpush1.msra.mxu0 %v627
    %2649 = vmatprep.subr.mxu0 0.0
    %2650 = vmatpush1.msra.mxu0 %v626
    %2651 = vmatprep.subr.mxu0 0.0
    %2652 = vmatpush1.msra.mxu0 %v625
    %2653 = vmatprep.subr.mxu0 0.0
    %2654 = vmatpush1.msra.mxu0 %v624
    %2655 = vmatprep.subr.mxu0 0.0
    %2656 = vmatpush1.msra.mxu0 %v623
    %2657 = vmatprep.subr.mxu0 0.0
    %2658 = vmatpush1.msra.mxu0 %v622
    %2659 = vmatprep.subr.mxu0 0.0
    %2660 = vmatpush1.msra.mxu0 %v621
    %2661 = vmatprep.subr.mxu0 0.0
    %2662 = vmatpush1.msra.mxu0 %v620
    %2663 = vmatprep.subr.mxu0 0.0
    %2664 = vmatpush1.msra.mxu0 %v619
    %2665 = vmatprep.subr.mxu0 0.0
    %2666 = vmatpush1.msra.mxu0 %v618
    %2667 = vmatprep.subr.mxu0 0.0
    %2668 = vmatpush1.msra.mxu0 %v617
    %2669 = vmatprep.subr.mxu0 0.0
    %2670 = vmatpush1.msra.mxu0 %v616
    %2671 = vmatprep.subr.mxu0 0.0
    %2672 = vmatpush1.msra.mxu0 %v615
    %2673 = vmatprep.subr.mxu0 0.0
    %2674 = vmatpush1.msra.mxu0 %v614
    %2675 = vmatprep.subr.mxu0 0.0
    %2676 = vmatpush2.msra.mxu0 %v645
    %2677 = vmatprep.subr.mxu0 0.0
    %2678 = vmatpush2.msra.mxu0 %v644
    %2679 = vmatprep.subr.mxu0 0.0
    %2680 = vmatpush2.msra.mxu0 %v643
    %2681 = vmatprep.subr.mxu0 0.0
    %2682 = vmatpush2.msra.mxu0 %v642
    %2683 = vmatprep.subr.mxu0 0.0
    %2684 = vmatpush2.msra.mxu0 %v641
    %2685 = vmatprep.subr.mxu0 0.0
    %2686 = vmatpush2.msra.mxu0 %v640
    %2687 = vmatprep.subr.mxu0 0.0
    %2688 = vmatpush2.msra.mxu0 %v639
    %2689 = vmatprep.subr.mxu0 0.0
    %2690 = vmatpush2.msra.mxu0 %v638
    %2691 = vmatprep.subr.mxu0 0.0
    %2692 = vmatpush2.msra.mxu0 %v637
    %2693 = vmatprep.subr.mxu0 0.0
    %2694 = vmatpush2.msra.mxu0 %v636
    %2695 = vmatprep.subr.mxu0 0.0
    %2696 = vmatpush2.msra.mxu0 %v635
    %2697 = vmatprep.subr.mxu0 0.0
    %2698 = vmatpush2.msra.mxu0 %v634
    %2699 = vmatprep.subr.mxu0 0.0
    %2700 = vmatpush2.msra.mxu0 %v633
    %2701 = vmatprep.subr.mxu0 0.0
    %2702 = vmatpush2.msra.mxu0 %v632
    %2703 = vmatprep.subr.mxu0 0.0
    %2704 = vmatpush2.msra.mxu0 %v631
    %2705 = vmatprep.subr.mxu0 0.0
    %2706 = vmatpush2.msra.mxu0 %v630
    %2707 = vmatprep.mubr.f32.mxu0 %v1269
    %2708 = vmatmul.mubr.f32.gmra.mxu0 %v1267
    %v2709 = vpop.f32.mrf.mxu0
    %v2710 = vadd.f32 %v2640, %v2709
    %v2711 = vpop.f32.mrf.mxu0
    %2712 = vdwg.mxu0
    %2713 = vmatprep.subr.mxu0 0.0
    %2714 = vmatpush1.msra.mxu0 %v661
    %2715 = vmatprep.subr.mxu0 0.0
    %2716 = vmatpush1.msra.mxu0 %v660
    %2717 = vmatprep.subr.mxu0 0.0
    %2718 = vmatpush1.msra.mxu0 %v659
    %2719 = vmatprep.subr.mxu0 0.0
    %2720 = vmatpush1.msra.mxu0 %v658
    %2721 = vmatprep.subr.mxu0 0.0
    %2722 = vmatpush1.msra.mxu0 %v657
    %2723 = vmatprep.subr.mxu0 0.0
    %2724 = vmatpush1.msra.mxu0 %v656
    %2725 = vmatprep.subr.mxu0 0.0
    %2726 = vmatpush1.msra.mxu0 %v655
    %2727 = vmatprep.subr.mxu0 0.0
    %2728 = vmatpush1.msra.mxu0 %v654
    %2729 = vmatprep.subr.mxu0 0.0
    %2730 = vmatpush1.msra.mxu0 %v653
    %2731 = vmatprep.subr.mxu0 0.0
    %2732 = vmatpush1.msra.mxu0 %v652
    %2733 = vmatprep.subr.mxu0 0.0
    %2734 = vmatpush1.msra.mxu0 %v651
    %2735 = vmatprep.subr.mxu0 0.0
    %2736 = vmatpush1.msra.mxu0 %v650
    %2737 = vmatprep.subr.mxu0 0.0
    %2738 = vmatpush1.msra.mxu0 %v649
    %2739 = vmatprep.subr.mxu0 0.0
    %2740 = vmatpush1.msra.mxu0 %v648
    %2741 = vmatprep.subr.mxu0 0.0
    %2742 = vmatpush1.msra.mxu0 %v647
    %2743 = vmatprep.subr.mxu0 0.0
    %2744 = vmatpush1.msra.mxu0 %v646
    %2745 = vmatprep.subr.mxu0 0.0
    %2746 = vmatpush2.msra.mxu0 %v677
    %2747 = vmatprep.subr.mxu0 0.0
    %2748 = vmatpush2.msra.mxu0 %v676
    %2749 = vmatprep.subr.mxu0 0.0
    %2750 = vmatpush2.msra.mxu0 %v675
    %2751 = vmatprep.subr.mxu0 0.0
    %2752 = vmatpush2.msra.mxu0 %v674
    %2753 = vmatprep.subr.mxu0 0.0
    %2754 = vmatpush2.msra.mxu0 %v673
    %2755 = vmatprep.subr.mxu0 0.0
    %2756 = vmatpush2.msra.mxu0 %v672
    %2757 = vmatprep.subr.mxu0 0.0
    %2758 = vmatpush2.msra.mxu0 %v671
    %2759 = vmatprep.subr.mxu0 0.0
    %2760 = vmatpush2.msra.mxu0 %v670
    %2761 = vmatprep.subr.mxu0 0.0
    %2762 = vmatpush2.msra.mxu0 %v669
    %2763 = vmatprep.subr.mxu0 0.0
    %2764 = vmatpush2.msra.mxu0 %v668
    %2765 = vmatprep.subr.mxu0 0.0
    %2766 = vmatpush2.msra.mxu0 %v667
    %2767 = vmatprep.subr.mxu0 0.0
    %2768 = vmatpush2.msra.mxu0 %v666
    %2769 = vmatprep.subr.mxu0 0.0
    %2770 = vmatpush2.msra.mxu0 %v665
    %2771 = vmatprep.subr.mxu0 0.0
    %2772 = vmatpush2.msra.mxu0 %v664
    %2773 = vmatprep.subr.mxu0 0.0
    %2774 = vmatpush2.msra.mxu0 %v663
    %2775 = vmatprep.subr.mxu0 0.0
    %2776 = vmatpush2.msra.mxu0 %v662
    %2777 = vmatprep.mubr.f32.mxu0 %v1285
    %2778 = vmatmul.mubr.f32.gmra.mxu0 %v1277
    %v2779 = vpop.f32.mrf.mxu0
    %v2780 = vadd.f32 %v2710, %v2779
    %v2781 = vpop.f32.mrf.mxu0
    %2782 = vdwg.mxu0
    %2783 = vmatprep.subr.mxu0 0.0
    %2784 = vmatpush1.msra.mxu0 %v693
    %2785 = vmatprep.subr.mxu0 0.0
    %2786 = vmatpush1.msra.mxu0 %v692
    %2787 = vmatprep.subr.mxu0 0.0
    %2788 = vmatpush1.msra.mxu0 %v691
    %2789 = vmatprep.subr.mxu0 0.0
    %2790 = vmatpush1.msra.mxu0 %v690
    %2791 = vmatprep.subr.mxu0 0.0
    %2792 = vmatpush1.msra.mxu0 %v689
    %2793 = vmatprep.subr.mxu0 0.0
    %2794 = vmatpush1.msra.mxu0 %v688
    %2795 = vmatprep.subr.mxu0 0.0
    %2796 = vmatpush1.msra.mxu0 %v687
    %2797 = vmatprep.subr.mxu0 0.0
    %2798 = vmatpush1.msra.mxu0 %v686
    %2799 = vmatprep.subr.mxu0 0.0
    %2800 = vmatpush1.msra.mxu0 %v685
    %2801 = vmatprep.subr.mxu0 0.0
    %2802 = vmatpush1.msra.mxu0 %v684
    %2803 = vmatprep.subr.mxu0 0.0
    %2804 = vmatpush1.msra.mxu0 %v683
    %2805 = vmatprep.subr.mxu0 0.0
    %2806 = vmatpush1.msra.mxu0 %v682
    %2807 = vmatprep.subr.mxu0 0.0
    %2808 = vmatpush1.msra.mxu0 %v681
    %2809 = vmatprep.subr.mxu0 0.0
    %2810 = vmatpush1.msra.mxu0 %v680
    %2811 = vmatprep.subr.mxu0 0.0
    %2812 = vmatpush1.msra.mxu0 %v679
    %2813 = vmatprep.subr.mxu0 0.0
    %2814 = vmatpush1.msra.mxu0 %v678
    %2815 = vmatprep.subr.mxu0 0.0
    %2816 = vmatpush2.msra.mxu0 %v709
    %2817 = vmatprep.subr.mxu0 0.0
    %2818 = vmatpush2.msra.mxu0 %v708
    %2819 = vmatprep.subr.mxu0 0.0
    %2820 = vmatpush2.msra.mxu0 %v707
    %2821 = vmatprep.subr.mxu0 0.0
    %2822 = vmatpush2.msra.mxu0 %v706
    %2823 = vmatprep.subr.mxu0 0.0
    %2824 = vmatpush2.msra.mxu0 %v705
    %2825 = vmatprep.subr.mxu0 0.0
    %2826 = vmatpush2.msra.mxu0 %v704
    %2827 = vmatprep.subr.mxu0 0.0
    %2828 = vmatpush2.msra.mxu0 %v703
    %2829 = vmatprep.subr.mxu0 0.0
    %2830 = vmatpush2.msra.mxu0 %v702
    %2831 = vmatprep.subr.mxu0 0.0
    %2832 = vmatpush2.msra.mxu0 %v701
    %2833 = vmatprep.subr.mxu0 0.0
    %2834 = vmatpush2.msra.mxu0 %v700
    %2835 = vmatprep.subr.mxu0 0.0
    %2836 = vmatpush2.msra.mxu0 %v699
    %2837 = vmatprep.subr.mxu0 0.0
    %2838 = vmatpush2.msra.mxu0 %v698
    %2839 = vmatprep.subr.mxu0 0.0
    %2840 = vmatpush2.msra.mxu0 %v697
    %2841 = vmatprep.subr.mxu0 0.0
    %2842 = vmatpush2.msra.mxu0 %v696
    %2843 = vmatprep.subr.mxu0 0.0
    %2844 = vmatpush2.msra.mxu0 %v695
    %2845 = vmatprep.subr.mxu0 0.0
    %2846 = vmatpush2.msra.mxu0 %v694
    %2847 = vmatprep.mubr.f32.mxu0 %v1286
    %2848 = vmatmul.mubr.f32.gmra.mxu0 %v1284
    %v2849 = vpop.f32.mrf.mxu0
    %v2850 = vadd.f32 %v2780, %v2849
    %v2851 = vpop.f32.mrf.mxu0
    %2852 = vdwg.mxu0
    %2853 = vmatprep.subr.mxu0 0.0
    %2854 = vmatpush1.msra.mxu0 %v725
    %2855 = vmatprep.subr.mxu0 0.0
    %2856 = vmatpush1.msra.mxu0 %v724
    %2857 = vmatprep.subr.mxu0 0.0
    %2858 = vmatpush1.msra.mxu0 %v723
    %2859 = vmatprep.subr.mxu0 0.0
    %2860 = vmatpush1.msra.mxu0 %v722
    %2861 = vmatprep.subr.mxu0 0.0
    %2862 = vmatpush1.msra.mxu0 %v721
    %2863 = vmatprep.subr.mxu0 0.0
    %2864 = vmatpush1.msra.mxu0 %v720
    %2865 = vmatprep.subr.mxu0 0.0
    %2866 = vmatpush1.msra.mxu0 %v719
    %2867 = vmatprep.subr.mxu0 0.0
    %2868 = vmatpush1.msra.mxu0 %v718
    %2869 = vmatprep.subr.mxu0 0.0
    %2870 = vmatpush1.msra.mxu0 %v717
    %2871 = vmatprep.subr.mxu0 0.0
    %2872 = vmatpush1.msra.mxu0 %v716
    %2873 = vmatprep.subr.mxu0 0.0
    %2874 = vmatpush1.msra.mxu0 %v715
    %2875 = vmatprep.subr.mxu0 0.0
    %2876 = vmatpush1.msra.mxu0 %v714
    %2877 = vmatprep.subr.mxu0 0.0
    %2878 = vmatpush1.msra.mxu0 %v713
    %2879 = vmatprep.subr.mxu0 0.0
    %2880 = vmatpush1.msra.mxu0 %v712
    %2881 = vmatprep.subr.mxu0 0.0
    %2882 = vmatpush1.msra.mxu0 %v711
    %2883 = vmatprep.subr.mxu0 0.0
    %2884 = vmatpush1.msra.mxu0 %v710
    %2885 = vmatprep.subr.mxu0 0.0
    %2886 = vmatpush2.msra.mxu0 %v741
    %2887 = vmatprep.subr.mxu0 0.0
    %2888 = vmatpush2.msra.mxu0 %v740
    %2889 = vmatprep.subr.mxu0 0.0
    %2890 = vmatpush2.msra.mxu0 %v739
    %2891 = vmatprep.subr.mxu0 0.0
    %2892 = vmatpush2.msra.mxu0 %v738
    %2893 = vmatprep.subr.mxu0 0.0
    %2894 = vmatpush2.msra.mxu0 %v737
    %2895 = vmatprep.subr.mxu0 0.0
    %2896 = vmatpush2.msra.mxu0 %v736
    %2897 = vmatprep.subr.mxu0 0.0
    %2898 = vmatpush2.msra.mxu0 %v735
    %2899 = vmatprep.subr.mxu0 0.0
    %2900 = vmatpush2.msra.mxu0 %v734
    %2901 = vmatprep.subr.mxu0 0.0
    %2902 = vmatpush2.msra.mxu0 %v733
    %2903 = vmatprep.subr.mxu0 0.0
    %2904 = vmatpush2.msra.mxu0 %v732
    %2905 = vmatprep.subr.mxu0 0.0
    %2906 = vmatpush2.msra.mxu0 %v731
    %2907 = vmatprep.subr.mxu0 0.0
    %2908 = vmatpush2.msra.mxu0 %v730
    %2909 = vmatprep.subr.mxu0 0.0
    %2910 = vmatpush2.msra.mxu0 %v729
    %2911 = vmatprep.subr.mxu0 0.0
    %2912 = vmatpush2.msra.mxu0 %v728
    %2913 = vmatprep.subr.mxu0 0.0
    %2914 = vmatpush2.msra.mxu0 %v727
    %2915 = vmatprep.subr.mxu0 0.0
    %2916 = vmatpush2.msra.mxu0 %v726
    %2917 = vmatprep.mubr.f32.mxu0 %v1302
    %2918 = vmatmul.mubr.f32.gmra.mxu0 %v1294
    %v2919 = vpop.f32.mrf.mxu0
    %v2920 = vadd.f32 %v2850, %v2919
    %v2921 = vpop.f32.mrf.mxu0
    %2922 = vdwg.mxu0
    %2923 = vmatprep.subr.mxu0 0.0
    %2924 = vmatpush1.msra.mxu0 %v757
    %2925 = vmatprep.subr.mxu0 0.0
    %2926 = vmatpush1.msra.mxu0 %v756
    %2927 = vmatprep.subr.mxu0 0.0
    %2928 = vmatpush1.msra.mxu0 %v755
    %2929 = vmatprep.subr.mxu0 0.0
    %2930 = vmatpush1.msra.mxu0 %v754
    %2931 = vmatprep.subr.mxu0 0.0
    %2932 = vmatpush1.msra.mxu0 %v753
    %2933 = vmatprep.subr.mxu0 0.0
    %2934 = vmatpush1.msra.mxu0 %v752
    %2935 = vmatprep.subr.mxu0 0.0
    %2936 = vmatpush1.msra.mxu0 %v751
    %2937 = vmatprep.subr.mxu0 0.0
    %2938 = vmatpush1.msra.mxu0 %v750
    %2939 = vmatprep.subr.mxu0 0.0
    %2940 = vmatpush1.msra.mxu0 %v749
    %2941 = vmatprep.subr.mxu0 0.0
    %2942 = vmatpush1.msra.mxu0 %v748
    %2943 = vmatprep.subr.mxu0 0.0
    %2944 = vmatpush1.msra.mxu0 %v747
    %2945 = vmatprep.subr.mxu0 0.0
    %2946 = vmatpush1.msra.mxu0 %v746
    %2947 = vmatprep.subr.mxu0 0.0
    %2948 = vmatpush1.msra.mxu0 %v745
    %2949 = vmatprep.subr.mxu0 0.0
    %2950 = vmatpush1.msra.mxu0 %v744
    %2951 = vmatprep.subr.mxu0 0.0
    %2952 = vmatpush1.msra.mxu0 %v743
    %2953 = vmatprep.subr.mxu0 0.0
    %2954 = vmatpush1.msra.mxu0 %v742
    %2955 = vmatprep.subr.mxu0 0.0
    %2956 = vmatpush2.msra.mxu0 %v773
    %2957 = vmatprep.subr.mxu0 0.0
    %2958 = vmatpush2.msra.mxu0 %v772
    %2959 = vmatprep.subr.mxu0 0.0
    %2960 = vmatpush2.msra.mxu0 %v771
    %2961 = vmatprep.subr.mxu0 0.0
    %2962 = vmatpush2.msra.mxu0 %v770
    %2963 = vmatprep.subr.mxu0 0.0
    %2964 = vmatpush2.msra.mxu0 %v769
    %2965 = vmatprep.subr.mxu0 0.0
    %2966 = vmatpush2.msra.mxu0 %v768
    %2967 = vmatprep.subr.mxu0 0.0
    %2968 = vmatpush2.msra.mxu0 %v767
    %2969 = vmatprep.subr.mxu0 0.0
    %2970 = vmatpush2.msra.mxu0 %v766
    %2971 = vmatprep.subr.mxu0 0.0
    %2972 = vmatpush2.msra.mxu0 %v765
    %2973 = vmatprep.subr.mxu0 0.0
    %2974 = vmatpush2.msra.mxu0 %v764
    %2975 = vmatprep.subr.mxu0 0.0
    %2976 = vmatpush2.msra.mxu0 %v763
    %2977 = vmatprep.subr.mxu0 0.0
    %2978 = vmatpush2.msra.mxu0 %v762
    %2979 = vmatprep.subr.mxu0 0.0
    %2980 = vmatpush2.msra.mxu0 %v761
    %2981 = vmatprep.subr.mxu0 0.0
    %2982 = vmatpush2.msra.mxu0 %v760
    %2983 = vmatprep.subr.mxu0 0.0
    %2984 = vmatpush2.msra.mxu0 %v759
    %2985 = vmatprep.subr.mxu0 0.0
    %2986 = vmatpush2.msra.mxu0 %v758
    %2987 = vmatprep.mubr.f32.mxu0 %v1303
    %2988 = vmatmul.mubr.f32.gmra.mxu0 %v1301
    %v2989 = vpop.f32.mrf.mxu0
    %v2990 = vadd.f32 %v2920, %v2989
    %v2991 = vpop.f32.mrf.mxu0
    %2992 = vdwg.mxu0
    %2993 = vmatprep.subr.mxu0 0.0
    %2994 = vmatpush1.msra.mxu0 %v789
    %2995 = vmatprep.subr.mxu0 0.0
    %2996 = vmatpush1.msra.mxu0 %v788
    %2997 = vmatprep.subr.mxu0 0.0
    %2998 = vmatpush1.msra.mxu0 %v787
    %2999 = vmatprep.subr.mxu0 0.0
    %3000 = vmatpush1.msra.mxu0 %v786
    %3001 = vmatprep.subr.mxu0 0.0
    %3002 = vmatpush1.msra.mxu0 %v785
    %3003 = vmatprep.subr.mxu0 0.0
    %3004 = vmatpush1.msra.mxu0 %v784
    %3005 = vmatprep.subr.mxu0 0.0
    %3006 = vmatpush1.msra.mxu0 %v783
    %3007 = vmatprep.subr.mxu0 0.0
    %3008 = vmatpush1.msra.mxu0 %v782
    %3009 = vmatprep.subr.mxu0 0.0
    %3010 = vmatpush1.msra.mxu0 %v781
    %3011 = vmatprep.subr.mxu0 0.0
    %3012 = vmatpush1.msra.mxu0 %v780
    %3013 = vmatprep.subr.mxu0 0.0
    %3014 = vmatpush1.msra.mxu0 %v779
    %3015 = vmatprep.subr.mxu0 0.0
    %3016 = vmatpush1.msra.mxu0 %v778
    %3017 = vmatprep.subr.mxu0 0.0
    %3018 = vmatpush1.msra.mxu0 %v777
    %3019 = vmatprep.subr.mxu0 0.0
    %3020 = vmatpush1.msra.mxu0 %v776
    %3021 = vmatprep.subr.mxu0 0.0
    %3022 = vmatpush1.msra.mxu0 %v775
    %3023 = vmatprep.subr.mxu0 0.0
    %3024 = vmatpush1.msra.mxu0 %v774
    %3025 = vmatprep.subr.mxu0 0.0
    %3026 = vmatpush2.msra.mxu0 %v805
    %3027 = vmatprep.subr.mxu0 0.0
    %3028 = vmatpush2.msra.mxu0 %v804
    %3029 = vmatprep.subr.mxu0 0.0
    %3030 = vmatpush2.msra.mxu0 %v803
    %3031 = vmatprep.subr.mxu0 0.0
    %3032 = vmatpush2.msra.mxu0 %v802
    %3033 = vmatprep.subr.mxu0 0.0
    %3034 = vmatpush2.msra.mxu0 %v801
    %3035 = vmatprep.subr.mxu0 0.0
    %3036 = vmatpush2.msra.mxu0 %v800
    %3037 = vmatprep.subr.mxu0 0.0
    %3038 = vmatpush2.msra.mxu0 %v799
    %3039 = vmatprep.subr.mxu0 0.0
    %3040 = vmatpush2.msra.mxu0 %v798
    %3041 = vmatprep.subr.mxu0 0.0
    %3042 = vmatpush2.msra.mxu0 %v797
    %3043 = vmatprep.subr.mxu0 0.0
    %3044 = vmatpush2.msra.mxu0 %v796
    %3045 = vmatprep.subr.mxu0 0.0
    %3046 = vmatpush2.msra.mxu0 %v795
    %3047 = vmatprep.subr.mxu0 0.0
    %3048 = vmatpush2.msra.mxu0 %v794
    %3049 = vmatprep.subr.mxu0 0.0
    %3050 = vmatpush2.msra.mxu0 %v793
    %3051 = vmatprep.subr.mxu0 0.0
    %3052 = vmatpush2.msra.mxu0 %v792
    %3053 = vmatprep.subr.mxu0 0.0
    %3054 = vmatpush2.msra.mxu0 %v791
    %3055 = vmatprep.subr.mxu0 0.0
    %3056 = vmatpush2.msra.mxu0 %v790
    %3057 = vmatprep.mubr.f32.mxu0 %v1319
    %3058 = vmatmul.mubr.f32.gmra.mxu0 %v1311
    %v3059 = vpop.f32.mrf.mxu0
    %v3060 = vadd.f32 %v2990, %v3059
    %v3061 = vpop.f32.mrf.mxu0
    %3062 = vdwg.mxu0
    %3063 = vmatprep.subr.mxu0 0.0
    %3064 = vmatpush1.msra.mxu0 %v821
    %3065 = vmatprep.subr.mxu0 0.0
    %3066 = vmatpush1.msra.mxu0 %v820
    %3067 = vmatprep.subr.mxu0 0.0
    %3068 = vmatpush1.msra.mxu0 %v819
    %3069 = vmatprep.subr.mxu0 0.0
    %3070 = vmatpush1.msra.mxu0 %v818
    %3071 = vmatprep.subr.mxu0 0.0
    %3072 = vmatpush1.msra.mxu0 %v817
    %3073 = vmatprep.subr.mxu0 0.0
    %3074 = vmatpush1.msra.mxu0 %v816
    %3075 = vmatprep.subr.mxu0 0.0
    %3076 = vmatpush1.msra.mxu0 %v815
    %3077 = vmatprep.subr.mxu0 0.0
    %3078 = vmatpush1.msra.mxu0 %v814
    %3079 = vmatprep.subr.mxu0 0.0
    %3080 = vmatpush1.msra.mxu0 %v813
    %3081 = vmatprep.subr.mxu0 0.0
    %3082 = vmatpush1.msra.mxu0 %v812
    %3083 = vmatprep.subr.mxu0 0.0
    %3084 = vmatpush1.msra.mxu0 %v811
    %3085 = vmatprep.subr.mxu0 0.0
    %3086 = vmatpush1.msra.mxu0 %v810
    %3087 = vmatprep.subr.mxu0 0.0
    %3088 = vmatpush1.msra.mxu0 %v809
    %3089 = vmatprep.subr.mxu0 0.0
    %3090 = vmatpush1.msra.mxu0 %v808
    %3091 = vmatprep.subr.mxu0 0.0
    %3092 = vmatpush1.msra.mxu0 %v807
    %3093 = vmatprep.subr.mxu0 0.0
    %3094 = vmatpush1.msra.mxu0 %v806
    %3095 = vmatprep.subr.mxu0 0.0
    %3096 = vmatpush2.msra.mxu0 %v837
    %3097 = vmatprep.subr.mxu0 0.0
    %3098 = vmatpush2.msra.mxu0 %v836
    %3099 = vmatprep.subr.mxu0 0.0
    %3100 = vmatpush2.msra.mxu0 %v835
    %3101 = vmatprep.subr.mxu0 0.0
    %3102 = vmatpush2.msra.mxu0 %v834
    %3103 = vmatprep.subr.mxu0 0.0
    %3104 = vmatpush2.msra.mxu0 %v833
    %3105 = vmatprep.subr.mxu0 0.0
    %3106 = vmatpush2.msra.mxu0 %v832
    %3107 = vmatprep.subr.mxu0 0.0
    %3108 = vmatpush2.msra.mxu0 %v831
    %3109 = vmatprep.subr.mxu0 0.0
    %3110 = vmatpush2.msra.mxu0 %v830
    %3111 = vmatprep.subr.mxu0 0.0
    %3112 = vmatpush2.msra.mxu0 %v829
    %3113 = vmatprep.subr.mxu0 0.0
    %3114 = vmatpush2.msra.mxu0 %v828
    %3115 = vmatprep.subr.mxu0 0.0
    %3116 = vmatpush2.msra.mxu0 %v827
    %3117 = vmatprep.subr.mxu0 0.0
    %3118 = vmatpush2.msra.mxu0 %v826
    %3119 = vmatprep.subr.mxu0 0.0
    %3120 = vmatpush2.msra.mxu0 %v825
    %3121 = vmatprep.subr.mxu0 0.0
    %3122 = vmatpush2.msra.mxu0 %v824
    %3123 = vmatprep.subr.mxu0 0.0
    %3124 = vmatpush2.msra.mxu0 %v823
    %3125 = vmatprep.subr.mxu0 0.0
    %3126 = vmatpush2.msra.mxu0 %v822
    %3127 = vmatprep.mubr.f32.mxu0 %v1320
    %3128 = vmatmul.mubr.f32.gmra.mxu0 %v1318
    %v3129 = vpop.f32.mrf.mxu0
    %v3130 = vadd.f32 %v3060, %v3129
    %v3131 = vpop.f32.mrf.mxu0
    %3132 = vdwg.mxu0
    %3133 = vmatprep.subr.mxu0 0.0
    %3134 = vmatpush1.msra.mxu0 %v853
    %3135 = vmatprep.subr.mxu0 0.0
    %3136 = vmatpush1.msra.mxu0 %v852
    %3137 = vmatprep.subr.mxu0 0.0
    %3138 = vmatpush1.msra.mxu0 %v851
    %3139 = vmatprep.subr.mxu0 0.0
    %3140 = vmatpush1.msra.mxu0 %v850
    %3141 = vmatprep.subr.mxu0 0.0
    %3142 = vmatpush1.msra.mxu0 %v849
    %3143 = vmatprep.subr.mxu0 0.0
    %3144 = vmatpush1.msra.mxu0 %v848
    %3145 = vmatprep.subr.mxu0 0.0
    %3146 = vmatpush1.msra.mxu0 %v847
    %3147 = vmatprep.subr.mxu0 0.0
    %3148 = vmatpush1.msra.mxu0 %v846
    %3149 = vmatprep.subr.mxu0 0.0
    %3150 = vmatpush1.msra.mxu0 %v845
    %3151 = vmatprep.subr.mxu0 0.0
    %3152 = vmatpush1.msra.mxu0 %v844
    %3153 = vmatprep.subr.mxu0 0.0
    %3154 = vmatpush1.msra.mxu0 %v843
    %3155 = vmatprep.subr.mxu0 0.0
    %3156 = vmatpush1.msra.mxu0 %v842
    %3157 = vmatprep.subr.mxu0 0.0
    %3158 = vmatpush1.msra.mxu0 %v841
    %3159 = vmatprep.subr.mxu0 0.0
    %3160 = vmatpush1.msra.mxu0 %v840
    %3161 = vmatprep.subr.mxu0 0.0
    %3162 = vmatpush1.msra.mxu0 %v839
    %3163 = vmatprep.subr.mxu0 0.0
    %3164 = vmatpush1.msra.mxu0 %v838
    %3165 = vmatprep.subr.mxu0 0.0
    %3166 = vmatpush2.msra.mxu0 %v869
    %3167 = vmatprep.subr.mxu0 0.0
    %3168 = vmatpush2.msra.mxu0 %v868
    %3169 = vmatprep.subr.mxu0 0.0
    %3170 = vmatpush2.msra.mxu0 %v867
    %3171 = vmatprep.subr.mxu0 0.0
    %3172 = vmatpush2.msra.mxu0 %v866
    %3173 = vmatprep.subr.mxu0 0.0
    %3174 = vmatpush2.msra.mxu0 %v865
    %3175 = vmatprep.subr.mxu0 0.0
    %3176 = vmatpush2.msra.mxu0 %v864
    %3177 = vmatprep.subr.mxu0 0.0
    %3178 = vmatpush2.msra.mxu0 %v863
    %3179 = vmatprep.subr.mxu0 0.0
    %3180 = vmatpush2.msra.mxu0 %v862
    %3181 = vmatprep.subr.mxu0 0.0
    %3182 = vmatpush2.msra.mxu0 %v861
    %3183 = vmatprep.subr.mxu0 0.0
    %3184 = vmatpush2.msra.mxu0 %v860
    %3185 = vmatprep.subr.mxu0 0.0
    %3186 = vmatpush2.msra.mxu0 %v859
    %3187 = vmatprep.subr.mxu0 0.0
    %3188 = vmatpush2.msra.mxu0 %v858
    %3189 = vmatprep.subr.mxu0 0.0
    %3190 = vmatpush2.msra.mxu0 %v857
    %3191 = vmatprep.subr.mxu0 0.0
    %3192 = vmatpush2.msra.mxu0 %v856
    %3193 = vmatprep.subr.mxu0 0.0
    %3194 = vmatpush2.msra.mxu0 %v855
    %3195 = vmatprep.subr.mxu0 0.0
    %3196 = vmatpush2.msra.mxu0 %v854
    %3197 = vmatprep.mubr.f32.mxu0 %v1336
    %3198 = vmatmul.mubr.f32.gmra.mxu0 %v1328
    %v3199 = vpop.f32.mrf.mxu0
    %v3200 = vadd.f32 %v3130, %v3199
    %v3201 = vpop.f32.mrf.mxu0
    %3202 = vdwg.mxu0
    %3203 = vmatprep.subr.mxu0 0.0
    %3204 = vmatpush1.msra.mxu0 %v885
    %3205 = vmatprep.subr.mxu0 0.0
    %3206 = vmatpush1.msra.mxu0 %v884
    %3207 = vmatprep.subr.mxu0 0.0
    %3208 = vmatpush1.msra.mxu0 %v883
    %3209 = vmatprep.subr.mxu0 0.0
    %3210 = vmatpush1.msra.mxu0 %v882
    %3211 = vmatprep.subr.mxu0 0.0
    %3212 = vmatpush1.msra.mxu0 %v881
    %3213 = vmatprep.subr.mxu0 0.0
    %3214 = vmatpush1.msra.mxu0 %v880
    %3215 = vmatprep.subr.mxu0 0.0
    %3216 = vmatpush1.msra.mxu0 %v879
    %3217 = vmatprep.subr.mxu0 0.0
    %3218 = vmatpush1.msra.mxu0 %v878
    %3219 = vmatprep.subr.mxu0 0.0
    %3220 = vmatpush1.msra.mxu0 %v877
    %3221 = vmatprep.subr.mxu0 0.0
    %3222 = vmatpush1.msra.mxu0 %v876
    %3223 = vmatprep.subr.mxu0 0.0
    %3224 = vmatpush1.msra.mxu0 %v875
    %3225 = vmatprep.subr.mxu0 0.0
    %3226 = vmatpush1.msra.mxu0 %v874
    %3227 = vmatprep.subr.mxu0 0.0
    %3228 = vmatpush1.msra.mxu0 %v873
    %3229 = vmatprep.subr.mxu0 0.0
    %3230 = vmatpush1.msra.mxu0 %v872
    %3231 = vmatprep.subr.mxu0 0.0
    %3232 = vmatpush1.msra.mxu0 %v871
    %3233 = vmatprep.subr.mxu0 0.0
    %3234 = vmatpush1.msra.mxu0 %v870
    %3235 = vmatprep.subr.mxu0 0.0
    %3236 = vmatpush2.msra.mxu0 %v901
    %3237 = vmatprep.subr.mxu0 0.0
    %3238 = vmatpush2.msra.mxu0 %v900
    %3239 = vmatprep.subr.mxu0 0.0
    %3240 = vmatpush2.msra.mxu0 %v899
    %3241 = vmatprep.subr.mxu0 0.0
    %3242 = vmatpush2.msra.mxu0 %v898
    %3243 = vmatprep.subr.mxu0 0.0
    %3244 = vmatpush2.msra.mxu0 %v897
    %3245 = vmatprep.subr.mxu0 0.0
    %3246 = vmatpush2.msra.mxu0 %v896
    %3247 = vmatprep.subr.mxu0 0.0
    %3248 = vmatpush2.msra.mxu0 %v895
    %3249 = vmatprep.subr.mxu0 0.0
    %3250 = vmatpush2.msra.mxu0 %v894
    %3251 = vmatprep.subr.mxu0 0.0
    %3252 = vmatpush2.msra.mxu0 %v893
    %3253 = vmatprep.subr.mxu0 0.0
    %3254 = vmatpush2.msra.mxu0 %v892
    %3255 = vmatprep.subr.mxu0 0.0
    %3256 = vmatpush2.msra.mxu0 %v891
    %3257 = vmatprep.subr.mxu0 0.0
    %3258 = vmatpush2.msra.mxu0 %v890
    %3259 = vmatprep.subr.mxu0 0.0
    %3260 = vmatpush2.msra.mxu0 %v889
    %3261 = vmatprep.subr.mxu0 0.0
    %3262 = vmatpush2.msra.mxu0 %v888
    %3263 = vmatprep.subr.mxu0 0.0
    %3264 = vmatpush2.msra.mxu0 %v887
    %3265 = vmatprep.subr.mxu0 0.0
    %3266 = vmatpush2.msra.mxu0 %v886
    %3267 = vmatprep.mubr.f32.mxu0 %v1337
    %3268 = vmatmul.mubr.f32.gmra.mxu0 %v1335
    %v3269 = vpop.f32.mrf.mxu0
    %v3270 = vadd.f32 %v3200, %v3269
    %v3271 = vpop.f32.mrf.mxu0
    %3272 = vdwg.mxu0
    %3273 = vmatprep.subr.mxu0 0.0
    %3274 = vmatpush1.msra.mxu0 %v917
    %3275 = vmatprep.subr.mxu0 0.0
    %3276 = vmatpush1.msra.mxu0 %v916
    %3277 = vmatprep.subr.mxu0 0.0
    %3278 = vmatpush1.msra.mxu0 %v915
    %3279 = vmatprep.subr.mxu0 0.0
    %3280 = vmatpush1.msra.mxu0 %v914
    %3281 = vmatprep.subr.mxu0 0.0
    %3282 = vmatpush1.msra.mxu0 %v913
    %3283 = vmatprep.subr.mxu0 0.0
    %3284 = vmatpush1.msra.mxu0 %v912
    %3285 = vmatprep.subr.mxu0 0.0
    %3286 = vmatpush1.msra.mxu0 %v911
    %3287 = vmatprep.subr.mxu0 0.0
    %3288 = vmatpush1.msra.mxu0 %v910
    %3289 = vmatprep.subr.mxu0 0.0
    %3290 = vmatpush1.msra.mxu0 %v909
    %3291 = vmatprep.subr.mxu0 0.0
    %3292 = vmatpush1.msra.mxu0 %v908
    %3293 = vmatprep.subr.mxu0 0.0
    %3294 = vmatpush1.msra.mxu0 %v907
    %3295 = vmatprep.subr.mxu0 0.0
    %3296 = vmatpush1.msra.mxu0 %v906
    %3297 = vmatprep.subr.mxu0 0.0
    %3298 = vmatpush1.msra.mxu0 %v905
    %3299 = vmatprep.subr.mxu0 0.0
    %3300 = vmatpush1.msra.mxu0 %v904
    %3301 = vmatprep.subr.mxu0 0.0
    %3302 = vmatpush1.msra.mxu0 %v903
    %3303 = vmatprep.subr.mxu0 0.0
    %3304 = vmatpush1.msra.mxu0 %v902
    %3305 = vmatprep.subr.mxu0 0.0
    %3306 = vmatpush2.msra.mxu0 %v933
    %3307 = vmatprep.subr.mxu0 0.0
    %3308 = vmatpush2.msra.mxu0 %v932
    %3309 = vmatprep.subr.mxu0 0.0
    %3310 = vmatpush2.msra.mxu0 %v931
    %3311 = vmatprep.subr.mxu0 0.0
    %3312 = vmatpush2.msra.mxu0 %v930
    %3313 = vmatprep.subr.mxu0 0.0
    %3314 = vmatpush2.msra.mxu0 %v929
    %3315 = vmatprep.subr.mxu0 0.0
    %3316 = vmatpush2.msra.mxu0 %v928
    %3317 = vmatprep.subr.mxu0 0.0
    %3318 = vmatpush2.msra.mxu0 %v927
    %3319 = vmatprep.subr.mxu0 0.0
    %3320 = vmatpush2.msra.mxu0 %v926
    %3321 = vmatprep.subr.mxu0 0.0
    %3322 = vmatpush2.msra.mxu0 %v925
    %3323 = vmatprep.subr.mxu0 0.0
    %3324 = vmatpush2.msra.mxu0 %v924
    %3325 = vmatprep.subr.mxu0 0.0
    %3326 = vmatpush2.msra.mxu0 %v923
    %3327 = vmatprep.subr.mxu0 0.0
    %3328 = vmatpush2.msra.mxu0 %v922
    %3329 = vmatprep.subr.mxu0 0.0
    %3330 = vmatpush2.msra.mxu0 %v921
    %3331 = vmatprep.subr.mxu0 0.0
    %3332 = vmatpush2.msra.mxu0 %v920
    %3333 = vmatprep.subr.mxu0 0.0
    %3334 = vmatpush2.msra.mxu0 %v919
    %3335 = vmatprep.subr.mxu0 0.0
    %3336 = vmatpush2.msra.mxu0 %v918
    %3337 = vmatprep.mubr.f32.mxu0 %v1353
    %3338 = vmatmul.mubr.f32.gmra.mxu0 %v1345
    %v3339 = vpop.f32.mrf.mxu0
    %v3340 = vadd.f32 %v3270, %v3339
    %v3341 = vpop.f32.mrf.mxu0
    %3342 = vdwg.mxu0
    %3343 = vmatprep.subr.mxu0 0.0
    %3344 = vmatpush1.msra.mxu0 %v949
    %3345 = vmatprep.subr.mxu0 0.0
    %3346 = vmatpush1.msra.mxu0 %v948
    %3347 = vmatprep.subr.mxu0 0.0
    %3348 = vmatpush1.msra.mxu0 %v947
    %3349 = vmatprep.subr.mxu0 0.0
    %3350 = vmatpush1.msra.mxu0 %v946
    %3351 = vmatprep.subr.mxu0 0.0
    %3352 = vmatpush1.msra.mxu0 %v945
    %3353 = vmatprep.subr.mxu0 0.0
    %3354 = vmatpush1.msra.mxu0 %v944
    %3355 = vmatprep.subr.mxu0 0.0
    %3356 = vmatpush1.msra.mxu0 %v943
    %3357 = vmatprep.subr.mxu0 0.0
    %3358 = vmatpush1.msra.mxu0 %v942
    %3359 = vmatprep.subr.mxu0 0.0
    %3360 = vmatpush1.msra.mxu0 %v941
    %3361 = vmatprep.subr.mxu0 0.0
    %3362 = vmatpush1.msra.mxu0 %v940
    %3363 = vmatprep.subr.mxu0 0.0
    %3364 = vmatpush1.msra.mxu0 %v939
    %3365 = vmatprep.subr.mxu0 0.0
    %3366 = vmatpush1.msra.mxu0 %v938
    %3367 = vmatprep.subr.mxu0 0.0
    %3368 = vmatpush1.msra.mxu0 %v937
    %3369 = vmatprep.subr.mxu0 0.0
    %3370 = vmatpush1.msra.mxu0 %v936
    %3371 = vmatprep.subr.mxu0 0.0
    %3372 = vmatpush1.msra.mxu0 %v935
    %3373 = vmatprep.subr.mxu0 0.0
    %3374 = vmatpush1.msra.mxu0 %v934
    %3375 = vmatprep.subr.mxu0 0.0
    %3376 = vmatpush2.msra.mxu0 %v965
    %3377 = vmatprep.subr.mxu0 0.0
    %3378 = vmatpush2.msra.mxu0 %v964
    %3379 = vmatprep.subr.mxu0 0.0
    %3380 = vmatpush2.msra.mxu0 %v963
    %3381 = vmatprep.subr.mxu0 0.0
    %3382 = vmatpush2.msra.mxu0 %v962
    %3383 = vmatprep.subr.mxu0 0.0
    %3384 = vmatpush2.msra.mxu0 %v961
    %3385 = vmatprep.subr.mxu0 0.0
    %3386 = vmatpush2.msra.mxu0 %v960
    %3387 = vmatprep.subr.mxu0 0.0
    %3388 = vmatpush2.msra.mxu0 %v959
    %3389 = vmatprep.subr.mxu0 0.0
    %3390 = vmatpush2.msra.mxu0 %v958
    %3391 = vmatprep.subr.mxu0 0.0
    %3392 = vmatpush2.msra.mxu0 %v957
    %3393 = vmatprep.subr.mxu0 0.0
    %3394 = vmatpush2.msra.mxu0 %v956
    %3395 = vmatprep.subr.mxu0 0.0
    %3396 = vmatpush2.msra.mxu0 %v955
    %3397 = vmatprep.subr.mxu0 0.0
    %3398 = vmatpush2.msra.mxu0 %v954
    %3399 = vmatprep.subr.mxu0 0.0
    %3400 = vmatpush2.msra.mxu0 %v953
    %3401 = vmatprep.subr.mxu0 0.0
    %3402 = vmatpush2.msra.mxu0 %v952
    %3403 = vmatprep.subr.mxu0 0.0
    %3404 = vmatpush2.msra.mxu0 %v951
    %3405 = vmatprep.subr.mxu0 0.0
    %3406 = vmatpush2.msra.mxu0 %v950
    %3407 = vmatprep.mubr.f32.mxu0 %v1354
    %3408 = vmatmul.mubr.f32.gmra.mxu0 %v1352
    %v3409 = vpop.f32.mrf.mxu0
    %v3410 = vadd.f32 %v3340, %v3409
    %v3411 = vpop.f32.mrf.mxu0
    %3412 = vdwg.mxu0
    %3413 = vmatprep.subr.mxu0 0.0
    %3414 = vmatpush1.msra.mxu0 %v981
    %3415 = vmatprep.subr.mxu0 0.0
    %3416 = vmatpush1.msra.mxu0 %v980
    %3417 = vmatprep.subr.mxu0 0.0
    %3418 = vmatpush1.msra.mxu0 %v979
    %3419 = vmatprep.subr.mxu0 0.0
    %3420 = vmatpush1.msra.mxu0 %v978
    %3421 = vmatprep.subr.mxu0 0.0
    %3422 = vmatpush1.msra.mxu0 %v977
    %3423 = vmatprep.subr.mxu0 0.0
    %3424 = vmatpush1.msra.mxu0 %v976
    %3425 = vmatprep.subr.mxu0 0.0
    %3426 = vmatpush1.msra.mxu0 %v975
    %3427 = vmatprep.subr.mxu0 0.0
    %3428 = vmatpush1.msra.mxu0 %v974
    %3429 = vmatprep.subr.mxu0 0.0
    %3430 = vmatpush1.msra.mxu0 %v973
    %3431 = vmatprep.subr.mxu0 0.0
    %3432 = vmatpush1.msra.mxu0 %v972
    %3433 = vmatprep.subr.mxu0 0.0
    %3434 = vmatpush1.msra.mxu0 %v971
    %3435 = vmatprep.subr.mxu0 0.0
    %3436 = vmatpush1.msra.mxu0 %v970
    %3437 = vmatprep.subr.mxu0 0.0
    %3438 = vmatpush1.msra.mxu0 %v969
    %3439 = vmatprep.subr.mxu0 0.0
    %3440 = vmatpush1.msra.mxu0 %v968
    %3441 = vmatprep.subr.mxu0 0.0
    %3442 = vmatpush1.msra.mxu0 %v967
    %3443 = vmatprep.subr.mxu0 0.0
    %3444 = vmatpush1.msra.mxu0 %v966
    %3445 = vmatprep.subr.mxu0 0.0
    %3446 = vmatpush2.msra.mxu0 %v997
    %3447 = vmatprep.subr.mxu0 0.0
    %3448 = vmatpush2.msra.mxu0 %v996
    %3449 = vmatprep.subr.mxu0 0.0
    %3450 = vmatpush2.msra.mxu0 %v995
    %3451 = vmatprep.subr.mxu0 0.0
    %3452 = vmatpush2.msra.mxu0 %v994
    %3453 = vmatprep.subr.mxu0 0.0
    %3454 = vmatpush2.msra.mxu0 %v993
    %3455 = vmatprep.subr.mxu0 0.0
    %3456 = vmatpush2.msra.mxu0 %v992
    %3457 = vmatprep.subr.mxu0 0.0
    %3458 = vmatpush2.msra.mxu0 %v991
    %3459 = vmatprep.subr.mxu0 0.0
    %3460 = vmatpush2.msra.mxu0 %v990
    %3461 = vmatprep.subr.mxu0 0.0
    %3462 = vmatpush2.msra.mxu0 %v989
    %3463 = vmatprep.subr.mxu0 0.0
    %3464 = vmatpush2.msra.mxu0 %v988
    %3465 = vmatprep.subr.mxu0 0.0
    %3466 = vmatpush2.msra.mxu0 %v987
    %3467 = vmatprep.subr.mxu0 0.0
    %3468 = vmatpush2.msra.mxu0 %v986
    %3469 = vmatprep.subr.mxu0 0.0
    %3470 = vmatpush2.msra.mxu0 %v985
    %3471 = vmatprep.subr.mxu0 0.0
    %3472 = vmatpush2.msra.mxu0 %v984
    %3473 = vmatprep.subr.mxu0 0.0
    %3474 = vmatpush2.msra.mxu0 %v983
    %3475 = vmatprep.subr.mxu0 0.0
    %3476 = vmatpush2.msra.mxu0 %v982
    %3477 = vmatprep.mubr.f32.mxu0 %v1370
    %3478 = vmatmul.mubr.f32.gmra.mxu0 %v1362
    %v3479 = vpop.f32.mrf.mxu0
    %v3480 = vadd.f32 %v3410, %v3479
    %v3481 = vpop.f32.mrf.mxu0
    %3482 = vdwg.mxu0
    %3483 = vmatprep.subr.mxu0 0.0
    %3484 = vmatpush1.msra.mxu0 %v1013
    %3485 = vmatprep.subr.mxu0 0.0
    %3486 = vmatpush1.msra.mxu0 %v1012
    %3487 = vmatprep.subr.mxu0 0.0
    %3488 = vmatpush1.msra.mxu0 %v1011
    %3489 = vmatprep.subr.mxu0 0.0
    %3490 = vmatpush1.msra.mxu0 %v1010
    %3491 = vmatprep.subr.mxu0 0.0
    %3492 = vmatpush1.msra.mxu0 %v1009
    %3493 = vmatprep.subr.mxu0 0.0
    %3494 = vmatpush1.msra.mxu0 %v1008
    %3495 = vmatprep.subr.mxu0 0.0
    %3496 = vmatpush1.msra.mxu0 %v1007
    %3497 = vmatprep.subr.mxu0 0.0
    %3498 = vmatpush1.msra.mxu0 %v1006
    %3499 = vmatprep.subr.mxu0 0.0
    %3500 = vmatpush1.msra.mxu0 %v1005
    %3501 = vmatprep.subr.mxu0 0.0
    %3502 = vmatpush1.msra.mxu0 %v1004
    %3503 = vmatprep.subr.mxu0 0.0
    %3504 = vmatpush1.msra.mxu0 %v1003
    %3505 = vmatprep.subr.mxu0 0.0
    %3506 = vmatpush1.msra.mxu0 %v1002
    %3507 = vmatprep.subr.mxu0 0.0
    %3508 = vmatpush1.msra.mxu0 %v1001
    %3509 = vmatprep.subr.mxu0 0.0
    %3510 = vmatpush1.msra.mxu0 %v1000
    %3511 = vmatprep.subr.mxu0 0.0
    %3512 = vmatpush1.msra.mxu0 %v999
    %3513 = vmatprep.subr.mxu0 0.0
    %3514 = vmatpush1.msra.mxu0 %v998
    %3515 = vmatprep.subr.mxu0 0.0
    %3516 = vmatpush2.msra.mxu0 %v1029
    %3517 = vmatprep.subr.mxu0 0.0
    %3518 = vmatpush2.msra.mxu0 %v1028
    %3519 = vmatprep.subr.mxu0 0.0
    %3520 = vmatpush2.msra.mxu0 %v1027
    %3521 = vmatprep.subr.mxu0 0.0
    %3522 = vmatpush2.msra.mxu0 %v1026
    %3523 = vmatprep.subr.mxu0 0.0
    %3524 = vmatpush2.msra.mxu0 %v1025
    %3525 = vmatprep.subr.mxu0 0.0
    %3526 = vmatpush2.msra.mxu0 %v1024
    %3527 = vmatprep.subr.mxu0 0.0
    %3528 = vmatpush2.msra.mxu0 %v1023
    %3529 = vmatprep.subr.mxu0 0.0
    %3530 = vmatpush2.msra.mxu0 %v1022
    %3531 = vmatprep.subr.mxu0 0.0
    %3532 = vmatpush2.msra.mxu0 %v1021
    %3533 = vmatprep.subr.mxu0 0.0
    %3534 = vmatpush2.msra.mxu0 %v1020
    %3535 = vmatprep.subr.mxu0 0.0
    %3536 = vmatpush2.msra.mxu0 %v1019
    %3537 = vmatprep.subr.mxu0 0.0
    %3538 = vmatpush2.msra.mxu0 %v1018
    %3539 = vmatprep.subr.mxu0 0.0
    %3540 = vmatpush2.msra.mxu0 %v1017
    %3541 = vmatprep.subr.mxu0 0.0
    %3542 = vmatpush2.msra.mxu0 %v1016
    %3543 = vmatprep.subr.mxu0 0.0
    %3544 = vmatpush2.msra.mxu0 %v1015
    %3545 = vmatprep.subr.mxu0 0.0
    %3546 = vmatpush2.msra.mxu0 %v1014
    %3547 = vmatprep.mubr.f32.mxu0 %v1371
    %3548 = vmatmul.mubr.f32.gmra.mxu0 %v1369
    %v3549 = vpop.f32.mrf.mxu0
    %v3550 = vadd.f32 %v3480, %v3549
    %v3551 = vpop.f32.mrf.mxu0
    %3552 = vdwg.mxu0
    %3553 = vmatprep.subr.mxu0 0.0
    %3554 = vmatpush1.msra.mxu0 %v1045
    %3555 = vmatprep.subr.mxu0 0.0
    %3556 = vmatpush1.msra.mxu0 %v1044
    %3557 = vmatprep.subr.mxu0 0.0
    %3558 = vmatpush1.msra.mxu0 %v1043
    %3559 = vmatprep.subr.mxu0 0.0
    %3560 = vmatpush1.msra.mxu0 %v1042
    %3561 = vmatprep.subr.mxu0 0.0
    %3562 = vmatpush1.msra.mxu0 %v1041
    %3563 = vmatprep.subr.mxu0 0.0
    %3564 = vmatpush1.msra.mxu0 %v1040
    %3565 = vmatprep.subr.mxu0 0.0
    %3566 = vmatpush1.msra.mxu0 %v1039
    %3567 = vmatprep.subr.mxu0 0.0
    %3568 = vmatpush1.msra.mxu0 %v1038
    %3569 = vmatprep.subr.mxu0 0.0
    %3570 = vmatpush1.msra.mxu0 %v1037
    %3571 = vmatprep.subr.mxu0 0.0
    %3572 = vmatpush1.msra.mxu0 %v1036
    %3573 = vmatprep.subr.mxu0 0.0
    %3574 = vmatpush1.msra.mxu0 %v1035
    %3575 = vmatprep.subr.mxu0 0.0
    %3576 = vmatpush1.msra.mxu0 %v1034
    %3577 = vmatprep.subr.mxu0 0.0
    %3578 = vmatpush1.msra.mxu0 %v1033
    %3579 = vmatprep.subr.mxu0 0.0
    %3580 = vmatpush1.msra.mxu0 %v1032
    %3581 = vmatprep.subr.mxu0 0.0
    %3582 = vmatpush1.msra.mxu0 %v1031
    %3583 = vmatprep.subr.mxu0 0.0
    %3584 = vmatpush1.msra.mxu0 %v1030
    %3585 = vmatprep.subr.mxu0 0.0
    %3586 = vmatpush2.msra.mxu0 %v1061
    %3587 = vmatprep.subr.mxu0 0.0
    %3588 = vmatpush2.msra.mxu0 %v1060
    %3589 = vmatprep.subr.mxu0 0.0
    %3590 = vmatpush2.msra.mxu0 %v1059
    %3591 = vmatprep.subr.mxu0 0.0
    %3592 = vmatpush2.msra.mxu0 %v1058
    %3593 = vmatprep.subr.mxu0 0.0
    %3594 = vmatpush2.msra.mxu0 %v1057
    %3595 = vmatprep.subr.mxu0 0.0
    %3596 = vmatpush2.msra.mxu0 %v1056
    %3597 = vmatprep.subr.mxu0 0.0
    %3598 = vmatpush2.msra.mxu0 %v1055
    %3599 = vmatprep.subr.mxu0 0.0
    %3600 = vmatpush2.msra.mxu0 %v1054
    %3601 = vmatprep.subr.mxu0 0.0
    %3602 = vmatpush2.msra.mxu0 %v1053
    %3603 = vmatprep.subr.mxu0 0.0
    %3604 = vmatpush2.msra.mxu0 %v1052
    %3605 = vmatprep.subr.mxu0 0.0
    %3606 = vmatpush2.msra.mxu0 %v1051
    %3607 = vmatprep.subr.mxu0 0.0
    %3608 = vmatpush2.msra.mxu0 %v1050
    %3609 = vmatprep.subr.mxu0 0.0
    %3610 = vmatpush2.msra.mxu0 %v1049
    %3611 = vmatprep.subr.mxu0 0.0
    %3612 = vmatpush2.msra.mxu0 %v1048
    %3613 = vmatprep.subr.mxu0 0.0
    %3614 = vmatpush2.msra.mxu0 %v1047
    %3615 = vmatprep.subr.mxu0 0.0
    %3616 = vmatpush2.msra.mxu0 %v1046
    %3617 = vmatprep.mubr.f32.mxu0 %v1387
    %3618 = vmatmul.mubr.f32.gmra.mxu0 %v1379
    %v3619 = vpop.f32.mrf.mxu0
    %v3620 = vadd.f32 %v3550, %v3619
    %v3621 = vpop.f32.mrf.mxu0
    %3622 = vdwg.mxu0
    %3623 = vmatprep.subr.mxu0 0.0
    %3624 = vmatpush1.msra.mxu0 %v1077
    %3625 = vmatprep.subr.mxu0 0.0
    %3626 = vmatpush1.msra.mxu0 %v1076
    %3627 = vmatprep.subr.mxu0 0.0
    %3628 = vmatpush1.msra.mxu0 %v1075
    %3629 = vmatprep.subr.mxu0 0.0
    %3630 = vmatpush1.msra.mxu0 %v1074
    %3631 = vmatprep.subr.mxu0 0.0
    %3632 = vmatpush1.msra.mxu0 %v1073
    %3633 = vmatprep.subr.mxu0 0.0
    %3634 = vmatpush1.msra.mxu0 %v1072
    %3635 = vmatprep.subr.mxu0 0.0
    %3636 = vmatpush1.msra.mxu0 %v1071
    %3637 = vmatprep.subr.mxu0 0.0
    %3638 = vmatpush1.msra.mxu0 %v1070
    %3639 = vmatprep.subr.mxu0 0.0
    %3640 = vmatpush1.msra.mxu0 %v1069
    %3641 = vmatprep.subr.mxu0 0.0
    %3642 = vmatpush1.msra.mxu0 %v1068
    %3643 = vmatprep.subr.mxu0 0.0
    %3644 = vmatpush1.msra.mxu0 %v1067
    %3645 = vmatprep.subr.mxu0 0.0
    %3646 = vmatpush1.msra.mxu0 %v1066
    %3647 = vmatprep.subr.mxu0 0.0
    %3648 = vmatpush1.msra.mxu0 %v1065
    %3649 = vmatprep.subr.mxu0 0.0
    %3650 = vmatpush1.msra.mxu0 %v1064
    %3651 = vmatprep.subr.mxu0 0.0
    %3652 = vmatpush1.msra.mxu0 %v1063
    %3653 = vmatprep.subr.mxu0 0.0
    %3654 = vmatpush1.msra.mxu0 %v1062
    %3655 = vmatprep.subr.mxu0 0.0
    %3656 = vmatpush2.msra.mxu0 %v1093
    %3657 = vmatprep.subr.mxu0 0.0
    %3658 = vmatpush2.msra.mxu0 %v1092
    %3659 = vmatprep.subr.mxu0 0.0
    %3660 = vmatpush2.msra.mxu0 %v1091
    %3661 = vmatprep.subr.mxu0 0.0
    %3662 = vmatpush2.msra.mxu0 %v1090
    %3663 = vmatprep.subr.mxu0 0.0
    %3664 = vmatpush2.msra.mxu0 %v1089
    %3665 = vmatprep.subr.mxu0 0.0
    %3666 = vmatpush2.msra.mxu0 %v1088
    %3667 = vmatprep.subr.mxu0 0.0
    %3668 = vmatpush2.msra.mxu0 %v1087
    %3669 = vmatprep.subr.mxu0 0.0
    %3670 = vmatpush2.msra.mxu0 %v1086
    %3671 = vmatprep.subr.mxu0 0.0
    %3672 = vmatpush2.msra.mxu0 %v1085
    %3673 = vmatprep.subr.mxu0 0.0
    %3674 = vmatpush2.msra.mxu0 %v1084
    %3675 = vmatprep.subr.mxu0 0.0
    %3676 = vmatpush2.msra.mxu0 %v1083
    %3677 = vmatprep.subr.mxu0 0.0
    %3678 = vmatpush2.msra.mxu0 %v1082
    %3679 = vmatprep.subr.mxu0 0.0
    %3680 = vmatpush2.msra.mxu0 %v1081
    %3681 = vmatprep.subr.mxu0 0.0
    %3682 = vmatpush2.msra.mxu0 %v1080
    %3683 = vmatprep.subr.mxu0 0.0
    %3684 = vmatpush2.msra.mxu0 %v1079
    %3685 = vmatprep.subr.mxu0 0.0
    %3686 = vmatpush2.msra.mxu0 %v1078
    %3687 = vmatprep.mubr.f32.mxu0 %v1388
    %3688 = vmatmul.mubr.f32.gmra.mxu0 %v1386
    %v3689 = vpop.f32.mrf.mxu0
    %v3690 = vadd.f32 %v3620, %v3689
    %v3691 = vpop.f32.mrf.mxu0
    %3692 = vdwg.mxu0
    %v3693 = vmax.f32 %v3690, 0.0
    %v3694 = vld [vmem:[%s1] sm:$0x3]
    %v3695 = vld [vmem:[%s4] sm:$0xff]
    %v3696 = vld [vmem:[%s4 + $0x8] sm:$0xff]
    %v3697 = vld [vmem:[%s4 + $0x10] sm:$0xff]
    %v3698 = vld [vmem:[%s5] sm:$0x1]
    %v3700 = vlaneseq
    %v3701 = vshrl.u32 %v3700, 7
    %v3702 = vsub.s32 0, %v3701
    %v3703 = vrot.slane %v3698, %v3702
    %vm3705 = vcmask 195584
    %v3707 = vsel %vm3705, %v3694, 0
    %3709 = vmatprep.subr.mxu0 0.0
    %3710 = vmatpush1.msra.mxu0 0.0
    %3711 = vmatprep.subr.mxu0 0.0
    %3712 = vmatpush1.msra.mxu0 0.0
    %3713 = vmatprep.subr.mxu0 0.0
    %3714 = vmatpush1.msra.mxu0 0.0
    %3715 = vmatprep.subr.mxu0 0.0
    %3716 = vmatpush1.msra.mxu0 0.0
    %3717 = vmatprep.subr.mxu0 0.0
    %3718 = vmatpush1.msra.mxu0 0.0
    %3719 = vmatprep.subr.mxu0 0.0
    %3720 = vmatpush1.msra.mxu0 0.0
    %3721 = vmatprep.subr.mxu0 0.0
    %3722 = vmatpush1.msra.mxu0 0.0
    %3723 = vmatprep.subr.mxu0 0.0
    %3724 = vmatpush1.msra.mxu0 0.0
    %3725 = vmatprep.subr.mxu0 0.0
    %3726 = vmatpush1.msra.mxu0 0.0
    %3727 = vmatprep.subr.mxu0 0.0
    %3728 = vmatpush1.msra.mxu0 0.0
    %3729 = vmatprep.subr.mxu0 0.0
    %3730 = vmatpush1.msra.mxu0 0.0
    %3731 = vmatprep.subr.mxu0 0.0
    %3732 = vmatpush1.msra.mxu0 0.0
    %3733 = vmatprep.subr.mxu0 0.0
    %3734 = vmatpush1.msra.mxu0 0.0
    %3735 = vmatprep.subr.mxu0 0.0
    %3736 = vmatpush1.msra.mxu0 %v3697
    %3737 = vmatprep.subr.mxu0 0.0
    %3738 = vmatpush1.msra.mxu0 %v3696
    %3739 = vmatprep.subr.mxu0 0.0
    %3740 = vmatpush1.msra.mxu0 %v3695
    %3741 = vmatprep.subr.mxu0 0.0
    %3742 = vmatpush2.msra.mxu0 0.0
    %3743 = vmatprep.subr.mxu0 0.0
    %3744 = vmatpush2.msra.mxu0 0.0
    %3745 = vmatprep.subr.mxu0 0.0
    %3746 = vmatpush2.msra.mxu0 0.0
    %3747 = vmatprep.subr.mxu0 0.0
    %3748 = vmatpush2.msra.mxu0 0.0
    %3749 = vmatprep.subr.mxu0 0.0
    %3750 = vmatpush2.msra.mxu0 0.0
    %3751 = vmatprep.subr.mxu0 0.0
    %3752 = vmatpush2.msra.mxu0 0.0
    %3753 = vmatprep.subr.mxu0 0.0
    %3754 = vmatpush2.msra.mxu0 0.0
    %3755 = vmatprep.subr.mxu0 0.0
    %3756 = vmatpush2.msra.mxu0 0.0
    %3757 = vmatprep.subr.mxu0 0.0
    %3758 = vmatpush2.msra.mxu0 0.0
    %3759 = vmatprep.subr.mxu0 0.0
    %3760 = vmatpush2.msra.mxu0 0.0
    %3761 = vmatprep.subr.mxu0 0.0
    %3762 = vmatpush2.msra.mxu0 0.0
    %3763 = vmatprep.subr.mxu0 0.0
    %3764 = vmatpush2.msra.mxu0 0.0
    %3765 = vmatprep.subr.mxu0 0.0
    %3766 = vmatpush2.msra.mxu0 0.0
    %3767 = vmatprep.subr.mxu0 0.0
    %3768 = vmatpush2.msra.mxu0 0.0
    %3769 = vmatprep.subr.mxu0 0.0
    %3770 = vmatpush2.msra.mxu0 0.0
    %3771 = vmatprep.subr.mxu0 0.0
    %3772 = vmatpush2.msra.mxu0 0.0
    %3773 = vmatprep.mubr.f32.mxu0 0.0
    %3774 = vmatmul.mubr.f32.gmra.mxu0 %v3707
    %v3775 = vpop.f32.mrf.mxu0
    %v3776 = vadd.f32 %v3703, %v3775
    %v3777 = vpop.f32.mrf.mxu0
    %3778 = vdwg.mxu0
    %v3779 = vmax.f32 %v3776, 0.0
    %v3780 = vld [vmem:[%s6] sm:$0xff]
    %v3781 = vld [vmem:[%s6 + $0x8] sm:$0xff]
    %v3782 = vld [vmem:[%s6 + $0x10] sm:$0xff]
    %v3783 = vld [vmem:[%s6 + $0x18] sm:$0xff]
    %v3784 = vld [vmem:[%s7] sm:$0x1]
    %v3786 = vlaneseq
    %v3787 = vshrl.u32 %v3786, 7
    %v3788 = vsub.s32 0, %v3787
    %v3789 = vrot.slane %v3784, %v3788
    %vm3791 = vcmask 261120
    %v3793 = vsel %vm3791, %v3779, 0
    %3795 = vmatprep.subr.mxu0 0.0
    %3796 = vmatpush1.msra.mxu0 0.0
    %3797 = vmatprep.subr.mxu0 0.0
    %3798 = vmatpush1.msra.mxu0 0.0
    %3799 = vmatprep.subr.mxu0 0.0
    %3800 = vmatpush1.msra.mxu0 0.0
    %3801 = vmatprep.subr.mxu0 0.0
    %3802 = vmatpush1.msra.mxu0 0.0
    %3803 = vmatprep.subr.mxu0 0.0
    %3804 = vmatpush1.msra.mxu0 0.0
    %3805 = vmatprep.subr.mxu0 0.0
    %3806 = vmatpush1.msra.mxu0 0.0
    %3807 = vmatprep.subr.mxu0 0.0
    %3808 = vmatpush1.msra.mxu0 0.0
    %3809 = vmatprep.subr.mxu0 0.0
    %3810 = vmatpush1.msra.mxu0 0.0
    %3811 = vmatprep.subr.mxu0 0.0
    %3812 = vmatpush1.msra.mxu0 0.0
    %3813 = vmatprep.subr.mxu0 0.0
    %3814 = vmatpush1.msra.mxu0 0.0
    %3815 = vmatprep.subr.mxu0 0.0
    %3816 = vmatpush1.msra.mxu0 0.0
    %3817 = vmatprep.subr.mxu0 0.0
    %3818 = vmatpush1.msra.mxu0 0.0
    %3819 = vmatprep.subr.mxu0 0.0
    %3820 = vmatpush1.msra.mxu0 %v3783
    %3821 = vmatprep.subr.mxu0 0.0
    %3822 = vmatpush1.msra.mxu0 %v3782
    %3823 = vmatprep.subr.mxu0 0.0
    %3824 = vmatpush1.msra.mxu0 %v3781
    %3825 = vmatprep.subr.mxu0 0.0
    %3826 = vmatpush1.msra.mxu0 %v3780
    %3827 = vmatprep.subr.mxu0 0.0
    %3828 = vmatpush2.msra.mxu0 0.0
    %3829 = vmatprep.subr.mxu0 0.0
    %3830 = vmatpush2.msra.mxu0 0.0
    %3831 = vmatprep.subr.mxu0 0.0
    %3832 = vmatpush2.msra.mxu0 0.0
    %3833 = vmatprep.subr.mxu0 0.0
    %3834 = vmatpush2.msra.mxu0 0.0
    %3835 = vmatprep.subr.mxu0 0.0
    %3836 = vmatpush2.msra.mxu0 0.0
    %3837 = vmatprep.subr.mxu0 0.0
    %3838 = vmatpush2.msra.mxu0 0.0
    %3839 = vmatprep.subr.mxu0 0.0
    %3840 = vmatpush2.msra.mxu0 0.0
    %3841 = vmatprep.subr.mxu0 0.0
    %3842 = vmatpush2.msra.mxu0 0.0
    %3843 = vmatprep.subr.mxu0 0.0
    %3844 = vmatpush2.msra.mxu0 0.0
    %3845 = vmatprep.subr.mxu0 0.0
    %3846 = vmatpush2.msra.mxu0 0.0
    %3847 = vmatprep.subr.mxu0 0.0
    %3848 = vmatpush2.msra.mxu0 0.0
    %3849 = vmatprep.subr.mxu0 0.0
    %3850 = vmatpush2.msra.mxu0 0.0
    %3851 = vmatprep.subr.mxu0 0.0
    %3852 = vmatpush2.msra.mxu0 0.0
    %3853 = vmatprep.subr.mxu0 0.0
    %3854 = vmatpush2.msra.mxu0 0.0
    %3855 = vmatprep.subr.mxu0 0.0
    %3856 = vmatpush2.msra.mxu0 0.0
    %3857 = vmatprep.subr.mxu0 0.0
    %3858 = vmatpush2.msra.mxu0 0.0
    %3859 = vmatprep.mubr.f32.mxu0 0.0
    %3860 = vmatmul.mubr.f32.gmra.mxu0 %v3793
    %v3861 = vpop.f32.mrf.mxu0
    %v3862 = vadd.f32 %v3789, %v3861
    %v3863 = vpop.f32.mrf.mxu0
    %3864 = vdwg.mxu0
    %v3865 = vmax.f32 %v3862, 0.0
    %v3866 = vld [vmem:[%s8] sm:$0xff]
    %v3867 = vld [vmem:[%s8 + $0x8] sm:$0xff]
    %v3868 = vld [vmem:[%s8 + $0x10] sm:$0xff]
    %v3869 = vld [vmem:[%s8 + $0x18] sm:$0xff]
    %v3870 = vld [vmem:[%s9] sm:$0x1]
    %v3872 = vlaneseq
    %v3873 = vshrl.u32 %v3872, 7
    %v3874 = vsub.s32 0, %v3873
    %v3875 = vrot.slane %v3870, %v3874
    %v3878 = vsel %vm3791, %v3865, 0
    %3880 = vmatprep.subr.mxu0 0.0
    %3881 = vmatpush1.msra.mxu0 0.0
    %3882 = vmatprep.subr.mxu0 0.0
    %3883 = vmatpush1.msra.mxu0 0.0
    %3884 = vmatprep.subr.mxu0 0.0
    %3885 = vmatpush1.msra.mxu0 0.0
    %3886 = vmatprep.subr.mxu0 0.0
    %3887 = vmatpush1.msra.mxu0 0.0
    %3888 = vmatprep.subr.mxu0 0.0
    %3889 = vmatpush1.msra.mxu0 0.0
    %3890 = vmatprep.subr.mxu0 0.0
    %3891 = vmatpush1.msra.mxu0 0.0
    %3892 = vmatprep.subr.mxu0 0.0
    %3893 = vmatpush1.msra.mxu0 0.0
    %3894 = vmatprep.subr.mxu0 0.0
    %3895 = vmatpush1.msra.mxu0 0.0
    %3896 = vmatprep.subr.mxu0 0.0
    %3897 = vmatpush1.msra.mxu0 0.0
    %3898 = vmatprep.subr.mxu0 0.0
    %3899 = vmatpush1.msra.mxu0 0.0
    %3900 = vmatprep.subr.mxu0 0.0
    %3901 = vmatpush1.msra.mxu0 0.0
    %3902 = vmatprep.subr.mxu0 0.0
    %3903 = vmatpush1.msra.mxu0 0.0
    %3904 = vmatprep.subr.mxu0 0.0
    %3905 = vmatpush1.msra.mxu0 %v3869
    %3906 = vmatprep.subr.mxu0 0.0
    %3907 = vmatpush1.msra.mxu0 %v3868
    %3908 = vmatprep.subr.mxu0 0.0
    %3909 = vmatpush1.msra.mxu0 %v3867
    %3910 = vmatprep.subr.mxu0 0.0
    %3911 = vmatpush1.msra.mxu0 %v3866
    %3912 = vmatprep.subr.mxu0 0.0
    %3913 = vmatpush2.msra.mxu0 0.0
    %3914 = vmatprep.subr.mxu0 0.0
    %3915 = vmatpush2.msra.mxu0 0.0
    %3916 = vmatprep.subr.mxu0 0.0
    %3917 = vmatpush2.msra.mxu0 0.0
    %3918 = vmatprep.subr.mxu0 0.0
    %3919 = vmatpush2.msra.mxu0 0.0
    %3920 = vmatprep.subr.mxu0 0.0
    %3921 = vmatpush2.msra.mxu0 0.0
    %3922 = vmatprep.subr.mxu0 0.0
    %3923 = vmatpush2.msra.mxu0 0.0
    %3924 = vmatprep.subr.mxu0 0.0
    %3925 = vmatpush2.msra.mxu0 0.0
    %3926 = vmatprep.subr.mxu0 0.0
    %3927 = vmatpush2.msra.mxu0 0.0
    %3928 = vmatprep.subr.mxu0 0.0
    %3929 = vmatpush2.msra.mxu0 0.0
    %3930 = vmatprep.subr.mxu0 0.0
    %3931 = vmatpush2.msra.mxu0 0.0
    %3932 = vmatprep.subr.mxu0 0.0
    %3933 = vmatpush2.msra.mxu0 0.0
    %3934 = vmatprep.subr.mxu0 0.0
    %3935 = vmatpush2.msra.mxu0 0.0
    %3936 = vmatprep.subr.mxu0 0.0
    %3937 = vmatpush2.msra.mxu0 0.0
    %3938 = vmatprep.subr.mxu0 0.0
    %3939 = vmatpush2.msra.mxu0 0.0
    %3940 = vmatprep.subr.mxu0 0.0
    %3941 = vmatpush2.msra.mxu0 0.0
    %3942 = vmatprep.subr.mxu0 0.0
    %3943 = vmatpush2.msra.mxu0 0.0
    %3944 = vmatprep.mubr.f32.mxu0 0.0
    %3945 = vmatmul.mubr.f32.gmra.mxu0 %v3878
    %v3946 = vpop.f32.mrf.mxu0
    %v3947 = vadd.f32 %v3875, %v3946
    %v3948 = vpop.f32.mrf.mxu0
    %3949 = vdwg.mxu0
    %v3950 = vmax.f32 %v3947, 0.0
    %v3951 = vld [vmem:[%s10] sm:$0xff]
    %v3952 = vld [vmem:[%s10 + $0x8] sm:$0xff]
    %v3953 = vld [vmem:[%s10 + $0x10] sm:$0xff]
    %v3954 = vld [vmem:[%s10 + $0x18] sm:$0xff]
    %v3955 = vld [vmem:[%s10 + $0x20] sm:$0xff]
    %v3956 = vld [vmem:[%s10 + $0x28] sm:$0xff]
    %v3957 = vld [vmem:[%s10 + $0x30] sm:$0xff]
    %v3958 = vld [vmem:[%s10 + $0x38] sm:$0xff]
    %v3960 = vsel %vm3791, %v3950, 0
    %3962 = vmatprep.subr.mxu0 0.0
    %3963 = vmatpush1.msra.mxu0 0.0
    %3964 = vmatprep.subr.mxu0 0.0
    %3965 = vmatpush1.msra.mxu0 0.0
    %3966 = vmatprep.subr.mxu0 0.0
    %3967 = vmatpush1.msra.mxu0 0.0
    %3968 = vmatprep.subr.mxu0 0.0
    %3969 = vmatpush1.msra.mxu0 0.0
    %3970 = vmatprep.subr.mxu0 0.0
    %3971 = vmatpush1.msra.mxu0 0.0
    %3972 = vmatprep.subr.mxu0 0.0
    %3973 = vmatpush1.msra.mxu0 0.0
    %3974 = vmatprep.subr.mxu0 0.0
    %3975 = vmatpush1.msra.mxu0 0.0
    %3976 = vmatprep.subr.mxu0 0.0
    %3977 = vmatpush1.msra.mxu0 0.0
    %3978 = vmatprep.subr.mxu0 0.0
    %3979 = vmatpush1.msra.mxu0 0.0
    %3980 = vmatprep.subr.mxu0 0.0
    %3981 = vmatpush1.msra.mxu0 0.0
    %3982 = vmatprep.subr.mxu0 0.0
    %3983 = vmatpush1.msra.mxu0 0.0
    %3984 = vmatprep.subr.mxu0 0.0
    %3985 = vmatpush1.msra.mxu0 0.0
    %3986 = vmatprep.subr.mxu0 0.0
    %3987 = vmatpush1.msra.mxu0 %v3958
    %3988 = vmatprep.subr.mxu0 0.0
    %3989 = vmatpush1.msra.mxu0 %v3957
    %3990 = vmatprep.subr.mxu0 0.0
    %3991 = vmatpush1.msra.mxu0 %v3956
    %3992 = vmatprep.subr.mxu0 0.0
    %3993 = vmatpush1.msra.mxu0 %v3955
    %3994 = vmatprep.subr.mxu0 0.0
    %3995 = vmatpush2.msra.mxu0 0.0
    %3996 = vmatprep.subr.mxu0 0.0
    %3997 = vmatpush2.msra.mxu0 0.0
    %3998 = vmatprep.subr.mxu0 0.0
    %3999 = vmatpush2.msra.mxu0 0.0
    %4000 = vmatprep.subr.mxu0 0.0
    %4001 = vmatpush2.msra.mxu0 0.0
    %4002 = vmatprep.subr.mxu0 0.0
    %4003 = vmatpush2.msra.mxu0 0.0
    %4004 = vmatprep.subr.mxu0 0.0
    %4005 = vmatpush2.msra.mxu0 0.0
    %4006 = vmatprep.subr.mxu0 0.0
    %4007 = vmatpush2.msra.mxu0 0.0
    %4008 = vmatprep.subr.mxu0 0.0
    %4009 = vmatpush2.msra.mxu0 0.0
    %4010 = vmatprep.subr.mxu0 0.0
    %4011 = vmatpush2.msra.mxu0 0.0
    %4012 = vmatprep.subr.mxu0 0.0
    %4013 = vmatpush2.msra.mxu0 0.0
    %4014 = vmatprep.subr.mxu0 0.0
    %4015 = vmatpush2.msra.mxu0 0.0
    %4016 = vmatprep.subr.mxu0 0.0
    %4017 = vmatpush2.msra.mxu0 0.0
    %4018 = vmatprep.subr.mxu0 0.0
    %4019 = vmatpush2.msra.mxu0 0.0
    %4020 = vmatprep.subr.mxu0 0.0
    %4021 = vmatpush2.msra.mxu0 0.0
    %4022 = vmatprep.subr.mxu0 0.0
    %4023 = vmatpush2.msra.mxu0 0.0
    %4024 = vmatprep.subr.mxu0 0.0
    %4025 = vmatpush2.msra.mxu0 0.0
    %4026 = vmatprep.mubr.f32.mxu0 0.0
    %4027 = vmatmul.mubr.f32.gmra.mxu0 %v3960
    %v4028 = vpop.f32.mrf.mxu0
    %v4029 = vadd.f32 0.0, %v4028
    %v4030 = vpop.f32.mrf.mxu0
    %4031 = vdwg.mxu0
    %v4033 = vsel %vm3791, %v3693, 0
    %4035 = vmatprep.subr.mxu0 0.0
    %4036 = vmatpush1.msra.mxu0 0.0
    %4037 = vmatprep.subr.mxu0 0.0
    %4038 = vmatpush1.msra.mxu0 0.0
    %4039 = vmatprep.subr.mxu0 0.0
    %4040 = vmatpush1.msra.mxu0 0.0
    %4041 = vmatprep.subr.mxu0 0.0
    %4042 = vmatpush1.msra.mxu0 0.0
    %4043 = vmatprep.subr.mxu0 0.0
    %4044 = vmatpush1.msra.mxu0 0.0
    %4045 = vmatprep.subr.mxu0 0.0
    %4046 = vmatpush1.msra.mxu0 0.0
    %4047 = vmatprep.subr.mxu0 0.0
    %4048 = vmatpush1.msra.mxu0 0.0
    %4049 = vmatprep.subr.mxu0 0.0
    %4050 = vmatpush1.msra.mxu0 0.0
    %4051 = vmatprep.subr.mxu0 0.0
    %4052 = vmatpush1.msra.mxu0 0.0
    %4053 = vmatprep.subr.mxu0 0.0
    %4054 = vmatpush1.msra.mxu0 0.0
    %4055 = vmatprep.subr.mxu0 0.0
    %4056 = vmatpush1.msra.mxu0 0.0
    %4057 = vmatprep.subr.mxu0 0.0
    %4058 = vmatpush1.msra.mxu0 0.0
    %4059 = vmatprep.subr.mxu0 0.0
    %4060 = vmatpush1.msra.mxu0 %v3954
    %4061 = vmatprep.subr.mxu0 0.0
    %4062 = vmatpush1.msra.mxu0 %v3953
    %4063 = vmatprep.subr.mxu0 0.0
    %4064 = vmatpush1.msra.mxu0 %v3952
    %4065 = vmatprep.subr.mxu0 0.0
    %4066 = vmatpush1.msra.mxu0 %v3951
    %4067 = vmatprep.subr.mxu0 0.0
    %4068 = vmatpush2.msra.mxu0 0.0
    %4069 = vmatprep.subr.mxu0 0.0
    %4070 = vmatpush2.msra.mxu0 0.0
    %4071 = vmatprep.subr.mxu0 0.0
    %4072 = vmatpush2.msra.mxu0 0.0
    %4073 = vmatprep.subr.mxu0 0.0
    %4074 = vmatpush2.msra.mxu0 0.0
    %4075 = vmatprep.subr.mxu0 0.0
    %4076 = vmatpush2.msra.mxu0 0.0
    %4077 = vmatprep.subr.mxu0 0.0
    %4078 = vmatpush2.msra.mxu0 0.0
    %4079 = vmatprep.subr.mxu0 0.0
    %4080 = vmatpush2.msra.mxu0 0.0
    %4081 = vmatprep.subr.mxu0 0.0
    %4082 = vmatpush2.msra.mxu0 0.0
    %4083 = vmatprep.subr.mxu0 0.0
    %4084 = vmatpush2.msra.mxu0 0.0
    %4085 = vmatprep.subr.mxu0 0.0
    %4086 = vmatpush2.msra.mxu0 0.0
    %4087 = vmatprep.subr.mxu0 0.0
    %4088 = vmatpush2.msra.mxu0 0.0
    %4089 = vmatprep.subr.mxu0 0.0
    %4090 = vmatpush2.msra.mxu0 0.0
    %4091 = vmatprep.subr.mxu0 0.0
    %4092 = vmatpush2.msra.mxu0 0.0
    %4093 = vmatprep.subr.mxu0 0.0
    %4094 = vmatpush2.msra.mxu0 0.0
    %4095 = vmatprep.subr.mxu0 0.0
    %4096 = vmatpush2.msra.mxu0 0.0
    %4097 = vmatprep.subr.mxu0 0.0
    %4098 = vmatpush2.msra.mxu0 0.0
    %4099 = vmatprep.mubr.f32.mxu0 0.0
    %4100 = vmatmul.mubr.f32.gmra.mxu0 %v4033
    %v4101 = vpop.f32.mrf.mxu0
    %v4102 = vadd.f32 %v4029, %v4101
    %v4103 = vpop.f32.mrf.mxu0
    %4104 = vdwg.mxu0
    %v4105 = vld [vmem:[%s11] sm:$0x1]
    %v4107 = vlaneseq
    %v4108 = vshrl.u32 %v4107, 7
    %v4109 = vsub.s32 0, %v4108
    %v4110 = vrot.slane %v4105, %v4109
    %v4112 = vadd.f32 %v4102, %v4110
    %v4113 = vmax.f32 %v4112, 0.0
    %v4114 = vld [vmem:[%s12] sm:$0xff]
    %v4115 = vld [vmem:[%s12 + $0x8] sm:$0xff]
    %v4116 = vld [vmem:[%s12 + $0x10] sm:$0xff]
    %v4117 = vld [vmem:[%s12 + $0x18] sm:$0xff]
    %v4118 = vld [vmem:[%s13] sm:$0x1]
    %v4120 = vlaneseq
    %v4121 = vshrl.u32 %v4120, 7
    %v4122 = vsub.s32 0, %v4121
    %v4123 = vrot.slane %v4118, %v4122
    %v4126 = vsel %vm3791, %v4113, 0
    %4128 = vmatprep.subr.mxu0 0.0
    %4129 = vmatpush1.msra.mxu0 0.0
    %4130 = vmatprep.subr.mxu0 0.0
    %4131 = vmatpush1.msra.mxu0 0.0
    %4132 = vmatprep.subr.mxu0 0.0
    %4133 = vmatpush1.msra.mxu0 0.0
    %4134 = vmatprep.subr.mxu0 0.0
    %4135 = vmatpush1.msra.mxu0 0.0
    %4136 = vmatprep.subr.mxu0 0.0
    %4137 = vmatpush1.msra.mxu0 0.0
    %4138 = vmatprep.subr.mxu0 0.0
    %4139 = vmatpush1.msra.mxu0 0.0
    %4140 = vmatprep.subr.mxu0 0.0
    %4141 = vmatpush1.msra.mxu0 0.0
    %4142 = vmatprep.subr.mxu0 0.0
    %4143 = vmatpush1.msra.mxu0 0.0
    %4144 = vmatprep.subr.mxu0 0.0
    %4145 = vmatpush1.msra.mxu0 0.0
    %4146 = vmatprep.subr.mxu0 0.0
    %4147 = vmatpush1.msra.mxu0 0.0
    %4148 = vmatprep.subr.mxu0 0.0
    %4149 = vmatpush1.msra.mxu0 0.0
    %4150 = vmatprep.subr.mxu0 0.0
    %4151 = vmatpush1.msra.mxu0 0.0
    %4152 = vmatprep.subr.mxu0 0.0
    %4153 = vmatpush1.msra.mxu0 %v4117
    %4154 = vmatprep.subr.mxu0 0.0
    %4155 = vmatpush1.msra.mxu0 %v4116
    %4156 = vmatprep.subr.mxu0 0.0
    %4157 = vmatpush1.msra.mxu0 %v4115
    %4158 = vmatprep.subr.mxu0 0.0
    %4159 = vmatpush1.msra.mxu0 %v4114
    %4160 = vmatprep.subr.mxu0 0.0
    %4161 = vmatpush2.msra.mxu0 0.0
    %4162 = vmatprep.subr.mxu0 0.0
    %4163 = vmatpush2.msra.mxu0 0.0
    %4164 = vmatprep.subr.mxu0 0.0
    %4165 = vmatpush2.msra.mxu0 0.0
    %4166 = vmatprep.subr.mxu0 0.0
    %4167 = vmatpush2.msra.mxu0 0.0
    %4168 = vmatprep.subr.mxu0 0.0
    %4169 = vmatpush2.msra.mxu0 0.0
    %4170 = vmatprep.subr.mxu0 0.0
    %4171 = vmatpush2.msra.mxu0 0.0
    %4172 = vmatprep.subr.mxu0 0.0
    %4173 = vmatpush2.msra.mxu0 0.0
    %4174 = vmatprep.subr.mxu0 0.0
    %4175 = vmatpush2.msra.mxu0 0.0
    %4176 = vmatprep.subr.mxu0 0.0
    %4177 = vmatpush2.msra.mxu0 0.0
    %4178 = vmatprep.subr.mxu0 0.0
    %4179 = vmatpush2.msra.mxu0 0.0
    %4180 = vmatprep.subr.mxu0 0.0
    %4181 = vmatpush2.msra.mxu0 0.0
    %4182 = vmatprep.subr.mxu0 0.0
    %4183 = vmatpush2.msra.mxu0 0.0
    %4184 = vmatprep.subr.mxu0 0.0
    %4185 = vmatpush2.msra.mxu0 0.0
    %4186 = vmatprep.subr.mxu0 0.0
    %4187 = vmatpush2.msra.mxu0 0.0
    %4188 = vmatprep.subr.mxu0 0.0
    %4189 = vmatpush2.msra.mxu0 0.0
    %4190 = vmatprep.subr.mxu0 0.0
    %4191 = vmatpush2.msra.mxu0 0.0
    %4192 = vmatprep.mubr.f32.mxu0 0.0
    %4193 = vmatmul.mubr.f32.gmra.mxu0 %v4126
    %v4194 = vpop.f32.mrf.mxu0
    %v4195 = vadd.f32 %v4123, %v4194
    %v4196 = vpop.f32.mrf.mxu0
    %4197 = vdwg.mxu0
    %v4198 = vmax.f32 %v4195, 0.0
    %v4199 = vld [vmem:[%s14] sm:$0xff]
    %v4200 = vld [vmem:[%s14 + $0x8] sm:$0xff]
    %v4201 = vld [vmem:[%s14 + $0x10] sm:$0xff]
    %v4202 = vld [vmem:[%s14 + $0x18] sm:$0xff]
    %v4203 = vld [vmem:[%s15] sm:$0x1]
    %v4205 = vlaneseq
    %v4206 = vshrl.u32 %v4205, 7
    %v4207 = vsub.s32 0, %v4206
    %v4208 = vrot.slane %v4203, %v4207
    %v4211 = vsel %vm3791, %v4198, 0
    %4213 = vmatprep.subr.mxu0 0.0
    %4214 = vmatpush1.msra.mxu0 0.0
    %4215 = vmatprep.subr.mxu0 0.0
    %4216 = vmatpush1.msra.mxu0 0.0
    %4217 = vmatprep.subr.mxu0 0.0
    %4218 = vmatpush1.msra.mxu0 0.0
    %4219 = vmatprep.subr.mxu0 0.0
    %4220 = vmatpush1.msra.mxu0 0.0
    %4221 = vmatprep.subr.mxu0 0.0
    %4222 = vmatpush1.msra.mxu0 0.0
    %4223 = vmatprep.subr.mxu0 0.0
    %4224 = vmatpush1.msra.mxu0 0.0
    %4225 = vmatprep.subr.mxu0 0.0
    %4226 = vmatpush1.msra.mxu0 0.0
    %4227 = vmatprep.subr.mxu0 0.0
    %4228 = vmatpush1.msra.mxu0 0.0
    %4229 = vmatprep.subr.mxu0 0.0
    %4230 = vmatpush1.msra.mxu0 0.0
    %4231 = vmatprep.subr.mxu0 0.0
    %4232 = vmatpush1.msra.mxu0 0.0
    %4233 = vmatprep.subr.mxu0 0.0
    %4234 = vmatpush1.msra.mxu0 0.0
    %4235 = vmatprep.subr.mxu0 0.0
    %4236 = vmatpush1.msra.mxu0 0.0
    %4237 = vmatprep.subr.mxu0 0.0
    %4238 = vmatpush1.msra.mxu0 %v4202
    %4239 = vmatprep.subr.mxu0 0.0
    %4240 = vmatpush1.msra.mxu0 %v4201
    %4241 = vmatprep.subr.mxu0 0.0
    %4242 = vmatpush1.msra.mxu0 %v4200
    %4243 = vmatprep.subr.mxu0 0.0
    %4244 = vmatpush1.msra.mxu0 %v4199
    %4245 = vmatprep.subr.mxu0 0.0
    %4246 = vmatpush2.msra.mxu0 0.0
    %4247 = vmatprep.subr.mxu0 0.0
    %4248 = vmatpush2.msra.mxu0 0.0
    %4249 = vmatprep.subr.mxu0 0.0
    %4250 = vmatpush2.msra.mxu0 0.0
    %4251 = vmatprep.subr.mxu0 0.0
    %4252 = vmatpush2.msra.mxu0 0.0
    %4253 = vmatprep.subr.mxu0 0.0
    %4254 = vmatpush2.msra.mxu0 0.0
    %4255 = vmatprep.subr.mxu0 0.0
    %4256 = vmatpush2.msra.mxu0 0.0
    %4257 = vmatprep.subr.mxu0 0.0
    %4258 = vmatpush2.msra.mxu0 0.0
    %4259 = vmatprep.subr.mxu0 0.0
    %4260 = vmatpush2.msra.mxu0 0.0
    %4261 = vmatprep.subr.mxu0 0.0
    %4262 = vmatpush2.msra.mxu0 0.0
    %4263 = vmatprep.subr.mxu0 0.0
    %4264 = vmatpush2.msra.mxu0 0.0
    %4265 = vmatprep.subr.mxu0 0.0
    %4266 = vmatpush2.msra.mxu0 0.0
    %4267 = vmatprep.subr.mxu0 0.0
    %4268 = vmatpush2.msra.mxu0 0.0
    %4269 = vmatprep.subr.mxu0 0.0
    %4270 = vmatpush2.msra.mxu0 0.0
    %4271 = vmatprep.subr.mxu0 0.0
    %4272 = vmatpush2.msra.mxu0 0.0
    %4273 = vmatprep.subr.mxu0 0.0
    %4274 = vmatpush2.msra.mxu0 0.0
    %4275 = vmatprep.subr.mxu0 0.0
    %4276 = vmatpush2.msra.mxu0 0.0
    %4277 = vmatprep.mubr.f32.mxu0 0.0
    %4278 = vmatmul.mubr.f32.gmra.mxu0 %v4211
    %v4279 = vpop.f32.mrf.mxu0
    %v4280 = vadd.f32 %v4208, %v4279
    %v4281 = vpop.f32.mrf.mxu0
    %4282 = vdwg.mxu0
    %vm4283 = vcmask 148480
    %4284 = vst.msk [vmem:[#allocation2] sm:$0x3] %vm4283, %v4280
    // Predicated region
    $region66: #{action_prediction_forward.3} parent=1 // pred_check
      _
    $region67: #{action_prediction_forward.3} parent=1 // pred_check_branch
      %4286 = sbr.rel (0) target = $region69
    $region68: #{action_prediction_forward.3} parent=1 // pred_region
      %s4288 = ssub.s32 32, 32
      %4289 = vsyncadd [#allocation3], %s4288
      %s4291 = sshll.u32 [#allocation2], 4
      %s4292 = int_to_ptr.vmem [resolvable:$true] %s4291
      %4294 = dma.vmem_to_hbm [thread:$0]  %s4292, 32, %s16, [#allocation3]
    $region69: #{action_prediction_forward.3} parent=1 // pred_fallthru
      _
    // Predicated region
    $region70: #{action_prediction_forward.3} parent=1 // pred_check
      _
    $region71: #{action_prediction_forward.3} parent=1 // pred_check_branch
      %4296 = sbr.rel (0) target = $region73
    $region72: #{action_prediction_forward.3} parent=1 // pred_region
      %4297 = dma.done [#allocation3], 32
    $region73: #{action_prediction_forward.3} parent=1 // pred_fallthru
      _
    %4298 = vsyncpa [#allocation3], 1

</llo_original>
